<compile_context>
chip_gen: v5e
topology: v5e:2x2
jax: 0.10.0
libtpu: 0.0.40
codegen_flags: <defaults>
</compile_context>

<pallas_src>
import functools

import jax
import jax.numpy as jnp
from jax.experimental import pallas as pl
from jax.experimental.pallas import tpu as pltpu

BN_EPS = 1e-5


# --------------------------- VMEM budget (per generation) -------------------- #

def _vmem_limit_bytes():
    """Generation-aware scoped-VMEM cap: ~75% of physical, capped at 96 MiB."""
    cap = None
    try:
        cap = getattr(pltpu.get_tpu_info(), "vmem_capacity_bytes", None)
    except Exception:
        cap = None
    if not cap:
        cap = 64 * 1024 * 1024          # conservative default (v7x physical/TC)
    return int(min(cap - cap // 4, 96 * 1024 * 1024))


VMEM_LIMIT = _vmem_limit_bytes()


# --------------------------- tiled fused matmul kernels ---------------------- #

def _mm_kernel(x_ref, w_ref, s_ref, b_ref, o_ref, acc_ref, *, relu):
    k = pl.program_id(2)

    @pl.when(k == 0)
    def _():
        acc_ref[...] = jnp.zeros_like(acc_ref)

    acc_ref[...] += jnp.dot(x_ref[...], w_ref[...],
                            preferred_element_type=jnp.float32)

    @pl.when(k == pl.num_programs(2) - 1)
    def _():
        y = acc_ref[...] * s_ref[...] + b_ref[...]
        if relu:
            y = jnp.maximum(y, 0.0)
        o_ref[...] = y.astype(o_ref.dtype)


def _mm_res_kernel(x_ref, w_ref, s_ref, b_ref, r_ref, o_ref, acc_ref, *, relu):
    k = pl.program_id(2)

    @pl.when(k == 0)
    def _():
        acc_ref[...] = jnp.zeros_like(acc_ref)

    acc_ref[...] += jnp.dot(x_ref[...], w_ref[...],
                            preferred_element_type=jnp.float32)

    @pl.when(k == pl.num_programs(2) - 1)
    def _():
        # residual arrives bf16; upcast in-kernel (halves its HBM read).
        y = acc_ref[...] * s_ref[...] + b_ref[...] + r_ref[...].astype(jnp.float32)
        if relu:
            y = jnp.maximum(y, 0.0)
        o_ref[...] = y.astype(o_ref.dtype)


def _pick_tile(dim, candidates):
    for c in candidates:
        if dim % c == 0:
            return c
    return dim


def _mm_vmem_bytes(tm, tk, tn, has_residual):
    x = tm * tk * 2                      # bf16 activations
    w = tk * tn * 2                      # bf16 weights
    sb = 2 * tn * 4                      # scale + shift
    r = tm * tn * 2 if has_residual else 0
    out = tm * tn * 4
    acc = tm * tn * 4
    return 2 * (x + w + sb + r + out) + acc     # BlockSpec double-buffers in/out


def fused_matmul(x2d, w, scale, shift, residual=None, relu=True,
                 out_dtype=jnp.float32):
    """(M, K) @ (K, Cout) with fused folded-BN affine (+ residual) (+ ReLU)."""
    M, K = x2d.shape
    Kw, Cout = w.shape
    assert K == Kw

    tn = _pick_tile(Cout, (256, 128))
    tk = _pick_tile(K, (1152, 1024, 768, 512, 384, 256, 128))
    budget = int(VMEM_LIMIT * 0.8)
    has_res = residual is not None

    # Keep >=2 programs on the parallel axes so both v7x TensorCores get work.
    tm_cap = M if (Cout // tn) >= 2 else max(8, M // 2)
    tm = M
    for c in (1024, 512, 256, 128, 64, 32, 16, 8):
        if c <= tm_cap and M % c == 0 and _mm_vmem_bytes(c, tk, tn, has_res) <= budget:
            tm = c
            break
    while (_mm_vmem_bytes(tm, tk, tn, has_res) > budget and tk > 128
           and tk % 2 == 0 and K % (tk // 2) == 0):
        tk //= 2

    grid = (M // tm, Cout // tn, K // tk)

    in_specs = [
        pl.BlockSpec((tm, tk), lambda i, j, k: (i, k)),   # activations (bf16)
        pl.BlockSpec((tk, tn), lambda i, j, k: (k, j)),   # weights     (bf16)
        pl.BlockSpec((1, tn), lambda i, j, k: (0, j)),    # BN scale    (f32)
        pl.BlockSpec((1, tn), lambda i, j, k: (0, j)),    # BN shift    (f32)
    ]
    # .astype is a no-op for args that are already bf16/f32 (no extra HBM pass).
    args = [x2d.astype(jnp.bfloat16), w.astype(jnp.bfloat16),
            scale.astype(jnp.float32), shift.astype(jnp.float32)]
    if residual is None:
        kernel = functools.partial(_mm_kernel, relu=relu)
    else:
        in_specs.append(pl.BlockSpec((tm, tn), lambda i, j, k: (i, j)))
        args.append(residual.astype(jnp.bfloat16))
        kernel = functools.partial(_mm_res_kernel, relu=relu)

    return pl.pallas_call(
        kernel,
        out_shape=jax.ShapeDtypeStruct((M, Cout), out_dtype),
        grid_spec=pltpu.PrefetchScalarGridSpec(
            num_scalar_prefetch=0,
            grid=grid,
            in_specs=in_specs,
            out_specs=pl.BlockSpec((tm, tn), lambda i, j, k: (i, j)),
            scratch_shapes=[pltpu.VMEM((tm, tn), jnp.float32)],
        ),
        compiler_params=pltpu.CompilerParams(
            dimension_semantics=("parallel", "parallel", "arbitrary"),
            vmem_limit_bytes=VMEM_LIMIT,
        ),
    )(*args)


# ----------------- conv2: 3x3 taps folded inside the kernel ------------------ #

def _conv2_tap_kernel(xp_ref, w_ref, s_ref, b_ref, o_ref, *, H, W, dilation):
    # xp_ref: (1, H+2d, W+2d, C) bf16 -- one zero-padded image (halo included)
    # w_ref : (9, C, tn) bf16         -- per-tap weight slabs
    # o_ref : (H*W, tn)               -- one image's output rows
    d = dilation
    C = xp_ref.shape[-1]
    tn = o_ref.shape[-1]
    acc = jnp.zeros((H * W, tn), jnp.float32)
    for tap in range(9):                     # static unroll: 9 MXU matmuls
        i, j = tap // 3, tap % 3
        patch = xp_ref[0, i * d:i * d + H, j * d:j * d + W, :]   # (H, W, C)
        acc = acc + jnp.dot(patch.reshape(H * W, C), w_ref[tap],
                            preferred_element_type=jnp.float32)
    y = acc * s_ref[...] + b_ref[...]
    y = jnp.maximum(y, 0.0)
    o_ref[...] = y.astype(o_ref.dtype)


def _conv2_tap_fits(H, W, C, tn, d):
    xp_b = (H + 2 * d) * (W + 2 * d) * C * 2
    w_b = 9 * C * tn * 2
    out_b = H * W * tn * 2
    acc_b = H * W * tn * 4
    est = 2 * (xp_b + w_b + out_b + 2 * tn * 4) + acc_b
    return (H * W) % 8 == 0 and est <= int(VMEM_LIMIT * 0.8)


def conv2_3x3_fused(xp, w9, scale, shift, H, W, dilation,
                    out_dtype=jnp.bfloat16):
    """3x3 dilated conv (stride 1) + folded BN + ReLU, no HBM im2col slab."""
    N = xp.shape[0]
    C = xp.shape[-1]
    Cout = w9.shape[-1]
    tn = _pick_tile(Cout, (256, 128))
    d = dilation
    kernel = functools.partial(_conv2_tap_kernel, H=H, W=W, dilation=d)
    return pl.pallas_call(
        kernel,
        out_shape=jax.ShapeDtypeStruct((N * H * W, Cout), out_dtype),
        grid_spec=pltpu.PrefetchScalarGridSpec(
            num_scalar_prefetch=0,
            grid=(N, Cout // tn),
            in_specs=[
                pl.BlockSpec((1, H + 2 * d, W + 2 * d, C),
                             lambda n, j: (n, 0, 0, 0)),
                pl.BlockSpec((9, C, tn), lambda n, j: (0, 0, j)),
                pl.BlockSpec((1, tn), lambda n, j: (0, j)),
                pl.BlockSpec((1, tn), lambda n, j: (0, j)),
            ],
            out_specs=pl.BlockSpec((H * W, tn), lambda n, j: (n, j)),
        ),
        compiler_params=pltpu.CompilerParams(
            dimension_semantics=("parallel", "parallel"),
            vmem_limit_bytes=VMEM_LIMIT,
        ),
    )(xp, w9, scale, shift)


# ------------------------------ JAX glue ------------------------------------ #

def fold_bn(gamma, beta, mean, var):
    # eval-mode BatchNorm folded into scale/shift (bn.eval() because fix_bn=True)
    scale = gamma / jnp.sqrt(var + BN_EPS)
    shift = beta - mean * scale
    return scale[None, :], shift[None, :]


def im2col_3x3(x_nhwc, padding=1, dilation=1):
    # standard 3x3 im2col (stride 1), columns ordered [tap (= i*3+j), channel]
    N, H, W, C = x_nhwc.shape
    xp = jnp.pad(x_nhwc, ((0, 0), (padding, padding), (padding, padding), (0, 0)))
    cols = []
    for i in range(3):
        for j in range(3):
            cols.append(xp[:, i * dilation:i * dilation + H,
                           j * dilation:j * dilation + W, :])
    return jnp.stack(cols, axis=3).reshape(N, H, W, 9 * C)


def _bilinear_sample(img, py, px):
    # img: (N,H,W,C); py/px: (N,H,W) fractional sample coords; zero padding OOB.
    N, H, W, C = img.shape
    y0 = jnp.floor(py)
    x0 = jnp.floor(px)
    wy1 = py - y0
    wx1 = px - x0
    wy0 = 1.0 - wy1
    wx0 = 1.0 - wx1
    flat = img.reshape(N, H * W, C)

    def gather(yi, xi):
        valid = (yi >= 0) & (yi <= H - 1) & (xi >= 0) & (xi <= W - 1)
        yc = jnp.clip(yi, 0, H - 1).astype(jnp.int32)
        xc = jnp.clip(xi, 0, W - 1).astype(jnp.int32)
        idx = (yc * W + xc).reshape(N, H * W, 1)
        g = jnp.take_along_axis(flat, idx, axis=1).reshape(N, H, W, C)
        return g * valid[..., None].astype(img.dtype)

    v00 = gather(y0, x0)
    v01 = gather(y0, x0 + 1)
    v10 = gather(y0 + 1, x0)
    v11 = gather(y0 + 1, x0 + 1)
    return (v00 * (wy0 * wx0)[..., None] + v01 * (wy0 * wx1)[..., None] +
            v10 * (wy1 * wx0)[..., None] + v11 * (wy1 * wx1)[..., None])


def deform_im2col(x_nhwc, offsets_nhwc, padding=1, dilation=1):
    # Deformable-conv sampling (deformable_group=1).  Offset channel layout:
    # (dy_k, dx_k) pairs per kernel point k = i*3 + j (mmcv DCNv1 convention).
    N, H, W, C = x_nhwc.shape
    ys = jnp.arange(H, dtype=jnp.float32)[None, :, None]
    xs = jnp.arange(W, dtype=jnp.float32)[None, None, :]
    cols = []
    for k in range(9):
        i, j = k // 3, k % 3
        dy = offsets_nhwc[..., 2 * k]
        dx = offsets_nhwc[..., 2 * k + 1]
        py = ys + (i * dilation - padding) + dy
        px = xs + (j * dilation - padding) + dx
        cols.append(_bilinear_sample(x_nhwc, py, px))
    return jnp.stack(cols, axis=3).reshape(N, H, W, 9 * C)


# --------------------------- DCNBottleneck forward --------------------------- #

def dcn_bottleneck_forward(x_nchw, p, stride=1, dilation=1, offsets_are_zero=True):
    # downsample=None configuration: identity residual requires stride == 1 and
    # inplanes == 4*planes (same constraint the PyTorch module implies).
    assert stride == 1, "downsample=None => stride must be 1 (identity residual)"
    # single fused pass: NCHW f32 -> NHWC bf16 (MXU input + bf16 residual slab)
    x_bf = jnp.transpose(x_nchw, (0, 2, 3, 1)).astype(jnp.bfloat16)
    N, H, W, Cin = x_bf.shape
    M = N * H * W
    planes = p["w1"].shape[1]
    assert Cin == 4 * planes, "identity residual requires inplanes == 4*planes"
    d = dilation
    x2d = x_bf.reshape(M, Cin)

    # conv1 (1x1) + bn1 + relu  (tiled fused Pallas matmul, bf16 MXU, f32 epilogue)
    out = fused_matmul(x2d, p["w1"], p["bn1_scale"], p["bn1_shift"],
                       relu=True, out_dtype=jnp.bfloat16)
    out_nhwc = out.reshape(N, H, W, planes)

    if offsets_are_zero:
        # Zero offsets (conv2_offset is zero-initialised in __init__): the
        # deformable conv degenerates to a standard dilated 3x3 conv.
        tn = _pick_tile(planes, (256, 128))
        if _conv2_tap_fits(H, W, planes, tn, d):
            # Fold the 9 taps inside the kernel (no HBM im2col slab): pad once,
            # one haloed image block per grid step.
            xp = jnp.pad(out_nhwc, ((0, 0), (d, d), (d, d), (0, 0)))
            out = conv2_3x3_fused(xp, p["w2"], p["bn2_scale"], p["bn2_shift"],
                                  H, W, d, out_dtype=jnp.bfloat16)
        else:
            # TODO(synk): halo-tile the conv2 kernel along H for very large
            # feature maps instead of falling back to the HBM im2col slab.
            cols = im2col_3x3(out_nhwc, padding=d, dilation=d).reshape(M, 9 * planes)
            out = fused_matmul(cols, p["w2"].reshape(9 * planes, planes),
                               p["bn2_scale"], p["bn2_shift"],
                               relu=True, out_dtype=jnp.bfloat16)
    else:
        # General deformable fallback (trained / nonzero offsets).
        # conv2_offset (3x3, pad=1, dil=1) + bias, padded to a lane-dense 128
        # output (first 18 channels used).
        off_cols = im2col_3x3(out_nhwc, padding=1, dilation=1).reshape(M, 9 * planes)
        ones = jnp.ones((1, p["w_off_p"].shape[1]), jnp.float32)
        offs = fused_matmul(off_cols, p["w_off_p"], ones, p["b_off_p"],
                            relu=False, out_dtype=jnp.float32)
        offset = offs[:, :18].reshape(N, H, W, 18)
        # TODO(synk): move this data-dependent bilinear gather into a Pallas
        # kernel (scalar-prefetched corner indices + manual DMA row gather).
        cols = deform_im2col(out_nhwc.astype(jnp.float32), offset,
                             padding=d, dilation=d)
        out = fused_matmul(cols.reshape(M, 9 * planes),
                           p["w2"].reshape(9 * planes, planes),
                           p["bn2_scale"], p["bn2_shift"],
                           relu=True, out_dtype=jnp.bfloat16)

    # conv3 (1x1) + bn3 + residual add + relu (bf16 residual upcast in-kernel)
    out = fused_matmul(out, p["w3"], p["bn3_scale"], p["bn3_shift"],
                       residual=x2d, relu=True, out_dtype=jnp.float32)
    out = out.reshape(N, H, W, Cin)
    # TODO(synk): when stacking blocks, keep activations NHWC between blocks so
    # these entry/exit transposes amortise.
    return jnp.transpose(out, (0, 3, 1, 2))   # back to NCHW


# ----------------------------- parameter setup ------------------------------- #

def make_params(inplanes, planes, key):
    ks = jax.random.split(key, 12)
    f32 = jnp.float32
    bf16 = jnp.bfloat16

    # conv weights (PyTorch shapes), converted to matmul layout
    w1_pt = 0.1 * jax.random.normal(ks[0], (planes, inplanes, 1, 1), f32)
    w2_pt = 0.1 * jax.random.normal(ks[1], (planes, planes, 3, 3), f32)
    w3_pt = 0.1 * jax.random.normal(ks[2], (4 * planes, planes, 1, 1), f32)
    w_off_pt = jnp.zeros((18, planes, 3, 3), f32)      # zeroed in __init__
    b_off = jnp.zeros((18,), f32)                      # zeroed in __init__

    def bn(kg, kb, km, kv, c):
        gamma = 1.0 + 0.1 * jax.random.normal(kg, (c,), f32)
        beta = 0.1 * jax.random.normal(kb, (c,), f32)
        mean = 0.1 * jax.random.normal(km, (c,), f32)
        var = 0.5 + jnp.abs(jax.random.normal(kv, (c,), f32))
        return fold_bn(gamma, beta, mean, var)

    bn1_scale, bn1_shift = bn(ks[3], ks[4], ks[5], ks[6], planes)
    bn2_scale, bn2_shift = bn(ks[7], ks[8], ks[9], ks[10], planes)
    bn3_scale, bn3_shift = bn(ks[11], ks[3], ks[7], ks[0], 4 * planes)

    # pre-cast to bf16 once (MXU input dtype) -> no per-call cast passes
    w1 = jnp.transpose(w1_pt[:, :, 0, 0]).astype(bf16)                   # (Cin, planes)
    w2 = jnp.transpose(w2_pt, (2, 3, 1, 0)).reshape(9, planes, planes).astype(bf16)
    w3 = jnp.transpose(w3_pt[:, :, 0, 0]).astype(bf16)                   # (planes, 4*planes)
    # offset conv padded to a lane-dense 128-wide output (avoids vst.msk stores)
    w_off = jnp.transpose(w_off_pt, (2, 3, 1, 0)).reshape(9 * planes, 18)
    w_off_p = jnp.pad(w_off, ((0, 0), (0, 128 - 18))).astype(bf16)       # (9*planes, 128)
    b_off_p = jnp.pad(b_off, (0, 128 - 18))[None, :]                     # (1, 128)

    return {
        "w1": w1, "w2": w2, "w3": w3,
        "w_off_p": w_off_p, "b_off_p": b_off_p,
        "bn1_scale": bn1_scale, "bn1_shift": bn1_shift,
        "bn2_scale": bn2_scale, "bn2_shift": bn2_shift,
        "bn3_scale": bn3_scale, "bn3_shift": bn3_shift,
    }


if __name__ == "__main__":
    # Small-but-representative config: inplanes = 4*planes (downsample=None,
    # identity residual), channels wide enough to be lane-dense, grid exposes
    # >=2 programs on the parallel axes for every kernel.
    N, planes, H, W = 2, 128, 16, 16
    inplanes = 4 * planes
    key = jax.random.PRNGKey(0)
    kx, kp = jax.random.split(key)
    x = jax.random.normal(kx, (N, inplanes, H, W), jnp.float32)   # NCHW like PyTorch
    params = make_params(inplanes, planes, kp)

    # conv2_offset is zero-initialised in the module's __init__: decide the
    # fast-path flag on the host so it is a static Python bool under jit.
    offsets_are_zero = bool(jnp.all(params["w_off_p"] == 0)) and \
                       bool(jnp.all(params["b_off_p"] == 0))

    fwd = jax.jit(functools.partial(dcn_bottleneck_forward, stride=1,
                                    dilation=1,
                                    offsets_are_zero=offsets_are_zero))
    out = jax.block_until_ready(fwd(x, params))
    assert out.shape == (N, inplanes, H, W)
    assert bool(jnp.all(jnp.isfinite(out)))
    print("KERNEL_OK")
</pallas_src>

<mosaic_0001>
module attributes {stable_mosaic.version = 11 : i64} {
  func.func @_mm_kernel(%arg0: i32, %arg1: i32, %arg2: i32, %arg3: memref<256x512xbf16, #tpu.memory_space<vmem>>, %arg4: memref<512x128xbf16, #tpu.memory_space<vmem>>, %arg5: memref<1x128xf32, #tpu.memory_space<vmem>>, %arg6: memref<1x128xf32, #tpu.memory_space<vmem>>, %arg7: memref<256x128xbf16, #tpu.memory_space<vmem>>, %arg8: memref<256x128xf32, #tpu.memory_space<vmem>>) attributes {dimension_semantics = [#tpu.dimension_semantics<parallel>, #tpu.dimension_semantics<parallel>, #tpu.dimension_semantics<arbitrary>], iteration_bounds = array<i64: 2, 1, 1>, scalar_prefetch = 0 : i64, scratch_operands = 1 : i64, tpu.core_type = #tpu.core_type<tc>, window_params = [{transform_indices = @transform_0, window_bounds = array<i64: 256, 512>}, {transform_indices = @transform_1, window_bounds = array<i64: 512, 128>}, {transform_indices = @transform_2, window_bounds = array<i64: 1, 128>}, {transform_indices = @transform_3, window_bounds = array<i64: 1, 128>}, {transform_indices = @transform_4, window_bounds = array<i64: 256, 128>}]} {
    %c0_i32 = arith.constant 0 : i32
    %0 = arith.cmpi eq, %arg2, %c0_i32 : i32
    %1 = arith.extui %0 : i1 to i32
    %c0_i32_0 = arith.constant 0 : i32
    %2 = arith.cmpi ne, %1, %c0_i32_0 : i32
    scf.if %2 {
      %cst_10 = arith.constant 0.000000e+00 : f32
      %12 = vector.broadcast %cst_10 : f32 to vector<256x128xf32>
      %c0_11 = arith.constant 0 : index
      %c0_12 = arith.constant 0 : index
      %13 = vector.load %arg8[%c0_11, %c0_12] : memref<256x128xf32, #tpu.memory_space<vmem>>, vector<256x128xf32>
      tpu.vector_store %arg8[%c0_11, %c0_12], %12 {strides = array<i32>} : memref<256x128xf32, #tpu.memory_space<vmem>>, vector<256x128xf32>,
    } else {
    }
    %c0 = arith.constant 0 : index
    %c0_1 = arith.constant 0 : index
    %3 = vector.load %arg8[%c0, %c0_1] : memref<256x128xf32, #tpu.memory_space<vmem>>, vector<256x128xf32>
    %c0_2 = arith.constant 0 : index
    %c0_3 = arith.constant 0 : index
    %4 = vector.load %arg3[%c0_2, %c0_3] : memref<256x512xbf16, #tpu.memory_space<vmem>>, vector<256x512xbf16>
    %c0_4 = arith.constant 0 : index
    %c0_5 = arith.constant 0 : index
    %5 = vector.load %arg4[%c0_4, %c0_5] : memref<512x128xbf16, #tpu.memory_space<vmem>>, vector<512x128xbf16>
    %cst = arith.constant dense<0.000000e+00> : vector<256x128xf32>
    %6 = tpu.matmul %4, %5, %cst {dimension_numbers = #tpu.dot_dimension_numbers<[1], [0], [0], [1], [0, 0, 1, 1], [], []>} : vector<256x512xbf16>, vector<512x128xbf16>, vector<256x128xf32> -> vector<256x128xf32>
    %7 = arith.addf %3, %6 : vector<256x128xf32>
    %c0_6 = arith.constant 0 : index
    %c0_7 = arith.constant 0 : index
    %8 = vector.load %arg8[%c0_6, %c0_7] : memref<256x128xf32, #tpu.memory_space<vmem>>, vector<256x128xf32>
    tpu.vector_store %arg8[%c0_6, %c0_7], %7 {strides = array<i32>} : memref<256x128xf32, #tpu.memory_space<vmem>>, vector<256x128xf32>,
    %c0_i32_8 = arith.constant 0 : i32
    %9 = arith.cmpi eq, %arg2, %c0_i32_8 : i32
    %10 = arith.extui %9 : i1 to i32
    %c0_i32_9 = arith.constant 0 : i32
    %11 = arith.cmpi ne, %10, %c0_i32_9 : i32
    scf.if %11 {
      %c0_10 = arith.constant 0 : index
      %c0_11 = arith.constant 0 : index
      %12 = vector.load %arg8[%c0_10, %c0_11] : memref<256x128xf32, #tpu.memory_space<vmem>>, vector<256x128xf32>
      %c0_12 = arith.constant 0 : index
      %c0_13 = arith.constant 0 : index
      %13 = vector.load %arg5[%c0_12, %c0_13] : memref<1x128xf32, #tpu.memory_space<vmem>>, vector<1x128xf32>
      %14 = vector.broadcast %13 : vector<1x128xf32> to vector<256x128xf32>
      %15 = arith.mulf %12, %14 : vector<256x128xf32>
      %c0_14 = arith.constant 0 : index
      %c0_15 = arith.constant 0 : index
      %16 = vector.load %arg6[%c0_14, %c0_15] : memref<1x128xf32, #tpu.memory_space<vmem>>, vector<1x128xf32>
      %17 = vector.broadcast %16 : vector<1x128xf32> to vector<256x128xf32>
      %18 = arith.addf %15, %17 : vector<256x128xf32>
      %cst_16 = arith.constant 0.000000e+00 : f32
      %19 = vector.broadcast %cst_16 : f32 to vector<256x128xf32>
      %20 = arith.maximumf %18, %19 : vector<256x128xf32>
      %21 = arith.truncf %20 : vector<256x128xf32> to vector<256x128xbf16>
      %c0_17 = arith.constant 0 : index
      %c0_18 = arith.constant 0 : index
      %22 = vector.load %arg7[%c0_17, %c0_18] : memref<256x128xbf16, #tpu.memory_space<vmem>>, vector<256x128xbf16>
      tpu.vector_store %arg7[%c0_17, %c0_18], %21 {strides = array<i32>} : memref<256x128xbf16, #tpu.memory_space<vmem>>, vector<256x128xbf16>,
    } else {
    }
    return
  }
  func.func @transform_0(%arg0: i32, %arg1: i32, %arg2: i32) -> (i32, i32) {
    %c0_i32 = arith.constant 0 : i32
    return %arg0, %arg2 : i32, i32
  }
  func.func @transform_1(%arg0: i32, %arg1: i32, %arg2: i32) -> (i32, i32) {
    %c0_i32 = arith.constant 0 : i32
    return %arg2, %arg1 : i32, i32
  }
  func.func @transform_2(%arg0: i32, %arg1: i32, %arg2: i32) -> (i32, i32) {
    %c0_i32 = arith.constant 0 : i32
    %c0_i32_0 = arith.constant 0 : i32
    return %c0_i32, %arg1 : i32, i32
  }
  func.func @transform_3(%arg0: i32, %arg1: i32, %arg2: i32) -> (i32, i32) {
    %c0_i32 = arith.constant 0 : i32
    %c0_i32_0 = arith.constant 0 : i32
    return %c0_i32, %arg1 : i32, i32
  }
  func.func @transform_4(%arg0: i32, %arg1: i32, %arg2: i32) -> (i32, i32) {
    %c0_i32 = arith.constant 0 : i32
    return %arg0, %arg1 : i32, i32
  }
}

module attributes {stable_mosaic.version = 11 : i64} {
  func.func @_conv2_tap_kernel(%arg0: i32, %arg1: i32, %arg2: memref<1x18x18x128xbf16, #tpu.memory_space<vmem>>, %arg3: memref<9x128x128xbf16, #tpu.memory_space<vmem>>, %arg4: memref<1x128xf32, #tpu.memory_space<vmem>>, %arg5: memref<1x128xf32, #tpu.memory_space<vmem>>, %arg6: memref<256x128xbf16, #tpu.memory_space<vmem>>) attributes {dimension_semantics = [#tpu.dimension_semantics<parallel>, #tpu.dimension_semantics<parallel>], iteration_bounds = array<i64: 2, 1>, scalar_prefetch = 0 : i64, scratch_operands = 0 : i64, tpu.core_type = #tpu.core_type<tc>, window_params = [{transform_indices = @transform_0, window_bounds = array<i64: 1, 18, 18, 128>}, {transform_indices = @transform_1, window_bounds = array<i64: 9, 128, 128>}, {transform_indices = @transform_2, window_bounds = array<i64: 1, 128>}, {transform_indices = @transform_3, window_bounds = array<i64: 1, 128>}, {transform_indices = @transform_4, window_bounds = array<i64: 256, 128>}]} {
    %cst = arith.constant 0.000000e+00 : f32
    %0 = vector.broadcast %cst : f32 to vector<256x128xf32>
    %c0 = arith.constant 0 : index
    %c0_0 = arith.constant 0 : index
    %c0_1 = arith.constant 0 : index
    %c0_2 = arith.constant 0 : index
    %1 = vector.load %arg2[%c0, %c0_0, %c0_1, %c0_2] : memref<1x18x18x128xbf16, #tpu.memory_space<vmem>>, vector<1x16x16x128xbf16>
    %2 = vector.shape_cast %1 : vector<1x16x16x128xbf16> to vector<16x16x128xbf16>
    %3 = vector.shape_cast %2 : vector<16x16x128xbf16> to vector<256x128xbf16>
    %c0_3 = arith.constant 0 : index
    %c0_4 = arith.constant 0 : index
    %c0_5 = arith.constant 0 : index
    %4 = vector.load %arg3[%c0_3, %c0_4, %c0_5] : memref<9x128x128xbf16, #tpu.memory_space<vmem>>, vector<1x128x128xbf16>
    %5 = vector.shape_cast %4 : vector<1x128x128xbf16> to vector<128x128xbf16>
    %cst_6 = arith.constant dense<0.000000e+00> : vector<256x128xf32>
    %6 = tpu.matmul %3, %5, %cst_6 {dimension_numbers = #tpu.dot_dimension_numbers<[1], [0], [0], [1], [0, 0, 1, 1], [], []>} : vector<256x128xbf16>, vector<128x128xbf16>, vector<256x128xf32> -> vector<256x128xf32>
    %7 = arith.addf %0, %6 : vector<256x128xf32>
    %c0_7 = arith.constant 0 : index
    %c0_8 = arith.constant 0 : index
    %c1 = arith.constant 1 : index
    %c0_9 = arith.constant 0 : index
    %8 = vector.load %arg2[%c0_7, %c0_8, %c1, %c0_9] : memref<1x18x18x128xbf16, #tpu.memory_space<vmem>>, vector<1x16x16x128xbf16>
    %9 = vector.shape_cast %8 : vector<1x16x16x128xbf16> to vector<16x16x128xbf16>
    %10 = vector.shape_cast %9 : vector<16x16x128xbf16> to vector<256x128xbf16>
    %c1_10 = arith.constant 1 : index
    %c0_11 = arith.constant 0 : index
    %c0_12 = arith.constant 0 : index
    %11 = vector.load %arg3[%c1_10, %c0_11, %c0_12] : memref<9x128x128xbf16, #tpu.memory_space<vmem>>, vector<1x128x128xbf16>
    %12 = vector.shape_cast %11 : vector<1x128x128xbf16> to vector<128x128xbf16>
    %cst_13 = arith.constant dense<0.000000e+00> : vector<256x128xf32>
    %13 = tpu.matmul %10, %12, %cst_13 {dimension_numbers = #tpu.dot_dimension_numbers<[1], [0], [0], [1], [0, 0, 1, 1], [], []>} : vector<256x128xbf16>, vector<128x128xbf16>, vector<256x128xf32> -> vector<256x128xf32>
    %14 = arith.addf %7, %13 : vector<256x128xf32>
    %c0_14 = arith.constant 0 : index
    %c0_15 = arith.constant 0 : index
    %c2 = arith.constant 2 : index
    %c0_16 = arith.constant 0 : index
    %15 = vector.load %arg2[%c0_14, %c0_15, %c2, %c0_16] : memref<1x18x18x128xbf16, #tpu.memory_space<vmem>>, vector<1x16x16x128xbf16>
    %16 = vector.shape_cast %15 : vector<1x16x16x128xbf16> to vector<16x16x128xbf16>
    %17 = vector.shape_cast %16 : vector<16x16x128xbf16> to vector<256x128xbf16>
    %c2_17 = arith.constant 2 : index
    %c0_18 = arith.constant 0 : index
    %c0_19 = arith.constant 0 : index
    %18 = vector.load %arg3[%c2_17, %c0_18, %c0_19] : memref<9x128x128xbf16, #tpu.memory_space<vmem>>, vector<1x128x128xbf16>
    %19 = vector.shape_cast %18 : vector<1x128x128xbf16> to vector<128x128xbf16>
    %cst_20 = arith.constant dense<0.000000e+00> : vector<256x128xf32>
    %20 = tpu.matmul %17, %19, %cst_20 {dimension_numbers = #tpu.dot_dimension_numbers<[1], [0], [0], [1], [0, 0, 1, 1], [], []>} : vector<256x128xbf16>, vector<128x128xbf16>, vector<256x128xf32> -> vector<256x128xf32>
    %21 = arith.addf %14, %20 : vector<256x128xf32>
    %c0_21 = arith.constant 0 : index
    %c1_22 = arith.constant 1 : index
    %c0_23 = arith.constant 0 : index
    %c0_24 = arith.constant 0 : index
    %22 = vector.load %arg2[%c0_21, %c1_22, %c0_23, %c0_24] : memref<1x18x18x128xbf16, #tpu.memory_space<vmem>>, vector<1x16x16x128xbf16>
    %23 = vector.shape_cast %22 : vector<1x16x16x128xbf16> to vector<16x16x128xbf16>
    %24 = vector.shape_cast %23 : vector<16x16x128xbf16> to vector<256x128xbf16>
    %c3 = arith.constant 3 : index
    %c0_25 = arith.constant 0 : index
    %c0_26 = arith.constant 0 : index
    %25 = vector.load %arg3[%c3, %c0_25, %c0_26] : memref<9x128x128xbf16, #tpu.memory_space<vmem>>, vector<1x128x128xbf16>
    %26 = vector.shape_cast %25 : vector<1x128x128xbf16> to vector<128x128xbf16>
    %cst_27 = arith.constant dense<0.000000e+00> : vector<256x128xf32>
    %27 = tpu.matmul %24, %26, %cst_27 {dimension_numbers = #tpu.dot_dimension_numbers<[1], [0], [0], [1], [0, 0, 1, 1], [], []>} : vector<256x128xbf16>, vector<128x128xbf16>, vector<256x128xf32> -> vector<256x128xf32>
    %28 = arith.addf %21, %27 : vector<256x128xf32>
    %c0_28 = arith.constant 0 : index
    %c1_29 = arith.constant 1 : index
    %c1_30 = arith.constant 1 : index
    %c0_31 = arith.constant 0 : index
    %29 = vector.load %arg2[%c0_28, %c1_29, %c1_30, %c0_31] : memref<1x18x18x128xbf16, #tpu.memory_space<vmem>>, vector<1x16x16x128xbf16>
    %30 = vector.shape_cast %29 : vector<1x16x16x128xbf16> to vector<16x16x128xbf16>
    %31 = vector.shape_cast %30 : vector<16x16x128xbf16> to vector<256x128xbf16>
    %c4 = arith.constant 4 : index
    %c0_32 = arith.constant 0 : index
    %c0_33 = arith.constant 0 : index
    %32 = vector.load %arg3[%c4, %c0_32, %c0_33] : memref<9x128x128xbf16, #tpu.memory_space<vmem>>, vector<1x128x128xbf16>
    %33 = vector.shape_cast %32 : vector<1x128x128xbf16> to vector<128x128xbf16>
    %cst_34 = arith.constant dense<0.000000e+00> : vector<256x128xf32>
    %34 = tpu.matmul %31, %33, %cst_34 {dimension_numbers = #tpu.dot_dimension_numbers<[1], [0], [0], [1], [0, 0, 1, 1], [], []>} : vector<256x128xbf16>, vector<128x128xbf16>, vector<256x128xf32> -> vector<256x128xf32>
    %35 = arith.addf %28, %34 : vector<256x128xf32>
    %c0_35 = arith.constant 0 : index
    %c1_36 = arith.constant 1 : index
    %c2_37 = arith.constant 2 : index
    %c0_38 = arith.constant 0 : index
    %36 = vector.load %arg2[%c0_35, %c1_36, %c2_37, %c0_38] : memref<1x18x18x128xbf16, #tpu.memory_space<vmem>>, vector<1x16x16x128xbf16>
    %37 = vector.shape_cast %36 : vector<1x16x16x128xbf16> to vector<16x16x128xbf16>
    %38 = vector.shape_cast %37 : vector<16x16x128xbf16> to vector<256x128xbf16>
    %c5 = arith.constant 5 : index
    %c0_39 = arith.constant 0 : index
    %c0_40 = arith.constant 0 : index
    %39 = vector.load %arg3[%c5, %c0_39, %c0_40] : memref<9x128x128xbf16, #tpu.memory_space<vmem>>, vector<1x128x128xbf16>
    %40 = vector.shape_cast %39 : vector<1x128x128xbf16> to vector<128x128xbf16>
    %cst_41 = arith.constant dense<0.000000e+00> : vector<256x128xf32>
    %41 = tpu.matmul %38, %40, %cst_41 {dimension_numbers = #tpu.dot_dimension_numbers<[1], [0], [0], [1], [0, 0, 1, 1], [], []>} : vector<256x128xbf16>, vector<128x128xbf16>, vector<256x128xf32> -> vector<256x128xf32>
    %42 = arith.addf %35, %41 : vector<256x128xf32>
    %c0_42 = arith.constant 0 : index
    %c2_43 = arith.constant 2 : index
    %c0_44 = arith.constant 0 : index
    %c0_45 = arith.constant 0 : index
    %43 = vector.load %arg2[%c0_42, %c2_43, %c0_44, %c0_45] : memref<1x18x18x128xbf16, #tpu.memory_space<vmem>>, vector<1x16x16x128xbf16>
    %44 = vector.shape_cast %43 : vector<1x16x16x128xbf16> to vector<16x16x128xbf16>
    %45 = vector.shape_cast %44 : vector<16x16x128xbf16> to vector<256x128xbf16>
    %c6 = arith.constant 6 : index
    %c0_46 = arith.constant 0 : index
    %c0_47 = arith.constant 0 : index
    %46 = vector.load %arg3[%c6, %c0_46, %c0_47] : memref<9x128x128xbf16, #tpu.memory_space<vmem>>, vector<1x128x128xbf16>
    %47 = vector.shape_cast %46 : vector<1x128x128xbf16> to vector<128x128xbf16>
    %cst_48 = arith.constant dense<0.000000e+00> : vector<256x128xf32>
    %48 = tpu.matmul %45, %47, %cst_48 {dimension_numbers = #tpu.dot_dimension_numbers<[1], [0], [0], [1], [0, 0, 1, 1], [], []>} : vector<256x128xbf16>, vector<128x128xbf16>, vector<256x128xf32> -> vector<256x128xf32>
    %49 = arith.addf %42, %48 : vector<256x128xf32>
    %c0_49 = arith.constant 0 : index
    %c2_50 = arith.constant 2 : index
    %c1_51 = arith.constant 1 : index
    %c0_52 = arith.constant 0 : index
    %50 = vector.load %arg2[%c0_49, %c2_50, %c1_51, %c0_52] : memref<1x18x18x128xbf16, #tpu.memory_space<vmem>>, vector<1x16x16x128xbf16>
    %51 = vector.shape_cast %50 : vector<1x16x16x128xbf16> to vector<16x16x128xbf16>
    %52 = vector.shape_cast %51 : vector<16x16x128xbf16> to vector<256x128xbf16>
    %c7 = arith.constant 7 : index
    %c0_53 = arith.constant 0 : index
    %c0_54 = arith.constant 0 : index
    %53 = vector.load %arg3[%c7, %c0_53, %c0_54] : memref<9x128x128xbf16, #tpu.memory_space<vmem>>, vector<1x128x128xbf16>
    %54 = vector.shape_cast %53 : vector<1x128x128xbf16> to vector<128x128xbf16>
    %cst_55 = arith.constant dense<0.000000e+00> : vector<256x128xf32>
    %55 = tpu.matmul %52, %54, %cst_55 {dimension_numbers = #tpu.dot_dimension_numbers<[1], [0], [0], [1], [0, 0, 1, 1], [], []>} : vector<256x128xbf16>, vector<128x128xbf16>, vector<256x128xf32> -> vector<256x128xf32>
    %56 = arith.addf %49, %55 : vector<256x128xf32>
    %c0_56 = arith.constant 0 : index
    %c2_57 = arith.constant 2 : index
    %c2_58 = arith.constant 2 : index
    %c0_59 = arith.constant 0 : index
    %57 = vector.load %arg2[%c0_56, %c2_57, %c2_58, %c0_59] : memref<1x18x18x128xbf16, #tpu.memory_space<vmem>>, vector<1x16x16x128xbf16>
    %58 = vector.shape_cast %57 : vector<1x16x16x128xbf16> to vector<16x16x128xbf16>
    %59 = vector.shape_cast %58 : vector<16x16x128xbf16> to vector<256x128xbf16>
    %c8 = arith.constant 8 : index
    %c0_60 = arith.constant 0 : index
    %c0_61 = arith.constant 0 : index
    %60 = vector.load %arg3[%c8, %c0_60, %c0_61] : memref<9x128x128xbf16, #tpu.memory_space<vmem>>, vector<1x128x128xbf16>
    %61 = vector.shape_cast %60 : vector<1x128x128xbf16> to vector<128x128xbf16>
    %cst_62 = arith.constant dense<0.000000e+00> : vector<256x128xf32>
    %62 = tpu.matmul %59, %61, %cst_62 {dimension_numbers = #tpu.dot_dimension_numbers<[1], [0], [0], [1], [0, 0, 1, 1], [], []>} : vector<256x128xbf16>, vector<128x128xbf16>, vector<256x128xf32> -> vector<256x128xf32>
    %63 = arith.addf %56, %62 : vector<256x128xf32>
    %c0_63 = arith.constant 0 : index
    %c0_64 = arith.constant 0 : index
    %64 = vector.load %arg4[%c0_63, %c0_64] : memref<1x128xf32, #tpu.memory_space<vmem>>, vector<1x128xf32>
    %65 = vector.broadcast %64 : vector<1x128xf32> to vector<256x128xf32>
    %66 = arith.mulf %63, %65 : vector<256x128xf32>
    %c0_65 = arith.constant 0 : index
    %c0_66 = arith.constant 0 : index
    %67 = vector.load %arg5[%c0_65, %c0_66] : memref<1x128xf32, #tpu.memory_space<vmem>>, vector<1x128xf32>
    %68 = vector.broadcast %67 : vector<1x128xf32> to vector<256x128xf32>
    %69 = arith.addf %66, %68 : vector<256x128xf32>
    %cst_67 = arith.constant 0.000000e+00 : f32
    %70 = vector.broadcast %cst_67 : f32 to vector<256x128xf32>
    %71 = arith.maximumf %69, %70 : vector<256x128xf32>
    %72 = arith.truncf %71 : vector<256x128xf32> to vector<256x128xbf16>
    %c0_68 = arith.constant 0 : index
    %c0_69 = arith.constant 0 : index
    %73 = vector.load %arg6[%c0_68, %c0_69] : memref<256x128xbf16, #tpu.memory_space<vmem>>, vector<256x128xbf16>
    tpu.vector_store %arg6[%c0_68, %c0_69], %72 {strides = array<i32>} : memref<256x128xbf16, #tpu.memory_space<vmem>>, vector<256x128xbf16>,
    return
  }
  func.func @transform_0(%arg0: i32, %arg1: i32) -> (i32, i32, i32, i32) {
    %c0_i32 = arith.constant 0 : i32
    %c0_i32_0 = arith.constant 0 : i32
    %c0_i32_1 = arith.constant 0 : i32
    %c0_i32_2 = arith.constant 0 : i32
    return %arg0, %c0_i32, %c0_i32_0, %c0_i32_1 : i32, i32, i32, i32
  }
  func.func @transform_1(%arg0: i32, %arg1: i32) -> (i32, i32, i32) {
    %c0_i32 = arith.constant 0 : i32
    %c0_i32_0 = arith.constant 0 : i32
    %c0_i32_1 = arith.constant 0 : i32
    return %c0_i32, %c0_i32_0, %arg1 : i32, i32, i32
  }
  func.func @transform_2(%arg0: i32, %arg1: i32) -> (i32, i32) {
    %c0_i32 = arith.constant 0 : i32
    %c0_i32_0 = arith.constant 0 : i32
    return %c0_i32, %arg1 : i32, i32
  }
  func.func @transform_3(%arg0: i32, %arg1: i32) -> (i32, i32) {
    %c0_i32 = arith.constant 0 : i32
    %c0_i32_0 = arith.constant 0 : i32
    return %c0_i32, %arg1 : i32, i32
  }
  func.func @transform_4(%arg0: i32, %arg1: i32) -> (i32, i32) {
    %c0_i32 = arith.constant 0 : i32
    return %arg0, %arg1 : i32, i32
  }
}

module attributes {stable_mosaic.version = 11 : i64} {
  func.func @_mm_res_kernel(%arg0: i32, %arg1: i32, %arg2: i32, %arg3: memref<512x128xbf16, #tpu.memory_space<vmem>>, %arg4: memref<128x256xbf16, #tpu.memory_space<vmem>>, %arg5: memref<1x256xf32, #tpu.memory_space<vmem>>, %arg6: memref<1x256xf32, #tpu.memory_space<vmem>>, %arg7: memref<512x256xbf16, #tpu.memory_space<vmem>>, %arg8: memref<512x256xf32, #tpu.memory_space<vmem>>, %arg9: memref<512x256xf32, #tpu.memory_space<vmem>>) attributes {dimension_semantics = [#tpu.dimension_semantics<parallel>, #tpu.dimension_semantics<parallel>, #tpu.dimension_semantics<arbitrary>], iteration_bounds = array<i64: 1, 2, 1>, scalar_prefetch = 0 : i64, scratch_operands = 1 : i64, tpu.core_type = #tpu.core_type<tc>, window_params = [{transform_indices = @transform_0, window_bounds = array<i64: 512, 128>}, {transform_indices = @transform_1, window_bounds = array<i64: 128, 256>}, {transform_indices = @transform_2, window_bounds = array<i64: 1, 256>}, {transform_indices = @transform_3, window_bounds = array<i64: 1, 256>}, {transform_indices = @transform_4, window_bounds = array<i64: 512, 256>}, {transform_indices = @transform_5, window_bounds = array<i64: 512, 256>}]} {
    %c0_i32 = arith.constant 0 : i32
    %0 = arith.cmpi eq, %arg2, %c0_i32 : i32
    %1 = arith.extui %0 : i1 to i32
    %c0_i32_0 = arith.constant 0 : i32
    %2 = arith.cmpi ne, %1, %c0_i32_0 : i32
    scf.if %2 {
      %cst_10 = arith.constant 0.000000e+00 : f32
      %12 = vector.broadcast %cst_10 : f32 to vector<512x256xf32>
      %c0_11 = arith.constant 0 : index
      %c0_12 = arith.constant 0 : index
      %13 = vector.load %arg9[%c0_11, %c0_12] : memref<512x256xf32, #tpu.memory_space<vmem>>, vector<512x256xf32>
      tpu.vector_store %arg9[%c0_11, %c0_12], %12 {strides = array<i32>} : memref<512x256xf32, #tpu.memory_space<vmem>>, vector<512x256xf32>,
    } else {
    }
    %c0 = arith.constant 0 : index
    %c0_1 = arith.constant 0 : index
    %3 = vector.load %arg9[%c0, %c0_1] : memref<512x256xf32, #tpu.memory_space<vmem>>, vector<512x256xf32>
    %c0_2 = arith.constant 0 : index
    %c0_3 = arith.constant 0 : index
    %4 = vector.load %arg3[%c0_2, %c0_3] : memref<512x128xbf16, #tpu.memory_space<vmem>>, vector<512x128xbf16>
    %c0_4 = arith.constant 0 : index
    %c0_5 = arith.constant 0 : index
    %5 = vector.load %arg4[%c0_4, %c0_5] : memref<128x256xbf16, #tpu.memory_space<vmem>>, vector<128x256xbf16>
    %cst = arith.constant dense<0.000000e+00> : vector<512x256xf32>
    %6 = tpu.matmul %4, %5, %cst {dimension_numbers = #tpu.dot_dimension_numbers<[1], [0], [0], [1], [0, 0, 1, 1], [], []>} : vector<512x128xbf16>, vector<128x256xbf16>, vector<512x256xf32> -> vector<512x256xf32>
    %7 = arith.addf %3, %6 : vector<512x256xf32>
    %c0_6 = arith.constant 0 : index
    %c0_7 = arith.constant 0 : index
    %8 = vector.load %arg9[%c0_6, %c0_7] : memref<512x256xf32, #tpu.memory_space<vmem>>, vector<512x256xf32>
    tpu.vector_store %arg9[%c0_6, %c0_7], %7 {strides = array<i32>} : memref<512x256xf32, #tpu.memory_space<vmem>>, vector<512x256xf32>,
    %c0_i32_8 = arith.constant 0 : i32
    %9 = arith.cmpi eq, %arg2, %c0_i32_8 : i32
    %10 = arith.extui %9 : i1 to i32
    %c0_i32_9 = arith.constant 0 : i32
    %11 = arith.cmpi ne, %10, %c0_i32_9 : i32
    scf.if %11 {
      %c0_10 = arith.constant 0 : index
      %c0_11 = arith.constant 0 : index
      %12 = vector.load %arg9[%c0_10, %c0_11] : memref<512x256xf32, #tpu.memory_space<vmem>>, vector<512x256xf32>
      %c0_12 = arith.constant 0 : index
      %c0_13 = arith.constant 0 : index
      %13 = vector.load %arg5[%c0_12, %c0_13] : memref<1x256xf32, #tpu.memory_space<vmem>>, vector<1x256xf32>
      %14 = vector.broadcast %13 : vector<1x256xf32> to vector<512x256xf32>
      %15 = arith.mulf %12, %14 : vector<512x256xf32>
      %c0_14 = arith.constant 0 : index
      %c0_15 = arith.constant 0 : index
      %16 = vector.load %arg6[%c0_14, %c0_15] : memref<1x256xf32, #tpu.memory_space<vmem>>, vector<1x256xf32>
      %17 = vector.broadcast %16 : vector<1x256xf32> to vector<512x256xf32>
      %18 = arith.addf %15, %17 : vector<512x256xf32>
      %c0_16 = arith.constant 0 : index
      %c0_17 = arith.constant 0 : index
      %19 = vector.load %arg7[%c0_16, %c0_17] : memref<512x256xbf16, #tpu.memory_space<vmem>>, vector<512x256xbf16>
      %20 = arith.extf %19 : vector<512x256xbf16> to vector<512x256xf32>
      %21 = arith.addf %18, %20 : vector<512x256xf32>
      %cst_18 = arith.constant 0.000000e+00 : f32
      %22 = vector.broadcast %cst_18 : f32 to vector<512x256xf32>
      %23 = arith.maximumf %21, %22 : vector<512x256xf32>
      %c0_19 = arith.constant 0 : index
      %c0_20 = arith.constant 0 : index
      %24 = vector.load %arg8[%c0_19, %c0_20] : memref<512x256xf32, #tpu.memory_space<vmem>>, vector<512x256xf32>
      tpu.vector_store %arg8[%c0_19, %c0_20], %23 {strides = array<i32>} : memref<512x256xf32, #tpu.memory_space<vmem>>, vector<512x256xf32>,
    } else {
    }
    return
  }
  func.func @transform_0(%arg0: i32, %arg1: i32, %arg2: i32) -> (i32, i32) {
    %c0_i32 = arith.constant 0 : i32
    return %arg0, %arg2 : i32, i32
  }
  func.func @transform_1(%arg0: i32, %arg1: i32, %arg2: i32) -> (i32, i32) {
    %c0_i32 = arith.constant 0 : i32
    return %arg2, %arg1 : i32, i32
  }
  func.func @transform_2(%arg0: i32, %arg1: i32, %arg2: i32) -> (i32, i32) {
    %c0_i32 = arith.constant 0 : i32
    %c0_i32_0 = arith.constant 0 : i32
    return %c0_i32, %arg1 : i32, i32
  }
  func.func @transform_3(%arg0: i32, %arg1: i32, %arg2: i32) -> (i32, i32) {
    %c0_i32 = arith.constant 0 : i32
    %c0_i32_0 = arith.constant 0 : i32
    return %c0_i32, %arg1 : i32, i32
  }
  func.func @transform_4(%arg0: i32, %arg1: i32, %arg2: i32) -> (i32, i32) {
    %c0_i32 = arith.constant 0 : i32
    return %arg0, %arg1 : i32, i32
  }
  func.func @transform_5(%arg0: i32, %arg1: i32, %arg2: i32) -> (i32, i32) {
    %c0_i32 = arith.constant 0 : i32
    return %arg0, %arg1 : i32, i32
  }
}

</mosaic_0001>

<llo_original>
// kernel: dcn_bottleneck_forward.3
$region0: #{dcn_bottleneck_forward.3}
  #allocation0 [shape = 'u32[]', space=smem, size = 0x4, offset = 0x4, fixed_abs, tag = 'smem constant byte address 0x4 - core index']
  #allocation1 [shape = 'u32[72,128]{1,0:T(1,128)}', space=vmem, size = 0x9000, scoped, tag = 'internal scratch']
  #allocation2 [shape = 'f32[256,128]{1,0:T(8,128)}', space=vmem, size = 0x20000, scoped, tag = 'scratch operand']
  %s0 = inlined_call_operand.vmem [shape: bf16[512,512], index: 0, kind: input, shape index: {}]
  %s1 = inlined_call_operand.vmem [shape: bf16[512,128], index: 1, kind: input, shape index: {}]
  %s2 = inlined_call_operand.vmem [shape: f32[1,128], index: 2, kind: input, shape index: {}]
  %s3 = inlined_call_operand.vmem [shape: f32[1,128], index: 3, kind: input, shape index: {}]
  %s4 = inlined_call_operand.vmem [shape: bf16[512,128], index: 4, kind: output, shape index: {}]
  %s5 = sld [smem:[#allocation0]]
  $region57: #{dcn_bottleneck_forward.3} parent=0
    _
  %s7 = ssub.s32 1, %s5
  %s8 = scalar_select 0, %s7, %s5
  loop: start=0, step=1, limit=4
  $region2: #{dcn_bottleneck_forward.3} parent=0 // loop_pre_header
    _
  $region3: #{dcn_bottleneck_forward.3} parent=0 // loop_header
    %s10 = sphi 0, %s14
    %p11 = scmp.ge.s32.totalorder %s10, 4
    %s17 = sphi 0, %s36
    %s18 = sphi 0, %s32
    %s19 = sphi 0, %s28
    %s20 = sphi 0, %s17
    %s21 = sphi 0, %s18
    %s22 = sphi 0, %s19
    %s23 = sphi 0, %s20
    %s24 = sphi 0, %s21
    %s25 = sphi 0, %s22
    %s41 = sphi 0, %s43
    %s44 = sphi 0, %s41
    %s45 = sphi 0, %s44
    %s61 = sphi 0, %s45
    %s69 = sphi 0, %s71
    %s72 = sphi 0, %s69
    %s73 = sphi 0, %s72
    %s89 = sphi 0, %s73
    %s95 = sphi 0, %s97
    %s98 = sphi 0, %s95
    %s99 = sphi 0, %s98
    %s115 = sphi 0, %s99
    %s121 = sphi 0, %s123
    %s124 = sphi 0, %s121
    %s125 = sphi 0, %s124
    %s141 = sphi 0, %s125
    %s149 = sphi 0, %s151
    %s152 = sphi 0, %s149
    %s153 = sphi 0, %s152
    %s169 = sphi 0, %s153
  $region4: #{dcn_bottleneck_forward.3} parent=0 // loop_header_branch
    %13 = sbr.rel (%p11) target = $region8
  $region5: #{dcn_bottleneck_forward.3} parent=0 // loop_body
    %s15 = ssub.s32 %s10, 1
    %s16 = ssub.s32 %s10, 2
    %s26 = sadd.s32 1, %s19
    %p27 = scmp.ge.s32.totalorder %s26, 1
    %s28 = scalar_select %p27, 0, %s26
    %s29 = sadd.s32 1, %s18
    %s30 = scalar_select %p27, %s29, %s18
    %p31 = scmp.ge.s32.totalorder %s30, 1
    %s32 = scalar_select %p31, 0, %s30
    %s33 = sadd.s32 1, %s17
    %s34 = scalar_select %p31, %s33, %s17
    %p35 = scmp.ge.s32.totalorder %s34, 2
    %s36 = scalar_select %p35, 0, %s34
    %s37 = ssub.s32 %s17, %s36
    %s38 = ssub.s32 %s19, %s28
    %s39 = sor.u32 %s37, %s38
    %p40 = scmp.eq.s32.totalorder %s39, 0
    %s42 = sadd.s32 %s41, 1
    %s43 = scalar_select %p40, %s41, %s42
    %p46 = pneg %p40
    %p47 = scmp.eq.s32.totalorder %s10, 1
    %p48 = por %p46, %p47
    %p49 = scmp.ne.s32.totalorder %s41, %s44
    %p50 = scmp.eq.s32.totalorder %s10, 0
    %p51 = por %p49, %p50
    %p52 = scmp.ne.s32.totalorder %s41, %s44
    %p53 = scmp.eq.s32.totalorder %s15, 1
    %p54 = por %p52, %p53
    %p55 = scmp.ne.s32.totalorder %s44, %s45
    %p56 = scmp.eq.s32.totalorder %s15, 0
    %p57 = por %p55, %p56
    %p58 = scmp.ne.s32.totalorder %s44, %s45
    %p59 = scmp.eq.s32.totalorder %s16, 1
    %p60 = por %p58, %p59
    %p62 = scmp.ne.s32.totalorder %s45, %s61
    %p63 = scmp.eq.s32.totalorder %s16, 0
    %p64 = por %p62, %p63
    %s65 = ssub.s32 %s19, %s28
    %s66 = ssub.s32 %s18, %s32
    %s67 = sor.u32 %s65, %s66
    %p68 = scmp.eq.s32.totalorder %s67, 0
    %s70 = sadd.s32 %s69, 1
    %s71 = scalar_select %p68, %s69, %s70
    %p74 = pneg %p68
    %p75 = scmp.eq.s32.totalorder %s10, 1
    %p76 = por %p74, %p75
    %p77 = scmp.ne.s32.totalorder %s69, %s72
    %p78 = scmp.eq.s32.totalorder %s10, 0
    %p79 = por %p77, %p78
    %p80 = scmp.ne.s32.totalorder %s69, %s72
    %p81 = scmp.eq.s32.totalorder %s15, 1
    %p82 = por %p80, %p81
    %p83 = scmp.ne.s32.totalorder %s72, %s73
    %p84 = scmp.eq.s32.totalorder %s15, 0
    %p85 = por %p83, %p84
    %p86 = scmp.ne.s32.totalorder %s72, %s73
    %p87 = scmp.eq.s32.totalorder %s16, 1
    %p88 = por %p86, %p87
    %p90 = scmp.ne.s32.totalorder %s73, %s89
    %p91 = scmp.eq.s32.totalorder %s16, 0
    %p92 = por %p90, %p91
    %s93 = ssub.s32 %s18, %s32
    %p94 = scmp.eq.s32.totalorder %s93, 0
    %s96 = sadd.s32 %s95, 1
    %s97 = scalar_select %p94, %s95, %s96
    %p100 = pneg %p94
    %p101 = scmp.eq.s32.totalorder %s10, 1
    %p102 = por %p100, %p101
    %p103 = scmp.ne.s32.totalorder %s95, %s98
    %p104 = scmp.eq.s32.totalorder %s10, 0
    %p105 = por %p103, %p104
    %p106 = scmp.ne.s32.totalorder %s95, %s98
    %p107 = scmp.eq.s32.totalorder %s15, 1
    %p108 = por %p106, %p107
    %p109 = scmp.ne.s32.totalorder %s98, %s99
    %p110 = scmp.eq.s32.totalorder %s15, 0
    %p111 = por %p109, %p110
    %p112 = scmp.ne.s32.totalorder %s98, %s99
    %p113 = scmp.eq.s32.totalorder %s16, 1
    %p114 = por %p112, %p113
    %p116 = scmp.ne.s32.totalorder %s99, %s115
    %p117 = scmp.eq.s32.totalorder %s16, 0
    %p118 = por %p116, %p117
    %s119 = ssub.s32 %s18, %s32
    %p120 = scmp.eq.s32.totalorder %s119, 0
    %s122 = sadd.s32 %s121, 1
    %s123 = scalar_select %p120, %s121, %s122
    %p126 = pneg %p120
    %p127 = scmp.eq.s32.totalorder %s10, 1
    %p128 = por %p126, %p127
    %p129 = scmp.ne.s32.totalorder %s121, %s124
    %p130 = scmp.eq.s32.totalorder %s10, 0
    %p131 = por %p129, %p130
    %p132 = scmp.ne.s32.totalorder %s121, %s124
    %p133 = scmp.eq.s32.totalorder %s15, 1
    %p134 = por %p132, %p133
    %p135 = scmp.ne.s32.totalorder %s124, %s125
    %p136 = scmp.eq.s32.totalorder %s15, 0
    %p137 = por %p135, %p136
    %p138 = scmp.ne.s32.totalorder %s124, %s125
    %p139 = scmp.eq.s32.totalorder %s16, 1
    %p140 = por %p138, %p139
    %p142 = scmp.ne.s32.totalorder %s125, %s141
    %p143 = scmp.eq.s32.totalorder %s16, 0
    %p144 = por %p142, %p143
    %s145 = ssub.s32 %s17, %s36
    %s146 = ssub.s32 %s18, %s32
    %s147 = sor.u32 %s145, %s146
    %p148 = scmp.eq.s32.totalorder %s147, 0
    %s150 = sadd.s32 %s149, 1
    %s151 = scalar_select %p148, %s149, %s150
    %p154 = pneg %p148
    %p155 = scmp.eq.s32.totalorder %s10, 1
    %p156 = por %p154, %p155
    %p157 = scmp.ne.s32.totalorder %s149, %s152
    %p158 = scmp.eq.s32.totalorder %s10, 0
    %p159 = por %p157, %p158
    %p160 = scmp.ne.s32.totalorder %s149, %s152
    %p161 = scmp.eq.s32.totalorder %s15, 1
    %p162 = por %p160, %p161
    %p163 = scmp.ne.s32.totalorder %s152, %s153
    %p164 = scmp.eq.s32.totalorder %s15, 0
    %p165 = por %p163, %p164
    %p166 = scmp.ne.s32.totalorder %s152, %s153
    %p167 = scmp.eq.s32.totalorder %s16, 1
    %p168 = por %p166, %p167
    %p170 = scmp.ne.s32.totalorder %s153, %s169
    %p171 = scmp.eq.s32.totalorder %s16, 0
    %p172 = por %p170, %p171
    %p173 = scmp.le.s32.totalorder 1, %s10
    %p174 = scmp.lt.s32.totalorder %s10, 3
    %p175 = pnand %p173, %p174
    %p176 = pneg %p175
    // Predicated region
    $region9: #{dcn_bottleneck_forward.3} parent=5 // pred_check
      _
    $region10: #{dcn_bottleneck_forward.3} parent=5 // pred_check_branch
      %178 = sbr.rel (%p175) target = $region12
    $region11: #{dcn_bottleneck_forward.3} parent=5 // pred_region
      %s179 = ssub.s32 %s10, 1
      // Predicated region
      $region13: #{dcn_bottleneck_forward.3} parent=11 // pred_check
        %p180 = pneg %p85
      $region14: #{dcn_bottleneck_forward.3} parent=11 // pred_check_branch
        %182 = sbr.rel (%p180) target = $region16
      $region15: #{dcn_bottleneck_forward.3} parent=11 // pred_region
        %s183 = smul.u32 64, %s22
        %p184 = scmp.lt.s32.totalorder %s183, 63
        %s185 = scalar_select %p184, %s183, 63
        %p186 = scmp.lt.s32.totalorder %s21, 0
        %s187 = scalar_select %p186, %s21, 0
        %s188 = sadd.s32 %s187, %s185
        %s189 = smul.addr %s188, 4
        %s190 = scalar_lea.vmem %s1, %s189
        %s191 = smul.u32 64, %s22
      $region16: #{dcn_bottleneck_forward.3} parent=11 // pred_fallthru
        _
      // Predicated region
      $region17: #{dcn_bottleneck_forward.3} parent=11 // pred_check
        %p192 = pneg %p111
      $region18: #{dcn_bottleneck_forward.3} parent=11 // pred_check_branch
        %194 = sbr.rel (%p192) target = $region20
      $region19: #{dcn_bottleneck_forward.3} parent=11 // pred_region
        %p195 = scmp.lt.s32.totalorder %s21, 0
        %s196 = scalar_select %p195, %s21, 0
        %s197 = scalar_lea.vmem %s2, %s196
      $region20: #{dcn_bottleneck_forward.3} parent=11 // pred_fallthru
        _
      // Predicated region
      $region21: #{dcn_bottleneck_forward.3} parent=11 // pred_check
        %p198 = pneg %p137
      $region22: #{dcn_bottleneck_forward.3} parent=11 // pred_check_branch
        %200 = sbr.rel (%p198) target = $region24
      $region23: #{dcn_bottleneck_forward.3} parent=11 // pred_region
        %p201 = scmp.lt.s32.totalorder %s21, 0
        %s202 = scalar_select %p201, %s21, 0
        %s203 = scalar_lea.vmem %s3, %s202
      $region24: #{dcn_bottleneck_forward.3} parent=11 // pred_fallthru
        _
    $region12: #{dcn_bottleneck_forward.3} parent=5 // pred_fallthru
      _
    %p204 = scmp.lt.s32.totalorder %s10, 2
    // Predicated region
    $region25: #{dcn_bottleneck_forward.3} parent=5 // pred_check
      %p205 = pneg %p204
    $region26: #{dcn_bottleneck_forward.3} parent=5 // pred_check_branch
      %207 = sbr.rel (%p205) target = $region28
    $region27: #{dcn_bottleneck_forward.3} parent=5 // pred_region
      // Predicated region
      $region29: #{dcn_bottleneck_forward.3} parent=27 // pred_check
        %p208 = pneg %p51
      $region30: #{dcn_bottleneck_forward.3} parent=27 // pred_check_branch
        %210 = sbr.rel (%p208) target = $region32
      $region31: #{dcn_bottleneck_forward.3} parent=27 // pred_region
        %s211 = smul.u32 32, %s17
        %s212 = smul.u32 4, %s19
        %p213 = scmp.lt.s32.totalorder %s211, 63
        %s214 = scalar_select %p213, %s211, 63
        %p215 = scmp.lt.s32.totalorder %s212, 3
        %s216 = scalar_select %p215, %s212, 3
        %s217 = smul.addr %s214, 4
        %s218 = sadd.s32 %s216, %s217
        %s219 = smul.addr %s218, 4
        %s220 = scalar_lea.vmem %s0, %s219
        %s221 = smul.u32 32, %s17
        %s222 = smul.u32 4, %s19
      $region32: #{dcn_bottleneck_forward.3} parent=27 // pred_fallthru
        _
    $region28: #{dcn_bottleneck_forward.3} parent=5 // pred_fallthru
      _
    %p223 = scmp.le.s32.totalorder 1, %s10
    %p224 = scmp.lt.s32.totalorder %s10, 3
    %p225 = pnand %p223, %p224
    %p226 = pneg %p225
    // Predicated region
    $region33: #{dcn_bottleneck_forward.3} parent=5 // pred_check
      _
    $region34: #{dcn_bottleneck_forward.3} parent=5 // pred_check_branch
      %228 = sbr.rel (%p225) target = $region36
    $region35: #{dcn_bottleneck_forward.3} parent=5 // pred_region
      %s229 = ssub.s32 %s10, 1
      %s230 = smul.u32 32, %s20
      %s231 = smul.u32 4, %s22
      %p232 = scmp.lt.s32.totalorder %s230, 63
      %s233 = scalar_select %p232, %s230, 63
      %p234 = scmp.lt.s32.totalorder %s231, 3
      %s235 = scalar_select %p234, %s231, 3
      %s236 = smul.addr %s233, 4
      %s237 = sadd.s32 %s235, %s236
      %s238 = smul.addr %s237, 4
      %s239 = scalar_lea.vmem %s0, %s238
      %p240 = pneg %p57
      %p241 = pneg %p54
      %s242 = smul.u32 64, %s22
      %p243 = scmp.lt.s32.totalorder %s242, 63
      %s244 = scalar_select %p243, %s242, 63
      %p245 = scmp.lt.s32.totalorder %s21, 0
      %s246 = scalar_select %p245, %s21, 0
      %s247 = sadd.s32 %s246, %s244
      %s248 = smul.addr %s247, 4
      %s249 = scalar_lea.vmem %s1, %s248
      %p250 = pneg %p85
      %p251 = pneg %p82
      %p252 = scmp.lt.s32.totalorder %s21, 0
      %s253 = scalar_select %p252, %s21, 0
      %s254 = scalar_lea.vmem %s2, %s253
      %p255 = pneg %p111
      %p256 = pneg %p108
      %p257 = scmp.lt.s32.totalorder %s21, 0
      %s258 = scalar_select %p257, %s21, 0
      %s259 = scalar_lea.vmem %s3, %s258
      %p260 = pneg %p137
      %p261 = pneg %p134
      %p262 = pneg %p165
      %p263 = pneg %p162
      %s264 = smul.u32 32, %s20
      %p265 = scmp.lt.s32.totalorder %s264, 63
      %s266 = scalar_select %p265, %s264, 63
      %p267 = scmp.lt.s32.totalorder %s21, 0
      %s268 = scalar_select %p267, %s21, 0
      %s269 = sadd.s32 %s268, %s266
      %s270 = smul.addr %s269, 4
      %s271 = scalar_lea.vmem %s4, %s270
      %s272 = smul.u32 32, %s20
      %s273 = smul.u32 4, %s22
      %p274 = scmp.lt.s32.totalorder %s272, 63
      %s275 = scalar_select %p274, %s272, 63
      %p276 = scmp.lt.s32.totalorder %s273, 3
      %s277 = scalar_select %p276, %s273, 3
      %s278 = smul.addr %s275, 4
      %s279 = sadd.s32 %s277, %s278
      %s280 = smul.addr %s279, 4
      %s281 = scalar_lea.vmem %s0, %s280
      %s282 = smul.u32 32, %s20
      %s283 = smul.u32 4, %s22
      %s284 = smul.u32 64, %s22
      %p285 = scmp.lt.s32.totalorder %s284, 63
      %s286 = scalar_select %p285, %s284, 63
      %p287 = scmp.lt.s32.totalorder %s21, 0
      %s288 = scalar_select %p287, %s21, 0
      %s289 = sadd.s32 %s288, %s286
      %s290 = smul.addr %s289, 4
      %s291 = scalar_lea.vmem %s1, %s290
      %s292 = smul.u32 64, %s22
      %p293 = scmp.lt.s32.totalorder %s21, 0
      %s294 = scalar_select %p293, %s21, 0
      %s295 = scalar_lea.vmem %s2, %s294
      %p296 = scmp.lt.s32.totalorder %s21, 0
      %s297 = scalar_select %p296, %s21, 0
      %s298 = scalar_lea.vmem %s3, %s297
      %s299 = smul.u32 32, %s20
      %p300 = scmp.lt.s32.totalorder %s299, 63
      %s301 = scalar_select %p300, %s299, 63
      %p302 = scmp.lt.s32.totalorder %s21, 0
      %s303 = scalar_select %p302, %s21, 0
      %s304 = sadd.s32 %s303, %s301
      %s305 = smul.addr %s304, 4
      %s306 = scalar_lea.vmem %s4, %s305
      %s307 = smul.u32 32, %s20
      %p308 = scmp.eq.s32.totalorder %s22, 0
      // Predicated region
      $region37: #{dcn_bottleneck_forward.3} parent=35 // pred_check
        %p309 = pneg %p308
      $region38: #{dcn_bottleneck_forward.3} parent=35 // pred_check_branch
        %311 = sbr.rel (%p309) target = $region40
      $region39: #{dcn_bottleneck_forward.3} parent=35 // pred_region
        %312 = vst [vmem:[#allocation2] sm:$0xff] 0.0
        %313 = vst [vmem:[#allocation2 + $0x8] sm:$0xff] 0.0
        %314 = vst [vmem:[#allocation2 + $0x10] sm:$0xff] 0.0
        %315 = vst [vmem:[#allocation2 + $0x18] sm:$0xff] 0.0
        %316 = vst [vmem:[#allocation2 + $0x20] sm:$0xff] 0.0
        %317 = vst [vmem:[#allocation2 + $0x28] sm:$0xff] 0.0
        %318 = vst [vmem:[#allocation2 + $0x30] sm:$0xff] 0.0
        %319 = vst [vmem:[#allocation2 + $0x38] sm:$0xff] 0.0
        %320 = vst [vmem:[#allocation2 + $0x40] sm:$0xff] 0.0
        %321 = vst [vmem:[#allocation2 + $0x48] sm:$0xff] 0.0
        %322 = vst [vmem:[#allocation2 + $0x50] sm:$0xff] 0.0
        %323 = vst [vmem:[#allocation2 + $0x58] sm:$0xff] 0.0
        %324 = vst [vmem:[#allocation2 + $0x60] sm:$0xff] 0.0
        %325 = vst [vmem:[#allocation2 + $0x68] sm:$0xff] 0.0
        %326 = vst [vmem:[#allocation2 + $0x70] sm:$0xff] 0.0
        %327 = vst [vmem:[#allocation2 + $0x78] sm:$0xff] 0.0
        %328 = vst [vmem:[#allocation2 + $0x80] sm:$0xff] 0.0
        %329 = vst [vmem:[#allocation2 + $0x88] sm:$0xff] 0.0
        %330 = vst [vmem:[#allocation2 + $0x90] sm:$0xff] 0.0
        %331 = vst [vmem:[#allocation2 + $0x98] sm:$0xff] 0.0
        %332 = vst [vmem:[#allocation2 + $0xa0] sm:$0xff] 0.0
        %333 = vst [vmem:[#allocation2 + $0xa8] sm:$0xff] 0.0
        %334 = vst [vmem:[#allocation2 + $0xb0] sm:$0xff] 0.0
        %335 = vst [vmem:[#allocation2 + $0xb8] sm:$0xff] 0.0
        %336 = vst [vmem:[#allocation2 + $0xc0] sm:$0xff] 0.0
        %337 = vst [vmem:[#allocation2 + $0xc8] sm:$0xff] 0.0
        %338 = vst [vmem:[#allocation2 + $0xd0] sm:$0xff] 0.0
        %339 = vst [vmem:[#allocation2 + $0xd8] sm:$0xff] 0.0
        %340 = vst [vmem:[#allocation2 + $0xe0] sm:$0xff] 0.0
        %341 = vst [vmem:[#allocation2 + $0xe8] sm:$0xff] 0.0
        %342 = vst [vmem:[#allocation2 + $0xf0] sm:$0xff] 0.0
        %343 = vst [vmem:[#allocation2 + $0xf8] sm:$0xff] 0.0
      $region40: #{dcn_bottleneck_forward.3} parent=35 // pred_fallthru
        _
      %v344 = vld [vmem:[#allocation2] sm:$0xff]
      %v345 = vld [vmem:[#allocation2 + $0x8] sm:$0xff]
      %v346 = vld [vmem:[#allocation2 + $0x10] sm:$0xff]
      %v347 = vld [vmem:[#allocation2 + $0x18] sm:$0xff]
      %v348 = vld [vmem:[#allocation2 + $0x20] sm:$0xff]
      %v349 = vld [vmem:[#allocation2 + $0x28] sm:$0xff]
      %v350 = vld [vmem:[#allocation2 + $0x30] sm:$0xff]
      %v351 = vld [vmem:[#allocation2 + $0x38] sm:$0xff]
      %v352 = vld [vmem:[#allocation2 + $0x40] sm:$0xff]
      %v353 = vld [vmem:[#allocation2 + $0x48] sm:$0xff]
      %v354 = vld [vmem:[#allocation2 + $0x50] sm:$0xff]
      %v355 = vld [vmem:[#allocation2 + $0x58] sm:$0xff]
      %v356 = vld [vmem:[#allocation2 + $0x60] sm:$0xff]
      %v357 = vld [vmem:[#allocation2 + $0x68] sm:$0xff]
      %v358 = vld [vmem:[#allocation2 + $0x70] sm:$0xff]
      %v359 = vld [vmem:[#allocation2 + $0x78] sm:$0xff]
      %v360 = vld [vmem:[#allocation2 + $0x80] sm:$0xff]
      %v361 = vld [vmem:[#allocation2 + $0x88] sm:$0xff]
      %v362 = vld [vmem:[#allocation2 + $0x90] sm:$0xff]
      %v363 = vld [vmem:[#allocation2 + $0x98] sm:$0xff]
      %v364 = vld [vmem:[#allocation2 + $0xa0] sm:$0xff]
      %v365 = vld [vmem:[#allocation2 + $0xa8] sm:$0xff]
      %v366 = vld [vmem:[#allocation2 + $0xb0] sm:$0xff]
      %v367 = vld [vmem:[#allocation2 + $0xb8] sm:$0xff]
      %v368 = vld [vmem:[#allocation2 + $0xc0] sm:$0xff]
      %v369 = vld [vmem:[#allocation2 + $0xc8] sm:$0xff]
      %v370 = vld [vmem:[#allocation2 + $0xd0] sm:$0xff]
      %v371 = vld [vmem:[#allocation2 + $0xd8] sm:$0xff]
      %v372 = vld [vmem:[#allocation2 + $0xe0] sm:$0xff]
      %v373 = vld [vmem:[#allocation2 + $0xe8] sm:$0xff]
      %v374 = vld [vmem:[#allocation2 + $0xf0] sm:$0xff]
      %v375 = vld [vmem:[#allocation2 + $0xf8] sm:$0xff]
      %v376 = vld [vmem:[%s281] sm:$0xff]
      %v377 = vld [vmem:[%s281 + $0x8] sm:$0xff]
      %v378 = vld [vmem:[%s281 + $0x10] sm:$0xff]
      %v379 = vld [vmem:[%s281 + $0x18] sm:$0xff]
      %v380 = vld [vmem:[%s281 + $0x20] sm:$0xff]
      %v381 = vld [vmem:[%s281 + $0x28] sm:$0xff]
      %v382 = vld [vmem:[%s281 + $0x30] sm:$0xff]
      %v383 = vld [vmem:[%s281 + $0x38] sm:$0xff]
      %v384 = vld [vmem:[%s281 + $0x40] sm:$0xff]
      %v385 = vld [vmem:[%s281 + $0x48] sm:$0xff]
      %v386 = vld [vmem:[%s281 + $0x50] sm:$0xff]
      %v387 = vld [vmem:[%s281 + $0x58] sm:$0xff]
      %v388 = vld [vmem:[%s281 + $0x60] sm:$0xff]
      %v389 = vld [vmem:[%s281 + $0x68] sm:$0xff]
      %v390 = vld [vmem:[%s281 + $0x70] sm:$0xff]
      %v391 = vld [vmem:[%s281 + $0x78] sm:$0xff]
      %v392 = vld [vmem:[%s281 + $0x80] sm:$0xff]
      %v393 = vld [vmem:[%s281 + $0x88] sm:$0xff]
      %v394 = vld [vmem:[%s281 + $0x90] sm:$0xff]
      %v395 = vld [vmem:[%s281 + $0x98] sm:$0xff]
      %v396 = vld [vmem:[%s281 + $0xa0] sm:$0xff]
      %v397 = vld [vmem:[%s281 + $0xa8] sm:$0xff]
      %v398 = vld [vmem:[%s281 + $0xb0] sm:$0xff]
      %v399 = vld [vmem:[%s281 + $0xb8] sm:$0xff]
      %v400 = vld [vmem:[%s281 + $0xc0] sm:$0xff]
      %v401 = vld [vmem:[%s281 + $0xc8] sm:$0xff]
      %v402 = vld [vmem:[%s281 + $0xd0] sm:$0xff]
      %v403 = vld [vmem:[%s281 + $0xd8] sm:$0xff]
      %v404 = vld [vmem:[%s281 + $0xe0] sm:$0xff]
      %v405 = vld [vmem:[%s281 + $0xe8] sm:$0xff]
      %v406 = vld [vmem:[%s281 + $0xf0] sm:$0xff]
      %v407 = vld [vmem:[%s281 + $0xf8] sm:$0xff]
      %v408 = vld [vmem:[%s281 + $0x100] sm:$0xff]
      %v409 = vld [vmem:[%s281 + $0x108] sm:$0xff]
      %v410 = vld [vmem:[%s281 + $0x110] sm:$0xff]
      %v411 = vld [vmem:[%s281 + $0x118] sm:$0xff]
      %v412 = vld [vmem:[%s281 + $0x120] sm:$0xff]
      %v413 = vld [vmem:[%s281 + $0x128] sm:$0xff]
      %v414 = vld [vmem:[%s281 + $0x130] sm:$0xff]
      %v415 = vld [vmem:[%s281 + $0x138] sm:$0xff]
      %v416 = vld [vmem:[%s281 + $0x140] sm:$0xff]
      %v417 = vld [vmem:[%s281 + $0x148] sm:$0xff]
      %v418 = vld [vmem:[%s281 + $0x150] sm:$0xff]
      %v419 = vld [vmem:[%s281 + $0x158] sm:$0xff]
      %v420 = vld [vmem:[%s281 + $0x160] sm:$0xff]
      %v421 = vld [vmem:[%s281 + $0x168] sm:$0xff]
      %v422 = vld [vmem:[%s281 + $0x170] sm:$0xff]
      %v423 = vld [vmem:[%s281 + $0x178] sm:$0xff]
      %v424 = vld [vmem:[%s281 + $0x180] sm:$0xff]
      %v425 = vld [vmem:[%s281 + $0x188] sm:$0xff]
      %v426 = vld [vmem:[%s281 + $0x190] sm:$0xff]
      %v427 = vld [vmem:[%s281 + $0x198] sm:$0xff]
      %v428 = vld [vmem:[%s281 + $0x1a0] sm:$0xff]
      %v429 = vld [vmem:[%s281 + $0x1a8] sm:$0xff]
      %v430 = vld [vmem:[%s281 + $0x1b0] sm:$0xff]
      %v431 = vld [vmem:[%s281 + $0x1b8] sm:$0xff]
      %v432 = vld [vmem:[%s281 + $0x1c0] sm:$0xff]
      %v433 = vld [vmem:[%s281 + $0x1c8] sm:$0xff]
      %v434 = vld [vmem:[%s281 + $0x1d0] sm:$0xff]
      %v435 = vld [vmem:[%s281 + $0x1d8] sm:$0xff]
      %v436 = vld [vmem:[%s281 + $0x1e0] sm:$0xff]
      %v437 = vld [vmem:[%s281 + $0x1e8] sm:$0xff]
      %v438 = vld [vmem:[%s281 + $0x1f0] sm:$0xff]
      %v439 = vld [vmem:[%s281 + $0x1f8] sm:$0xff]
      %v440 = vld [vmem:[%s291] sm:$0xf]
      %v441 = vld [vmem:[%s291 + $0x4] sm:$0xf]
      %v442 = vld [vmem:[%s291 + $0x8] sm:$0xf]
      %v443 = vld [vmem:[%s291 + $0xc] sm:$0xf]
      %v444 = vld [vmem:[%s291 + $0x10] sm:$0xf]
      %v445 = vld [vmem:[%s291 + $0x14] sm:$0xf]
      %v446 = vld [vmem:[%s291 + $0x18] sm:$0xf]
      %v447 = vld [vmem:[%s291 + $0x1c] sm:$0xf]
      %v448 = vld [vmem:[%s291 + $0x20] sm:$0xf]
      %v449 = vld [vmem:[%s291 + $0x24] sm:$0xf]
      %v450 = vld [vmem:[%s291 + $0x28] sm:$0xf]
      %v451 = vld [vmem:[%s291 + $0x2c] sm:$0xf]
      %v452 = vld [vmem:[%s291 + $0x30] sm:$0xf]
      %v453 = vld [vmem:[%s291 + $0x34] sm:$0xf]
      %v454 = vld [vmem:[%s291 + $0x38] sm:$0xf]
      %v455 = vld [vmem:[%s291 + $0x3c] sm:$0xf]
      %v456 = vld [vmem:[%s291 + $0x40] sm:$0xf]
      %v457 = vld [vmem:[%s291 + $0x44] sm:$0xf]
      %v458 = vld [vmem:[%s291 + $0x48] sm:$0xf]
      %v459 = vld [vmem:[%s291 + $0x4c] sm:$0xf]
      %v460 = vld [vmem:[%s291 + $0x50] sm:$0xf]
      %v461 = vld [vmem:[%s291 + $0x54] sm:$0xf]
      %v462 = vld [vmem:[%s291 + $0x58] sm:$0xf]
      %v463 = vld [vmem:[%s291 + $0x5c] sm:$0xf]
      %v464 = vld [vmem:[%s291 + $0x60] sm:$0xf]
      %v465 = vld [vmem:[%s291 + $0x64] sm:$0xf]
      %v466 = vld [vmem:[%s291 + $0x68] sm:$0xf]
      %v467 = vld [vmem:[%s291 + $0x6c] sm:$0xf]
      %v468 = vld [vmem:[%s291 + $0x70] sm:$0xf]
      %v469 = vld [vmem:[%s291 + $0x74] sm:$0xf]
      %v470 = vld [vmem:[%s291 + $0x78] sm:$0xf]
      %v471 = vld [vmem:[%s291 + $0x7c] sm:$0xf]
      %v472 = vld [vmem:[%s291 + $0x80] sm:$0xf]
      %v473 = vld [vmem:[%s291 + $0x84] sm:$0xf]
      %v474 = vld [vmem:[%s291 + $0x88] sm:$0xf]
      %v475 = vld [vmem:[%s291 + $0x8c] sm:$0xf]
      %v476 = vld [vmem:[%s291 + $0x90] sm:$0xf]
      %v477 = vld [vmem:[%s291 + $0x94] sm:$0xf]
      %v478 = vld [vmem:[%s291 + $0x98] sm:$0xf]
      %v479 = vld [vmem:[%s291 + $0x9c] sm:$0xf]
      %v480 = vld [vmem:[%s291 + $0xa0] sm:$0xf]
      %v481 = vld [vmem:[%s291 + $0xa4] sm:$0xf]
      %v482 = vld [vmem:[%s291 + $0xa8] sm:$0xf]
      %v483 = vld [vmem:[%s291 + $0xac] sm:$0xf]
      %v484 = vld [vmem:[%s291 + $0xb0] sm:$0xf]
      %v485 = vld [vmem:[%s291 + $0xb4] sm:$0xf]
      %v486 = vld [vmem:[%s291 + $0xb8] sm:$0xf]
      %v487 = vld [vmem:[%s291 + $0xbc] sm:$0xf]
      %v488 = vld [vmem:[%s291 + $0xc0] sm:$0xf]
      %v489 = vld [vmem:[%s291 + $0xc4] sm:$0xf]
      %v490 = vld [vmem:[%s291 + $0xc8] sm:$0xf]
      %v491 = vld [vmem:[%s291 + $0xcc] sm:$0xf]
      %v492 = vld [vmem:[%s291 + $0xd0] sm:$0xf]
      %v493 = vld [vmem:[%s291 + $0xd4] sm:$0xf]
      %v494 = vld [vmem:[%s291 + $0xd8] sm:$0xf]
      %v495 = vld [vmem:[%s291 + $0xdc] sm:$0xf]
      %v496 = vld [vmem:[%s291 + $0xe0] sm:$0xf]
      %v497 = vld [vmem:[%s291 + $0xe4] sm:$0xf]
      %v498 = vld [vmem:[%s291 + $0xe8] sm:$0xf]
      %v499 = vld [vmem:[%s291 + $0xec] sm:$0xf]
      %v500 = vld [vmem:[%s291 + $0xf0] sm:$0xf]
      %v501 = vld [vmem:[%s291 + $0xf4] sm:$0xf]
      %v502 = vld [vmem:[%s291 + $0xf8] sm:$0xf]
      %v503 = vld [vmem:[%s291 + $0xfc] sm:$0xf]
      %v568 = vunpack.c.l.b16 %v376
      %v569 = vunpack.c.h.b16 %v376
      %v570 = vunpack.c.l.b16 %v377
      %v571 = vunpack.c.h.b16 %v377
      %v572 = vunpack.c.l.b16 %v378
      %v573 = vunpack.c.h.b16 %v378
      %v574 = vunpack.c.l.b16 %v379
      %v575 = vunpack.c.h.b16 %v379
      %v576 = vunpack.c.l.b16 %v380
      %v577 = vunpack.c.h.b16 %v380
      %v578 = vunpack.c.l.b16 %v381
      %v579 = vunpack.c.h.b16 %v381
      %v580 = vunpack.c.l.b16 %v382
      %v581 = vunpack.c.h.b16 %v382
      %v582 = vunpack.c.l.b16 %v383
      %v583 = vunpack.c.h.b16 %v383
      %v584 = vunpack.c.l.b16 %v384
      %v585 = vunpack.c.h.b16 %v384
      %v586 = vunpack.c.l.b16 %v385
      %v587 = vunpack.c.h.b16 %v385
      %v588 = vunpack.c.l.b16 %v386
      %v589 = vunpack.c.h.b16 %v386
      %v590 = vunpack.c.l.b16 %v387
      %v591 = vunpack.c.h.b16 %v387
      %v592 = vunpack.c.l.b16 %v388
      %v593 = vunpack.c.h.b16 %v388
      %v594 = vunpack.c.l.b16 %v389
      %v595 = vunpack.c.h.b16 %v389
      %v596 = vunpack.c.l.b16 %v390
      %v597 = vunpack.c.h.b16 %v390
      %v598 = vunpack.c.l.b16 %v391
      %v599 = vunpack.c.h.b16 %v391
      %v600 = vunpack.c.l.b16 %v392
      %v601 = vunpack.c.h.b16 %v392
      %v602 = vunpack.c.l.b16 %v393
      %v603 = vunpack.c.h.b16 %v393
      %v604 = vunpack.c.l.b16 %v394
      %v605 = vunpack.c.h.b16 %v394
      %v606 = vunpack.c.l.b16 %v395
      %v607 = vunpack.c.h.b16 %v395
      %v608 = vunpack.c.l.b16 %v396
      %v609 = vunpack.c.h.b16 %v396
      %v610 = vunpack.c.l.b16 %v397
      %v611 = vunpack.c.h.b16 %v397
      %v612 = vunpack.c.l.b16 %v398
      %v613 = vunpack.c.h.b16 %v398
      %v614 = vunpack.c.l.b16 %v399
      %v615 = vunpack.c.h.b16 %v399
      %v616 = vunpack.c.l.b16 %v400
      %v617 = vunpack.c.h.b16 %v400
      %v618 = vunpack.c.l.b16 %v401
      %v619 = vunpack.c.h.b16 %v401
      %v620 = vunpack.c.l.b16 %v402
      %v621 = vunpack.c.h.b16 %v402
      %v622 = vunpack.c.l.b16 %v403
      %v623 = vunpack.c.h.b16 %v403
      %v624 = vunpack.c.l.b16 %v404
      %v625 = vunpack.c.h.b16 %v404
      %v626 = vunpack.c.l.b16 %v405
      %v627 = vunpack.c.h.b16 %v405
      %v628 = vunpack.c.l.b16 %v406
      %v629 = vunpack.c.h.b16 %v406
      %v630 = vunpack.c.l.b16 %v407
      %v631 = vunpack.c.h.b16 %v407
      %v632 = vunpack.c.l.b16 %v408
      %v633 = vunpack.c.h.b16 %v408
      %v634 = vunpack.c.l.b16 %v409
      %v635 = vunpack.c.h.b16 %v409
      %v636 = vunpack.c.l.b16 %v410
      %v637 = vunpack.c.h.b16 %v410
      %v638 = vunpack.c.l.b16 %v411
      %v639 = vunpack.c.h.b16 %v411
      %v640 = vunpack.c.l.b16 %v412
      %v641 = vunpack.c.h.b16 %v412
      %v642 = vunpack.c.l.b16 %v413
      %v643 = vunpack.c.h.b16 %v413
      %v644 = vunpack.c.l.b16 %v414
      %v645 = vunpack.c.h.b16 %v414
      %v646 = vunpack.c.l.b16 %v415
      %v647 = vunpack.c.h.b16 %v415
      %v648 = vunpack.c.l.b16 %v416
      %v649 = vunpack.c.h.b16 %v416
      %v650 = vunpack.c.l.b16 %v417
      %v651 = vunpack.c.h.b16 %v417
      %v652 = vunpack.c.l.b16 %v418
      %v653 = vunpack.c.h.b16 %v418
      %v654 = vunpack.c.l.b16 %v419
      %v655 = vunpack.c.h.b16 %v419
      %v656 = vunpack.c.l.b16 %v420
      %v657 = vunpack.c.h.b16 %v420
      %v658 = vunpack.c.l.b16 %v421
      %v659 = vunpack.c.h.b16 %v421
      %v660 = vunpack.c.l.b16 %v422
      %v661 = vunpack.c.h.b16 %v422
      %v662 = vunpack.c.l.b16 %v423
      %v663 = vunpack.c.h.b16 %v423
      %v664 = vunpack.c.l.b16 %v424
      %v665 = vunpack.c.h.b16 %v424
      %v666 = vunpack.c.l.b16 %v425
      %v667 = vunpack.c.h.b16 %v425
      %v668 = vunpack.c.l.b16 %v426
      %v669 = vunpack.c.h.b16 %v426
      %v670 = vunpack.c.l.b16 %v427
      %v671 = vunpack.c.h.b16 %v427
      %v672 = vunpack.c.l.b16 %v428
      %v673 = vunpack.c.h.b16 %v428
      %v674 = vunpack.c.l.b16 %v429
      %v675 = vunpack.c.h.b16 %v429
      %v676 = vunpack.c.l.b16 %v430
      %v677 = vunpack.c.h.b16 %v430
      %v678 = vunpack.c.l.b16 %v431
      %v679 = vunpack.c.h.b16 %v431
      %v680 = vunpack.c.l.b16 %v432
      %v681 = vunpack.c.h.b16 %v432
      %v682 = vunpack.c.l.b16 %v433
      %v683 = vunpack.c.h.b16 %v433
      %v684 = vunpack.c.l.b16 %v434
      %v685 = vunpack.c.h.b16 %v434
      %v686 = vunpack.c.l.b16 %v435
      %v687 = vunpack.c.h.b16 %v435
      %v688 = vunpack.c.l.b16 %v436
      %v689 = vunpack.c.h.b16 %v436
      %v690 = vunpack.c.l.b16 %v437
      %v691 = vunpack.c.h.b16 %v437
      %v692 = vunpack.c.l.b16 %v438
      %v693 = vunpack.c.h.b16 %v438
      %v694 = vunpack.c.l.b16 %v439
      %v695 = vunpack.c.h.b16 %v439
      %v696 = vpack.c.b16 %v572, %v568
      %v697 = vpack.c.b16 %v573, %v569
      %v698 = vpack.c.b16 %v574, %v570
      %v699 = vpack.c.b16 %v575, %v571
      %v700 = vpack.c.b16 %v580, %v576
      %v701 = vpack.c.b16 %v581, %v577
      %v702 = vpack.c.b16 %v582, %v578
      %v703 = vpack.c.b16 %v583, %v579
      %v704 = vpack.c.b16 %v588, %v584
      %v705 = vpack.c.b16 %v589, %v585
      %v706 = vpack.c.b16 %v590, %v586
      %v707 = vpack.c.b16 %v591, %v587
      %v708 = vpack.c.b16 %v596, %v592
      %v709 = vpack.c.b16 %v597, %v593
      %v710 = vpack.c.b16 %v598, %v594
      %v711 = vpack.c.b16 %v599, %v595
      %v712 = vpack.c.b16 %v604, %v600
      %v713 = vpack.c.b16 %v605, %v601
      %v714 = vpack.c.b16 %v606, %v602
      %v715 = vpack.c.b16 %v607, %v603
      %v716 = vpack.c.b16 %v612, %v608
      %v717 = vpack.c.b16 %v613, %v609
      %v718 = vpack.c.b16 %v614, %v610
      %v719 = vpack.c.b16 %v615, %v611
      %v720 = vpack.c.b16 %v620, %v616
      %v721 = vpack.c.b16 %v621, %v617
      %v722 = vpack.c.b16 %v622, %v618
      %v723 = vpack.c.b16 %v623, %v619
      %v724 = vpack.c.b16 %v628, %v624
      %v725 = vpack.c.b16 %v629, %v625
      %v726 = vpack.c.b16 %v630, %v626
      %v727 = vpack.c.b16 %v631, %v627
      %v728 = vpack.c.b16 %v636, %v632
      %v729 = vpack.c.b16 %v637, %v633
      %v730 = vpack.c.b16 %v638, %v634
      %v731 = vpack.c.b16 %v639, %v635
      %v732 = vpack.c.b16 %v644, %v640
      %v733 = vpack.c.b16 %v645, %v641
      %v734 = vpack.c.b16 %v646, %v642
      %v735 = vpack.c.b16 %v647, %v643
      %v736 = vpack.c.b16 %v652, %v648
      %v737 = vpack.c.b16 %v653, %v649
      %v738 = vpack.c.b16 %v654, %v650
      %v739 = vpack.c.b16 %v655, %v651
      %v740 = vpack.c.b16 %v660, %v656
      %v741 = vpack.c.b16 %v661, %v657
      %v742 = vpack.c.b16 %v662, %v658
      %v743 = vpack.c.b16 %v663, %v659
      %v744 = vpack.c.b16 %v668, %v664
      %v745 = vpack.c.b16 %v669, %v665
      %v746 = vpack.c.b16 %v670, %v666
      %v747 = vpack.c.b16 %v671, %v667
      %v748 = vpack.c.b16 %v676, %v672
      %v749 = vpack.c.b16 %v677, %v673
      %v750 = vpack.c.b16 %v678, %v674
      %v751 = vpack.c.b16 %v679, %v675
      %v752 = vpack.c.b16 %v684, %v680
      %v753 = vpack.c.b16 %v685, %v681
      %v754 = vpack.c.b16 %v686, %v682
      %v755 = vpack.c.b16 %v687, %v683
      %v756 = vpack.c.b16 %v692, %v688
      %v757 = vpack.c.b16 %v693, %v689
      %v758 = vpack.c.b16 %v694, %v690
      %v759 = vpack.c.b16 %v695, %v691
      %v888 = vunpack.c.l.b16 %v440
      %v889 = vunpack.c.l.b16 %v441
      %v890 = vunpack.c.l.b16 %v442
      %v891 = vunpack.c.l.b16 %v443
      %v892 = vunpack.c.l.b16 %v444
      %v893 = vunpack.c.l.b16 %v445
      %v894 = vunpack.c.l.b16 %v446
      %v895 = vunpack.c.l.b16 %v447
      %v896 = vunpack.c.l.b16 %v448
      %v897 = vunpack.c.l.b16 %v449
      %v898 = vunpack.c.l.b16 %v450
      %v899 = vunpack.c.l.b16 %v451
      %v900 = vunpack.c.l.b16 %v452
      %v901 = vunpack.c.l.b16 %v453
      %v902 = vunpack.c.l.b16 %v454
      %v903 = vunpack.c.l.b16 %v455
      %v904 = vunpack.c.l.b16 %v456
      %v905 = vunpack.c.l.b16 %v457
      %v906 = vunpack.c.l.b16 %v458
      %v907 = vunpack.c.l.b16 %v459
      %v908 = vunpack.c.l.b16 %v460
      %v909 = vunpack.c.l.b16 %v461
      %v910 = vunpack.c.l.b16 %v462
      %v911 = vunpack.c.l.b16 %v463
      %v912 = vunpack.c.l.b16 %v464
      %v913 = vunpack.c.l.b16 %v465
      %v914 = vunpack.c.l.b16 %v466
      %v915 = vunpack.c.l.b16 %v467
      %v916 = vunpack.c.l.b16 %v468
      %v917 = vunpack.c.l.b16 %v469
      %v918 = vunpack.c.l.b16 %v470
      %v919 = vunpack.c.l.b16 %v471
      %v920 = vunpack.c.l.b16 %v472
      %v921 = vunpack.c.l.b16 %v473
      %v922 = vunpack.c.l.b16 %v474
      %v923 = vunpack.c.l.b16 %v475
      %v924 = vunpack.c.l.b16 %v476
      %v925 = vunpack.c.l.b16 %v477
      %v926 = vunpack.c.l.b16 %v478
      %v927 = vunpack.c.l.b16 %v479
      %v928 = vunpack.c.l.b16 %v480
      %v929 = vunpack.c.l.b16 %v481
      %v930 = vunpack.c.l.b16 %v482
      %v931 = vunpack.c.l.b16 %v483
      %v932 = vunpack.c.l.b16 %v484
      %v933 = vunpack.c.l.b16 %v485
      %v934 = vunpack.c.l.b16 %v486
      %v935 = vunpack.c.l.b16 %v487
      %v936 = vunpack.c.l.b16 %v488
      %v937 = vunpack.c.l.b16 %v489
      %v938 = vunpack.c.l.b16 %v490
      %v939 = vunpack.c.l.b16 %v491
      %v940 = vunpack.c.l.b16 %v492
      %v941 = vunpack.c.l.b16 %v493
      %v942 = vunpack.c.l.b16 %v494
      %v943 = vunpack.c.l.b16 %v495
      %v944 = vunpack.c.l.b16 %v496
      %v945 = vunpack.c.l.b16 %v497
      %v946 = vunpack.c.l.b16 %v498
      %v947 = vunpack.c.l.b16 %v499
      %v948 = vunpack.c.l.b16 %v500
      %v949 = vunpack.c.l.b16 %v501
      %v950 = vunpack.c.l.b16 %v502
      %v951 = vunpack.c.l.b16 %v503
      %v952 = vpack.c.b16 %v889, %v888
      %v953 = vpack.c.b16 %v891, %v890
      %v954 = vpack.c.b16 %v893, %v892
      %v955 = vpack.c.b16 %v895, %v894
      %v956 = vpack.c.b16 %v897, %v896
      %v957 = vpack.c.b16 %v899, %v898
      %v958 = vpack.c.b16 %v901, %v900
      %v959 = vpack.c.b16 %v903, %v902
      %v960 = vpack.c.b16 %v905, %v904
      %v961 = vpack.c.b16 %v907, %v906
      %v962 = vpack.c.b16 %v909, %v908
      %v963 = vpack.c.b16 %v911, %v910
      %v964 = vpack.c.b16 %v913, %v912
      %v965 = vpack.c.b16 %v915, %v914
      %v966 = vpack.c.b16 %v917, %v916
      %v967 = vpack.c.b16 %v919, %v918
      %v968 = vpack.c.b16 %v921, %v920
      %v969 = vpack.c.b16 %v923, %v922
      %v970 = vpack.c.b16 %v925, %v924
      %v971 = vpack.c.b16 %v927, %v926
      %v972 = vpack.c.b16 %v929, %v928
      %v973 = vpack.c.b16 %v931, %v930
      %v974 = vpack.c.b16 %v933, %v932
      %v975 = vpack.c.b16 %v935, %v934
      %v976 = vpack.c.b16 %v937, %v936
      %v977 = vpack.c.b16 %v939, %v938
      %v978 = vpack.c.b16 %v941, %v940
      %v979 = vpack.c.b16 %v943, %v942
      %v980 = vpack.c.b16 %v945, %v944
      %v981 = vpack.c.b16 %v947, %v946
      %v982 = vpack.c.b16 %v949, %v948
      %v983 = vpack.c.b16 %v951, %v950
      %1016 = vmatpush.bf16.msra.mxu0 %v959
      %1017 = vmatpush.bf16.msra.mxu0 %v958
      %1018 = vmatpush.bf16.msra.mxu0 %v957
      %1019 = vmatpush.bf16.msra.mxu0 %v956
      %1020 = vmatpush.bf16.msra.mxu0 %v955
      %1021 = vmatpush.bf16.msra.mxu0 %v954
      %1022 = vmatpush.bf16.msra.mxu0 %v953
      %1023 = vmatpush.bf16.msra.mxu0 %v952
      %1024 = vmatmul.bf16.gmra.mxu0 %v696
      %v1025 = vpop.f32.mrf.mxu0
      %v1026 = vadd.f32 0.0, %v1025
      %v1027 = vpop.f32.mrf.mxu0
      %v1028 = vadd.f32 0.0, %v1027
      %1029 = vmatmul.bf16.gmra.mxu0 %v700
      %v1030 = vpop.f32.mrf.mxu0
      %v1031 = vadd.f32 0.0, %v1030
      %v1032 = vpop.f32.mrf.mxu0
      %v1033 = vadd.f32 0.0, %v1032
      %1034 = vmatmul.bf16.gmra.mxu0 %v704
      %v1035 = vpop.f32.mrf.mxu0
      %v1036 = vadd.f32 0.0, %v1035
      %v1037 = vpop.f32.mrf.mxu0
      %v1038 = vadd.f32 0.0, %v1037
      %1039 = vmatmul.bf16.gmra.mxu0 %v708
      %v1040 = vpop.f32.mrf.mxu0
      %v1041 = vadd.f32 0.0, %v1040
      %v1042 = vpop.f32.mrf.mxu0
      %v1043 = vadd.f32 0.0, %v1042
      %1044 = vmatmul.bf16.gmra.mxu0 %v712
      %v1045 = vpop.f32.mrf.mxu0
      %v1046 = vadd.f32 0.0, %v1045
      %v1047 = vpop.f32.mrf.mxu0
      %v1048 = vadd.f32 0.0, %v1047
      %1049 = vmatmul.bf16.gmra.mxu0 %v716
      %v1050 = vpop.f32.mrf.mxu0
      %v1051 = vadd.f32 0.0, %v1050
      %v1052 = vpop.f32.mrf.mxu0
      %v1053 = vadd.f32 0.0, %v1052
      %1054 = vmatmul.bf16.gmra.mxu0 %v720
      %v1055 = vpop.f32.mrf.mxu0
      %v1056 = vadd.f32 0.0, %v1055
      %v1057 = vpop.f32.mrf.mxu0
      %v1058 = vadd.f32 0.0, %v1057
      %1059 = vmatmul.bf16.gmra.mxu0 %v724
      %v1060 = vpop.f32.mrf.mxu0
      %v1061 = vadd.f32 0.0, %v1060
      %v1062 = vpop.f32.mrf.mxu0
      %v1063 = vadd.f32 0.0, %v1062
      %1064 = vmatmul.bf16.gmra.mxu0 %v728
      %v1065 = vpop.f32.mrf.mxu0
      %v1066 = vadd.f32 0.0, %v1065
      %v1067 = vpop.f32.mrf.mxu0
      %v1068 = vadd.f32 0.0, %v1067
      %1069 = vmatmul.bf16.gmra.mxu0 %v732
      %v1070 = vpop.f32.mrf.mxu0
      %v1071 = vadd.f32 0.0, %v1070
      %v1072 = vpop.f32.mrf.mxu0
      %v1073 = vadd.f32 0.0, %v1072
      %1074 = vmatmul.bf16.gmra.mxu0 %v736
      %v1075 = vpop.f32.mrf.mxu0
      %v1076 = vadd.f32 0.0, %v1075
      %v1077 = vpop.f32.mrf.mxu0
      %v1078 = vadd.f32 0.0, %v1077
      %1079 = vmatmul.bf16.gmra.mxu0 %v740
      %v1080 = vpop.f32.mrf.mxu0
      %v1081 = vadd.f32 0.0, %v1080
      %v1082 = vpop.f32.mrf.mxu0
      %v1083 = vadd.f32 0.0, %v1082
      %1084 = vmatmul.bf16.gmra.mxu0 %v744
      %v1085 = vpop.f32.mrf.mxu0
      %v1086 = vadd.f32 0.0, %v1085
      %v1087 = vpop.f32.mrf.mxu0
      %v1088 = vadd.f32 0.0, %v1087
      %1089 = vmatmul.bf16.gmra.mxu0 %v748
      %v1090 = vpop.f32.mrf.mxu0
      %v1091 = vadd.f32 0.0, %v1090
      %v1092 = vpop.f32.mrf.mxu0
      %v1093 = vadd.f32 0.0, %v1092
      %1094 = vmatmul.bf16.gmra.mxu0 %v752
      %v1095 = vpop.f32.mrf.mxu0
      %v1096 = vadd.f32 0.0, %v1095
      %v1097 = vpop.f32.mrf.mxu0
      %v1098 = vadd.f32 0.0, %v1097
      %1099 = vmatmul.bf16.gmra.mxu0 %v756
      %v1100 = vpop.f32.mrf.mxu0
      %v1101 = vadd.f32 0.0, %v1100
      %v1102 = vpop.f32.mrf.mxu0
      %v1103 = vadd.f32 0.0, %v1102
      %1104 = vdwg.mxu0
      %1105 = vmatpush.bf16.msra.mxu0 %v967
      %1106 = vmatpush.bf16.msra.mxu0 %v966
      %1107 = vmatpush.bf16.msra.mxu0 %v965
      %1108 = vmatpush.bf16.msra.mxu0 %v964
      %1109 = vmatpush.bf16.msra.mxu0 %v963
      %1110 = vmatpush.bf16.msra.mxu0 %v962
      %1111 = vmatpush.bf16.msra.mxu0 %v961
      %1112 = vmatpush.bf16.msra.mxu0 %v960
      %1113 = vmatmul.bf16.gmra.mxu0 %v697
      %v1114 = vpop.f32.mrf.mxu0
      %v1115 = vadd.f32 %v1026, %v1114
      %v1116 = vpop.f32.mrf.mxu0
      %v1117 = vadd.f32 %v1028, %v1116
      %1118 = vmatmul.bf16.gmra.mxu0 %v701
      %v1119 = vpop.f32.mrf.mxu0
      %v1120 = vadd.f32 %v1031, %v1119
      %v1121 = vpop.f32.mrf.mxu0
      %v1122 = vadd.f32 %v1033, %v1121
      %1123 = vmatmul.bf16.gmra.mxu0 %v705
      %v1124 = vpop.f32.mrf.mxu0
      %v1125 = vadd.f32 %v1036, %v1124
      %v1126 = vpop.f32.mrf.mxu0
      %v1127 = vadd.f32 %v1038, %v1126
      %1128 = vmatmul.bf16.gmra.mxu0 %v709
      %v1129 = vpop.f32.mrf.mxu0
      %v1130 = vadd.f32 %v1041, %v1129
      %v1131 = vpop.f32.mrf.mxu0
      %v1132 = vadd.f32 %v1043, %v1131
      %1133 = vmatmul.bf16.gmra.mxu0 %v713
      %v1134 = vpop.f32.mrf.mxu0
      %v1135 = vadd.f32 %v1046, %v1134
      %v1136 = vpop.f32.mrf.mxu0
      %v1137 = vadd.f32 %v1048, %v1136
      %1138 = vmatmul.bf16.gmra.mxu0 %v717
      %v1139 = vpop.f32.mrf.mxu0
      %v1140 = vadd.f32 %v1051, %v1139
      %v1141 = vpop.f32.mrf.mxu0
      %v1142 = vadd.f32 %v1053, %v1141
      %1143 = vmatmul.bf16.gmra.mxu0 %v721
      %v1144 = vpop.f32.mrf.mxu0
      %v1145 = vadd.f32 %v1056, %v1144
      %v1146 = vpop.f32.mrf.mxu0
      %v1147 = vadd.f32 %v1058, %v1146
      %1148 = vmatmul.bf16.gmra.mxu0 %v725
      %v1149 = vpop.f32.mrf.mxu0
      %v1150 = vadd.f32 %v1061, %v1149
      %v1151 = vpop.f32.mrf.mxu0
      %v1152 = vadd.f32 %v1063, %v1151
      %1153 = vmatmul.bf16.gmra.mxu0 %v729
      %v1154 = vpop.f32.mrf.mxu0
      %v1155 = vadd.f32 %v1066, %v1154
      %v1156 = vpop.f32.mrf.mxu0
      %v1157 = vadd.f32 %v1068, %v1156
      %1158 = vmatmul.bf16.gmra.mxu0 %v733
      %v1159 = vpop.f32.mrf.mxu0
      %v1160 = vadd.f32 %v1071, %v1159
      %v1161 = vpop.f32.mrf.mxu0
      %v1162 = vadd.f32 %v1073, %v1161
      %1163 = vmatmul.bf16.gmra.mxu0 %v737
      %v1164 = vpop.f32.mrf.mxu0
      %v1165 = vadd.f32 %v1076, %v1164
      %v1166 = vpop.f32.mrf.mxu0
      %v1167 = vadd.f32 %v1078, %v1166
      %1168 = vmatmul.bf16.gmra.mxu0 %v741
      %v1169 = vpop.f32.mrf.mxu0
      %v1170 = vadd.f32 %v1081, %v1169
      %v1171 = vpop.f32.mrf.mxu0
      %v1172 = vadd.f32 %v1083, %v1171
      %1173 = vmatmul.bf16.gmra.mxu0 %v745
      %v1174 = vpop.f32.mrf.mxu0
      %v1175 = vadd.f32 %v1086, %v1174
      %v1176 = vpop.f32.mrf.mxu0
      %v1177 = vadd.f32 %v1088, %v1176
      %1178 = vmatmul.bf16.gmra.mxu0 %v749
      %v1179 = vpop.f32.mrf.mxu0
      %v1180 = vadd.f32 %v1091, %v1179
      %v1181 = vpop.f32.mrf.mxu0
      %v1182 = vadd.f32 %v1093, %v1181
      %1183 = vmatmul.bf16.gmra.mxu0 %v753
      %v1184 = vpop.f32.mrf.mxu0
      %v1185 = vadd.f32 %v1096, %v1184
      %v1186 = vpop.f32.mrf.mxu0
      %v1187 = vadd.f32 %v1098, %v1186
      %1188 = vmatmul.bf16.gmra.mxu0 %v757
      %v1189 = vpop.f32.mrf.mxu0
      %v1190 = vadd.f32 %v1101, %v1189
      %v1191 = vpop.f32.mrf.mxu0
      %v1192 = vadd.f32 %v1103, %v1191
      %1193 = vdwg.mxu0
      %1194 = vmatpush.bf16.msra.mxu0 %v975
      %1195 = vmatpush.bf16.msra.mxu0 %v974
      %1196 = vmatpush.bf16.msra.mxu0 %v973
      %1197 = vmatpush.bf16.msra.mxu0 %v972
      %1198 = vmatpush.bf16.msra.mxu0 %v971
      %1199 = vmatpush.bf16.msra.mxu0 %v970
      %1200 = vmatpush.bf16.msra.mxu0 %v969
      %1201 = vmatpush.bf16.msra.mxu0 %v968
      %1202 = vmatmul.bf16.gmra.mxu0 %v698
      %v1203 = vpop.f32.mrf.mxu0
      %v1204 = vadd.f32 %v1115, %v1203
      %v1205 = vpop.f32.mrf.mxu0
      %v1206 = vadd.f32 %v1117, %v1205
      %1207 = vmatmul.bf16.gmra.mxu0 %v702
      %v1208 = vpop.f32.mrf.mxu0
      %v1209 = vadd.f32 %v1120, %v1208
      %v1210 = vpop.f32.mrf.mxu0
      %v1211 = vadd.f32 %v1122, %v1210
      %1212 = vmatmul.bf16.gmra.mxu0 %v706
      %v1213 = vpop.f32.mrf.mxu0
      %v1214 = vadd.f32 %v1125, %v1213
      %v1215 = vpop.f32.mrf.mxu0
      %v1216 = vadd.f32 %v1127, %v1215
      %1217 = vmatmul.bf16.gmra.mxu0 %v710
      %v1218 = vpop.f32.mrf.mxu0
      %v1219 = vadd.f32 %v1130, %v1218
      %v1220 = vpop.f32.mrf.mxu0
      %v1221 = vadd.f32 %v1132, %v1220
      %1222 = vmatmul.bf16.gmra.mxu0 %v714
      %v1223 = vpop.f32.mrf.mxu0
      %v1224 = vadd.f32 %v1135, %v1223
      %v1225 = vpop.f32.mrf.mxu0
      %v1226 = vadd.f32 %v1137, %v1225
      %1227 = vmatmul.bf16.gmra.mxu0 %v718
      %v1228 = vpop.f32.mrf.mxu0
      %v1229 = vadd.f32 %v1140, %v1228
      %v1230 = vpop.f32.mrf.mxu0
      %v1231 = vadd.f32 %v1142, %v1230
      %1232 = vmatmul.bf16.gmra.mxu0 %v722
      %v1233 = vpop.f32.mrf.mxu0
      %v1234 = vadd.f32 %v1145, %v1233
      %v1235 = vpop.f32.mrf.mxu0
      %v1236 = vadd.f32 %v1147, %v1235
      %1237 = vmatmul.bf16.gmra.mxu0 %v726
      %v1238 = vpop.f32.mrf.mxu0
      %v1239 = vadd.f32 %v1150, %v1238
      %v1240 = vpop.f32.mrf.mxu0
      %v1241 = vadd.f32 %v1152, %v1240
      %1242 = vmatmul.bf16.gmra.mxu0 %v730
      %v1243 = vpop.f32.mrf.mxu0
      %v1244 = vadd.f32 %v1155, %v1243
      %v1245 = vpop.f32.mrf.mxu0
      %v1246 = vadd.f32 %v1157, %v1245
      %1247 = vmatmul.bf16.gmra.mxu0 %v734
      %v1248 = vpop.f32.mrf.mxu0
      %v1249 = vadd.f32 %v1160, %v1248
      %v1250 = vpop.f32.mrf.mxu0
      %v1251 = vadd.f32 %v1162, %v1250
      %1252 = vmatmul.bf16.gmra.mxu0 %v738
      %v1253 = vpop.f32.mrf.mxu0
      %v1254 = vadd.f32 %v1165, %v1253
      %v1255 = vpop.f32.mrf.mxu0
      %v1256 = vadd.f32 %v1167, %v1255
      %1257 = vmatmul.bf16.gmra.mxu0 %v742
      %v1258 = vpop.f32.mrf.mxu0
      %v1259 = vadd.f32 %v1170, %v1258
      %v1260 = vpop.f32.mrf.mxu0
      %v1261 = vadd.f32 %v1172, %v1260
      %1262 = vmatmul.bf16.gmra.mxu0 %v746
      %v1263 = vpop.f32.mrf.mxu0
      %v1264 = vadd.f32 %v1175, %v1263
      %v1265 = vpop.f32.mrf.mxu0
      %v1266 = vadd.f32 %v1177, %v1265
      %1267 = vmatmul.bf16.gmra.mxu0 %v750
      %v1268 = vpop.f32.mrf.mxu0
      %v1269 = vadd.f32 %v1180, %v1268
      %v1270 = vpop.f32.mrf.mxu0
      %v1271 = vadd.f32 %v1182, %v1270
      %1272 = vmatmul.bf16.gmra.mxu0 %v754
      %v1273 = vpop.f32.mrf.mxu0
      %v1274 = vadd.f32 %v1185, %v1273
      %v1275 = vpop.f32.mrf.mxu0
      %v1276 = vadd.f32 %v1187, %v1275
      %1277 = vmatmul.bf16.gmra.mxu0 %v758
      %v1278 = vpop.f32.mrf.mxu0
      %v1279 = vadd.f32 %v1190, %v1278
      %v1280 = vpop.f32.mrf.mxu0
      %v1281 = vadd.f32 %v1192, %v1280
      %1282 = vdwg.mxu0
      %1283 = vmatpush.bf16.msra.mxu0 %v983
      %1284 = vmatpush.bf16.msra.mxu0 %v982
      %1285 = vmatpush.bf16.msra.mxu0 %v981
      %1286 = vmatpush.bf16.msra.mxu0 %v980
      %1287 = vmatpush.bf16.msra.mxu0 %v979
      %1288 = vmatpush.bf16.msra.mxu0 %v978
      %1289 = vmatpush.bf16.msra.mxu0 %v977
      %1290 = vmatpush.bf16.msra.mxu0 %v976
      %1291 = vmatmul.bf16.gmra.mxu0 %v699
      %v1292 = vpop.f32.mrf.mxu0
      %v1293 = vadd.f32 %v1204, %v1292
      %v1294 = vpop.f32.mrf.mxu0
      %v1295 = vadd.f32 %v1206, %v1294
      %1296 = vmatmul.bf16.gmra.mxu0 %v703
      %v1297 = vpop.f32.mrf.mxu0
      %v1298 = vadd.f32 %v1209, %v1297
      %v1299 = vpop.f32.mrf.mxu0
      %v1300 = vadd.f32 %v1211, %v1299
      %1301 = vmatmul.bf16.gmra.mxu0 %v707
      %v1302 = vpop.f32.mrf.mxu0
      %v1303 = vadd.f32 %v1214, %v1302
      %v1304 = vpop.f32.mrf.mxu0
      %v1305 = vadd.f32 %v1216, %v1304
      %1306 = vmatmul.bf16.gmra.mxu0 %v711
      %v1307 = vpop.f32.mrf.mxu0
      %v1308 = vadd.f32 %v1219, %v1307
      %v1309 = vpop.f32.mrf.mxu0
      %v1310 = vadd.f32 %v1221, %v1309
      %1311 = vmatmul.bf16.gmra.mxu0 %v715
      %v1312 = vpop.f32.mrf.mxu0
      %v1313 = vadd.f32 %v1224, %v1312
      %v1314 = vpop.f32.mrf.mxu0
      %v1315 = vadd.f32 %v1226, %v1314
      %1316 = vmatmul.bf16.gmra.mxu0 %v719
      %v1317 = vpop.f32.mrf.mxu0
      %v1318 = vadd.f32 %v1229, %v1317
      %v1319 = vpop.f32.mrf.mxu0
      %v1320 = vadd.f32 %v1231, %v1319
      %1321 = vmatmul.bf16.gmra.mxu0 %v723
      %v1322 = vpop.f32.mrf.mxu0
      %v1323 = vadd.f32 %v1234, %v1322
      %v1324 = vpop.f32.mrf.mxu0
      %v1325 = vadd.f32 %v1236, %v1324
      %1326 = vmatmul.bf16.gmra.mxu0 %v727
      %v1327 = vpop.f32.mrf.mxu0
      %v1328 = vadd.f32 %v1239, %v1327
      %v1329 = vpop.f32.mrf.mxu0
      %v1330 = vadd.f32 %v1241, %v1329
      %1331 = vmatmul.bf16.gmra.mxu0 %v731
      %v1332 = vpop.f32.mrf.mxu0
      %v1333 = vadd.f32 %v1244, %v1332
      %v1334 = vpop.f32.mrf.mxu0
      %v1335 = vadd.f32 %v1246, %v1334
      %1336 = vmatmul.bf16.gmra.mxu0 %v735
      %v1337 = vpop.f32.mrf.mxu0
      %v1338 = vadd.f32 %v1249, %v1337
      %v1339 = vpop.f32.mrf.mxu0
      %v1340 = vadd.f32 %v1251, %v1339
      %1341 = vmatmul.bf16.gmra.mxu0 %v739
      %v1342 = vpop.f32.mrf.mxu0
      %v1343 = vadd.f32 %v1254, %v1342
      %v1344 = vpop.f32.mrf.mxu0
      %v1345 = vadd.f32 %v1256, %v1344
      %1346 = vmatmul.bf16.gmra.mxu0 %v743
      %v1347 = vpop.f32.mrf.mxu0
      %v1348 = vadd.f32 %v1259, %v1347
      %v1349 = vpop.f32.mrf.mxu0
      %v1350 = vadd.f32 %v1261, %v1349
      %1351 = vmatmul.bf16.gmra.mxu0 %v747
      %v1352 = vpop.f32.mrf.mxu0
      %v1353 = vadd.f32 %v1264, %v1352
      %v1354 = vpop.f32.mrf.mxu0
      %v1355 = vadd.f32 %v1266, %v1354
      %1356 = vmatmul.bf16.gmra.mxu0 %v751
      %v1357 = vpop.f32.mrf.mxu0
      %v1358 = vadd.f32 %v1269, %v1357
      %v1359 = vpop.f32.mrf.mxu0
      %v1360 = vadd.f32 %v1271, %v1359
      %1361 = vmatmul.bf16.gmra.mxu0 %v755
      %v1362 = vpop.f32.mrf.mxu0
      %v1363 = vadd.f32 %v1274, %v1362
      %v1364 = vpop.f32.mrf.mxu0
      %v1365 = vadd.f32 %v1276, %v1364
      %1366 = vmatmul.bf16.gmra.mxu0 %v759
      %v1367 = vpop.f32.mrf.mxu0
      %v1368 = vadd.f32 %v1279, %v1367
      %v1369 = vpop.f32.mrf.mxu0
      %v1370 = vadd.f32 %v1281, %v1369
      %1371 = vdwg.mxu0
      %v1372 = vadd.f32 %v344, %v1293
      %v1373 = vadd.f32 %v345, %v1295
      %v1374 = vadd.f32 %v346, %v1298
      %v1375 = vadd.f32 %v347, %v1300
      %v1376 = vadd.f32 %v348, %v1303
      %v1377 = vadd.f32 %v349, %v1305
      %v1378 = vadd.f32 %v350, %v1308
      %v1379 = vadd.f32 %v351, %v1310
      %v1380 = vadd.f32 %v352, %v1313
      %v1381 = vadd.f32 %v353, %v1315
      %v1382 = vadd.f32 %v354, %v1318
      %v1383 = vadd.f32 %v355, %v1320
      %v1384 = vadd.f32 %v356, %v1323
      %v1385 = vadd.f32 %v357, %v1325
      %v1386 = vadd.f32 %v358, %v1328
      %v1387 = vadd.f32 %v359, %v1330
      %v1388 = vadd.f32 %v360, %v1333
      %v1389 = vadd.f32 %v361, %v1335
      %v1390 = vadd.f32 %v362, %v1338
      %v1391 = vadd.f32 %v363, %v1340
      %v1392 = vadd.f32 %v364, %v1343
      %v1393 = vadd.f32 %v365, %v1345
      %v1394 = vadd.f32 %v366, %v1348
      %v1395 = vadd.f32 %v367, %v1350
      %v1396 = vadd.f32 %v368, %v1353
      %v1397 = vadd.f32 %v369, %v1355
      %v1398 = vadd.f32 %v370, %v1358
      %v1399 = vadd.f32 %v371, %v1360
      %v1400 = vadd.f32 %v372, %v1363
      %v1401 = vadd.f32 %v373, %v1365
      %v1402 = vadd.f32 %v374, %v1368
      %v1403 = vadd.f32 %v375, %v1370
      %1404 = vst [vmem:[#allocation2] sm:$0xff] %v1372
      %1405 = vst [vmem:[#allocation2 + $0x8] sm:$0xff] %v1373
      %1406 = vst [vmem:[#allocation2 + $0x10] sm:$0xff] %v1374
      %1407 = vst [vmem:[#allocation2 + $0x18] sm:$0xff] %v1375
      %1408 = vst [vmem:[#allocation2 + $0x20] sm:$0xff] %v1376
      %1409 = vst [vmem:[#allocation2 + $0x28] sm:$0xff] %v1377
      %1410 = vst [vmem:[#allocation2 + $0x30] sm:$0xff] %v1378
      %1411 = vst [vmem:[#allocation2 + $0x38] sm:$0xff] %v1379
      %1412 = vst [vmem:[#allocation2 + $0x40] sm:$0xff] %v1380
      %1413 = vst [vmem:[#allocation2 + $0x48] sm:$0xff] %v1381
      %1414 = vst [vmem:[#allocation2 + $0x50] sm:$0xff] %v1382
      %1415 = vst [vmem:[#allocation2 + $0x58] sm:$0xff] %v1383
      %1416 = vst [vmem:[#allocation2 + $0x60] sm:$0xff] %v1384
      %1417 = vst [vmem:[#allocation2 + $0x68] sm:$0xff] %v1385
      %1418 = vst [vmem:[#allocation2 + $0x70] sm:$0xff] %v1386
      %1419 = vst [vmem:[#allocation2 + $0x78] sm:$0xff] %v1387
      %1420 = vst [vmem:[#allocation2 + $0x80] sm:$0xff] %v1388
      %1421 = vst [vmem:[#allocation2 + $0x88] sm:$0xff] %v1389
      %1422 = vst [vmem:[#allocation2 + $0x90] sm:$0xff] %v1390
      %1423 = vst [vmem:[#allocation2 + $0x98] sm:$0xff] %v1391
      %1424 = vst [vmem:[#allocation2 + $0xa0] sm:$0xff] %v1392
      %1425 = vst [vmem:[#allocation2 + $0xa8] sm:$0xff] %v1393
      %1426 = vst [vmem:[#allocation2 + $0xb0] sm:$0xff] %v1394
      %1427 = vst [vmem:[#allocation2 + $0xb8] sm:$0xff] %v1395
      %1428 = vst [vmem:[#allocation2 + $0xc0] sm:$0xff] %v1396
      %1429 = vst [vmem:[#allocation2 + $0xc8] sm:$0xff] %v1397
      %1430 = vst [vmem:[#allocation2 + $0xd0] sm:$0xff] %v1398
      %1431 = vst [vmem:[#allocation2 + $0xd8] sm:$0xff] %v1399
      %1432 = vst [vmem:[#allocation2 + $0xe0] sm:$0xff] %v1400
      %1433 = vst [vmem:[#allocation2 + $0xe8] sm:$0xff] %v1401
      %1434 = vst [vmem:[#allocation2 + $0xf0] sm:$0xff] %v1402
      %1435 = vst [vmem:[#allocation2 + $0xf8] sm:$0xff] %v1403
      // Predicated region
      $region41: #{dcn_bottleneck_forward.3} parent=35 // pred_check
        %p1436 = pneg %p308
      $region42: #{dcn_bottleneck_forward.3} parent=35 // pred_check_branch
        %1438 = sbr.rel (%p1436) target = $region44
      $region43: #{dcn_bottleneck_forward.3} parent=35 // pred_region
        %v1439 = vld [vmem:[#allocation2] sm:$0xff]
        %v1440 = vld [vmem:[#allocation2 + $0x8] sm:$0xff]
        %v1441 = vld [vmem:[#allocation2 + $0x10] sm:$0xff]
        %v1442 = vld [vmem:[#allocation2 + $0x18] sm:$0xff]
        %v1443 = vld [vmem:[#allocation2 + $0x20] sm:$0xff]
        %v1444 = vld [vmem:[#allocation2 + $0x28] sm:$0xff]
        %v1445 = vld [vmem:[#allocation2 + $0x30] sm:$0xff]
        %v1446 = vld [vmem:[#allocation2 + $0x38] sm:$0xff]
        %v1447 = vld [vmem:[#allocation2 + $0x40] sm:$0xff]
        %v1448 = vld [vmem:[#allocation2 + $0x48] sm:$0xff]
        %v1449 = vld [vmem:[#allocation2 + $0x50] sm:$0xff]
        %v1450 = vld [vmem:[#allocation2 + $0x58] sm:$0xff]
        %v1451 = vld [vmem:[#allocation2 + $0x60] sm:$0xff]
        %v1452 = vld [vmem:[#allocation2 + $0x68] sm:$0xff]
        %v1453 = vld [vmem:[#allocation2 + $0x70] sm:$0xff]
        %v1454 = vld [vmem:[#allocation2 + $0x78] sm:$0xff]
        %v1455 = vld [vmem:[#allocation2 + $0x80] sm:$0xff]
        %v1456 = vld [vmem:[#allocation2 + $0x88] sm:$0xff]
        %v1457 = vld [vmem:[#allocation2 + $0x90] sm:$0xff]
        %v1458 = vld [vmem:[#allocation2 + $0x98] sm:$0xff]
        %v1459 = vld [vmem:[#allocation2 + $0xa0] sm:$0xff]
        %v1460 = vld [vmem:[#allocation2 + $0xa8] sm:$0xff]
        %v1461 = vld [vmem:[#allocation2 + $0xb0] sm:$0xff]
        %v1462 = vld [vmem:[#allocation2 + $0xb8] sm:$0xff]
        %v1463 = vld [vmem:[#allocation2 + $0xc0] sm:$0xff]
        %v1464 = vld [vmem:[#allocation2 + $0xc8] sm:$0xff]
        %v1465 = vld [vmem:[#allocation2 + $0xd0] sm:$0xff]
        %v1466 = vld [vmem:[#allocation2 + $0xd8] sm:$0xff]
        %v1467 = vld [vmem:[#allocation2 + $0xe0] sm:$0xff]
        %v1468 = vld [vmem:[#allocation2 + $0xe8] sm:$0xff]
        %v1469 = vld [vmem:[#allocation2 + $0xf0] sm:$0xff]
        %v1470 = vld [vmem:[#allocation2 + $0xf8] sm:$0xff]
        %v1471 = vld [vmem:[%s295] sm:$0x1]
        %v1473 = vperm.slane %v1471, 0
        %v1475 = vmul.f32 %v1439, %v1473
        %v1476 = vmul.f32 %v1440, %v1473
        %v1477 = vmul.f32 %v1441, %v1473
        %v1478 = vmul.f32 %v1442, %v1473
        %v1479 = vmul.f32 %v1443, %v1473
        %v1480 = vmul.f32 %v1444, %v1473
        %v1481 = vmul.f32 %v1445, %v1473
        %v1482 = vmul.f32 %v1446, %v1473
        %v1483 = vmul.f32 %v1447, %v1473
        %v1484 = vmul.f32 %v1448, %v1473
        %v1485 = vmul.f32 %v1449, %v1473
        %v1486 = vmul.f32 %v1450, %v1473
        %v1487 = vmul.f32 %v1451, %v1473
        %v1488 = vmul.f32 %v1452, %v1473
        %v1489 = vmul.f32 %v1453, %v1473
        %v1490 = vmul.f32 %v1454, %v1473
        %v1491 = vmul.f32 %v1455, %v1473
        %v1492 = vmul.f32 %v1456, %v1473
        %v1493 = vmul.f32 %v1457, %v1473
        %v1494 = vmul.f32 %v1458, %v1473
        %v1495 = vmul.f32 %v1459, %v1473
        %v1496 = vmul.f32 %v1460, %v1473
        %v1497 = vmul.f32 %v1461, %v1473
        %v1498 = vmul.f32 %v1462, %v1473
        %v1499 = vmul.f32 %v1463, %v1473
        %v1500 = vmul.f32 %v1464, %v1473
        %v1501 = vmul.f32 %v1465, %v1473
        %v1502 = vmul.f32 %v1466, %v1473
        %v1503 = vmul.f32 %v1467, %v1473
        %v1504 = vmul.f32 %v1468, %v1473
        %v1505 = vmul.f32 %v1469, %v1473
        %v1506 = vmul.f32 %v1470, %v1473
        %v1507 = vld [vmem:[%s298] sm:$0x1]
        %v1509 = vperm.slane %v1507, 0
        %v1511 = vadd.f32 %v1475, %v1509
        %v1512 = vadd.f32 %v1476, %v1509
        %v1513 = vadd.f32 %v1477, %v1509
        %v1514 = vadd.f32 %v1478, %v1509
        %v1515 = vadd.f32 %v1479, %v1509
        %v1516 = vadd.f32 %v1480, %v1509
        %v1517 = vadd.f32 %v1481, %v1509
        %v1518 = vadd.f32 %v1482, %v1509
        %v1519 = vadd.f32 %v1483, %v1509
        %v1520 = vadd.f32 %v1484, %v1509
        %v1521 = vadd.f32 %v1485, %v1509
        %v1522 = vadd.f32 %v1486, %v1509
        %v1523 = vadd.f32 %v1487, %v1509
        %v1524 = vadd.f32 %v1488, %v1509
        %v1525 = vadd.f32 %v1489, %v1509
        %v1526 = vadd.f32 %v1490, %v1509
        %v1527 = vadd.f32 %v1491, %v1509
        %v1528 = vadd.f32 %v1492, %v1509
        %v1529 = vadd.f32 %v1493, %v1509
        %v1530 = vadd.f32 %v1494, %v1509
        %v1531 = vadd.f32 %v1495, %v1509
        %v1532 = vadd.f32 %v1496, %v1509
        %v1533 = vadd.f32 %v1497, %v1509
        %v1534 = vadd.f32 %v1498, %v1509
        %v1535 = vadd.f32 %v1499, %v1509
        %v1536 = vadd.f32 %v1500, %v1509
        %v1537 = vadd.f32 %v1501, %v1509
        %v1538 = vadd.f32 %v1502, %v1509
        %v1539 = vadd.f32 %v1503, %v1509
        %v1540 = vadd.f32 %v1504, %v1509
        %v1541 = vadd.f32 %v1505, %v1509
        %v1542 = vadd.f32 %v1506, %v1509
        %v1543 = vmax.f32 %v1511, 0.0
        %v1544 = vmax.f32 %v1512, 0.0
        %v1545 = vmax.f32 %v1513, 0.0
        %v1546 = vmax.f32 %v1514, 0.0
        %v1547 = vmax.f32 %v1515, 0.0
        %v1548 = vmax.f32 %v1516, 0.0
        %v1549 = vmax.f32 %v1517, 0.0
        %v1550 = vmax.f32 %v1518, 0.0
        %v1551 = vmax.f32 %v1519, 0.0
        %v1552 = vmax.f32 %v1520, 0.0
        %v1553 = vmax.f32 %v1521, 0.0
        %v1554 = vmax.f32 %v1522, 0.0
        %v1555 = vmax.f32 %v1523, 0.0
        %v1556 = vmax.f32 %v1524, 0.0
        %v1557 = vmax.f32 %v1525, 0.0
        %v1558 = vmax.f32 %v1526, 0.0
        %v1559 = vmax.f32 %v1527, 0.0
        %v1560 = vmax.f32 %v1528, 0.0
        %v1561 = vmax.f32 %v1529, 0.0
        %v1562 = vmax.f32 %v1530, 0.0
        %v1563 = vmax.f32 %v1531, 0.0
        %v1564 = vmax.f32 %v1532, 0.0
        %v1565 = vmax.f32 %v1533, 0.0
        %v1566 = vmax.f32 %v1534, 0.0
        %v1567 = vmax.f32 %v1535, 0.0
        %v1568 = vmax.f32 %v1536, 0.0
        %v1569 = vmax.f32 %v1537, 0.0
        %v1570 = vmax.f32 %v1538, 0.0
        %v1571 = vmax.f32 %v1539, 0.0
        %v1572 = vmax.f32 %v1540, 0.0
        %v1573 = vmax.f32 %v1541, 0.0
        %v1574 = vmax.f32 %v1542, 0.0
        %v1575 = vpack.c.bf16 %v1543, %v1543
        %v1576 = vpack.c.bf16 %v1544, %v1544
        %v1577 = vpack.c.bf16 %v1545, %v1545
        %v1578 = vpack.c.bf16 %v1546, %v1546
        %v1579 = vpack.c.bf16 %v1547, %v1547
        %v1580 = vpack.c.bf16 %v1548, %v1548
        %v1581 = vpack.c.bf16 %v1549, %v1549
        %v1582 = vpack.c.bf16 %v1550, %v1550
        %v1583 = vpack.c.bf16 %v1551, %v1551
        %v1584 = vpack.c.bf16 %v1552, %v1552
        %v1585 = vpack.c.bf16 %v1553, %v1553
        %v1586 = vpack.c.bf16 %v1554, %v1554
        %v1587 = vpack.c.bf16 %v1555, %v1555
        %v1588 = vpack.c.bf16 %v1556, %v1556
        %v1589 = vpack.c.bf16 %v1557, %v1557
        %v1590 = vpack.c.bf16 %v1558, %v1558
        %v1591 = vpack.c.bf16 %v1559, %v1559
        %v1592 = vpack.c.bf16 %v1560, %v1560
        %v1593 = vpack.c.bf16 %v1561, %v1561
        %v1594 = vpack.c.bf16 %v1562, %v1562
        %v1595 = vpack.c.bf16 %v1563, %v1563
        %v1596 = vpack.c.bf16 %v1564, %v1564
        %v1597 = vpack.c.bf16 %v1565, %v1565
        %v1598 = vpack.c.bf16 %v1566, %v1566
        %v1599 = vpack.c.bf16 %v1567, %v1567
        %v1600 = vpack.c.bf16 %v1568, %v1568
        %v1601 = vpack.c.bf16 %v1569, %v1569
        %v1602 = vpack.c.bf16 %v1570, %v1570
        %v1603 = vpack.c.bf16 %v1571, %v1571
        %v1604 = vpack.c.bf16 %v1572, %v1572
        %v1605 = vpack.c.bf16 %v1573, %v1573
        %v1606 = vpack.c.bf16 %v1574, %v1574
        %1607 = vst [vmem:[%s306] sm:$0xf] %v1575
        %1608 = vst [vmem:[%s306 + $0x4] sm:$0xf] %v1576
        %1609 = vst [vmem:[%s306 + $0x8] sm:$0xf] %v1577
        %1610 = vst [vmem:[%s306 + $0xc] sm:$0xf] %v1578
        %1611 = vst [vmem:[%s306 + $0x10] sm:$0xf] %v1579
        %1612 = vst [vmem:[%s306 + $0x14] sm:$0xf] %v1580
        %1613 = vst [vmem:[%s306 + $0x18] sm:$0xf] %v1581
        %1614 = vst [vmem:[%s306 + $0x1c] sm:$0xf] %v1582
        %1615 = vst [vmem:[%s306 + $0x20] sm:$0xf] %v1583
        %1616 = vst [vmem:[%s306 + $0x24] sm:$0xf] %v1584
        %1617 = vst [vmem:[%s306 + $0x28] sm:$0xf] %v1585
        %1618 = vst [vmem:[%s306 + $0x2c] sm:$0xf] %v1586
        %1619 = vst [vmem:[%s306 + $0x30] sm:$0xf] %v1587
        %1620 = vst [vmem:[%s306 + $0x34] sm:$0xf] %v1588
        %1621 = vst [vmem:[%s306 + $0x38] sm:$0xf] %v1589
        %1622 = vst [vmem:[%s306 + $0x3c] sm:$0xf] %v1590
        %1623 = vst [vmem:[%s306 + $0x40] sm:$0xf] %v1591
        %1624 = vst [vmem:[%s306 + $0x44] sm:$0xf] %v1592
        %1625 = vst [vmem:[%s306 + $0x48] sm:$0xf] %v1593
        %1626 = vst [vmem:[%s306 + $0x4c] sm:$0xf] %v1594
        %1627 = vst [vmem:[%s306 + $0x50] sm:$0xf] %v1595
        %1628 = vst [vmem:[%s306 + $0x54] sm:$0xf] %v1596
        %1629 = vst [vmem:[%s306 + $0x58] sm:$0xf] %v1597
        %1630 = vst [vmem:[%s306 + $0x5c] sm:$0xf] %v1598
        %1631 = vst [vmem:[%s306 + $0x60] sm:$0xf] %v1599
        %1632 = vst [vmem:[%s306 + $0x64] sm:$0xf] %v1600
        %1633 = vst [vmem:[%s306 + $0x68] sm:$0xf] %v1601
        %1634 = vst [vmem:[%s306 + $0x6c] sm:$0xf] %v1602
        %1635 = vst [vmem:[%s306 + $0x70] sm:$0xf] %v1603
        %1636 = vst [vmem:[%s306 + $0x74] sm:$0xf] %v1604
        %1637 = vst [vmem:[%s306 + $0x78] sm:$0xf] %v1605
        %1638 = vst [vmem:[%s306 + $0x7c] sm:$0xf] %v1606
      $region44: #{dcn_bottleneck_forward.3} parent=35 // pred_fallthru
        _
      %s1639 = smul.u32 32, %s20
      %p1640 = scmp.lt.s32.totalorder %s1639, 63
      %s1641 = scalar_select %p1640, %s1639, 63
      %p1642 = scmp.lt.s32.totalorder %s21, 0
      %s1643 = scalar_select %p1642, %s21, 0
      %s1644 = sadd.s32 %s1643, %s1641
      %s1645 = smul.addr %s1644, 4
      %s1646 = scalar_lea.vmem %s4, %s1645
      // Predicated region
      $region45: #{dcn_bottleneck_forward.3} parent=35 // pred_check
        %p1647 = pneg %p162
      $region46: #{dcn_bottleneck_forward.3} parent=35 // pred_check_branch
        %1649 = sbr.rel (%p1647) target = $region48
      $region47: #{dcn_bottleneck_forward.3} parent=35 // pred_region
        %s1650 = smul.u32 32, %s20
      $region48: #{dcn_bottleneck_forward.3} parent=35 // pred_fallthru
        _
    $region36: #{dcn_bottleneck_forward.3} parent=5 // pred_fallthru
      _
    %p1651 = scmp.le.s32.totalorder 2, %s10
    // Predicated region
    $region49: #{dcn_bottleneck_forward.3} parent=5 // pred_check
      %p1652 = pneg %p1651
    $region50: #{dcn_bottleneck_forward.3} parent=5 // pred_check_branch
      %1654 = sbr.rel (%p1652) target = $region52
    $region51: #{dcn_bottleneck_forward.3} parent=5 // pred_region
      %s1655 = ssub.s32 %s10, 2
      // Predicated region
      $region53: #{dcn_bottleneck_forward.3} parent=51 // pred_check
        %p1656 = pneg %p168
      $region54: #{dcn_bottleneck_forward.3} parent=51 // pred_check_branch
        %1658 = sbr.rel (%p1656) target = $region56
      $region55: #{dcn_bottleneck_forward.3} parent=51 // pred_region
        %s1659 = smul.u32 32, %s23
        %p1660 = scmp.lt.s32.totalorder %s1659, 63
        %s1661 = scalar_select %p1660, %s1659, 63
        %p1662 = scmp.lt.s32.totalorder %s24, 0
        %s1663 = scalar_select %p1662, %s24, 0
        %s1664 = sadd.s32 %s1663, %s1661
        %s1665 = smul.addr %s1664, 4
        %s1666 = scalar_lea.vmem %s4, %s1665
      $region56: #{dcn_bottleneck_forward.3} parent=51 // pred_fallthru
        _
    $region52: #{dcn_bottleneck_forward.3} parent=5 // pred_fallthru
      _
  $region6: #{dcn_bottleneck_forward.3} parent=0 // loop_footer
    %s14 = sadd.s32 1, %s10
  $region7: #{dcn_bottleneck_forward.3} parent=0 // loop_footer_branch
    %9 = sbr.rel target = $region3
  $region8: #{dcn_bottleneck_forward.3} parent=0 // loop_exit
    _

// kernel: dcn_bottleneck_forward.5
$region0: #{dcn_bottleneck_forward.5}
  #allocation0 [shape = 'u32[]', space=smem, size = 0x4, offset = 0x4, fixed_abs, tag = 'smem constant byte address 0x4 - core index']
  #allocation1 [shape = 'u32[72,128]{1,0:T(1,128)}', space=vmem, size = 0x9000, scoped, tag = 'internal scratch']
  #allocation2 [shape = 'f32[512,256]{1,0:T(8,128)}', space=vmem, size = 0x80000, scoped, tag = 'scratch operand']
  %s0 = inlined_call_operand.vmem [shape: bf16[512,128], index: 0, kind: input, shape index: {}]
  %s1 = inlined_call_operand.vmem [shape: bf16[128,512], index: 1, kind: input, shape index: {}]
  %s2 = inlined_call_operand.vmem [shape: f32[1,512], index: 2, kind: input, shape index: {}]
  %s3 = inlined_call_operand.vmem [shape: f32[1,512], index: 3, kind: input, shape index: {}]
  %s4 = inlined_call_operand.vmem [shape: bf16[512,512], index: 4, kind: input, shape index: {}]
  %s5 = inlined_call_operand.hbm [shape: f32[512,512], index: 5, kind: output, shape index: {}]
  %s6 = sld [smem:[#allocation0]]
  $region137: #{dcn_bottleneck_forward.5} parent=0
    _
  %s8 = ssub.s32 1, %s6
  %s9 = scalar_select 0, %s8, %s6
  $region1: #{dcn_bottleneck_forward.5} parent=0
    #allocation3 [shape = 'u8[131072]{0}', space=vmem, size = 0x20000, scoped, tag = 'input window, operand 1']
    #allocation4 [shape = 'u8[524288]{0}', space=vmem, size = 0x80000, scoped, tag = 'input window, operand 4']
    #allocation5 [shape = 'u8[1048576]{0}', space=vmem, size = 0x100000, scoped, tag = 'output window, operand 0']
    #allocation6 [shape = 's32[2]{0}', space=sflag, size = 0x8, scoped, tag = 'scoped memory for dcn_bottleneck_forward.5']
    %10 = vsyncpa [#allocation6], 0
    %s11 = scalar_lea.sflag [#allocation6], 1
    %12 = vsyncpa %s11, 0
    loop: start=0, step=1, limit=4
    $region2: #{dcn_bottleneck_forward.5} parent=1 // loop_pre_header
      _
    $region3: #{dcn_bottleneck_forward.5} parent=1 // loop_header
      %s14 = sphi 0, %s18
      %p15 = scmp.ge.s32.totalorder %s14, 4
      %s21 = sphi 0, %s40
      %s22 = sphi 0, %s36
      %s23 = sphi 0, %s32
      %s24 = sphi 0, %s21
      %s25 = sphi 0, %s22
      %s26 = sphi 0, %s23
      %s27 = sphi 0, %s24
      %s28 = sphi 0, %s25
      %s29 = sphi 0, %s26
      %s45 = sphi 0, %s47
      %s48 = sphi 0, %s45
      %s49 = sphi 0, %s48
      %s65 = sphi 0, %s49
      %s73 = sphi 0, %s75
      %s76 = sphi 0, %s73
      %s77 = sphi 0, %s76
      %s93 = sphi 0, %s77
      %s99 = sphi 0, %s101
      %s102 = sphi 0, %s99
      %s103 = sphi 0, %s102
      %s119 = sphi 0, %s103
      %s125 = sphi 0, %s127
      %s128 = sphi 0, %s125
      %s129 = sphi 0, %s128
      %s145 = sphi 0, %s129
      %s153 = sphi 0, %s155
      %s156 = sphi 0, %s153
      %s157 = sphi 0, %s156
      %s173 = sphi 0, %s157
      %s181 = sphi 0, %s183
      %s184 = sphi 0, %s181
      %s185 = sphi 0, %s184
      %s201 = sphi 0, %s185
    $region4: #{dcn_bottleneck_forward.5} parent=1 // loop_header_branch
      %17 = sbr.rel (%p15) target = $region8
    $region5: #{dcn_bottleneck_forward.5} parent=1 // loop_body
      %s19 = ssub.s32 %s14, 1
      %s20 = ssub.s32 %s14, 2
      %s30 = sadd.s32 1, %s23
      %p31 = scmp.ge.s32.totalorder %s30, 1
      %s32 = scalar_select %p31, 0, %s30
      %s33 = sadd.s32 1, %s22
      %s34 = scalar_select %p31, %s33, %s22
      %p35 = scmp.ge.s32.totalorder %s34, 2
      %s36 = scalar_select %p35, 0, %s34
      %s37 = sadd.s32 1, %s21
      %s38 = scalar_select %p35, %s37, %s21
      %p39 = scmp.ge.s32.totalorder %s38, 1
      %s40 = scalar_select %p39, 0, %s38
      %s41 = ssub.s32 %s21, %s40
      %s42 = ssub.s32 %s23, %s32
      %s43 = sor.u32 %s41, %s42
      %p44 = scmp.eq.s32.totalorder %s43, 0
      %s46 = sadd.s32 %s45, 1
      %s47 = scalar_select %p44, %s45, %s46
      %p50 = pneg %p44
      %p51 = scmp.eq.s32.totalorder %s14, 1
      %p52 = por %p50, %p51
      %p53 = scmp.ne.s32.totalorder %s45, %s48
      %p54 = scmp.eq.s32.totalorder %s14, 0
      %p55 = por %p53, %p54
      %p56 = scmp.ne.s32.totalorder %s45, %s48
      %p57 = scmp.eq.s32.totalorder %s19, 1
      %p58 = por %p56, %p57
      %p59 = scmp.ne.s32.totalorder %s48, %s49
      %p60 = scmp.eq.s32.totalorder %s19, 0
      %p61 = por %p59, %p60
      %p62 = scmp.ne.s32.totalorder %s48, %s49
      %p63 = scmp.eq.s32.totalorder %s20, 1
      %p64 = por %p62, %p63
      %p66 = scmp.ne.s32.totalorder %s49, %s65
      %p67 = scmp.eq.s32.totalorder %s20, 0
      %p68 = por %p66, %p67
      %s69 = ssub.s32 %s23, %s32
      %s70 = ssub.s32 %s22, %s36
      %s71 = sor.u32 %s69, %s70
      %p72 = scmp.eq.s32.totalorder %s71, 0
      %s74 = sadd.s32 %s73, 1
      %s75 = scalar_select %p72, %s73, %s74
      %p78 = pneg %p72
      %p79 = scmp.eq.s32.totalorder %s14, 1
      %p80 = por %p78, %p79
      %p81 = scmp.ne.s32.totalorder %s73, %s76
      %p82 = scmp.eq.s32.totalorder %s14, 0
      %p83 = por %p81, %p82
      %p84 = scmp.ne.s32.totalorder %s73, %s76
      %p85 = scmp.eq.s32.totalorder %s19, 1
      %p86 = por %p84, %p85
      %p87 = scmp.ne.s32.totalorder %s76, %s77
      %p88 = scmp.eq.s32.totalorder %s19, 0
      %p89 = por %p87, %p88
      %p90 = scmp.ne.s32.totalorder %s76, %s77
      %p91 = scmp.eq.s32.totalorder %s20, 1
      %p92 = por %p90, %p91
      %p94 = scmp.ne.s32.totalorder %s77, %s93
      %p95 = scmp.eq.s32.totalorder %s20, 0
      %p96 = por %p94, %p95
      %s97 = ssub.s32 %s22, %s36
      %p98 = scmp.eq.s32.totalorder %s97, 0
      %s100 = sadd.s32 %s99, 1
      %s101 = scalar_select %p98, %s99, %s100
      %p104 = pneg %p98
      %p105 = scmp.eq.s32.totalorder %s14, 1
      %p106 = por %p104, %p105
      %p107 = scmp.ne.s32.totalorder %s99, %s102
      %p108 = scmp.eq.s32.totalorder %s14, 0
      %p109 = por %p107, %p108
      %p110 = scmp.ne.s32.totalorder %s99, %s102
      %p111 = scmp.eq.s32.totalorder %s19, 1
      %p112 = por %p110, %p111
      %p113 = scmp.ne.s32.totalorder %s102, %s103
      %p114 = scmp.eq.s32.totalorder %s19, 0
      %p115 = por %p113, %p114
      %p116 = scmp.ne.s32.totalorder %s102, %s103
      %p117 = scmp.eq.s32.totalorder %s20, 1
      %p118 = por %p116, %p117
      %p120 = scmp.ne.s32.totalorder %s103, %s119
      %p121 = scmp.eq.s32.totalorder %s20, 0
      %p122 = por %p120, %p121
      %s123 = ssub.s32 %s22, %s36
      %p124 = scmp.eq.s32.totalorder %s123, 0
      %s126 = sadd.s32 %s125, 1
      %s127 = scalar_select %p124, %s125, %s126
      %p130 = pneg %p124
      %p131 = scmp.eq.s32.totalorder %s14, 1
      %p132 = por %p130, %p131
      %p133 = scmp.ne.s32.totalorder %s125, %s128
      %p134 = scmp.eq.s32.totalorder %s14, 0
      %p135 = por %p133, %p134
      %p136 = scmp.ne.s32.totalorder %s125, %s128
      %p137 = scmp.eq.s32.totalorder %s19, 1
      %p138 = por %p136, %p137
      %p139 = scmp.ne.s32.totalorder %s128, %s129
      %p140 = scmp.eq.s32.totalorder %s19, 0
      %p141 = por %p139, %p140
      %p142 = scmp.ne.s32.totalorder %s128, %s129
      %p143 = scmp.eq.s32.totalorder %s20, 1
      %p144 = por %p142, %p143
      %p146 = scmp.ne.s32.totalorder %s129, %s145
      %p147 = scmp.eq.s32.totalorder %s20, 0
      %p148 = por %p146, %p147
      %s149 = ssub.s32 %s21, %s40
      %s150 = ssub.s32 %s22, %s36
      %s151 = sor.u32 %s149, %s150
      %p152 = scmp.eq.s32.totalorder %s151, 0
      %s154 = sadd.s32 %s153, 1
      %s155 = scalar_select %p152, %s153, %s154
      %p158 = pneg %p152
      %p159 = scmp.eq.s32.totalorder %s14, 1
      %p160 = por %p158, %p159
      %p161 = scmp.ne.s32.totalorder %s153, %s156
      %p162 = scmp.eq.s32.totalorder %s14, 0
      %p163 = por %p161, %p162
      %p164 = scmp.ne.s32.totalorder %s153, %s156
      %p165 = scmp.eq.s32.totalorder %s19, 1
      %p166 = por %p164, %p165
      %p167 = scmp.ne.s32.totalorder %s156, %s157
      %p168 = scmp.eq.s32.totalorder %s19, 0
      %p169 = por %p167, %p168
      %p170 = scmp.ne.s32.totalorder %s156, %s157
      %p171 = scmp.eq.s32.totalorder %s20, 1
      %p172 = por %p170, %p171
      %p174 = scmp.ne.s32.totalorder %s157, %s173
      %p175 = scmp.eq.s32.totalorder %s20, 0
      %p176 = por %p174, %p175
      %s177 = ssub.s32 %s21, %s40
      %s178 = ssub.s32 %s22, %s36
      %s179 = sor.u32 %s177, %s178
      %p180 = scmp.eq.s32.totalorder %s179, 0
      %s182 = sadd.s32 %s181, 1
      %s183 = scalar_select %p180, %s181, %s182
      %p186 = pneg %p180
      %p187 = scmp.eq.s32.totalorder %s14, 1
      %p188 = por %p186, %p187
      %p189 = scmp.ne.s32.totalorder %s181, %s184
      %p190 = scmp.eq.s32.totalorder %s14, 0
      %p191 = por %p189, %p190
      %p192 = scmp.ne.s32.totalorder %s181, %s184
      %p193 = scmp.eq.s32.totalorder %s19, 1
      %p194 = por %p192, %p193
      %p195 = scmp.ne.s32.totalorder %s184, %s185
      %p196 = scmp.eq.s32.totalorder %s19, 0
      %p197 = por %p195, %p196
      %p198 = scmp.ne.s32.totalorder %s184, %s185
      %p199 = scmp.eq.s32.totalorder %s20, 1
      %p200 = por %p198, %p199
      %p202 = scmp.ne.s32.totalorder %s185, %s201
      %p203 = scmp.eq.s32.totalorder %s20, 0
      %p204 = por %p202, %p203
      %p205 = scmp.le.s32.totalorder 1, %s14
      %p206 = scmp.lt.s32.totalorder %s14, 3
      %p207 = pnand %p205, %p206
      %p208 = pneg %p207
      // Predicated region
      $region9: #{dcn_bottleneck_forward.5} parent=5 // pred_check
        _
      $region10: #{dcn_bottleneck_forward.5} parent=5 // pred_check_branch
        %210 = sbr.rel (%p207) target = $region12
      $region11: #{dcn_bottleneck_forward.5} parent=5 // pred_region
        %s211 = ssub.s32 %s14, 1
        // Predicated region
        $region13: #{dcn_bottleneck_forward.5} parent=11 // pred_check
          %p212 = pneg %p61
        $region14: #{dcn_bottleneck_forward.5} parent=11 // pred_check_branch
          %214 = sbr.rel (%p212) target = $region16
        $region15: #{dcn_bottleneck_forward.5} parent=11 // pred_region
          %s215 = smul.u32 64, %s24
          %p216 = scmp.lt.s32.totalorder %s215, 63
          %s217 = scalar_select %p216, %s215, 63
          %p218 = scmp.lt.s32.totalorder %s26, 0
          %s219 = scalar_select %p218, %s26, 0
          %s220 = sadd.s32 %s219, %s217
          %s221 = smul.addr %s220, 4
          %s222 = scalar_lea.vmem %s0, %s221
          %s223 = smul.u32 64, %s24
        $region16: #{dcn_bottleneck_forward.5} parent=11 // pred_fallthru
          _
      $region12: #{dcn_bottleneck_forward.5} parent=5 // pred_fallthru
        _
      %p224 = scmp.lt.s32.totalorder %s14, 2
      // Predicated region
      $region17: #{dcn_bottleneck_forward.5} parent=5 // pred_check
        %p225 = pneg %p224
      $region18: #{dcn_bottleneck_forward.5} parent=5 // pred_check_branch
        %227 = sbr.rel (%p225) target = $region20
      $region19: #{dcn_bottleneck_forward.5} parent=5 // pred_region
        // Predicated region
        $region21: #{dcn_bottleneck_forward.5} parent=19 // pred_check
          %p228 = pneg %p83
        $region22: #{dcn_bottleneck_forward.5} parent=19 // pred_check_branch
          %230 = sbr.rel (%p228) target = $region24
        $region23: #{dcn_bottleneck_forward.5} parent=19 // pred_region
          %s231 = sand.u32 %s73, 1
          %s232 = sand.u32 %s73, 1
          %s233 = smul.addr %s232, 128
          %s234 = scalar_lea.vmem [#allocation3], %s233
          %s235 = smul.u32 16, %s23
          %s236 = smul.u32 2, %s22
          %s237 = smul.addr %s235, 4
          %s238 = sadd.s32 %s236, %s237
          %s239 = smul.addr %s238, 4
          %s240 = scalar_lea.vmem %s1, %s239
          // Predicated region
          $region25: #{dcn_bottleneck_forward.5} parent=23 // pred_check
            _
          $region26: #{dcn_bottleneck_forward.5} parent=23 // pred_check_branch
            %242 = sbr.rel (0) target = $region28
          $region27: #{dcn_bottleneck_forward.5} parent=23 // pred_region
            // Predicated region
            $region29: #{dcn_bottleneck_forward.5} parent=27 // pred_check
              _
            $region30: #{dcn_bottleneck_forward.5} parent=27 // pred_check_branch
              %244 = sbr.rel (0) target = $region32
            $region31: #{dcn_bottleneck_forward.5} parent=27 // pred_region
              // Predicated region
              $region44: #{dcn_bottleneck_forward.5} parent=31 // pred_check
                _
              $region45: #{dcn_bottleneck_forward.5} parent=31 // pred_check_branch
                %290 = sbr.rel (0) target = $region47
              $region46: #{dcn_bottleneck_forward.5} parent=31 // pred_region
                loop: start=0, step=1, limit=1
                $region48: #{dcn_bottleneck_forward.5} parent=46 // loop_pre_header
                  _
                $region49: #{dcn_bottleneck_forward.5} parent=46 // loop_header
                  %s292 = sphi 0, %s296
                  %p293 = scmp.ge.s32.totalorder %s292, 1
                  %s297 = sphi %s240, %s240
                  %s298 = sphi %s234, %s234
                $region50: #{dcn_bottleneck_forward.5} parent=46 // loop_header_branch
                  %295 = sbr.rel (%p293) target = $region54
                $region51: #{dcn_bottleneck_forward.5} parent=46 // loop_body
                  %v299 = vld [vmem:[%s297] sm:$0xff]
                  %300 = vst [vmem:[%s298] sm:$0xff] %v299
                  %v301 = vld [vmem:[%s297 + $0x10] sm:$0xff]
                  %302 = vst [vmem:[%s298 + $0x8] sm:$0xff] %v301
                  %v303 = vld [vmem:[%s297 + $0x20] sm:$0xff]
                  %304 = vst [vmem:[%s298 + $0x10] sm:$0xff] %v303
                  %v305 = vld [vmem:[%s297 + $0x30] sm:$0xff]
                  %306 = vst [vmem:[%s298 + $0x18] sm:$0xff] %v305
                  %v307 = vld [vmem:[%s297 + $0x40] sm:$0xff]
                  %308 = vst [vmem:[%s298 + $0x20] sm:$0xff] %v307
                  %v309 = vld [vmem:[%s297 + $0x50] sm:$0xff]
                  %310 = vst [vmem:[%s298 + $0x28] sm:$0xff] %v309
                  %v311 = vld [vmem:[%s297 + $0x60] sm:$0xff]
                  %312 = vst [vmem:[%s298 + $0x30] sm:$0xff] %v311
                  %v313 = vld [vmem:[%s297 + $0x70] sm:$0xff]
                  %314 = vst [vmem:[%s298 + $0x38] sm:$0xff] %v313
                  %v315 = vld [vmem:[%s297 + $0x80] sm:$0xff]
                  %316 = vst [vmem:[%s298 + $0x40] sm:$0xff] %v315
                  %v317 = vld [vmem:[%s297 + $0x90] sm:$0xff]
                  %318 = vst [vmem:[%s298 + $0x48] sm:$0xff] %v317
                  %v319 = vld [vmem:[%s297 + $0xa0] sm:$0xff]
                  %320 = vst [vmem:[%s298 + $0x50] sm:$0xff] %v319
                  %v321 = vld [vmem:[%s297 + $0xb0] sm:$0xff]
                  %322 = vst [vmem:[%s298 + $0x58] sm:$0xff] %v321
                  %v323 = vld [vmem:[%s297 + $0xc0] sm:$0xff]
                  %324 = vst [vmem:[%s298 + $0x60] sm:$0xff] %v323
                  %v325 = vld [vmem:[%s297 + $0xd0] sm:$0xff]
                  %326 = vst [vmem:[%s298 + $0x68] sm:$0xff] %v325
                  %v327 = vld [vmem:[%s297 + $0xe0] sm:$0xff]
                  %328 = vst [vmem:[%s298 + $0x70] sm:$0xff] %v327
                  %v329 = vld [vmem:[%s297 + $0xf0] sm:$0xff]
                  %330 = vst [vmem:[%s298 + $0x78] sm:$0xff] %v329
                $region52: #{dcn_bottleneck_forward.5} parent=46 // loop_footer
                  %s296 = sadd.s32 1, %s292
                $region53: #{dcn_bottleneck_forward.5} parent=46 // loop_footer_branch
                  %291 = sbr.rel target = $region49
                $region54: #{dcn_bottleneck_forward.5} parent=46 // loop_exit
                  _
              $region47: #{dcn_bottleneck_forward.5} parent=31 // pred_fallthru
                _
              // Predicated region
              $region55: #{dcn_bottleneck_forward.5} parent=31 // pred_check
                _
              $region56: #{dcn_bottleneck_forward.5} parent=31 // pred_check_branch
                %332 = sbr.rel target = $region58
              $region57: #{dcn_bottleneck_forward.5} parent=31 // pred_region
                _
              $region58: #{dcn_bottleneck_forward.5} parent=31 // pred_fallthru
                _
            $region32: #{dcn_bottleneck_forward.5} parent=27 // pred_fallthru
              _
            // Predicated region
            $region33: #{dcn_bottleneck_forward.5} parent=27 // pred_check
              _
            $region34: #{dcn_bottleneck_forward.5} parent=27 // pred_check_branch
              %246 = sbr.rel target = $region36
            $region35: #{dcn_bottleneck_forward.5} parent=27 // pred_region
              %s248 = ssub.s32 256, 1
              loop: start=0, step=1, limit=1
              $region37: #{dcn_bottleneck_forward.5} parent=35 // loop_pre_header
                _
              $region38: #{dcn_bottleneck_forward.5} parent=35 // loop_header
                %s250 = sphi 0, %s254
                %p251 = scmp.ge.s32.totalorder %s250, 1
                %s255 = sphi %s240, %s240
                %s256 = sphi %s234, %s234
              $region39: #{dcn_bottleneck_forward.5} parent=35 // loop_header_branch
                %253 = sbr.rel (%p251) target = $region43
              $region40: #{dcn_bottleneck_forward.5} parent=35 // loop_body
                %v257 = vld [vmem:[%s255] sm:%s248]
                %258 = vst [vmem:[%s256] sm:%s248] %v257
                %v259 = vld [vmem:[%s255 + $0x10] sm:%s248]
                %260 = vst [vmem:[%s256 + $0x8] sm:%s248] %v259
                %v261 = vld [vmem:[%s255 + $0x20] sm:%s248]
                %262 = vst [vmem:[%s256 + $0x10] sm:%s248] %v261
                %v263 = vld [vmem:[%s255 + $0x30] sm:%s248]
                %264 = vst [vmem:[%s256 + $0x18] sm:%s248] %v263
                %v265 = vld [vmem:[%s255 + $0x40] sm:%s248]
                %266 = vst [vmem:[%s256 + $0x20] sm:%s248] %v265
                %v267 = vld [vmem:[%s255 + $0x50] sm:%s248]
                %268 = vst [vmem:[%s256 + $0x28] sm:%s248] %v267
                %v269 = vld [vmem:[%s255 + $0x60] sm:%s248]
                %270 = vst [vmem:[%s256 + $0x30] sm:%s248] %v269
                %v271 = vld [vmem:[%s255 + $0x70] sm:%s248]
                %272 = vst [vmem:[%s256 + $0x38] sm:%s248] %v271
                %v273 = vld [vmem:[%s255 + $0x80] sm:%s248]
                %274 = vst [vmem:[%s256 + $0x40] sm:%s248] %v273
                %v275 = vld [vmem:[%s255 + $0x90] sm:%s248]
                %276 = vst [vmem:[%s256 + $0x48] sm:%s248] %v275
                %v277 = vld [vmem:[%s255 + $0xa0] sm:%s248]
                %278 = vst [vmem:[%s256 + $0x50] sm:%s248] %v277
                %v279 = vld [vmem:[%s255 + $0xb0] sm:%s248]
                %280 = vst [vmem:[%s256 + $0x58] sm:%s248] %v279
                %v281 = vld [vmem:[%s255 + $0xc0] sm:%s248]
                %282 = vst [vmem:[%s256 + $0x60] sm:%s248] %v281
                %v283 = vld [vmem:[%s255 + $0xd0] sm:%s248]
                %284 = vst [vmem:[%s256 + $0x68] sm:%s248] %v283
                %v285 = vld [vmem:[%s255 + $0xe0] sm:%s248]
                %286 = vst [vmem:[%s256 + $0x70] sm:%s248] %v285
                %v287 = vld [vmem:[%s255 + $0xf0] sm:%s248]
                %288 = vst [vmem:[%s256 + $0x78] sm:%s248] %v287
              $region41: #{dcn_bottleneck_forward.5} parent=35 // loop_footer
                %s254 = sadd.s32 1, %s250
              $region42: #{dcn_bottleneck_forward.5} parent=35 // loop_footer_branch
                %249 = sbr.rel target = $region38
              $region43: #{dcn_bottleneck_forward.5} parent=35 // loop_exit
                _
            $region36: #{dcn_bottleneck_forward.5} parent=27 // pred_fallthru
              _
          $region28: #{dcn_bottleneck_forward.5} parent=23 // pred_fallthru
            _
          %333 = vnop
        $region24: #{dcn_bottleneck_forward.5} parent=19 // pred_fallthru
          _
        // Predicated region
        $region59: #{dcn_bottleneck_forward.5} parent=19 // pred_check
          %p334 = pneg %p109
        $region60: #{dcn_bottleneck_forward.5} parent=19 // pred_check_branch
          %336 = sbr.rel (%p334) target = $region62
        $region61: #{dcn_bottleneck_forward.5} parent=19 // pred_region
          %s337 = smul.u32 2, %s22
          %p338 = scmp.lt.s32.totalorder %s337, 3
          %s339 = scalar_select %p338, %s337, 3
          %s340 = scalar_lea.vmem %s2, %s339
          %s341 = smul.u32 2, %s22
        $region62: #{dcn_bottleneck_forward.5} parent=19 // pred_fallthru
          _
        // Predicated region
        $region63: #{dcn_bottleneck_forward.5} parent=19 // pred_check
          %p342 = pneg %p135
        $region64: #{dcn_bottleneck_forward.5} parent=19 // pred_check_branch
          %344 = sbr.rel (%p342) target = $region66
        $region65: #{dcn_bottleneck_forward.5} parent=19 // pred_region
          %s345 = smul.u32 2, %s22
          %p346 = scmp.lt.s32.totalorder %s345, 3
          %s347 = scalar_select %p346, %s345, 3
          %s348 = scalar_lea.vmem %s3, %s347
          %s349 = smul.u32 2, %s22
        $region66: #{dcn_bottleneck_forward.5} parent=19 // pred_fallthru
          _
        // Predicated region
        $region67: #{dcn_bottleneck_forward.5} parent=19 // pred_check
          %p350 = pneg %p163
        $region68: #{dcn_bottleneck_forward.5} parent=19 // pred_check_branch
          %352 = sbr.rel (%p350) target = $region70
        $region69: #{dcn_bottleneck_forward.5} parent=19 // pred_region
          %s353 = sand.u32 %s153, 1
          %s354 = sand.u32 %s153, 1
          %s355 = smul.addr %s354, 512
          %s356 = scalar_lea.vmem [#allocation4], %s355
          %s357 = smul.u32 64, %s21
          %s358 = smul.u32 2, %s22
          %s359 = smul.addr %s357, 4
          %s360 = sadd.s32 %s358, %s359
          %s361 = smul.addr %s360, 4
          %s362 = scalar_lea.vmem %s4, %s361
          // Predicated region
          $region71: #{dcn_bottleneck_forward.5} parent=69 // pred_check
            _
          $region72: #{dcn_bottleneck_forward.5} parent=69 // pred_check_branch
            %364 = sbr.rel (0) target = $region74
          $region73: #{dcn_bottleneck_forward.5} parent=69 // pred_region
            // Predicated region
            $region75: #{dcn_bottleneck_forward.5} parent=73 // pred_check
              _
            $region76: #{dcn_bottleneck_forward.5} parent=73 // pred_check_branch
              %366 = sbr.rel (0) target = $region78
            $region77: #{dcn_bottleneck_forward.5} parent=73 // pred_region
              // Predicated region
              $region90: #{dcn_bottleneck_forward.5} parent=77 // pred_check
                _
              $region91: #{dcn_bottleneck_forward.5} parent=77 // pred_check_branch
                %508 = sbr.rel (0) target = $region93
              $region92: #{dcn_bottleneck_forward.5} parent=77 // pred_region
                loop: start=0, step=1, limit=1
                $region94: #{dcn_bottleneck_forward.5} parent=92 // loop_pre_header
                  _
                $region95: #{dcn_bottleneck_forward.5} parent=92 // loop_header
                  %s510 = sphi 0, %s514
                  %p511 = scmp.ge.s32.totalorder %s510, 1
                  %s515 = sphi %s362, %s362
                  %s516 = sphi %s356, %s356
                $region96: #{dcn_bottleneck_forward.5} parent=92 // loop_header_branch
                  %513 = sbr.rel (%p511) target = $region100
                $region97: #{dcn_bottleneck_forward.5} parent=92 // loop_body
                  %v517 = vld [vmem:[%s515] sm:$0xff]
                  %518 = vst [vmem:[%s516] sm:$0xff] %v517
                  %v519 = vld [vmem:[%s515 + $0x10] sm:$0xff]
                  %520 = vst [vmem:[%s516 + $0x8] sm:$0xff] %v519
                  %v521 = vld [vmem:[%s515 + $0x20] sm:$0xff]
                  %522 = vst [vmem:[%s516 + $0x10] sm:$0xff] %v521
                  %v523 = vld [vmem:[%s515 + $0x30] sm:$0xff]
                  %524 = vst [vmem:[%s516 + $0x18] sm:$0xff] %v523
                  %v525 = vld [vmem:[%s515 + $0x40] sm:$0xff]
                  %526 = vst [vmem:[%s516 + $0x20] sm:$0xff] %v525
                  %v527 = vld [vmem:[%s515 + $0x50] sm:$0xff]
                  %528 = vst [vmem:[%s516 + $0x28] sm:$0xff] %v527
                  %v529 = vld [vmem:[%s515 + $0x60] sm:$0xff]
                  %530 = vst [vmem:[%s516 + $0x30] sm:$0xff] %v529
                  %v531 = vld [vmem:[%s515 + $0x70] sm:$0xff]
                  %532 = vst [vmem:[%s516 + $0x38] sm:$0xff] %v531
                  %v533 = vld [vmem:[%s515 + $0x80] sm:$0xff]
                  %534 = vst [vmem:[%s516 + $0x40] sm:$0xff] %v533
                  %v535 = vld [vmem:[%s515 + $0x90] sm:$0xff]
                  %536 = vst [vmem:[%s516 + $0x48] sm:$0xff] %v535
                  %v537 = vld [vmem:[%s515 + $0xa0] sm:$0xff]
                  %538 = vst [vmem:[%s516 + $0x50] sm:$0xff] %v537
                  %v539 = vld [vmem:[%s515 + $0xb0] sm:$0xff]
                  %540 = vst [vmem:[%s516 + $0x58] sm:$0xff] %v539
                  %v541 = vld [vmem:[%s515 + $0xc0] sm:$0xff]
                  %542 = vst [vmem:[%s516 + $0x60] sm:$0xff] %v541
                  %v543 = vld [vmem:[%s515 + $0xd0] sm:$0xff]
                  %544 = vst [vmem:[%s516 + $0x68] sm:$0xff] %v543
                  %v545 = vld [vmem:[%s515 + $0xe0] sm:$0xff]
                  %546 = vst [vmem:[%s516 + $0x70] sm:$0xff] %v545
                  %v547 = vld [vmem:[%s515 + $0xf0] sm:$0xff]
                  %548 = vst [vmem:[%s516 + $0x78] sm:$0xff] %v547
                  %v549 = vld [vmem:[%s515 + $0x100] sm:$0xff]
                  %550 = vst [vmem:[%s516 + $0x80] sm:$0xff] %v549
                  %v551 = vld [vmem:[%s515 + $0x110] sm:$0xff]
                  %552 = vst [vmem:[%s516 + $0x88] sm:$0xff] %v551
                  %v553 = vld [vmem:[%s515 + $0x120] sm:$0xff]
                  %554 = vst [vmem:[%s516 + $0x90] sm:$0xff] %v553
                  %v555 = vld [vmem:[%s515 + $0x130] sm:$0xff]
                  %556 = vst [vmem:[%s516 + $0x98] sm:$0xff] %v555
                  %v557 = vld [vmem:[%s515 + $0x140] sm:$0xff]
                  %558 = vst [vmem:[%s516 + $0xa0] sm:$0xff] %v557
                  %v559 = vld [vmem:[%s515 + $0x150] sm:$0xff]
                  %560 = vst [vmem:[%s516 + $0xa8] sm:$0xff] %v559
                  %v561 = vld [vmem:[%s515 + $0x160] sm:$0xff]
                  %562 = vst [vmem:[%s516 + $0xb0] sm:$0xff] %v561
                  %v563 = vld [vmem:[%s515 + $0x170] sm:$0xff]
                  %564 = vst [vmem:[%s516 + $0xb8] sm:$0xff] %v563
                  %v565 = vld [vmem:[%s515 + $0x180] sm:$0xff]
                  %566 = vst [vmem:[%s516 + $0xc0] sm:$0xff] %v565
                  %v567 = vld [vmem:[%s515 + $0x190] sm:$0xff]
                  %568 = vst [vmem:[%s516 + $0xc8] sm:$0xff] %v567
                  %v569 = vld [vmem:[%s515 + $0x1a0] sm:$0xff]
                  %570 = vst [vmem:[%s516 + $0xd0] sm:$0xff] %v569
                  %v571 = vld [vmem:[%s515 + $0x1b0] sm:$0xff]
                  %572 = vst [vmem:[%s516 + $0xd8] sm:$0xff] %v571
                  %v573 = vld [vmem:[%s515 + $0x1c0] sm:$0xff]
                  %574 = vst [vmem:[%s516 + $0xe0] sm:$0xff] %v573
                  %v575 = vld [vmem:[%s515 + $0x1d0] sm:$0xff]
                  %576 = vst [vmem:[%s516 + $0xe8] sm:$0xff] %v575
                  %v577 = vld [vmem:[%s515 + $0x1e0] sm:$0xff]
                  %578 = vst [vmem:[%s516 + $0xf0] sm:$0xff] %v577
                  %v579 = vld [vmem:[%s515 + $0x1f0] sm:$0xff]
                  %580 = vst [vmem:[%s516 + $0xf8] sm:$0xff] %v579
                  %v581 = vld [vmem:[%s515 + $0x200] sm:$0xff]
                  %582 = vst [vmem:[%s516 + $0x100] sm:$0xff] %v581
                  %v583 = vld [vmem:[%s515 + $0x210] sm:$0xff]
                  %584 = vst [vmem:[%s516 + $0x108] sm:$0xff] %v583
                  %v585 = vld [vmem:[%s515 + $0x220] sm:$0xff]
                  %586 = vst [vmem:[%s516 + $0x110] sm:$0xff] %v585
                  %v587 = vld [vmem:[%s515 + $0x230] sm:$0xff]
                  %588 = vst [vmem:[%s516 + $0x118] sm:$0xff] %v587
                  %v589 = vld [vmem:[%s515 + $0x240] sm:$0xff]
                  %590 = vst [vmem:[%s516 + $0x120] sm:$0xff] %v589
                  %v591 = vld [vmem:[%s515 + $0x250] sm:$0xff]
                  %592 = vst [vmem:[%s516 + $0x128] sm:$0xff] %v591
                  %v593 = vld [vmem:[%s515 + $0x260] sm:$0xff]
                  %594 = vst [vmem:[%s516 + $0x130] sm:$0xff] %v593
                  %v595 = vld [vmem:[%s515 + $0x270] sm:$0xff]
                  %596 = vst [vmem:[%s516 + $0x138] sm:$0xff] %v595
                  %v597 = vld [vmem:[%s515 + $0x280] sm:$0xff]
                  %598 = vst [vmem:[%s516 + $0x140] sm:$0xff] %v597
                  %v599 = vld [vmem:[%s515 + $0x290] sm:$0xff]
                  %600 = vst [vmem:[%s516 + $0x148] sm:$0xff] %v599
                  %v601 = vld [vmem:[%s515 + $0x2a0] sm:$0xff]
                  %602 = vst [vmem:[%s516 + $0x150] sm:$0xff] %v601
                  %v603 = vld [vmem:[%s515 + $0x2b0] sm:$0xff]
                  %604 = vst [vmem:[%s516 + $0x158] sm:$0xff] %v603
                  %v605 = vld [vmem:[%s515 + $0x2c0] sm:$0xff]
                  %606 = vst [vmem:[%s516 + $0x160] sm:$0xff] %v605
                  %v607 = vld [vmem:[%s515 + $0x2d0] sm:$0xff]
                  %608 = vst [vmem:[%s516 + $0x168] sm:$0xff] %v607
                  %v609 = vld [vmem:[%s515 + $0x2e0] sm:$0xff]
                  %610 = vst [vmem:[%s516 + $0x170] sm:$0xff] %v609
                  %v611 = vld [vmem:[%s515 + $0x2f0] sm:$0xff]
                  %612 = vst [vmem:[%s516 + $0x178] sm:$0xff] %v611
                  %v613 = vld [vmem:[%s515 + $0x300] sm:$0xff]
                  %614 = vst [vmem:[%s516 + $0x180] sm:$0xff] %v613
                  %v615 = vld [vmem:[%s515 + $0x310] sm:$0xff]
                  %616 = vst [vmem:[%s516 + $0x188] sm:$0xff] %v615
                  %v617 = vld [vmem:[%s515 + $0x320] sm:$0xff]
                  %618 = vst [vmem:[%s516 + $0x190] sm:$0xff] %v617
                  %v619 = vld [vmem:[%s515 + $0x330] sm:$0xff]
                  %620 = vst [vmem:[%s516 + $0x198] sm:$0xff] %v619
                  %v621 = vld [vmem:[%s515 + $0x340] sm:$0xff]
                  %622 = vst [vmem:[%s516 + $0x1a0] sm:$0xff] %v621
                  %v623 = vld [vmem:[%s515 + $0x350] sm:$0xff]
                  %624 = vst [vmem:[%s516 + $0x1a8] sm:$0xff] %v623
                  %v625 = vld [vmem:[%s515 + $0x360] sm:$0xff]
                  %626 = vst [vmem:[%s516 + $0x1b0] sm:$0xff] %v625
                  %v627 = vld [vmem:[%s515 + $0x370] sm:$0xff]
                  %628 = vst [vmem:[%s516 + $0x1b8] sm:$0xff] %v627
                  %v629 = vld [vmem:[%s515 + $0x380] sm:$0xff]
                  %630 = vst [vmem:[%s516 + $0x1c0] sm:$0xff] %v629
                  %v631 = vld [vmem:[%s515 + $0x390] sm:$0xff]
                  %632 = vst [vmem:[%s516 + $0x1c8] sm:$0xff] %v631
                  %v633 = vld [vmem:[%s515 + $0x3a0] sm:$0xff]
                  %634 = vst [vmem:[%s516 + $0x1d0] sm:$0xff] %v633
                  %v635 = vld [vmem:[%s515 + $0x3b0] sm:$0xff]
                  %636 = vst [vmem:[%s516 + $0x1d8] sm:$0xff] %v635
                  %v637 = vld [vmem:[%s515 + $0x3c0] sm:$0xff]
                  %638 = vst [vmem:[%s516 + $0x1e0] sm:$0xff] %v637
                  %v639 = vld [vmem:[%s515 + $0x3d0] sm:$0xff]
                  %640 = vst [vmem:[%s516 + $0x1e8] sm:$0xff] %v639
                  %v641 = vld [vmem:[%s515 + $0x3e0] sm:$0xff]
                  %642 = vst [vmem:[%s516 + $0x1f0] sm:$0xff] %v641
                  %v643 = vld [vmem:[%s515 + $0x3f0] sm:$0xff]
                  %644 = vst [vmem:[%s516 + $0x1f8] sm:$0xff] %v643
                $region98: #{dcn_bottleneck_forward.5} parent=92 // loop_footer
                  %s514 = sadd.s32 1, %s510
                $region99: #{dcn_bottleneck_forward.5} parent=92 // loop_footer_branch
                  %509 = sbr.rel target = $region95
                $region100: #{dcn_bottleneck_forward.5} parent=92 // loop_exit
                  _
              $region93: #{dcn_bottleneck_forward.5} parent=77 // pred_fallthru
                _
              // Predicated region
              $region101: #{dcn_bottleneck_forward.5} parent=77 // pred_check
                _
              $region102: #{dcn_bottleneck_forward.5} parent=77 // pred_check_branch
                %646 = sbr.rel target = $region104
              $region103: #{dcn_bottleneck_forward.5} parent=77 // pred_region
                _
              $region104: #{dcn_bottleneck_forward.5} parent=77 // pred_fallthru
                _
            $region78: #{dcn_bottleneck_forward.5} parent=73 // pred_fallthru
              _
            // Predicated region
            $region79: #{dcn_bottleneck_forward.5} parent=73 // pred_check
              _
            $region80: #{dcn_bottleneck_forward.5} parent=73 // pred_check_branch
              %368 = sbr.rel target = $region82
            $region81: #{dcn_bottleneck_forward.5} parent=73 // pred_region
              %s370 = ssub.s32 256, 1
              loop: start=0, step=1, limit=1
              $region83: #{dcn_bottleneck_forward.5} parent=81 // loop_pre_header
                _
              $region84: #{dcn_bottleneck_forward.5} parent=81 // loop_header
                %s372 = sphi 0, %s376
                %p373 = scmp.ge.s32.totalorder %s372, 1
                %s377 = sphi %s362, %s362
                %s378 = sphi %s356, %s356
              $region85: #{dcn_bottleneck_forward.5} parent=81 // loop_header_branch
                %375 = sbr.rel (%p373) target = $region89
              $region86: #{dcn_bottleneck_forward.5} parent=81 // loop_body
                %v379 = vld [vmem:[%s377] sm:%s370]
                %380 = vst [vmem:[%s378] sm:%s370] %v379
                %v381 = vld [vmem:[%s377 + $0x10] sm:%s370]
                %382 = vst [vmem:[%s378 + $0x8] sm:%s370] %v381
                %v383 = vld [vmem:[%s377 + $0x20] sm:%s370]
                %384 = vst [vmem:[%s378 + $0x10] sm:%s370] %v383
                %v385 = vld [vmem:[%s377 + $0x30] sm:%s370]
                %386 = vst [vmem:[%s378 + $0x18] sm:%s370] %v385
                %v387 = vld [vmem:[%s377 + $0x40] sm:%s370]
                %388 = vst [vmem:[%s378 + $0x20] sm:%s370] %v387
                %v389 = vld [vmem:[%s377 + $0x50] sm:%s370]
                %390 = vst [vmem:[%s378 + $0x28] sm:%s370] %v389
                %v391 = vld [vmem:[%s377 + $0x60] sm:%s370]
                %392 = vst [vmem:[%s378 + $0x30] sm:%s370] %v391
                %v393 = vld [vmem:[%s377 + $0x70] sm:%s370]
                %394 = vst [vmem:[%s378 + $0x38] sm:%s370] %v393
                %v395 = vld [vmem:[%s377 + $0x80] sm:%s370]
                %396 = vst [vmem:[%s378 + $0x40] sm:%s370] %v395
                %v397 = vld [vmem:[%s377 + $0x90] sm:%s370]
                %398 = vst [vmem:[%s378 + $0x48] sm:%s370] %v397
                %v399 = vld [vmem:[%s377 + $0xa0] sm:%s370]
                %400 = vst [vmem:[%s378 + $0x50] sm:%s370] %v399
                %v401 = vld [vmem:[%s377 + $0xb0] sm:%s370]
                %402 = vst [vmem:[%s378 + $0x58] sm:%s370] %v401
                %v403 = vld [vmem:[%s377 + $0xc0] sm:%s370]
                %404 = vst [vmem:[%s378 + $0x60] sm:%s370] %v403
                %v405 = vld [vmem:[%s377 + $0xd0] sm:%s370]
                %406 = vst [vmem:[%s378 + $0x68] sm:%s370] %v405
                %v407 = vld [vmem:[%s377 + $0xe0] sm:%s370]
                %408 = vst [vmem:[%s378 + $0x70] sm:%s370] %v407
                %v409 = vld [vmem:[%s377 + $0xf0] sm:%s370]
                %410 = vst [vmem:[%s378 + $0x78] sm:%s370] %v409
                %v411 = vld [vmem:[%s377 + $0x100] sm:%s370]
                %412 = vst [vmem:[%s378 + $0x80] sm:%s370] %v411
                %v413 = vld [vmem:[%s377 + $0x110] sm:%s370]
                %414 = vst [vmem:[%s378 + $0x88] sm:%s370] %v413
                %v415 = vld [vmem:[%s377 + $0x120] sm:%s370]
                %416 = vst [vmem:[%s378 + $0x90] sm:%s370] %v415
                %v417 = vld [vmem:[%s377 + $0x130] sm:%s370]
                %418 = vst [vmem:[%s378 + $0x98] sm:%s370] %v417
                %v419 = vld [vmem:[%s377 + $0x140] sm:%s370]
                %420 = vst [vmem:[%s378 + $0xa0] sm:%s370] %v419
                %v421 = vld [vmem:[%s377 + $0x150] sm:%s370]
                %422 = vst [vmem:[%s378 + $0xa8] sm:%s370] %v421
                %v423 = vld [vmem:[%s377 + $0x160] sm:%s370]
                %424 = vst [vmem:[%s378 + $0xb0] sm:%s370] %v423
                %v425 = vld [vmem:[%s377 + $0x170] sm:%s370]
                %426 = vst [vmem:[%s378 + $0xb8] sm:%s370] %v425
                %v427 = vld [vmem:[%s377 + $0x180] sm:%s370]
                %428 = vst [vmem:[%s378 + $0xc0] sm:%s370] %v427
                %v429 = vld [vmem:[%s377 + $0x190] sm:%s370]
                %430 = vst [vmem:[%s378 + $0xc8] sm:%s370] %v429
                %v431 = vld [vmem:[%s377 + $0x1a0] sm:%s370]
                %432 = vst [vmem:[%s378 + $0xd0] sm:%s370] %v431
                %v433 = vld [vmem:[%s377 + $0x1b0] sm:%s370]
                %434 = vst [vmem:[%s378 + $0xd8] sm:%s370] %v433
                %v435 = vld [vmem:[%s377 + $0x1c0] sm:%s370]
                %436 = vst [vmem:[%s378 + $0xe0] sm:%s370] %v435
                %v437 = vld [vmem:[%s377 + $0x1d0] sm:%s370]
                %438 = vst [vmem:[%s378 + $0xe8] sm:%s370] %v437
                %v439 = vld [vmem:[%s377 + $0x1e0] sm:%s370]
                %440 = vst [vmem:[%s378 + $0xf0] sm:%s370] %v439
                %v441 = vld [vmem:[%s377 + $0x1f0] sm:%s370]
                %442 = vst [vmem:[%s378 + $0xf8] sm:%s370] %v441
                %v443 = vld [vmem:[%s377 + $0x200] sm:%s370]
                %444 = vst [vmem:[%s378 + $0x100] sm:%s370] %v443
                %v445 = vld [vmem:[%s377 + $0x210] sm:%s370]
                %446 = vst [vmem:[%s378 + $0x108] sm:%s370] %v445
                %v447 = vld [vmem:[%s377 + $0x220] sm:%s370]
                %448 = vst [vmem:[%s378 + $0x110] sm:%s370] %v447
                %v449 = vld [vmem:[%s377 + $0x230] sm:%s370]
                %450 = vst [vmem:[%s378 + $0x118] sm:%s370] %v449
                %v451 = vld [vmem:[%s377 + $0x240] sm:%s370]
                %452 = vst [vmem:[%s378 + $0x120] sm:%s370] %v451
                %v453 = vld [vmem:[%s377 + $0x250] sm:%s370]
                %454 = vst [vmem:[%s378 + $0x128] sm:%s370] %v453
                %v455 = vld [vmem:[%s377 + $0x260] sm:%s370]
                %456 = vst [vmem:[%s378 + $0x130] sm:%s370] %v455
                %v457 = vld [vmem:[%s377 + $0x270] sm:%s370]
                %458 = vst [vmem:[%s378 + $0x138] sm:%s370] %v457
                %v459 = vld [vmem:[%s377 + $0x280] sm:%s370]
                %460 = vst [vmem:[%s378 + $0x140] sm:%s370] %v459
                %v461 = vld [vmem:[%s377 + $0x290] sm:%s370]
                %462 = vst [vmem:[%s378 + $0x148] sm:%s370] %v461
                %v463 = vld [vmem:[%s377 + $0x2a0] sm:%s370]
                %464 = vst [vmem:[%s378 + $0x150] sm:%s370] %v463
                %v465 = vld [vmem:[%s377 + $0x2b0] sm:%s370]
                %466 = vst [vmem:[%s378 + $0x158] sm:%s370] %v465
                %v467 = vld [vmem:[%s377 + $0x2c0] sm:%s370]
                %468 = vst [vmem:[%s378 + $0x160] sm:%s370] %v467
                %v469 = vld [vmem:[%s377 + $0x2d0] sm:%s370]
                %470 = vst [vmem:[%s378 + $0x168] sm:%s370] %v469
                %v471 = vld [vmem:[%s377 + $0x2e0] sm:%s370]
                %472 = vst [vmem:[%s378 + $0x170] sm:%s370] %v471
                %v473 = vld [vmem:[%s377 + $0x2f0] sm:%s370]
                %474 = vst [vmem:[%s378 + $0x178] sm:%s370] %v473
                %v475 = vld [vmem:[%s377 + $0x300] sm:%s370]
                %476 = vst [vmem:[%s378 + $0x180] sm:%s370] %v475
                %v477 = vld [vmem:[%s377 + $0x310] sm:%s370]
                %478 = vst [vmem:[%s378 + $0x188] sm:%s370] %v477
                %v479 = vld [vmem:[%s377 + $0x320] sm:%s370]
                %480 = vst [vmem:[%s378 + $0x190] sm:%s370] %v479
                %v481 = vld [vmem:[%s377 + $0x330] sm:%s370]
                %482 = vst [vmem:[%s378 + $0x198] sm:%s370] %v481
                %v483 = vld [vmem:[%s377 + $0x340] sm:%s370]
                %484 = vst [vmem:[%s378 + $0x1a0] sm:%s370] %v483
                %v485 = vld [vmem:[%s377 + $0x350] sm:%s370]
                %486 = vst [vmem:[%s378 + $0x1a8] sm:%s370] %v485
                %v487 = vld [vmem:[%s377 + $0x360] sm:%s370]
                %488 = vst [vmem:[%s378 + $0x1b0] sm:%s370] %v487
                %v489 = vld [vmem:[%s377 + $0x370] sm:%s370]
                %490 = vst [vmem:[%s378 + $0x1b8] sm:%s370] %v489
                %v491 = vld [vmem:[%s377 + $0x380] sm:%s370]
                %492 = vst [vmem:[%s378 + $0x1c0] sm:%s370] %v491
                %v493 = vld [vmem:[%s377 + $0x390] sm:%s370]
                %494 = vst [vmem:[%s378 + $0x1c8] sm:%s370] %v493
                %v495 = vld [vmem:[%s377 + $0x3a0] sm:%s370]
                %496 = vst [vmem:[%s378 + $0x1d0] sm:%s370] %v495
                %v497 = vld [vmem:[%s377 + $0x3b0] sm:%s370]
                %498 = vst [vmem:[%s378 + $0x1d8] sm:%s370] %v497
                %v499 = vld [vmem:[%s377 + $0x3c0] sm:%s370]
                %500 = vst [vmem:[%s378 + $0x1e0] sm:%s370] %v499
                %v501 = vld [vmem:[%s377 + $0x3d0] sm:%s370]
                %502 = vst [vmem:[%s378 + $0x1e8] sm:%s370] %v501
                %v503 = vld [vmem:[%s377 + $0x3e0] sm:%s370]
                %504 = vst [vmem:[%s378 + $0x1f0] sm:%s370] %v503
                %v505 = vld [vmem:[%s377 + $0x3f0] sm:%s370]
                %506 = vst [vmem:[%s378 + $0x1f8] sm:%s370] %v505
              $region87: #{dcn_bottleneck_forward.5} parent=81 // loop_footer
                %s376 = sadd.s32 1, %s372
              $region88: #{dcn_bottleneck_forward.5} parent=81 // loop_footer_branch
                %371 = sbr.rel target = $region84
              $region89: #{dcn_bottleneck_forward.5} parent=81 // loop_exit
                _
            $region82: #{dcn_bottleneck_forward.5} parent=73 // pred_fallthru
              _
          $region74: #{dcn_bottleneck_forward.5} parent=69 // pred_fallthru
            _
          %647 = vnop
        $region70: #{dcn_bottleneck_forward.5} parent=19 // pred_fallthru
          _
      $region20: #{dcn_bottleneck_forward.5} parent=5 // pred_fallthru
        _
      %p648 = scmp.le.s32.totalorder 1, %s14
      %p649 = scmp.lt.s32.totalorder %s14, 3
      %p650 = pnand %p648, %p649
      %p651 = pneg %p650
      // Predicated region
      $region105: #{dcn_bottleneck_forward.5} parent=5 // pred_check
        _
      $region106: #{dcn_bottleneck_forward.5} parent=5 // pred_check_branch
        %653 = sbr.rel (%p650) target = $region108
      $region107: #{dcn_bottleneck_forward.5} parent=5 // pred_region
        %s654 = ssub.s32 %s14, 1
        %s655 = sand.u32 %s76, 1
        %s656 = sand.u32 %s76, 1
        %s657 = smul.addr %s656, 128
        %s658 = scalar_lea.vmem [#allocation3], %s657
        // Predicated region
        $region109: #{dcn_bottleneck_forward.5} parent=107 // pred_check
          %p659 = pneg %p89
        $region110: #{dcn_bottleneck_forward.5} parent=107 // pred_check_branch
          %661 = sbr.rel (%p659) target = $region112
        $region111: #{dcn_bottleneck_forward.5} parent=107 // pred_region
          _
        $region112: #{dcn_bottleneck_forward.5} parent=107 // pred_fallthru
          _
        %s662 = sand.u32 %s156, 1
        %s663 = sand.u32 %s156, 1
        %s664 = smul.addr %s663, 512
        %s665 = scalar_lea.vmem [#allocation4], %s664
        // Predicated region
        $region113: #{dcn_bottleneck_forward.5} parent=107 // pred_check
          %p666 = pneg %p169
        $region114: #{dcn_bottleneck_forward.5} parent=107 // pred_check_branch
          %668 = sbr.rel (%p666) target = $region116
        $region115: #{dcn_bottleneck_forward.5} parent=107 // pred_region
          _
        $region116: #{dcn_bottleneck_forward.5} parent=107 // pred_fallthru
          _
        %s669 = smul.u32 64, %s24
        %p670 = scmp.lt.s32.totalorder %s669, 63
        %s671 = scalar_select %p670, %s669, 63
        %p672 = scmp.lt.s32.totalorder %s26, 0
        %s673 = scalar_select %p672, %s26, 0
        %s674 = sadd.s32 %s673, %s671
        %s675 = smul.addr %s674, 4
        %s676 = scalar_lea.vmem %s0, %s675
        %p677 = pneg %p61
        %p678 = pneg %p58
        %s679 = sand.u32 %s76, 1
        %s680 = sand.u32 %s76, 1
        %s681 = smul.addr %s680, 128
        %s682 = scalar_lea.vmem [#allocation3], %s681
        %p683 = pneg %p89
        %p684 = pneg %p86
        %s685 = smul.u32 2, %s25
        %p686 = scmp.lt.s32.totalorder %s685, 3
        %s687 = scalar_select %p686, %s685, 3
        %s688 = scalar_lea.vmem %s2, %s687
        %p689 = pneg %p115
        %p690 = pneg %p112
        %s691 = smul.u32 2, %s25
        %p692 = scmp.lt.s32.totalorder %s691, 3
        %s693 = scalar_select %p692, %s691, 3
        %s694 = scalar_lea.vmem %s3, %s693
        %p695 = pneg %p141
        %p696 = pneg %p138
        %s697 = sand.u32 %s156, 1
        %s698 = sand.u32 %s156, 1
        %s699 = smul.addr %s698, 512
        %s700 = scalar_lea.vmem [#allocation4], %s699
        %p701 = pneg %p169
        %p702 = pneg %p166
        %p703 = pneg %p197
        %p704 = pneg %p194
        %s705 = sand.u32 %s184, 1
        %s706 = scalar_lea.sflag [#allocation6], %s705
        %s707 = sand.u32 %s184, 1
        %s708 = smul.addr %s707, 1024
        %s709 = scalar_lea.vmem [#allocation5], %s708
        %s710 = smul.u32 64, %s24
        %p711 = scmp.lt.s32.totalorder %s710, 63
        %s712 = scalar_select %p711, %s710, 63
        %p713 = scmp.lt.s32.totalorder %s26, 0
        %s714 = scalar_select %p713, %s26, 0
        %s715 = sadd.s32 %s714, %s712
        %s716 = smul.addr %s715, 4
        %s717 = scalar_lea.vmem %s0, %s716
        %s718 = smul.u32 64, %s24
        %s719 = smul.u32 16, %s26
        %s720 = smul.u32 2, %s25
        %s721 = smul.u32 2, %s25
        %p722 = scmp.lt.s32.totalorder %s721, 3
        %s723 = scalar_select %p722, %s721, 3
        %s724 = scalar_lea.vmem %s2, %s723
        %s725 = smul.u32 2, %s25
        %s726 = smul.u32 2, %s25
        %p727 = scmp.lt.s32.totalorder %s726, 3
        %s728 = scalar_select %p727, %s726, 3
        %s729 = scalar_lea.vmem %s3, %s728
        %s730 = smul.u32 2, %s25
        %s731 = smul.u32 64, %s24
        %s732 = smul.u32 2, %s25
        %s733 = smul.u32 64, %s24
        %s734 = smul.u32 2, %s25
        %p735 = scmp.eq.s32.totalorder %s26, 0
        // Predicated region
        $region117: #{dcn_bottleneck_forward.5} parent=107 // pred_check
          %p736 = pneg %p735
        $region118: #{dcn_bottleneck_forward.5} parent=107 // pred_check_branch
          %738 = sbr.rel (%p736) target = $region120
        $region119: #{dcn_bottleneck_forward.5} parent=107 // pred_region
          %739 = vst [vmem:[#allocation2] sm:$0xff] 0.0
          %740 = vst [vmem:[#allocation2 + $0x8] sm:$0xff] 0.0
          %741 = vst [vmem:[#allocation2 + $0x10] sm:$0xff] 0.0
          %742 = vst [vmem:[#allocation2 + $0x18] sm:$0xff] 0.0
          %743 = vst [vmem:[#allocation2 + $0x20] sm:$0xff] 0.0
          %744 = vst [vmem:[#allocation2 + $0x28] sm:$0xff] 0.0
          %745 = vst [vmem:[#allocation2 + $0x30] sm:$0xff] 0.0
          %746 = vst [vmem:[#allocation2 + $0x38] sm:$0xff] 0.0
          %747 = vst [vmem:[#allocation2 + $0x40] sm:$0xff] 0.0
          %748 = vst [vmem:[#allocation2 + $0x48] sm:$0xff] 0.0
          %749 = vst [vmem:[#allocation2 + $0x50] sm:$0xff] 0.0
          %750 = vst [vmem:[#allocation2 + $0x58] sm:$0xff] 0.0
          %751 = vst [vmem:[#allocation2 + $0x60] sm:$0xff] 0.0
          %752 = vst [vmem:[#allocation2 + $0x68] sm:$0xff] 0.0
          %753 = vst [vmem:[#allocation2 + $0x70] sm:$0xff] 0.0
          %754 = vst [vmem:[#allocation2 + $0x78] sm:$0xff] 0.0
          %755 = vst [vmem:[#allocation2 + $0x80] sm:$0xff] 0.0
          %756 = vst [vmem:[#allocation2 + $0x88] sm:$0xff] 0.0
          %757 = vst [vmem:[#allocation2 + $0x90] sm:$0xff] 0.0
          %758 = vst [vmem:[#allocation2 + $0x98] sm:$0xff] 0.0
          %759 = vst [vmem:[#allocation2 + $0xa0] sm:$0xff] 0.0
          %760 = vst [vmem:[#allocation2 + $0xa8] sm:$0xff] 0.0
          %761 = vst [vmem:[#allocation2 + $0xb0] sm:$0xff] 0.0
          %762 = vst [vmem:[#allocation2 + $0xb8] sm:$0xff] 0.0
          %763 = vst [vmem:[#allocation2 + $0xc0] sm:$0xff] 0.0
          %764 = vst [vmem:[#allocation2 + $0xc8] sm:$0xff] 0.0
          %765 = vst [vmem:[#allocation2 + $0xd0] sm:$0xff] 0.0
          %766 = vst [vmem:[#allocation2 + $0xd8] sm:$0xff] 0.0
          %767 = vst [vmem:[#allocation2 + $0xe0] sm:$0xff] 0.0
          %768 = vst [vmem:[#allocation2 + $0xe8] sm:$0xff] 0.0
          %769 = vst [vmem:[#allocation2 + $0xf0] sm:$0xff] 0.0
          %770 = vst [vmem:[#allocation2 + $0xf8] sm:$0xff] 0.0
          %771 = vst [vmem:[#allocation2 + $0x100] sm:$0xff] 0.0
          %772 = vst [vmem:[#allocation2 + $0x108] sm:$0xff] 0.0
          %773 = vst [vmem:[#allocation2 + $0x110] sm:$0xff] 0.0
          %774 = vst [vmem:[#allocation2 + $0x118] sm:$0xff] 0.0
          %775 = vst [vmem:[#allocation2 + $0x120] sm:$0xff] 0.0
          %776 = vst [vmem:[#allocation2 + $0x128] sm:$0xff] 0.0
          %777 = vst [vmem:[#allocation2 + $0x130] sm:$0xff] 0.0
          %778 = vst [vmem:[#allocation2 + $0x138] sm:$0xff] 0.0
          %779 = vst [vmem:[#allocation2 + $0x140] sm:$0xff] 0.0
          %780 = vst [vmem:[#allocation2 + $0x148] sm:$0xff] 0.0
          %781 = vst [vmem:[#allocation2 + $0x150] sm:$0xff] 0.0
          %782 = vst [vmem:[#allocation2 + $0x158] sm:$0xff] 0.0
          %783 = vst [vmem:[#allocation2 + $0x160] sm:$0xff] 0.0
          %784 = vst [vmem:[#allocation2 + $0x168] sm:$0xff] 0.0
          %785 = vst [vmem:[#allocation2 + $0x170] sm:$0xff] 0.0
          %786 = vst [vmem:[#allocation2 + $0x178] sm:$0xff] 0.0
          %787 = vst [vmem:[#allocation2 + $0x180] sm:$0xff] 0.0
          %788 = vst [vmem:[#allocation2 + $0x188] sm:$0xff] 0.0
          %789 = vst [vmem:[#allocation2 + $0x190] sm:$0xff] 0.0
          %790 = vst [vmem:[#allocation2 + $0x198] sm:$0xff] 0.0
          %791 = vst [vmem:[#allocation2 + $0x1a0] sm:$0xff] 0.0
          %792 = vst [vmem:[#allocation2 + $0x1a8] sm:$0xff] 0.0
          %793 = vst [vmem:[#allocation2 + $0x1b0] sm:$0xff] 0.0
          %794 = vst [vmem:[#allocation2 + $0x1b8] sm:$0xff] 0.0
          %795 = vst [vmem:[#allocation2 + $0x1c0] sm:$0xff] 0.0
          %796 = vst [vmem:[#allocation2 + $0x1c8] sm:$0xff] 0.0
          %797 = vst [vmem:[#allocation2 + $0x1d0] sm:$0xff] 0.0
          %798 = vst [vmem:[#allocation2 + $0x1d8] sm:$0xff] 0.0
          %799 = vst [vmem:[#allocation2 + $0x1e0] sm:$0xff] 0.0
          %800 = vst [vmem:[#allocation2 + $0x1e8] sm:$0xff] 0.0
          %801 = vst [vmem:[#allocation2 + $0x1f0] sm:$0xff] 0.0
          %802 = vst [vmem:[#allocation2 + $0x1f8] sm:$0xff] 0.0
          %803 = vst [vmem:[#allocation2 + $0x200] sm:$0xff] 0.0
          %804 = vst [vmem:[#allocation2 + $0x208] sm:$0xff] 0.0
          %805 = vst [vmem:[#allocation2 + $0x210] sm:$0xff] 0.0
          %806 = vst [vmem:[#allocation2 + $0x218] sm:$0xff] 0.0
          %807 = vst [vmem:[#allocation2 + $0x220] sm:$0xff] 0.0
          %808 = vst [vmem:[#allocation2 + $0x228] sm:$0xff] 0.0
          %809 = vst [vmem:[#allocation2 + $0x230] sm:$0xff] 0.0
          %810 = vst [vmem:[#allocation2 + $0x238] sm:$0xff] 0.0
          %811 = vst [vmem:[#allocation2 + $0x240] sm:$0xff] 0.0
          %812 = vst [vmem:[#allocation2 + $0x248] sm:$0xff] 0.0
          %813 = vst [vmem:[#allocation2 + $0x250] sm:$0xff] 0.0
          %814 = vst [vmem:[#allocation2 + $0x258] sm:$0xff] 0.0
          %815 = vst [vmem:[#allocation2 + $0x260] sm:$0xff] 0.0
          %816 = vst [vmem:[#allocation2 + $0x268] sm:$0xff] 0.0
          %817 = vst [vmem:[#allocation2 + $0x270] sm:$0xff] 0.0
          %818 = vst [vmem:[#allocation2 + $0x278] sm:$0xff] 0.0
          %819 = vst [vmem:[#allocation2 + $0x280] sm:$0xff] 0.0
          %820 = vst [vmem:[#allocation2 + $0x288] sm:$0xff] 0.0
          %821 = vst [vmem:[#allocation2 + $0x290] sm:$0xff] 0.0
          %822 = vst [vmem:[#allocation2 + $0x298] sm:$0xff] 0.0
          %823 = vst [vmem:[#allocation2 + $0x2a0] sm:$0xff] 0.0
          %824 = vst [vmem:[#allocation2 + $0x2a8] sm:$0xff] 0.0
          %825 = vst [vmem:[#allocation2 + $0x2b0] sm:$0xff] 0.0
          %826 = vst [vmem:[#allocation2 + $0x2b8] sm:$0xff] 0.0
          %827 = vst [vmem:[#allocation2 + $0x2c0] sm:$0xff] 0.0
          %828 = vst [vmem:[#allocation2 + $0x2c8] sm:$0xff] 0.0
          %829 = vst [vmem:[#allocation2 + $0x2d0] sm:$0xff] 0.0
          %830 = vst [vmem:[#allocation2 + $0x2d8] sm:$0xff] 0.0
          %831 = vst [vmem:[#allocation2 + $0x2e0] sm:$0xff] 0.0
          %832 = vst [vmem:[#allocation2 + $0x2e8] sm:$0xff] 0.0
          %833 = vst [vmem:[#allocation2 + $0x2f0] sm:$0xff] 0.0
          %834 = vst [vmem:[#allocation2 + $0x2f8] sm:$0xff] 0.0
          %835 = vst [vmem:[#allocation2 + $0x300] sm:$0xff] 0.0
          %836 = vst [vmem:[#allocation2 + $0x308] sm:$0xff] 0.0
          %837 = vst [vmem:[#allocation2 + $0x310] sm:$0xff] 0.0
          %838 = vst [vmem:[#allocation2 + $0x318] sm:$0xff] 0.0
          %839 = vst [vmem:[#allocation2 + $0x320] sm:$0xff] 0.0
          %840 = vst [vmem:[#allocation2 + $0x328] sm:$0xff] 0.0
          %841 = vst [vmem:[#allocation2 + $0x330] sm:$0xff] 0.0
          %842 = vst [vmem:[#allocation2 + $0x338] sm:$0xff] 0.0
          %843 = vst [vmem:[#allocation2 + $0x340] sm:$0xff] 0.0
          %844 = vst [vmem:[#allocation2 + $0x348] sm:$0xff] 0.0
          %845 = vst [vmem:[#allocation2 + $0x350] sm:$0xff] 0.0
          %846 = vst [vmem:[#allocation2 + $0x358] sm:$0xff] 0.0
          %847 = vst [vmem:[#allocation2 + $0x360] sm:$0xff] 0.0
          %848 = vst [vmem:[#allocation2 + $0x368] sm:$0xff] 0.0
          %849 = vst [vmem:[#allocation2 + $0x370] sm:$0xff] 0.0
          %850 = vst [vmem:[#allocation2 + $0x378] sm:$0xff] 0.0
          %851 = vst [vmem:[#allocation2 + $0x380] sm:$0xff] 0.0
          %852 = vst [vmem:[#allocation2 + $0x388] sm:$0xff] 0.0
          %853 = vst [vmem:[#allocation2 + $0x390] sm:$0xff] 0.0
          %854 = vst [vmem:[#allocation2 + $0x398] sm:$0xff] 0.0
          %855 = vst [vmem:[#allocation2 + $0x3a0] sm:$0xff] 0.0
          %856 = vst [vmem:[#allocation2 + $0x3a8] sm:$0xff] 0.0
          %857 = vst [vmem:[#allocation2 + $0x3b0] sm:$0xff] 0.0
          %858 = vst [vmem:[#allocation2 + $0x3b8] sm:$0xff] 0.0
          %859 = vst [vmem:[#allocation2 + $0x3c0] sm:$0xff] 0.0
          %860 = vst [vmem:[#allocation2 + $0x3c8] sm:$0xff] 0.0
          %861 = vst [vmem:[#allocation2 + $0x3d0] sm:$0xff] 0.0
          %862 = vst [vmem:[#allocation2 + $0x3d8] sm:$0xff] 0.0
          %863 = vst [vmem:[#allocation2 + $0x3e0] sm:$0xff] 0.0
          %864 = vst [vmem:[#allocation2 + $0x3e8] sm:$0xff] 0.0
          %865 = vst [vmem:[#allocation2 + $0x3f0] sm:$0xff] 0.0
          %866 = vst [vmem:[#allocation2 + $0x3f8] sm:$0xff] 0.0
        $region120: #{dcn_bottleneck_forward.5} parent=107 // pred_fallthru
          _
        %v867 = vld [vmem:[#allocation2] sm:$0xff]
        %v868 = vld [vmem:[#allocation2 + $0x8] sm:$0xff]
        %v869 = vld [vmem:[#allocation2 + $0x10] sm:$0xff]
        %v870 = vld [vmem:[#allocation2 + $0x18] sm:$0xff]
        %v871 = vld [vmem:[#allocation2 + $0x20] sm:$0xff]
        %v872 = vld [vmem:[#allocation2 + $0x28] sm:$0xff]
        %v873 = vld [vmem:[#allocation2 + $0x30] sm:$0xff]
        %v874 = vld [vmem:[#allocation2 + $0x38] sm:$0xff]
        %v875 = vld [vmem:[#allocation2 + $0x40] sm:$0xff]
        %v876 = vld [vmem:[#allocation2 + $0x48] sm:$0xff]
        %v877 = vld [vmem:[#allocation2 + $0x50] sm:$0xff]
        %v878 = vld [vmem:[#allocation2 + $0x58] sm:$0xff]
        %v879 = vld [vmem:[#allocation2 + $0x60] sm:$0xff]
        %v880 = vld [vmem:[#allocation2 + $0x68] sm:$0xff]
        %v881 = vld [vmem:[#allocation2 + $0x70] sm:$0xff]
        %v882 = vld [vmem:[#allocation2 + $0x78] sm:$0xff]
        %v883 = vld [vmem:[#allocation2 + $0x80] sm:$0xff]
        %v884 = vld [vmem:[#allocation2 + $0x88] sm:$0xff]
        %v885 = vld [vmem:[#allocation2 + $0x90] sm:$0xff]
        %v886 = vld [vmem:[#allocation2 + $0x98] sm:$0xff]
        %v887 = vld [vmem:[#allocation2 + $0xa0] sm:$0xff]
        %v888 = vld [vmem:[#allocation2 + $0xa8] sm:$0xff]
        %v889 = vld [vmem:[#allocation2 + $0xb0] sm:$0xff]
        %v890 = vld [vmem:[#allocation2 + $0xb8] sm:$0xff]
        %v891 = vld [vmem:[#allocation2 + $0xc0] sm:$0xff]
        %v892 = vld [vmem:[#allocation2 + $0xc8] sm:$0xff]
        %v893 = vld [vmem:[#allocation2 + $0xd0] sm:$0xff]
        %v894 = vld [vmem:[#allocation2 + $0xd8] sm:$0xff]
        %v895 = vld [vmem:[#allocation2 + $0xe0] sm:$0xff]
        %v896 = vld [vmem:[#allocation2 + $0xe8] sm:$0xff]
        %v897 = vld [vmem:[#allocation2 + $0xf0] sm:$0xff]
        %v898 = vld [vmem:[#allocation2 + $0xf8] sm:$0xff]
        %v899 = vld [vmem:[#allocation2 + $0x100] sm:$0xff]
        %v900 = vld [vmem:[#allocation2 + $0x108] sm:$0xff]
        %v901 = vld [vmem:[#allocation2 + $0x110] sm:$0xff]
        %v902 = vld [vmem:[#allocation2 + $0x118] sm:$0xff]
        %v903 = vld [vmem:[#allocation2 + $0x120] sm:$0xff]
        %v904 = vld [vmem:[#allocation2 + $0x128] sm:$0xff]
        %v905 = vld [vmem:[#allocation2 + $0x130] sm:$0xff]
        %v906 = vld [vmem:[#allocation2 + $0x138] sm:$0xff]
        %v907 = vld [vmem:[#allocation2 + $0x140] sm:$0xff]
        %v908 = vld [vmem:[#allocation2 + $0x148] sm:$0xff]
        %v909 = vld [vmem:[#allocation2 + $0x150] sm:$0xff]
        %v910 = vld [vmem:[#allocation2 + $0x158] sm:$0xff]
        %v911 = vld [vmem:[#allocation2 + $0x160] sm:$0xff]
        %v912 = vld [vmem:[#allocation2 + $0x168] sm:$0xff]
        %v913 = vld [vmem:[#allocation2 + $0x170] sm:$0xff]
        %v914 = vld [vmem:[#allocation2 + $0x178] sm:$0xff]
        %v915 = vld [vmem:[#allocation2 + $0x180] sm:$0xff]
        %v916 = vld [vmem:[#allocation2 + $0x188] sm:$0xff]
        %v917 = vld [vmem:[#allocation2 + $0x190] sm:$0xff]
        %v918 = vld [vmem:[#allocation2 + $0x198] sm:$0xff]
        %v919 = vld [vmem:[#allocation2 + $0x1a0] sm:$0xff]
        %v920 = vld [vmem:[#allocation2 + $0x1a8] sm:$0xff]
        %v921 = vld [vmem:[#allocation2 + $0x1b0] sm:$0xff]
        %v922 = vld [vmem:[#allocation2 + $0x1b8] sm:$0xff]
        %v923 = vld [vmem:[#allocation2 + $0x1c0] sm:$0xff]
        %v924 = vld [vmem:[#allocation2 + $0x1c8] sm:$0xff]
        %v925 = vld [vmem:[#allocation2 + $0x1d0] sm:$0xff]
        %v926 = vld [vmem:[#allocation2 + $0x1d8] sm:$0xff]
        %v927 = vld [vmem:[#allocation2 + $0x1e0] sm:$0xff]
        %v928 = vld [vmem:[#allocation2 + $0x1e8] sm:$0xff]
        %v929 = vld [vmem:[#allocation2 + $0x1f0] sm:$0xff]
        %v930 = vld [vmem:[#allocation2 + $0x1f8] sm:$0xff]
        %v931 = vld [vmem:[#allocation2 + $0x200] sm:$0xff]
        %v932 = vld [vmem:[#allocation2 + $0x208] sm:$0xff]
        %v933 = vld [vmem:[#allocation2 + $0x210] sm:$0xff]
        %v934 = vld [vmem:[#allocation2 + $0x218] sm:$0xff]
        %v935 = vld [vmem:[#allocation2 + $0x220] sm:$0xff]
        %v936 = vld [vmem:[#allocation2 + $0x228] sm:$0xff]
        %v937 = vld [vmem:[#allocation2 + $0x230] sm:$0xff]
        %v938 = vld [vmem:[#allocation2 + $0x238] sm:$0xff]
        %v939 = vld [vmem:[#allocation2 + $0x240] sm:$0xff]
        %v940 = vld [vmem:[#allocation2 + $0x248] sm:$0xff]
        %v941 = vld [vmem:[#allocation2 + $0x250] sm:$0xff]
        %v942 = vld [vmem:[#allocation2 + $0x258] sm:$0xff]
        %v943 = vld [vmem:[#allocation2 + $0x260] sm:$0xff]
        %v944 = vld [vmem:[#allocation2 + $0x268] sm:$0xff]
        %v945 = vld [vmem:[#allocation2 + $0x270] sm:$0xff]
        %v946 = vld [vmem:[#allocation2 + $0x278] sm:$0xff]
        %v947 = vld [vmem:[#allocation2 + $0x280] sm:$0xff]
        %v948 = vld [vmem:[#allocation2 + $0x288] sm:$0xff]
        %v949 = vld [vmem:[#allocation2 + $0x290] sm:$0xff]
        %v950 = vld [vmem:[#allocation2 + $0x298] sm:$0xff]
        %v951 = vld [vmem:[#allocation2 + $0x2a0] sm:$0xff]
        %v952 = vld [vmem:[#allocation2 + $0x2a8] sm:$0xff]
        %v953 = vld [vmem:[#allocation2 + $0x2b0] sm:$0xff]
        %v954 = vld [vmem:[#allocation2 + $0x2b8] sm:$0xff]
        %v955 = vld [vmem:[#allocation2 + $0x2c0] sm:$0xff]
        %v956 = vld [vmem:[#allocation2 + $0x2c8] sm:$0xff]
        %v957 = vld [vmem:[#allocation2 + $0x2d0] sm:$0xff]
        %v958 = vld [vmem:[#allocation2 + $0x2d8] sm:$0xff]
        %v959 = vld [vmem:[#allocation2 + $0x2e0] sm:$0xff]
        %v960 = vld [vmem:[#allocation2 + $0x2e8] sm:$0xff]
        %v961 = vld [vmem:[#allocation2 + $0x2f0] sm:$0xff]
        %v962 = vld [vmem:[#allocation2 + $0x2f8] sm:$0xff]
        %v963 = vld [vmem:[#allocation2 + $0x300] sm:$0xff]
        %v964 = vld [vmem:[#allocation2 + $0x308] sm:$0xff]
        %v965 = vld [vmem:[#allocation2 + $0x310] sm:$0xff]
        %v966 = vld [vmem:[#allocation2 + $0x318] sm:$0xff]
        %v967 = vld [vmem:[#allocation2 + $0x320] sm:$0xff]
        %v968 = vld [vmem:[#allocation2 + $0x328] sm:$0xff]
        %v969 = vld [vmem:[#allocation2 + $0x330] sm:$0xff]
        %v970 = vld [vmem:[#allocation2 + $0x338] sm:$0xff]
        %v971 = vld [vmem:[#allocation2 + $0x340] sm:$0xff]
        %v972 = vld [vmem:[#allocation2 + $0x348] sm:$0xff]
        %v973 = vld [vmem:[#allocation2 + $0x350] sm:$0xff]
        %v974 = vld [vmem:[#allocation2 + $0x358] sm:$0xff]
        %v975 = vld [vmem:[#allocation2 + $0x360] sm:$0xff]
        %v976 = vld [vmem:[#allocation2 + $0x368] sm:$0xff]
        %v977 = vld [vmem:[#allocation2 + $0x370] sm:$0xff]
        %v978 = vld [vmem:[#allocation2 + $0x378] sm:$0xff]
        %v979 = vld [vmem:[#allocation2 + $0x380] sm:$0xff]
        %v980 = vld [vmem:[#allocation2 + $0x388] sm:$0xff]
        %v981 = vld [vmem:[#allocation2 + $0x390] sm:$0xff]
        %v982 = vld [vmem:[#allocation2 + $0x398] sm:$0xff]
        %v983 = vld [vmem:[#allocation2 + $0x3a0] sm:$0xff]
        %v984 = vld [vmem:[#allocation2 + $0x3a8] sm:$0xff]
        %v985 = vld [vmem:[#allocation2 + $0x3b0] sm:$0xff]
        %v986 = vld [vmem:[#allocation2 + $0x3b8] sm:$0xff]
        %v987 = vld [vmem:[#allocation2 + $0x3c0] sm:$0xff]
        %v988 = vld [vmem:[#allocation2 + $0x3c8] sm:$0xff]
        %v989 = vld [vmem:[#allocation2 + $0x3d0] sm:$0xff]
        %v990 = vld [vmem:[#allocation2 + $0x3d8] sm:$0xff]
        %v991 = vld [vmem:[#allocation2 + $0x3e0] sm:$0xff]
        %v992 = vld [vmem:[#allocation2 + $0x3e8] sm:$0xff]
        %v993 = vld [vmem:[#allocation2 + $0x3f0] sm:$0xff]
        %v994 = vld [vmem:[#allocation2 + $0x3f8] sm:$0xff]
        %v995 = vld [vmem:[%s717] sm:$0xf]
        %v996 = vld [vmem:[%s717 + $0x4] sm:$0xf]
        %v997 = vld [vmem:[%s717 + $0x8] sm:$0xf]
        %v998 = vld [vmem:[%s717 + $0xc] sm:$0xf]
        %v999 = vld [vmem:[%s717 + $0x10] sm:$0xf]
        %v1000 = vld [vmem:[%s717 + $0x14] sm:$0xf]
        %v1001 = vld [vmem:[%s717 + $0x18] sm:$0xf]
        %v1002 = vld [vmem:[%s717 + $0x1c] sm:$0xf]
        %v1003 = vld [vmem:[%s717 + $0x20] sm:$0xf]
        %v1004 = vld [vmem:[%s717 + $0x24] sm:$0xf]
        %v1005 = vld [vmem:[%s717 + $0x28] sm:$0xf]
        %v1006 = vld [vmem:[%s717 + $0x2c] sm:$0xf]
        %v1007 = vld [vmem:[%s717 + $0x30] sm:$0xf]
        %v1008 = vld [vmem:[%s717 + $0x34] sm:$0xf]
        %v1009 = vld [vmem:[%s717 + $0x38] sm:$0xf]
        %v1010 = vld [vmem:[%s717 + $0x3c] sm:$0xf]
        %v1011 = vld [vmem:[%s717 + $0x40] sm:$0xf]
        %v1012 = vld [vmem:[%s717 + $0x44] sm:$0xf]
        %v1013 = vld [vmem:[%s717 + $0x48] sm:$0xf]
        %v1014 = vld [vmem:[%s717 + $0x4c] sm:$0xf]
        %v1015 = vld [vmem:[%s717 + $0x50] sm:$0xf]
        %v1016 = vld [vmem:[%s717 + $0x54] sm:$0xf]
        %v1017 = vld [vmem:[%s717 + $0x58] sm:$0xf]
        %v1018 = vld [vmem:[%s717 + $0x5c] sm:$0xf]
        %v1019 = vld [vmem:[%s717 + $0x60] sm:$0xf]
        %v1020 = vld [vmem:[%s717 + $0x64] sm:$0xf]
        %v1021 = vld [vmem:[%s717 + $0x68] sm:$0xf]
        %v1022 = vld [vmem:[%s717 + $0x6c] sm:$0xf]
        %v1023 = vld [vmem:[%s717 + $0x70] sm:$0xf]
        %v1024 = vld [vmem:[%s717 + $0x74] sm:$0xf]
        %v1025 = vld [vmem:[%s717 + $0x78] sm:$0xf]
        %v1026 = vld [vmem:[%s717 + $0x7c] sm:$0xf]
        %v1027 = vld [vmem:[%s717 + $0x80] sm:$0xf]
        %v1028 = vld [vmem:[%s717 + $0x84] sm:$0xf]
        %v1029 = vld [vmem:[%s717 + $0x88] sm:$0xf]
        %v1030 = vld [vmem:[%s717 + $0x8c] sm:$0xf]
        %v1031 = vld [vmem:[%s717 + $0x90] sm:$0xf]
        %v1032 = vld [vmem:[%s717 + $0x94] sm:$0xf]
        %v1033 = vld [vmem:[%s717 + $0x98] sm:$0xf]
        %v1034 = vld [vmem:[%s717 + $0x9c] sm:$0xf]
        %v1035 = vld [vmem:[%s717 + $0xa0] sm:$0xf]
        %v1036 = vld [vmem:[%s717 + $0xa4] sm:$0xf]
        %v1037 = vld [vmem:[%s717 + $0xa8] sm:$0xf]
        %v1038 = vld [vmem:[%s717 + $0xac] sm:$0xf]
        %v1039 = vld [vmem:[%s717 + $0xb0] sm:$0xf]
        %v1040 = vld [vmem:[%s717 + $0xb4] sm:$0xf]
        %v1041 = vld [vmem:[%s717 + $0xb8] sm:$0xf]
        %v1042 = vld [vmem:[%s717 + $0xbc] sm:$0xf]
        %v1043 = vld [vmem:[%s717 + $0xc0] sm:$0xf]
        %v1044 = vld [vmem:[%s717 + $0xc4] sm:$0xf]
        %v1045 = vld [vmem:[%s717 + $0xc8] sm:$0xf]
        %v1046 = vld [vmem:[%s717 + $0xcc] sm:$0xf]
        %v1047 = vld [vmem:[%s717 + $0xd0] sm:$0xf]
        %v1048 = vld [vmem:[%s717 + $0xd4] sm:$0xf]
        %v1049 = vld [vmem:[%s717 + $0xd8] sm:$0xf]
        %v1050 = vld [vmem:[%s717 + $0xdc] sm:$0xf]
        %v1051 = vld [vmem:[%s717 + $0xe0] sm:$0xf]
        %v1052 = vld [vmem:[%s717 + $0xe4] sm:$0xf]
        %v1053 = vld [vmem:[%s717 + $0xe8] sm:$0xf]
        %v1054 = vld [vmem:[%s717 + $0xec] sm:$0xf]
        %v1055 = vld [vmem:[%s717 + $0xf0] sm:$0xf]
        %v1056 = vld [vmem:[%s717 + $0xf4] sm:$0xf]
        %v1057 = vld [vmem:[%s717 + $0xf8] sm:$0xf]
        %v1058 = vld [vmem:[%s717 + $0xfc] sm:$0xf]
        %v1059 = vld [vmem:[%s658] sm:$0xff]
        %v1060 = vld [vmem:[%s658 + $0x8] sm:$0xff]
        %v1061 = vld [vmem:[%s658 + $0x10] sm:$0xff]
        %v1062 = vld [vmem:[%s658 + $0x18] sm:$0xff]
        %v1063 = vld [vmem:[%s658 + $0x20] sm:$0xff]
        %v1064 = vld [vmem:[%s658 + $0x28] sm:$0xff]
        %v1065 = vld [vmem:[%s658 + $0x30] sm:$0xff]
        %v1066 = vld [vmem:[%s658 + $0x38] sm:$0xff]
        %v1067 = vld [vmem:[%s658 + $0x40] sm:$0xff]
        %v1068 = vld [vmem:[%s658 + $0x48] sm:$0xff]
        %v1069 = vld [vmem:[%s658 + $0x50] sm:$0xff]
        %v1070 = vld [vmem:[%s658 + $0x58] sm:$0xff]
        %v1071 = vld [vmem:[%s658 + $0x60] sm:$0xff]
        %v1072 = vld [vmem:[%s658 + $0x68] sm:$0xff]
        %v1073 = vld [vmem:[%s658 + $0x70] sm:$0xff]
        %v1074 = vld [vmem:[%s658 + $0x78] sm:$0xff]
        %v1139 = vunpack.c.l.b16 %v995
        %v1140 = vunpack.c.l.b16 %v996
        %v1141 = vunpack.c.l.b16 %v997
        %v1142 = vunpack.c.l.b16 %v998
        %v1143 = vunpack.c.l.b16 %v999
        %v1144 = vunpack.c.l.b16 %v1000
        %v1145 = vunpack.c.l.b16 %v1001
        %v1146 = vunpack.c.l.b16 %v1002
        %v1147 = vunpack.c.l.b16 %v1003
        %v1148 = vunpack.c.l.b16 %v1004
        %v1149 = vunpack.c.l.b16 %v1005
        %v1150 = vunpack.c.l.b16 %v1006
        %v1151 = vunpack.c.l.b16 %v1007
        %v1152 = vunpack.c.l.b16 %v1008
        %v1153 = vunpack.c.l.b16 %v1009
        %v1154 = vunpack.c.l.b16 %v1010
        %v1155 = vunpack.c.l.b16 %v1011
        %v1156 = vunpack.c.l.b16 %v1012
        %v1157 = vunpack.c.l.b16 %v1013
        %v1158 = vunpack.c.l.b16 %v1014
        %v1159 = vunpack.c.l.b16 %v1015
        %v1160 = vunpack.c.l.b16 %v1016
        %v1161 = vunpack.c.l.b16 %v1017
        %v1162 = vunpack.c.l.b16 %v1018
        %v1163 = vunpack.c.l.b16 %v1019
        %v1164 = vunpack.c.l.b16 %v1020
        %v1165 = vunpack.c.l.b16 %v1021
        %v1166 = vunpack.c.l.b16 %v1022
        %v1167 = vunpack.c.l.b16 %v1023
        %v1168 = vunpack.c.l.b16 %v1024
        %v1169 = vunpack.c.l.b16 %v1025
        %v1170 = vunpack.c.l.b16 %v1026
        %v1171 = vunpack.c.l.b16 %v1027
        %v1172 = vunpack.c.l.b16 %v1028
        %v1173 = vunpack.c.l.b16 %v1029
        %v1174 = vunpack.c.l.b16 %v1030
        %v1175 = vunpack.c.l.b16 %v1031
        %v1176 = vunpack.c.l.b16 %v1032
        %v1177 = vunpack.c.l.b16 %v1033
        %v1178 = vunpack.c.l.b16 %v1034
        %v1179 = vunpack.c.l.b16 %v1035
        %v1180 = vunpack.c.l.b16 %v1036
        %v1181 = vunpack.c.l.b16 %v1037
        %v1182 = vunpack.c.l.b16 %v1038
        %v1183 = vunpack.c.l.b16 %v1039
        %v1184 = vunpack.c.l.b16 %v1040
        %v1185 = vunpack.c.l.b16 %v1041
        %v1186 = vunpack.c.l.b16 %v1042
        %v1187 = vunpack.c.l.b16 %v1043
        %v1188 = vunpack.c.l.b16 %v1044
        %v1189 = vunpack.c.l.b16 %v1045
        %v1190 = vunpack.c.l.b16 %v1046
        %v1191 = vunpack.c.l.b16 %v1047
        %v1192 = vunpack.c.l.b16 %v1048
        %v1193 = vunpack.c.l.b16 %v1049
        %v1194 = vunpack.c.l.b16 %v1050
        %v1195 = vunpack.c.l.b16 %v1051
        %v1196 = vunpack.c.l.b16 %v1052
        %v1197 = vunpack.c.l.b16 %v1053
        %v1198 = vunpack.c.l.b16 %v1054
        %v1199 = vunpack.c.l.b16 %v1055
        %v1200 = vunpack.c.l.b16 %v1056
        %v1201 = vunpack.c.l.b16 %v1057
        %v1202 = vunpack.c.l.b16 %v1058
        %v1203 = vpack.c.b16 %v1140, %v1139
        %v1204 = vpack.c.b16 %v1142, %v1141
        %v1205 = vpack.c.b16 %v1144, %v1143
        %v1206 = vpack.c.b16 %v1146, %v1145
        %v1207 = vpack.c.b16 %v1148, %v1147
        %v1208 = vpack.c.b16 %v1150, %v1149
        %v1209 = vpack.c.b16 %v1152, %v1151
        %v1210 = vpack.c.b16 %v1154, %v1153
        %v1211 = vpack.c.b16 %v1156, %v1155
        %v1212 = vpack.c.b16 %v1158, %v1157
        %v1213 = vpack.c.b16 %v1160, %v1159
        %v1214 = vpack.c.b16 %v1162, %v1161
        %v1215 = vpack.c.b16 %v1164, %v1163
        %v1216 = vpack.c.b16 %v1166, %v1165
        %v1217 = vpack.c.b16 %v1168, %v1167
        %v1218 = vpack.c.b16 %v1170, %v1169
        %v1219 = vpack.c.b16 %v1172, %v1171
        %v1220 = vpack.c.b16 %v1174, %v1173
        %v1221 = vpack.c.b16 %v1176, %v1175
        %v1222 = vpack.c.b16 %v1178, %v1177
        %v1223 = vpack.c.b16 %v1180, %v1179
        %v1224 = vpack.c.b16 %v1182, %v1181
        %v1225 = vpack.c.b16 %v1184, %v1183
        %v1226 = vpack.c.b16 %v1186, %v1185
        %v1227 = vpack.c.b16 %v1188, %v1187
        %v1228 = vpack.c.b16 %v1190, %v1189
        %v1229 = vpack.c.b16 %v1192, %v1191
        %v1230 = vpack.c.b16 %v1194, %v1193
        %v1231 = vpack.c.b16 %v1196, %v1195
        %v1232 = vpack.c.b16 %v1198, %v1197
        %v1233 = vpack.c.b16 %v1200, %v1199
        %v1234 = vpack.c.b16 %v1202, %v1201
        %v1283 = vunpack.c.l.b16 %v1059
        %v1284 = vunpack.c.h.b16 %v1059
        %v1285 = vunpack.c.l.b16 %v1060
        %v1286 = vunpack.c.h.b16 %v1060
        %v1287 = vunpack.c.l.b16 %v1061
        %v1288 = vunpack.c.h.b16 %v1061
        %v1289 = vunpack.c.l.b16 %v1062
        %v1290 = vunpack.c.h.b16 %v1062
        %v1291 = vunpack.c.l.b16 %v1063
        %v1292 = vunpack.c.h.b16 %v1063
        %v1293 = vunpack.c.l.b16 %v1064
        %v1294 = vunpack.c.h.b16 %v1064
        %v1295 = vunpack.c.l.b16 %v1065
        %v1296 = vunpack.c.h.b16 %v1065
        %v1297 = vunpack.c.l.b16 %v1066
        %v1298 = vunpack.c.h.b16 %v1066
        %v1299 = vunpack.c.l.b16 %v1067
        %v1300 = vunpack.c.h.b16 %v1067
        %v1301 = vunpack.c.l.b16 %v1068
        %v1302 = vunpack.c.h.b16 %v1068
        %v1303 = vunpack.c.l.b16 %v1069
        %v1304 = vunpack.c.h.b16 %v1069
        %v1305 = vunpack.c.l.b16 %v1070
        %v1306 = vunpack.c.h.b16 %v1070
        %v1307 = vunpack.c.l.b16 %v1071
        %v1308 = vunpack.c.h.b16 %v1071
        %v1309 = vunpack.c.l.b16 %v1072
        %v1310 = vunpack.c.h.b16 %v1072
        %v1311 = vunpack.c.l.b16 %v1073
        %v1312 = vunpack.c.h.b16 %v1073
        %v1313 = vunpack.c.l.b16 %v1074
        %v1314 = vunpack.c.h.b16 %v1074
        %v1315 = vpack.c.b16 %v1285, %v1283
        %v1316 = vpack.c.b16 %v1286, %v1284
        %v1317 = vpack.c.b16 %v1289, %v1287
        %v1318 = vpack.c.b16 %v1290, %v1288
        %v1319 = vpack.c.b16 %v1293, %v1291
        %v1320 = vpack.c.b16 %v1294, %v1292
        %v1321 = vpack.c.b16 %v1297, %v1295
        %v1322 = vpack.c.b16 %v1298, %v1296
        %v1323 = vpack.c.b16 %v1301, %v1299
        %v1324 = vpack.c.b16 %v1302, %v1300
        %v1325 = vpack.c.b16 %v1305, %v1303
        %v1326 = vpack.c.b16 %v1306, %v1304
        %v1327 = vpack.c.b16 %v1309, %v1307
        %v1328 = vpack.c.b16 %v1310, %v1308
        %v1329 = vpack.c.b16 %v1313, %v1311
        %v1330 = vpack.c.b16 %v1314, %v1312
        %1347 = vmatpush.bf16.msra.mxu0 %v1329
        %1348 = vmatpush.bf16.msra.mxu0 %v1327
        %1349 = vmatpush.bf16.msra.mxu0 %v1325
        %1350 = vmatpush.bf16.msra.mxu0 %v1323
        %1351 = vmatpush.bf16.msra.mxu0 %v1321
        %1352 = vmatpush.bf16.msra.mxu0 %v1319
        %1353 = vmatpush.bf16.msra.mxu0 %v1317
        %1354 = vmatpush.bf16.msra.mxu0 %v1315
        %1355 = vmatmul.bf16.gmra.mxu0 %v1203
        %v1356 = vpop.f32.mrf.mxu0
        %v1357 = vadd.f32 0.0, %v1356
        %v1358 = vpop.f32.mrf.mxu0
        %v1359 = vadd.f32 0.0, %v1358
        %1360 = vmatmul.bf16.gmra.mxu0 %v1204
        %v1361 = vpop.f32.mrf.mxu0
        %v1362 = vadd.f32 0.0, %v1361
        %v1363 = vpop.f32.mrf.mxu0
        %v1364 = vadd.f32 0.0, %v1363
        %1365 = vmatmul.bf16.gmra.mxu0 %v1205
        %v1366 = vpop.f32.mrf.mxu0
        %v1367 = vadd.f32 0.0, %v1366
        %v1368 = vpop.f32.mrf.mxu0
        %v1369 = vadd.f32 0.0, %v1368
        %1370 = vmatmul.bf16.gmra.mxu0 %v1206
        %v1371 = vpop.f32.mrf.mxu0
        %v1372 = vadd.f32 0.0, %v1371
        %v1373 = vpop.f32.mrf.mxu0
        %v1374 = vadd.f32 0.0, %v1373
        %1375 = vmatmul.bf16.gmra.mxu0 %v1207
        %v1376 = vpop.f32.mrf.mxu0
        %v1377 = vadd.f32 0.0, %v1376
        %v1378 = vpop.f32.mrf.mxu0
        %v1379 = vadd.f32 0.0, %v1378
        %1380 = vmatmul.bf16.gmra.mxu0 %v1208
        %v1381 = vpop.f32.mrf.mxu0
        %v1382 = vadd.f32 0.0, %v1381
        %v1383 = vpop.f32.mrf.mxu0
        %v1384 = vadd.f32 0.0, %v1383
        %1385 = vmatmul.bf16.gmra.mxu0 %v1209
        %v1386 = vpop.f32.mrf.mxu0
        %v1387 = vadd.f32 0.0, %v1386
        %v1388 = vpop.f32.mrf.mxu0
        %v1389 = vadd.f32 0.0, %v1388
        %1390 = vmatmul.bf16.gmra.mxu0 %v1210
        %v1391 = vpop.f32.mrf.mxu0
        %v1392 = vadd.f32 0.0, %v1391
        %v1393 = vpop.f32.mrf.mxu0
        %v1394 = vadd.f32 0.0, %v1393
        %1395 = vmatmul.bf16.gmra.mxu0 %v1211
        %v1396 = vpop.f32.mrf.mxu0
        %v1397 = vadd.f32 0.0, %v1396
        %v1398 = vpop.f32.mrf.mxu0
        %v1399 = vadd.f32 0.0, %v1398
        %1400 = vmatmul.bf16.gmra.mxu0 %v1212
        %v1401 = vpop.f32.mrf.mxu0
        %v1402 = vadd.f32 0.0, %v1401
        %v1403 = vpop.f32.mrf.mxu0
        %v1404 = vadd.f32 0.0, %v1403
        %1405 = vmatmul.bf16.gmra.mxu0 %v1213
        %v1406 = vpop.f32.mrf.mxu0
        %v1407 = vadd.f32 0.0, %v1406
        %v1408 = vpop.f32.mrf.mxu0
        %v1409 = vadd.f32 0.0, %v1408
        %1410 = vmatmul.bf16.gmra.mxu0 %v1214
        %v1411 = vpop.f32.mrf.mxu0
        %v1412 = vadd.f32 0.0, %v1411
        %v1413 = vpop.f32.mrf.mxu0
        %v1414 = vadd.f32 0.0, %v1413
        %1415 = vmatmul.bf16.gmra.mxu0 %v1215
        %v1416 = vpop.f32.mrf.mxu0
        %v1417 = vadd.f32 0.0, %v1416
        %v1418 = vpop.f32.mrf.mxu0
        %v1419 = vadd.f32 0.0, %v1418
        %1420 = vmatmul.bf16.gmra.mxu0 %v1216
        %v1421 = vpop.f32.mrf.mxu0
        %v1422 = vadd.f32 0.0, %v1421
        %v1423 = vpop.f32.mrf.mxu0
        %v1424 = vadd.f32 0.0, %v1423
        %1425 = vmatmul.bf16.gmra.mxu0 %v1217
        %v1426 = vpop.f32.mrf.mxu0
        %v1427 = vadd.f32 0.0, %v1426
        %v1428 = vpop.f32.mrf.mxu0
        %v1429 = vadd.f32 0.0, %v1428
        %1430 = vmatmul.bf16.gmra.mxu0 %v1218
        %v1431 = vpop.f32.mrf.mxu0
        %v1432 = vadd.f32 0.0, %v1431
        %v1433 = vpop.f32.mrf.mxu0
        %v1434 = vadd.f32 0.0, %v1433
        %1435 = vmatmul.bf16.gmra.mxu0 %v1219
        %v1436 = vpop.f32.mrf.mxu0
        %v1437 = vadd.f32 0.0, %v1436
        %v1438 = vpop.f32.mrf.mxu0
        %v1439 = vadd.f32 0.0, %v1438
        %1440 = vmatmul.bf16.gmra.mxu0 %v1220
        %v1441 = vpop.f32.mrf.mxu0
        %v1442 = vadd.f32 0.0, %v1441
        %v1443 = vpop.f32.mrf.mxu0
        %v1444 = vadd.f32 0.0, %v1443
        %1445 = vmatmul.bf16.gmra.mxu0 %v1221
        %v1446 = vpop.f32.mrf.mxu0
        %v1447 = vadd.f32 0.0, %v1446
        %v1448 = vpop.f32.mrf.mxu0
        %v1449 = vadd.f32 0.0, %v1448
        %1450 = vmatmul.bf16.gmra.mxu0 %v1222
        %v1451 = vpop.f32.mrf.mxu0
        %v1452 = vadd.f32 0.0, %v1451
        %v1453 = vpop.f32.mrf.mxu0
        %v1454 = vadd.f32 0.0, %v1453
        %1455 = vmatmul.bf16.gmra.mxu0 %v1223
        %v1456 = vpop.f32.mrf.mxu0
        %v1457 = vadd.f32 0.0, %v1456
        %v1458 = vpop.f32.mrf.mxu0
        %v1459 = vadd.f32 0.0, %v1458
        %1460 = vmatmul.bf16.gmra.mxu0 %v1224
        %v1461 = vpop.f32.mrf.mxu0
        %v1462 = vadd.f32 0.0, %v1461
        %v1463 = vpop.f32.mrf.mxu0
        %v1464 = vadd.f32 0.0, %v1463
        %1465 = vmatmul.bf16.gmra.mxu0 %v1225
        %v1466 = vpop.f32.mrf.mxu0
        %v1467 = vadd.f32 0.0, %v1466
        %v1468 = vpop.f32.mrf.mxu0
        %v1469 = vadd.f32 0.0, %v1468
        %1470 = vmatmul.bf16.gmra.mxu0 %v1226
        %v1471 = vpop.f32.mrf.mxu0
        %v1472 = vadd.f32 0.0, %v1471
        %v1473 = vpop.f32.mrf.mxu0
        %v1474 = vadd.f32 0.0, %v1473
        %1475 = vmatmul.bf16.gmra.mxu0 %v1227
        %v1476 = vpop.f32.mrf.mxu0
        %v1477 = vadd.f32 0.0, %v1476
        %v1478 = vpop.f32.mrf.mxu0
        %v1479 = vadd.f32 0.0, %v1478
        %1480 = vmatmul.bf16.gmra.mxu0 %v1228
        %v1481 = vpop.f32.mrf.mxu0
        %v1482 = vadd.f32 0.0, %v1481
        %v1483 = vpop.f32.mrf.mxu0
        %v1484 = vadd.f32 0.0, %v1483
        %1485 = vmatmul.bf16.gmra.mxu0 %v1229
        %v1486 = vpop.f32.mrf.mxu0
        %v1487 = vadd.f32 0.0, %v1486
        %v1488 = vpop.f32.mrf.mxu0
        %v1489 = vadd.f32 0.0, %v1488
        %1490 = vmatmul.bf16.gmra.mxu0 %v1230
        %v1491 = vpop.f32.mrf.mxu0
        %v1492 = vadd.f32 0.0, %v1491
        %v1493 = vpop.f32.mrf.mxu0
        %v1494 = vadd.f32 0.0, %v1493
        %1495 = vmatmul.bf16.gmra.mxu0 %v1231
        %v1496 = vpop.f32.mrf.mxu0
        %v1497 = vadd.f32 0.0, %v1496
        %v1498 = vpop.f32.mrf.mxu0
        %v1499 = vadd.f32 0.0, %v1498
        %1500 = vmatmul.bf16.gmra.mxu0 %v1232
        %v1501 = vpop.f32.mrf.mxu0
        %v1502 = vadd.f32 0.0, %v1501
        %v1503 = vpop.f32.mrf.mxu0
        %v1504 = vadd.f32 0.0, %v1503
        %1505 = vmatmul.bf16.gmra.mxu0 %v1233
        %v1506 = vpop.f32.mrf.mxu0
        %v1507 = vadd.f32 0.0, %v1506
        %v1508 = vpop.f32.mrf.mxu0
        %v1509 = vadd.f32 0.0, %v1508
        %1510 = vmatmul.bf16.gmra.mxu0 %v1234
        %v1511 = vpop.f32.mrf.mxu0
        %v1512 = vadd.f32 0.0, %v1511
        %v1513 = vpop.f32.mrf.mxu0
        %v1514 = vadd.f32 0.0, %v1513
        %1515 = vdwg.mxu0
        %1516 = vmatpush.bf16.msra.mxu0 %v1330
        %1517 = vmatpush.bf16.msra.mxu0 %v1328
        %1518 = vmatpush.bf16.msra.mxu0 %v1326
        %1519 = vmatpush.bf16.msra.mxu0 %v1324
        %1520 = vmatpush.bf16.msra.mxu0 %v1322
        %1521 = vmatpush.bf16.msra.mxu0 %v1320
        %1522 = vmatpush.bf16.msra.mxu0 %v1318
        %1523 = vmatpush.bf16.msra.mxu0 %v1316
        %1524 = vmatmul.bf16.gmra.mxu0 %v1203
        %v1525 = vpop.f32.mrf.mxu0
        %v1526 = vadd.f32 0.0, %v1525
        %v1527 = vpop.f32.mrf.mxu0
        %v1528 = vadd.f32 0.0, %v1527
        %1529 = vmatmul.bf16.gmra.mxu0 %v1204
        %v1530 = vpop.f32.mrf.mxu0
        %v1531 = vadd.f32 0.0, %v1530
        %v1532 = vpop.f32.mrf.mxu0
        %v1533 = vadd.f32 0.0, %v1532
        %1534 = vmatmul.bf16.gmra.mxu0 %v1205
        %v1535 = vpop.f32.mrf.mxu0
        %v1536 = vadd.f32 0.0, %v1535
        %v1537 = vpop.f32.mrf.mxu0
        %v1538 = vadd.f32 0.0, %v1537
        %1539 = vmatmul.bf16.gmra.mxu0 %v1206
        %v1540 = vpop.f32.mrf.mxu0
        %v1541 = vadd.f32 0.0, %v1540
        %v1542 = vpop.f32.mrf.mxu0
        %v1543 = vadd.f32 0.0, %v1542
        %1544 = vmatmul.bf16.gmra.mxu0 %v1207
        %v1545 = vpop.f32.mrf.mxu0
        %v1546 = vadd.f32 0.0, %v1545
        %v1547 = vpop.f32.mrf.mxu0
        %v1548 = vadd.f32 0.0, %v1547
        %1549 = vmatmul.bf16.gmra.mxu0 %v1208
        %v1550 = vpop.f32.mrf.mxu0
        %v1551 = vadd.f32 0.0, %v1550
        %v1552 = vpop.f32.mrf.mxu0
        %v1553 = vadd.f32 0.0, %v1552
        %1554 = vmatmul.bf16.gmra.mxu0 %v1209
        %v1555 = vpop.f32.mrf.mxu0
        %v1556 = vadd.f32 0.0, %v1555
        %v1557 = vpop.f32.mrf.mxu0
        %v1558 = vadd.f32 0.0, %v1557
        %1559 = vmatmul.bf16.gmra.mxu0 %v1210
        %v1560 = vpop.f32.mrf.mxu0
        %v1561 = vadd.f32 0.0, %v1560
        %v1562 = vpop.f32.mrf.mxu0
        %v1563 = vadd.f32 0.0, %v1562
        %1564 = vmatmul.bf16.gmra.mxu0 %v1211
        %v1565 = vpop.f32.mrf.mxu0
        %v1566 = vadd.f32 0.0, %v1565
        %v1567 = vpop.f32.mrf.mxu0
        %v1568 = vadd.f32 0.0, %v1567
        %1569 = vmatmul.bf16.gmra.mxu0 %v1212
        %v1570 = vpop.f32.mrf.mxu0
        %v1571 = vadd.f32 0.0, %v1570
        %v1572 = vpop.f32.mrf.mxu0
        %v1573 = vadd.f32 0.0, %v1572
        %1574 = vmatmul.bf16.gmra.mxu0 %v1213
        %v1575 = vpop.f32.mrf.mxu0
        %v1576 = vadd.f32 0.0, %v1575
        %v1577 = vpop.f32.mrf.mxu0
        %v1578 = vadd.f32 0.0, %v1577
        %1579 = vmatmul.bf16.gmra.mxu0 %v1214
        %v1580 = vpop.f32.mrf.mxu0
        %v1581 = vadd.f32 0.0, %v1580
        %v1582 = vpop.f32.mrf.mxu0
        %v1583 = vadd.f32 0.0, %v1582
        %1584 = vmatmul.bf16.gmra.mxu0 %v1215
        %v1585 = vpop.f32.mrf.mxu0
        %v1586 = vadd.f32 0.0, %v1585
        %v1587 = vpop.f32.mrf.mxu0
        %v1588 = vadd.f32 0.0, %v1587
        %1589 = vmatmul.bf16.gmra.mxu0 %v1216
        %v1590 = vpop.f32.mrf.mxu0
        %v1591 = vadd.f32 0.0, %v1590
        %v1592 = vpop.f32.mrf.mxu0
        %v1593 = vadd.f32 0.0, %v1592
        %1594 = vmatmul.bf16.gmra.mxu0 %v1217
        %v1595 = vpop.f32.mrf.mxu0
        %v1596 = vadd.f32 0.0, %v1595
        %v1597 = vpop.f32.mrf.mxu0
        %v1598 = vadd.f32 0.0, %v1597
        %1599 = vmatmul.bf16.gmra.mxu0 %v1218
        %v1600 = vpop.f32.mrf.mxu0
        %v1601 = vadd.f32 0.0, %v1600
        %v1602 = vpop.f32.mrf.mxu0
        %v1603 = vadd.f32 0.0, %v1602
        %1604 = vmatmul.bf16.gmra.mxu0 %v1219
        %v1605 = vpop.f32.mrf.mxu0
        %v1606 = vadd.f32 0.0, %v1605
        %v1607 = vpop.f32.mrf.mxu0
        %v1608 = vadd.f32 0.0, %v1607
        %1609 = vmatmul.bf16.gmra.mxu0 %v1220
        %v1610 = vpop.f32.mrf.mxu0
        %v1611 = vadd.f32 0.0, %v1610
        %v1612 = vpop.f32.mrf.mxu0
        %v1613 = vadd.f32 0.0, %v1612
        %1614 = vmatmul.bf16.gmra.mxu0 %v1221
        %v1615 = vpop.f32.mrf.mxu0
        %v1616 = vadd.f32 0.0, %v1615
        %v1617 = vpop.f32.mrf.mxu0
        %v1618 = vadd.f32 0.0, %v1617
        %1619 = vmatmul.bf16.gmra.mxu0 %v1222
        %v1620 = vpop.f32.mrf.mxu0
        %v1621 = vadd.f32 0.0, %v1620
        %v1622 = vpop.f32.mrf.mxu0
        %v1623 = vadd.f32 0.0, %v1622
        %1624 = vmatmul.bf16.gmra.mxu0 %v1223
        %v1625 = vpop.f32.mrf.mxu0
        %v1626 = vadd.f32 0.0, %v1625
        %v1627 = vpop.f32.mrf.mxu0
        %v1628 = vadd.f32 0.0, %v1627
        %1629 = vmatmul.bf16.gmra.mxu0 %v1224
        %v1630 = vpop.f32.mrf.mxu0
        %v1631 = vadd.f32 0.0, %v1630
        %v1632 = vpop.f32.mrf.mxu0
        %v1633 = vadd.f32 0.0, %v1632
        %1634 = vmatmul.bf16.gmra.mxu0 %v1225
        %v1635 = vpop.f32.mrf.mxu0
        %v1636 = vadd.f32 0.0, %v1635
        %v1637 = vpop.f32.mrf.mxu0
        %v1638 = vadd.f32 0.0, %v1637
        %1639 = vmatmul.bf16.gmra.mxu0 %v1226
        %v1640 = vpop.f32.mrf.mxu0
        %v1641 = vadd.f32 0.0, %v1640
        %v1642 = vpop.f32.mrf.mxu0
        %v1643 = vadd.f32 0.0, %v1642
        %1644 = vmatmul.bf16.gmra.mxu0 %v1227
        %v1645 = vpop.f32.mrf.mxu0
        %v1646 = vadd.f32 0.0, %v1645
        %v1647 = vpop.f32.mrf.mxu0
        %v1648 = vadd.f32 0.0, %v1647
        %1649 = vmatmul.bf16.gmra.mxu0 %v1228
        %v1650 = vpop.f32.mrf.mxu0
        %v1651 = vadd.f32 0.0, %v1650
        %v1652 = vpop.f32.mrf.mxu0
        %v1653 = vadd.f32 0.0, %v1652
        %1654 = vmatmul.bf16.gmra.mxu0 %v1229
        %v1655 = vpop.f32.mrf.mxu0
        %v1656 = vadd.f32 0.0, %v1655
        %v1657 = vpop.f32.mrf.mxu0
        %v1658 = vadd.f32 0.0, %v1657
        %1659 = vmatmul.bf16.gmra.mxu0 %v1230
        %v1660 = vpop.f32.mrf.mxu0
        %v1661 = vadd.f32 0.0, %v1660
        %v1662 = vpop.f32.mrf.mxu0
        %v1663 = vadd.f32 0.0, %v1662
        %1664 = vmatmul.bf16.gmra.mxu0 %v1231
        %v1665 = vpop.f32.mrf.mxu0
        %v1666 = vadd.f32 0.0, %v1665
        %v1667 = vpop.f32.mrf.mxu0
        %v1668 = vadd.f32 0.0, %v1667
        %1669 = vmatmul.bf16.gmra.mxu0 %v1232
        %v1670 = vpop.f32.mrf.mxu0
        %v1671 = vadd.f32 0.0, %v1670
        %v1672 = vpop.f32.mrf.mxu0
        %v1673 = vadd.f32 0.0, %v1672
        %1674 = vmatmul.bf16.gmra.mxu0 %v1233
        %v1675 = vpop.f32.mrf.mxu0
        %v1676 = vadd.f32 0.0, %v1675
        %v1677 = vpop.f32.mrf.mxu0
        %v1678 = vadd.f32 0.0, %v1677
        %1679 = vmatmul.bf16.gmra.mxu0 %v1234
        %v1680 = vpop.f32.mrf.mxu0
        %v1681 = vadd.f32 0.0, %v1680
        %v1682 = vpop.f32.mrf.mxu0
        %v1683 = vadd.f32 0.0, %v1682
        %1684 = vdwg.mxu0
        %v1685 = vadd.f32 %v867, %v1357
        %v1686 = vadd.f32 %v868, %v1526
        %v1687 = vadd.f32 %v869, %v1359
        %v1688 = vadd.f32 %v870, %v1528
        %v1689 = vadd.f32 %v871, %v1362
        %v1690 = vadd.f32 %v872, %v1531
        %v1691 = vadd.f32 %v873, %v1364
        %v1692 = vadd.f32 %v874, %v1533
        %v1693 = vadd.f32 %v875, %v1367
        %v1694 = vadd.f32 %v876, %v1536
        %v1695 = vadd.f32 %v877, %v1369
        %v1696 = vadd.f32 %v878, %v1538
        %v1697 = vadd.f32 %v879, %v1372
        %v1698 = vadd.f32 %v880, %v1541
        %v1699 = vadd.f32 %v881, %v1374
        %v1700 = vadd.f32 %v882, %v1543
        %v1701 = vadd.f32 %v883, %v1377
        %v1702 = vadd.f32 %v884, %v1546
        %v1703 = vadd.f32 %v885, %v1379
        %v1704 = vadd.f32 %v886, %v1548
        %v1705 = vadd.f32 %v887, %v1382
        %v1706 = vadd.f32 %v888, %v1551
        %v1707 = vadd.f32 %v889, %v1384
        %v1708 = vadd.f32 %v890, %v1553
        %v1709 = vadd.f32 %v891, %v1387
        %v1710 = vadd.f32 %v892, %v1556
        %v1711 = vadd.f32 %v893, %v1389
        %v1712 = vadd.f32 %v894, %v1558
        %v1713 = vadd.f32 %v895, %v1392
        %v1714 = vadd.f32 %v896, %v1561
        %v1715 = vadd.f32 %v897, %v1394
        %v1716 = vadd.f32 %v898, %v1563
        %v1717 = vadd.f32 %v899, %v1397
        %v1718 = vadd.f32 %v900, %v1566
        %v1719 = vadd.f32 %v901, %v1399
        %v1720 = vadd.f32 %v902, %v1568
        %v1721 = vadd.f32 %v903, %v1402
        %v1722 = vadd.f32 %v904, %v1571
        %v1723 = vadd.f32 %v905, %v1404
        %v1724 = vadd.f32 %v906, %v1573
        %v1725 = vadd.f32 %v907, %v1407
        %v1726 = vadd.f32 %v908, %v1576
        %v1727 = vadd.f32 %v909, %v1409
        %v1728 = vadd.f32 %v910, %v1578
        %v1729 = vadd.f32 %v911, %v1412
        %v1730 = vadd.f32 %v912, %v1581
        %v1731 = vadd.f32 %v913, %v1414
        %v1732 = vadd.f32 %v914, %v1583
        %v1733 = vadd.f32 %v915, %v1417
        %v1734 = vadd.f32 %v916, %v1586
        %v1735 = vadd.f32 %v917, %v1419
        %v1736 = vadd.f32 %v918, %v1588
        %v1737 = vadd.f32 %v919, %v1422
        %v1738 = vadd.f32 %v920, %v1591
        %v1739 = vadd.f32 %v921, %v1424
        %v1740 = vadd.f32 %v922, %v1593
        %v1741 = vadd.f32 %v923, %v1427
        %v1742 = vadd.f32 %v924, %v1596
        %v1743 = vadd.f32 %v925, %v1429
        %v1744 = vadd.f32 %v926, %v1598
        %v1745 = vadd.f32 %v927, %v1432
        %v1746 = vadd.f32 %v928, %v1601
        %v1747 = vadd.f32 %v929, %v1434
        %v1748 = vadd.f32 %v930, %v1603
        %v1749 = vadd.f32 %v931, %v1437
        %v1750 = vadd.f32 %v932, %v1606
        %v1751 = vadd.f32 %v933, %v1439
        %v1752 = vadd.f32 %v934, %v1608
        %v1753 = vadd.f32 %v935, %v1442
        %v1754 = vadd.f32 %v936, %v1611
        %v1755 = vadd.f32 %v937, %v1444
        %v1756 = vadd.f32 %v938, %v1613
        %v1757 = vadd.f32 %v939, %v1447
        %v1758 = vadd.f32 %v940, %v1616
        %v1759 = vadd.f32 %v941, %v1449
        %v1760 = vadd.f32 %v942, %v1618
        %v1761 = vadd.f32 %v943, %v1452
        %v1762 = vadd.f32 %v944, %v1621
        %v1763 = vadd.f32 %v945, %v1454
        %v1764 = vadd.f32 %v946, %v1623
        %v1765 = vadd.f32 %v947, %v1457
        %v1766 = vadd.f32 %v948, %v1626
        %v1767 = vadd.f32 %v949, %v1459
        %v1768 = vadd.f32 %v950, %v1628
        %v1769 = vadd.f32 %v951, %v1462
        %v1770 = vadd.f32 %v952, %v1631
        %v1771 = vadd.f32 %v953, %v1464
        %v1772 = vadd.f32 %v954, %v1633
        %v1773 = vadd.f32 %v955, %v1467
        %v1774 = vadd.f32 %v956, %v1636
        %v1775 = vadd.f32 %v957, %v1469
        %v1776 = vadd.f32 %v958, %v1638
        %v1777 = vadd.f32 %v959, %v1472
        %v1778 = vadd.f32 %v960, %v1641
        %v1779 = vadd.f32 %v961, %v1474
        %v1780 = vadd.f32 %v962, %v1643
        %v1781 = vadd.f32 %v963, %v1477
        %v1782 = vadd.f32 %v964, %v1646
        %v1783 = vadd.f32 %v965, %v1479
        %v1784 = vadd.f32 %v966, %v1648
        %v1785 = vadd.f32 %v967, %v1482
        %v1786 = vadd.f32 %v968, %v1651
        %v1787 = vadd.f32 %v969, %v1484
        %v1788 = vadd.f32 %v970, %v1653
        %v1789 = vadd.f32 %v971, %v1487
        %v1790 = vadd.f32 %v972, %v1656
        %v1791 = vadd.f32 %v973, %v1489
        %v1792 = vadd.f32 %v974, %v1658
        %v1793 = vadd.f32 %v975, %v1492
        %v1794 = vadd.f32 %v976, %v1661
        %v1795 = vadd.f32 %v977, %v1494
        %v1796 = vadd.f32 %v978, %v1663
        %v1797 = vadd.f32 %v979, %v1497
        %v1798 = vadd.f32 %v980, %v1666
        %v1799 = vadd.f32 %v981, %v1499
        %v1800 = vadd.f32 %v982, %v1668
        %v1801 = vadd.f32 %v983, %v1502
        %v1802 = vadd.f32 %v984, %v1671
        %v1803 = vadd.f32 %v985, %v1504
        %v1804 = vadd.f32 %v986, %v1673
        %v1805 = vadd.f32 %v987, %v1507
        %v1806 = vadd.f32 %v988, %v1676
        %v1807 = vadd.f32 %v989, %v1509
        %v1808 = vadd.f32 %v990, %v1678
        %v1809 = vadd.f32 %v991, %v1512
        %v1810 = vadd.f32 %v992, %v1681
        %v1811 = vadd.f32 %v993, %v1514
        %v1812 = vadd.f32 %v994, %v1683
        %1813 = vst [vmem:[#allocation2] sm:$0xff] %v1685
        %1814 = vst [vmem:[#allocation2 + $0x8] sm:$0xff] %v1686
        %1815 = vst [vmem:[#allocation2 + $0x10] sm:$0xff] %v1687
        %1816 = vst [vmem:[#allocation2 + $0x18] sm:$0xff] %v1688
        %1817 = vst [vmem:[#allocation2 + $0x20] sm:$0xff] %v1689
        %1818 = vst [vmem:[#allocation2 + $0x28] sm:$0xff] %v1690
        %1819 = vst [vmem:[#allocation2 + $0x30] sm:$0xff] %v1691
        %1820 = vst [vmem:[#allocation2 + $0x38] sm:$0xff] %v1692
        %1821 = vst [vmem:[#allocation2 + $0x40] sm:$0xff] %v1693
        %1822 = vst [vmem:[#allocation2 + $0x48] sm:$0xff] %v1694
        %1823 = vst [vmem:[#allocation2 + $0x50] sm:$0xff] %v1695
        %1824 = vst [vmem:[#allocation2 + $0x58] sm:$0xff] %v1696
        %1825 = vst [vmem:[#allocation2 + $0x60] sm:$0xff] %v1697
        %1826 = vst [vmem:[#allocation2 + $0x68] sm:$0xff] %v1698
        %1827 = vst [vmem:[#allocation2 + $0x70] sm:$0xff] %v1699
        %1828 = vst [vmem:[#allocation2 + $0x78] sm:$0xff] %v1700
        %1829 = vst [vmem:[#allocation2 + $0x80] sm:$0xff] %v1701
        %1830 = vst [vmem:[#allocation2 + $0x88] sm:$0xff] %v1702
        %1831 = vst [vmem:[#allocation2 + $0x90] sm:$0xff] %v1703
        %1832 = vst [vmem:[#allocation2 + $0x98] sm:$0xff] %v1704
        %1833 = vst [vmem:[#allocation2 + $0xa0] sm:$0xff] %v1705
        %1834 = vst [vmem:[#allocation2 + $0xa8] sm:$0xff] %v1706
        %1835 = vst [vmem:[#allocation2 + $0xb0] sm:$0xff] %v1707
        %1836 = vst [vmem:[#allocation2 + $0xb8] sm:$0xff] %v1708
        %1837 = vst [vmem:[#allocation2 + $0xc0] sm:$0xff] %v1709
        %1838 = vst [vmem:[#allocation2 + $0xc8] sm:$0xff] %v1710
        %1839 = vst [vmem:[#allocation2 + $0xd0] sm:$0xff] %v1711
        %1840 = vst [vmem:[#allocation2 + $0xd8] sm:$0xff] %v1712
        %1841 = vst [vmem:[#allocation2 + $0xe0] sm:$0xff] %v1713
        %1842 = vst [vmem:[#allocation2 + $0xe8] sm:$0xff] %v1714
        %1843 = vst [vmem:[#allocation2 + $0xf0] sm:$0xff] %v1715
        %1844 = vst [vmem:[#allocation2 + $0xf8] sm:$0xff] %v1716
        %1845 = vst [vmem:[#allocation2 + $0x100] sm:$0xff] %v1717
        %1846 = vst [vmem:[#allocation2 + $0x108] sm:$0xff] %v1718
        %1847 = vst [vmem:[#allocation2 + $0x110] sm:$0xff] %v1719
        %1848 = vst [vmem:[#allocation2 + $0x118] sm:$0xff] %v1720
        %1849 = vst [vmem:[#allocation2 + $0x120] sm:$0xff] %v1721
        %1850 = vst [vmem:[#allocation2 + $0x128] sm:$0xff] %v1722
        %1851 = vst [vmem:[#allocation2 + $0x130] sm:$0xff] %v1723
        %1852 = vst [vmem:[#allocation2 + $0x138] sm:$0xff] %v1724
        %1853 = vst [vmem:[#allocation2 + $0x140] sm:$0xff] %v1725
        %1854 = vst [vmem:[#allocation2 + $0x148] sm:$0xff] %v1726
        %1855 = vst [vmem:[#allocation2 + $0x150] sm:$0xff] %v1727
        %1856 = vst [vmem:[#allocation2 + $0x158] sm:$0xff] %v1728
        %1857 = vst [vmem:[#allocation2 + $0x160] sm:$0xff] %v1729
        %1858 = vst [vmem:[#allocation2 + $0x168] sm:$0xff] %v1730
        %1859 = vst [vmem:[#allocation2 + $0x170] sm:$0xff] %v1731
        %1860 = vst [vmem:[#allocation2 + $0x178] sm:$0xff] %v1732
        %1861 = vst [vmem:[#allocation2 + $0x180] sm:$0xff] %v1733
        %1862 = vst [vmem:[#allocation2 + $0x188] sm:$0xff] %v1734
        %1863 = vst [vmem:[#allocation2 + $0x190] sm:$0xff] %v1735
        %1864 = vst [vmem:[#allocation2 + $0x198] sm:$0xff] %v1736
        %1865 = vst [vmem:[#allocation2 + $0x1a0] sm:$0xff] %v1737
        %1866 = vst [vmem:[#allocation2 + $0x1a8] sm:$0xff] %v1738
        %1867 = vst [vmem:[#allocation2 + $0x1b0] sm:$0xff] %v1739
        %1868 = vst [vmem:[#allocation2 + $0x1b8] sm:$0xff] %v1740
        %1869 = vst [vmem:[#allocation2 + $0x1c0] sm:$0xff] %v1741
        %1870 = vst [vmem:[#allocation2 + $0x1c8] sm:$0xff] %v1742
        %1871 = vst [vmem:[#allocation2 + $0x1d0] sm:$0xff] %v1743
        %1872 = vst [vmem:[#allocation2 + $0x1d8] sm:$0xff] %v1744
        %1873 = vst [vmem:[#allocation2 + $0x1e0] sm:$0xff] %v1745
        %1874 = vst [vmem:[#allocation2 + $0x1e8] sm:$0xff] %v1746
        %1875 = vst [vmem:[#allocation2 + $0x1f0] sm:$0xff] %v1747
        %1876 = vst [vmem:[#allocation2 + $0x1f8] sm:$0xff] %v1748
        %1877 = vst [vmem:[#allocation2 + $0x200] sm:$0xff] %v1749
        %1878 = vst [vmem:[#allocation2 + $0x208] sm:$0xff] %v1750
        %1879 = vst [vmem:[#allocation2 + $0x210] sm:$0xff] %v1751
        %1880 = vst [vmem:[#allocation2 + $0x218] sm:$0xff] %v1752
        %1881 = vst [vmem:[#allocation2 + $0x220] sm:$0xff] %v1753
        %1882 = vst [vmem:[#allocation2 + $0x228] sm:$0xff] %v1754
        %1883 = vst [vmem:[#allocation2 + $0x230] sm:$0xff] %v1755
        %1884 = vst [vmem:[#allocation2 + $0x238] sm:$0xff] %v1756
        %1885 = vst [vmem:[#allocation2 + $0x240] sm:$0xff] %v1757
        %1886 = vst [vmem:[#allocation2 + $0x248] sm:$0xff] %v1758
        %1887 = vst [vmem:[#allocation2 + $0x250] sm:$0xff] %v1759
        %1888 = vst [vmem:[#allocation2 + $0x258] sm:$0xff] %v1760
        %1889 = vst [vmem:[#allocation2 + $0x260] sm:$0xff] %v1761
        %1890 = vst [vmem:[#allocation2 + $0x268] sm:$0xff] %v1762
        %1891 = vst [vmem:[#allocation2 + $0x270] sm:$0xff] %v1763
        %1892 = vst [vmem:[#allocation2 + $0x278] sm:$0xff] %v1764
        %1893 = vst [vmem:[#allocation2 + $0x280] sm:$0xff] %v1765
        %1894 = vst [vmem:[#allocation2 + $0x288] sm:$0xff] %v1766
        %1895 = vst [vmem:[#allocation2 + $0x290] sm:$0xff] %v1767
        %1896 = vst [vmem:[#allocation2 + $0x298] sm:$0xff] %v1768
        %1897 = vst [vmem:[#allocation2 + $0x2a0] sm:$0xff] %v1769
        %1898 = vst [vmem:[#allocation2 + $0x2a8] sm:$0xff] %v1770
        %1899 = vst [vmem:[#allocation2 + $0x2b0] sm:$0xff] %v1771
        %1900 = vst [vmem:[#allocation2 + $0x2b8] sm:$0xff] %v1772
        %1901 = vst [vmem:[#allocation2 + $0x2c0] sm:$0xff] %v1773
        %1902 = vst [vmem:[#allocation2 + $0x2c8] sm:$0xff] %v1774
        %1903 = vst [vmem:[#allocation2 + $0x2d0] sm:$0xff] %v1775
        %1904 = vst [vmem:[#allocation2 + $0x2d8] sm:$0xff] %v1776
        %1905 = vst [vmem:[#allocation2 + $0x2e0] sm:$0xff] %v1777
        %1906 = vst [vmem:[#allocation2 + $0x2e8] sm:$0xff] %v1778
        %1907 = vst [vmem:[#allocation2 + $0x2f0] sm:$0xff] %v1779
        %1908 = vst [vmem:[#allocation2 + $0x2f8] sm:$0xff] %v1780
        %1909 = vst [vmem:[#allocation2 + $0x300] sm:$0xff] %v1781
        %1910 = vst [vmem:[#allocation2 + $0x308] sm:$0xff] %v1782
        %1911 = vst [vmem:[#allocation2 + $0x310] sm:$0xff] %v1783
        %1912 = vst [vmem:[#allocation2 + $0x318] sm:$0xff] %v1784
        %1913 = vst [vmem:[#allocation2 + $0x320] sm:$0xff] %v1785
        %1914 = vst [vmem:[#allocation2 + $0x328] sm:$0xff] %v1786
        %1915 = vst [vmem:[#allocation2 + $0x330] sm:$0xff] %v1787
        %1916 = vst [vmem:[#allocation2 + $0x338] sm:$0xff] %v1788
        %1917 = vst [vmem:[#allocation2 + $0x340] sm:$0xff] %v1789
        %1918 = vst [vmem:[#allocation2 + $0x348] sm:$0xff] %v1790
        %1919 = vst [vmem:[#allocation2 + $0x350] sm:$0xff] %v1791
        %1920 = vst [vmem:[#allocation2 + $0x358] sm:$0xff] %v1792
        %1921 = vst [vmem:[#allocation2 + $0x360] sm:$0xff] %v1793
        %1922 = vst [vmem:[#allocation2 + $0x368] sm:$0xff] %v1794
        %1923 = vst [vmem:[#allocation2 + $0x370] sm:$0xff] %v1795
        %1924 = vst [vmem:[#allocation2 + $0x378] sm:$0xff] %v1796
        %1925 = vst [vmem:[#allocation2 + $0x380] sm:$0xff] %v1797
        %1926 = vst [vmem:[#allocation2 + $0x388] sm:$0xff] %v1798
        %1927 = vst [vmem:[#allocation2 + $0x390] sm:$0xff] %v1799
        %1928 = vst [vmem:[#allocation2 + $0x398] sm:$0xff] %v1800
        %1929 = vst [vmem:[#allocation2 + $0x3a0] sm:$0xff] %v1801
        %1930 = vst [vmem:[#allocation2 + $0x3a8] sm:$0xff] %v1802
        %1931 = vst [vmem:[#allocation2 + $0x3b0] sm:$0xff] %v1803
        %1932 = vst [vmem:[#allocation2 + $0x3b8] sm:$0xff] %v1804
        %1933 = vst [vmem:[#allocation2 + $0x3c0] sm:$0xff] %v1805
        %1934 = vst [vmem:[#allocation2 + $0x3c8] sm:$0xff] %v1806
        %1935 = vst [vmem:[#allocation2 + $0x3d0] sm:$0xff] %v1807
        %1936 = vst [vmem:[#allocation2 + $0x3d8] sm:$0xff] %v1808
        %1937 = vst [vmem:[#allocation2 + $0x3e0] sm:$0xff] %v1809
        %1938 = vst [vmem:[#allocation2 + $0x3e8] sm:$0xff] %v1810
        %1939 = vst [vmem:[#allocation2 + $0x3f0] sm:$0xff] %v1811
        %1940 = vst [vmem:[#allocation2 + $0x3f8] sm:$0xff] %v1812
        // Predicated region
        $region121: #{dcn_bottleneck_forward.5} parent=107 // pred_check
          %p1941 = pneg %p735
        $region122: #{dcn_bottleneck_forward.5} parent=107 // pred_check_branch
          %1943 = sbr.rel (%p1941) target = $region124
        $region123: #{dcn_bottleneck_forward.5} parent=107 // pred_region
          %v1944 = vld [vmem:[#allocation2] sm:$0xff]
          %v1945 = vld [vmem:[#allocation2 + $0x8] sm:$0xff]
          %v1946 = vld [vmem:[#allocation2 + $0x10] sm:$0xff]
          %v1947 = vld [vmem:[#allocation2 + $0x18] sm:$0xff]
          %v1948 = vld [vmem:[#allocation2 + $0x20] sm:$0xff]
          %v1949 = vld [vmem:[#allocation2 + $0x28] sm:$0xff]
          %v1950 = vld [vmem:[#allocation2 + $0x30] sm:$0xff]
          %v1951 = vld [vmem:[#allocation2 + $0x38] sm:$0xff]
          %v1952 = vld [vmem:[#allocation2 + $0x40] sm:$0xff]
          %v1953 = vld [vmem:[#allocation2 + $0x48] sm:$0xff]
          %v1954 = vld [vmem:[#allocation2 + $0x50] sm:$0xff]
          %v1955 = vld [vmem:[#allocation2 + $0x58] sm:$0xff]
          %v1956 = vld [vmem:[#allocation2 + $0x60] sm:$0xff]
          %v1957 = vld [vmem:[#allocation2 + $0x68] sm:$0xff]
          %v1958 = vld [vmem:[#allocation2 + $0x70] sm:$0xff]
          %v1959 = vld [vmem:[#allocation2 + $0x78] sm:$0xff]
          %v1960 = vld [vmem:[#allocation2 + $0x80] sm:$0xff]
          %v1961 = vld [vmem:[#allocation2 + $0x88] sm:$0xff]
          %v1962 = vld [vmem:[#allocation2 + $0x90] sm:$0xff]
          %v1963 = vld [vmem:[#allocation2 + $0x98] sm:$0xff]
          %v1964 = vld [vmem:[#allocation2 + $0xa0] sm:$0xff]
          %v1965 = vld [vmem:[#allocation2 + $0xa8] sm:$0xff]
          %v1966 = vld [vmem:[#allocation2 + $0xb0] sm:$0xff]
          %v1967 = vld [vmem:[#allocation2 + $0xb8] sm:$0xff]
          %v1968 = vld [vmem:[#allocation2 + $0xc0] sm:$0xff]
          %v1969 = vld [vmem:[#allocation2 + $0xc8] sm:$0xff]
          %v1970 = vld [vmem:[#allocation2 + $0xd0] sm:$0xff]
          %v1971 = vld [vmem:[#allocation2 + $0xd8] sm:$0xff]
          %v1972 = vld [vmem:[#allocation2 + $0xe0] sm:$0xff]
          %v1973 = vld [vmem:[#allocation2 + $0xe8] sm:$0xff]
          %v1974 = vld [vmem:[#allocation2 + $0xf0] sm:$0xff]
          %v1975 = vld [vmem:[#allocation2 + $0xf8] sm:$0xff]
          %v1976 = vld [vmem:[#allocation2 + $0x100] sm:$0xff]
          %v1977 = vld [vmem:[#allocation2 + $0x108] sm:$0xff]
          %v1978 = vld [vmem:[#allocation2 + $0x110] sm:$0xff]
          %v1979 = vld [vmem:[#allocation2 + $0x118] sm:$0xff]
          %v1980 = vld [vmem:[#allocation2 + $0x120] sm:$0xff]
          %v1981 = vld [vmem:[#allocation2 + $0x128] sm:$0xff]
          %v1982 = vld [vmem:[#allocation2 + $0x130] sm:$0xff]
          %v1983 = vld [vmem:[#allocation2 + $0x138] sm:$0xff]
          %v1984 = vld [vmem:[#allocation2 + $0x140] sm:$0xff]
          %v1985 = vld [vmem:[#allocation2 + $0x148] sm:$0xff]
          %v1986 = vld [vmem:[#allocation2 + $0x150] sm:$0xff]
          %v1987 = vld [vmem:[#allocation2 + $0x158] sm:$0xff]
          %v1988 = vld [vmem:[#allocation2 + $0x160] sm:$0xff]
          %v1989 = vld [vmem:[#allocation2 + $0x168] sm:$0xff]
          %v1990 = vld [vmem:[#allocation2 + $0x170] sm:$0xff]
          %v1991 = vld [vmem:[#allocation2 + $0x178] sm:$0xff]
          %v1992 = vld [vmem:[#allocation2 + $0x180] sm:$0xff]
          %v1993 = vld [vmem:[#allocation2 + $0x188] sm:$0xff]
          %v1994 = vld [vmem:[#allocation2 + $0x190] sm:$0xff]
          %v1995 = vld [vmem:[#allocation2 + $0x198] sm:$0xff]
          %v1996 = vld [vmem:[#allocation2 + $0x1a0] sm:$0xff]
          %v1997 = vld [vmem:[#allocation2 + $0x1a8] sm:$0xff]
          %v1998 = vld [vmem:[#allocation2 + $0x1b0] sm:$0xff]
          %v1999 = vld [vmem:[#allocation2 + $0x1b8] sm:$0xff]
          %v2000 = vld [vmem:[#allocation2 + $0x1c0] sm:$0xff]
          %v2001 = vld [vmem:[#allocation2 + $0x1c8] sm:$0xff]
          %v2002 = vld [vmem:[#allocation2 + $0x1d0] sm:$0xff]
          %v2003 = vld [vmem:[#allocation2 + $0x1d8] sm:$0xff]
          %v2004 = vld [vmem:[#allocation2 + $0x1e0] sm:$0xff]
          %v2005 = vld [vmem:[#allocation2 + $0x1e8] sm:$0xff]
          %v2006 = vld [vmem:[#allocation2 + $0x1f0] sm:$0xff]
          %v2007 = vld [vmem:[#allocation2 + $0x1f8] sm:$0xff]
          %v2008 = vld [vmem:[#allocation2 + $0x200] sm:$0xff]
          %v2009 = vld [vmem:[#allocation2 + $0x208] sm:$0xff]
          %v2010 = vld [vmem:[#allocation2 + $0x210] sm:$0xff]
          %v2011 = vld [vmem:[#allocation2 + $0x218] sm:$0xff]
          %v2012 = vld [vmem:[#allocation2 + $0x220] sm:$0xff]
          %v2013 = vld [vmem:[#allocation2 + $0x228] sm:$0xff]
          %v2014 = vld [vmem:[#allocation2 + $0x230] sm:$0xff]
          %v2015 = vld [vmem:[#allocation2 + $0x238] sm:$0xff]
          %v2016 = vld [vmem:[#allocation2 + $0x240] sm:$0xff]
          %v2017 = vld [vmem:[#allocation2 + $0x248] sm:$0xff]
          %v2018 = vld [vmem:[#allocation2 + $0x250] sm:$0xff]
          %v2019 = vld [vmem:[#allocation2 + $0x258] sm:$0xff]
          %v2020 = vld [vmem:[#allocation2 + $0x260] sm:$0xff]
          %v2021 = vld [vmem:[#allocation2 + $0x268] sm:$0xff]
          %v2022 = vld [vmem:[#allocation2 + $0x270] sm:$0xff]
          %v2023 = vld [vmem:[#allocation2 + $0x278] sm:$0xff]
          %v2024 = vld [vmem:[#allocation2 + $0x280] sm:$0xff]
          %v2025 = vld [vmem:[#allocation2 + $0x288] sm:$0xff]
          %v2026 = vld [vmem:[#allocation2 + $0x290] sm:$0xff]
          %v2027 = vld [vmem:[#allocation2 + $0x298] sm:$0xff]
          %v2028 = vld [vmem:[#allocation2 + $0x2a0] sm:$0xff]
          %v2029 = vld [vmem:[#allocation2 + $0x2a8] sm:$0xff]
          %v2030 = vld [vmem:[#allocation2 + $0x2b0] sm:$0xff]
          %v2031 = vld [vmem:[#allocation2 + $0x2b8] sm:$0xff]
          %v2032 = vld [vmem:[#allocation2 + $0x2c0] sm:$0xff]
          %v2033 = vld [vmem:[#allocation2 + $0x2c8] sm:$0xff]
          %v2034 = vld [vmem:[#allocation2 + $0x2d0] sm:$0xff]
          %v2035 = vld [vmem:[#allocation2 + $0x2d8] sm:$0xff]
          %v2036 = vld [vmem:[#allocation2 + $0x2e0] sm:$0xff]
          %v2037 = vld [vmem:[#allocation2 + $0x2e8] sm:$0xff]
          %v2038 = vld [vmem:[#allocation2 + $0x2f0] sm:$0xff]
          %v2039 = vld [vmem:[#allocation2 + $0x2f8] sm:$0xff]
          %v2040 = vld [vmem:[#allocation2 + $0x300] sm:$0xff]
          %v2041 = vld [vmem:[#allocation2 + $0x308] sm:$0xff]
          %v2042 = vld [vmem:[#allocation2 + $0x310] sm:$0xff]
          %v2043 = vld [vmem:[#allocation2 + $0x318] sm:$0xff]
          %v2044 = vld [vmem:[#allocation2 + $0x320] sm:$0xff]
          %v2045 = vld [vmem:[#allocation2 + $0x328] sm:$0xff]
          %v2046 = vld [vmem:[#allocation2 + $0x330] sm:$0xff]
          %v2047 = vld [vmem:[#allocation2 + $0x338] sm:$0xff]
          %v2048 = vld [vmem:[#allocation2 + $0x340] sm:$0xff]
          %v2049 = vld [vmem:[#allocation2 + $0x348] sm:$0xff]
          %v2050 = vld [vmem:[#allocation2 + $0x350] sm:$0xff]
          %v2051 = vld [vmem:[#allocation2 + $0x358] sm:$0xff]
          %v2052 = vld [vmem:[#allocation2 + $0x360] sm:$0xff]
          %v2053 = vld [vmem:[#allocation2 + $0x368] sm:$0xff]
          %v2054 = vld [vmem:[#allocation2 + $0x370] sm:$0xff]
          %v2055 = vld [vmem:[#allocation2 + $0x378] sm:$0xff]
          %v2056 = vld [vmem:[#allocation2 + $0x380] sm:$0xff]
          %v2057 = vld [vmem:[#allocation2 + $0x388] sm:$0xff]
          %v2058 = vld [vmem:[#allocation2 + $0x390] sm:$0xff]
          %v2059 = vld [vmem:[#allocation2 + $0x398] sm:$0xff]
          %v2060 = vld [vmem:[#allocation2 + $0x3a0] sm:$0xff]
          %v2061 = vld [vmem:[#allocation2 + $0x3a8] sm:$0xff]
          %v2062 = vld [vmem:[#allocation2 + $0x3b0] sm:$0xff]
          %v2063 = vld [vmem:[#allocation2 + $0x3b8] sm:$0xff]
          %v2064 = vld [vmem:[#allocation2 + $0x3c0] sm:$0xff]
          %v2065 = vld [vmem:[#allocation2 + $0x3c8] sm:$0xff]
          %v2066 = vld [vmem:[#allocation2 + $0x3d0] sm:$0xff]
          %v2067 = vld [vmem:[#allocation2 + $0x3d8] sm:$0xff]
          %v2068 = vld [vmem:[#allocation2 + $0x3e0] sm:$0xff]
          %v2069 = vld [vmem:[#allocation2 + $0x3e8] sm:$0xff]
          %v2070 = vld [vmem:[#allocation2 + $0x3f0] sm:$0xff]
          %v2071 = vld [vmem:[#allocation2 + $0x3f8] sm:$0xff]
          %v2072 = vld [vmem:[%s724] sm:$0x3]
          %v2074 = vperm.slane %v2072, 0
          %v2075 = vperm.slane %v2072, 1
          %v2078 = vmul.f32 %v1944, %v2074
          %v2079 = vmul.f32 %v1945, %v2075
          %v2080 = vmul.f32 %v1946, %v2074
          %v2081 = vmul.f32 %v1947, %v2075
          %v2082 = vmul.f32 %v1948, %v2074
          %v2083 = vmul.f32 %v1949, %v2075
          %v2084 = vmul.f32 %v1950, %v2074
          %v2085 = vmul.f32 %v1951, %v2075
          %v2086 = vmul.f32 %v1952, %v2074
          %v2087 = vmul.f32 %v1953, %v2075
          %v2088 = vmul.f32 %v1954, %v2074
          %v2089 = vmul.f32 %v1955, %v2075
          %v2090 = vmul.f32 %v1956, %v2074
          %v2091 = vmul.f32 %v1957, %v2075
          %v2092 = vmul.f32 %v1958, %v2074
          %v2093 = vmul.f32 %v1959, %v2075
          %v2094 = vmul.f32 %v1960, %v2074
          %v2095 = vmul.f32 %v1961, %v2075
          %v2096 = vmul.f32 %v1962, %v2074
          %v2097 = vmul.f32 %v1963, %v2075
          %v2098 = vmul.f32 %v1964, %v2074
          %v2099 = vmul.f32 %v1965, %v2075
          %v2100 = vmul.f32 %v1966, %v2074
          %v2101 = vmul.f32 %v1967, %v2075
          %v2102 = vmul.f32 %v1968, %v2074
          %v2103 = vmul.f32 %v1969, %v2075
          %v2104 = vmul.f32 %v1970, %v2074
          %v2105 = vmul.f32 %v1971, %v2075
          %v2106 = vmul.f32 %v1972, %v2074
          %v2107 = vmul.f32 %v1973, %v2075
          %v2108 = vmul.f32 %v1974, %v2074
          %v2109 = vmul.f32 %v1975, %v2075
          %v2110 = vmul.f32 %v1976, %v2074
          %v2111 = vmul.f32 %v1977, %v2075
          %v2112 = vmul.f32 %v1978, %v2074
          %v2113 = vmul.f32 %v1979, %v2075
          %v2114 = vmul.f32 %v1980, %v2074
          %v2115 = vmul.f32 %v1981, %v2075
          %v2116 = vmul.f32 %v1982, %v2074
          %v2117 = vmul.f32 %v1983, %v2075
          %v2118 = vmul.f32 %v1984, %v2074
          %v2119 = vmul.f32 %v1985, %v2075
          %v2120 = vmul.f32 %v1986, %v2074
          %v2121 = vmul.f32 %v1987, %v2075
          %v2122 = vmul.f32 %v1988, %v2074
          %v2123 = vmul.f32 %v1989, %v2075
          %v2124 = vmul.f32 %v1990, %v2074
          %v2125 = vmul.f32 %v1991, %v2075
          %v2126 = vmul.f32 %v1992, %v2074
          %v2127 = vmul.f32 %v1993, %v2075
          %v2128 = vmul.f32 %v1994, %v2074
          %v2129 = vmul.f32 %v1995, %v2075
          %v2130 = vmul.f32 %v1996, %v2074
          %v2131 = vmul.f32 %v1997, %v2075
          %v2132 = vmul.f32 %v1998, %v2074
          %v2133 = vmul.f32 %v1999, %v2075
          %v2134 = vmul.f32 %v2000, %v2074
          %v2135 = vmul.f32 %v2001, %v2075
          %v2136 = vmul.f32 %v2002, %v2074
          %v2137 = vmul.f32 %v2003, %v2075
          %v2138 = vmul.f32 %v2004, %v2074
          %v2139 = vmul.f32 %v2005, %v2075
          %v2140 = vmul.f32 %v2006, %v2074
          %v2141 = vmul.f32 %v2007, %v2075
          %v2142 = vmul.f32 %v2008, %v2074
          %v2143 = vmul.f32 %v2009, %v2075
          %v2144 = vmul.f32 %v2010, %v2074
          %v2145 = vmul.f32 %v2011, %v2075
          %v2146 = vmul.f32 %v2012, %v2074
          %v2147 = vmul.f32 %v2013, %v2075
          %v2148 = vmul.f32 %v2014, %v2074
          %v2149 = vmul.f32 %v2015, %v2075
          %v2150 = vmul.f32 %v2016, %v2074
          %v2151 = vmul.f32 %v2017, %v2075
          %v2152 = vmul.f32 %v2018, %v2074
          %v2153 = vmul.f32 %v2019, %v2075
          %v2154 = vmul.f32 %v2020, %v2074
          %v2155 = vmul.f32 %v2021, %v2075
          %v2156 = vmul.f32 %v2022, %v2074
          %v2157 = vmul.f32 %v2023, %v2075
          %v2158 = vmul.f32 %v2024, %v2074
          %v2159 = vmul.f32 %v2025, %v2075
          %v2160 = vmul.f32 %v2026, %v2074
          %v2161 = vmul.f32 %v2027, %v2075
          %v2162 = vmul.f32 %v2028, %v2074
          %v2163 = vmul.f32 %v2029, %v2075
          %v2164 = vmul.f32 %v2030, %v2074
          %v2165 = vmul.f32 %v2031, %v2075
          %v2166 = vmul.f32 %v2032, %v2074
          %v2167 = vmul.f32 %v2033, %v2075
          %v2168 = vmul.f32 %v2034, %v2074
          %v2169 = vmul.f32 %v2035, %v2075
          %v2170 = vmul.f32 %v2036, %v2074
          %v2171 = vmul.f32 %v2037, %v2075
          %v2172 = vmul.f32 %v2038, %v2074
          %v2173 = vmul.f32 %v2039, %v2075
          %v2174 = vmul.f32 %v2040, %v2074
          %v2175 = vmul.f32 %v2041, %v2075
          %v2176 = vmul.f32 %v2042, %v2074
          %v2177 = vmul.f32 %v2043, %v2075
          %v2178 = vmul.f32 %v2044, %v2074
          %v2179 = vmul.f32 %v2045, %v2075
          %v2180 = vmul.f32 %v2046, %v2074
          %v2181 = vmul.f32 %v2047, %v2075
          %v2182 = vmul.f32 %v2048, %v2074
          %v2183 = vmul.f32 %v2049, %v2075
          %v2184 = vmul.f32 %v2050, %v2074
          %v2185 = vmul.f32 %v2051, %v2075
          %v2186 = vmul.f32 %v2052, %v2074
          %v2187 = vmul.f32 %v2053, %v2075
          %v2188 = vmul.f32 %v2054, %v2074
          %v2189 = vmul.f32 %v2055, %v2075
          %v2190 = vmul.f32 %v2056, %v2074
          %v2191 = vmul.f32 %v2057, %v2075
          %v2192 = vmul.f32 %v2058, %v2074
          %v2193 = vmul.f32 %v2059, %v2075
          %v2194 = vmul.f32 %v2060, %v2074
          %v2195 = vmul.f32 %v2061, %v2075
          %v2196 = vmul.f32 %v2062, %v2074
          %v2197 = vmul.f32 %v2063, %v2075
          %v2198 = vmul.f32 %v2064, %v2074
          %v2199 = vmul.f32 %v2065, %v2075
          %v2200 = vmul.f32 %v2066, %v2074
          %v2201 = vmul.f32 %v2067, %v2075
          %v2202 = vmul.f32 %v2068, %v2074
          %v2203 = vmul.f32 %v2069, %v2075
          %v2204 = vmul.f32 %v2070, %v2074
          %v2205 = vmul.f32 %v2071, %v2075
          %v2206 = vld [vmem:[%s729] sm:$0x3]
          %v2208 = vperm.slane %v2206, 0
          %v2209 = vperm.slane %v2206, 1
          %v2212 = vadd.f32 %v2078, %v2208
          %v2213 = vadd.f32 %v2079, %v2209
          %v2214 = vadd.f32 %v2080, %v2208
          %v2215 = vadd.f32 %v2081, %v2209
          %v2216 = vadd.f32 %v2082, %v2208
          %v2217 = vadd.f32 %v2083, %v2209
          %v2218 = vadd.f32 %v2084, %v2208
          %v2219 = vadd.f32 %v2085, %v2209
          %v2220 = vadd.f32 %v2086, %v2208
          %v2221 = vadd.f32 %v2087, %v2209
          %v2222 = vadd.f32 %v2088, %v2208
          %v2223 = vadd.f32 %v2089, %v2209
          %v2224 = vadd.f32 %v2090, %v2208
          %v2225 = vadd.f32 %v2091, %v2209
          %v2226 = vadd.f32 %v2092, %v2208
          %v2227 = vadd.f32 %v2093, %v2209
          %v2228 = vadd.f32 %v2094, %v2208
          %v2229 = vadd.f32 %v2095, %v2209
          %v2230 = vadd.f32 %v2096, %v2208
          %v2231 = vadd.f32 %v2097, %v2209
          %v2232 = vadd.f32 %v2098, %v2208
          %v2233 = vadd.f32 %v2099, %v2209
          %v2234 = vadd.f32 %v2100, %v2208
          %v2235 = vadd.f32 %v2101, %v2209
          %v2236 = vadd.f32 %v2102, %v2208
          %v2237 = vadd.f32 %v2103, %v2209
          %v2238 = vadd.f32 %v2104, %v2208
          %v2239 = vadd.f32 %v2105, %v2209
          %v2240 = vadd.f32 %v2106, %v2208
          %v2241 = vadd.f32 %v2107, %v2209
          %v2242 = vadd.f32 %v2108, %v2208
          %v2243 = vadd.f32 %v2109, %v2209
          %v2244 = vadd.f32 %v2110, %v2208
          %v2245 = vadd.f32 %v2111, %v2209
          %v2246 = vadd.f32 %v2112, %v2208
          %v2247 = vadd.f32 %v2113, %v2209
          %v2248 = vadd.f32 %v2114, %v2208
          %v2249 = vadd.f32 %v2115, %v2209
          %v2250 = vadd.f32 %v2116, %v2208
          %v2251 = vadd.f32 %v2117, %v2209
          %v2252 = vadd.f32 %v2118, %v2208
          %v2253 = vadd.f32 %v2119, %v2209
          %v2254 = vadd.f32 %v2120, %v2208
          %v2255 = vadd.f32 %v2121, %v2209
          %v2256 = vadd.f32 %v2122, %v2208
          %v2257 = vadd.f32 %v2123, %v2209
          %v2258 = vadd.f32 %v2124, %v2208
          %v2259 = vadd.f32 %v2125, %v2209
          %v2260 = vadd.f32 %v2126, %v2208
          %v2261 = vadd.f32 %v2127, %v2209
          %v2262 = vadd.f32 %v2128, %v2208
          %v2263 = vadd.f32 %v2129, %v2209
          %v2264 = vadd.f32 %v2130, %v2208
          %v2265 = vadd.f32 %v2131, %v2209
          %v2266 = vadd.f32 %v2132, %v2208
          %v2267 = vadd.f32 %v2133, %v2209
          %v2268 = vadd.f32 %v2134, %v2208
          %v2269 = vadd.f32 %v2135, %v2209
          %v2270 = vadd.f32 %v2136, %v2208
          %v2271 = vadd.f32 %v2137, %v2209
          %v2272 = vadd.f32 %v2138, %v2208
          %v2273 = vadd.f32 %v2139, %v2209
          %v2274 = vadd.f32 %v2140, %v2208
          %v2275 = vadd.f32 %v2141, %v2209
          %v2276 = vadd.f32 %v2142, %v2208
          %v2277 = vadd.f32 %v2143, %v2209
          %v2278 = vadd.f32 %v2144, %v2208
          %v2279 = vadd.f32 %v2145, %v2209
          %v2280 = vadd.f32 %v2146, %v2208
          %v2281 = vadd.f32 %v2147, %v2209
          %v2282 = vadd.f32 %v2148, %v2208
          %v2283 = vadd.f32 %v2149, %v2209
          %v2284 = vadd.f32 %v2150, %v2208
          %v2285 = vadd.f32 %v2151, %v2209
          %v2286 = vadd.f32 %v2152, %v2208
          %v2287 = vadd.f32 %v2153, %v2209
          %v2288 = vadd.f32 %v2154, %v2208
          %v2289 = vadd.f32 %v2155, %v2209
          %v2290 = vadd.f32 %v2156, %v2208
          %v2291 = vadd.f32 %v2157, %v2209
          %v2292 = vadd.f32 %v2158, %v2208
          %v2293 = vadd.f32 %v2159, %v2209
          %v2294 = vadd.f32 %v2160, %v2208
          %v2295 = vadd.f32 %v2161, %v2209
          %v2296 = vadd.f32 %v2162, %v2208
          %v2297 = vadd.f32 %v2163, %v2209
          %v2298 = vadd.f32 %v2164, %v2208
          %v2299 = vadd.f32 %v2165, %v2209
          %v2300 = vadd.f32 %v2166, %v2208
          %v2301 = vadd.f32 %v2167, %v2209
          %v2302 = vadd.f32 %v2168, %v2208
          %v2303 = vadd.f32 %v2169, %v2209
          %v2304 = vadd.f32 %v2170, %v2208
          %v2305 = vadd.f32 %v2171, %v2209
          %v2306 = vadd.f32 %v2172, %v2208
          %v2307 = vadd.f32 %v2173, %v2209
          %v2308 = vadd.f32 %v2174, %v2208
          %v2309 = vadd.f32 %v2175, %v2209
          %v2310 = vadd.f32 %v2176, %v2208
          %v2311 = vadd.f32 %v2177, %v2209
          %v2312 = vadd.f32 %v2178, %v2208
          %v2313 = vadd.f32 %v2179, %v2209
          %v2314 = vadd.f32 %v2180, %v2208
          %v2315 = vadd.f32 %v2181, %v2209
          %v2316 = vadd.f32 %v2182, %v2208
          %v2317 = vadd.f32 %v2183, %v2209
          %v2318 = vadd.f32 %v2184, %v2208
          %v2319 = vadd.f32 %v2185, %v2209
          %v2320 = vadd.f32 %v2186, %v2208
          %v2321 = vadd.f32 %v2187, %v2209
          %v2322 = vadd.f32 %v2188, %v2208
          %v2323 = vadd.f32 %v2189, %v2209
          %v2324 = vadd.f32 %v2190, %v2208
          %v2325 = vadd.f32 %v2191, %v2209
          %v2326 = vadd.f32 %v2192, %v2208
          %v2327 = vadd.f32 %v2193, %v2209
          %v2328 = vadd.f32 %v2194, %v2208
          %v2329 = vadd.f32 %v2195, %v2209
          %v2330 = vadd.f32 %v2196, %v2208
          %v2331 = vadd.f32 %v2197, %v2209
          %v2332 = vadd.f32 %v2198, %v2208
          %v2333 = vadd.f32 %v2199, %v2209
          %v2334 = vadd.f32 %v2200, %v2208
          %v2335 = vadd.f32 %v2201, %v2209
          %v2336 = vadd.f32 %v2202, %v2208
          %v2337 = vadd.f32 %v2203, %v2209
          %v2338 = vadd.f32 %v2204, %v2208
          %v2339 = vadd.f32 %v2205, %v2209
          %v2340 = vld [vmem:[%s665] sm:$0xff]
          %v2341 = vld [vmem:[%s665 + $0x8] sm:$0xff]
          %v2342 = vld [vmem:[%s665 + $0x10] sm:$0xff]
          %v2343 = vld [vmem:[%s665 + $0x18] sm:$0xff]
          %v2344 = vld [vmem:[%s665 + $0x20] sm:$0xff]
          %v2345 = vld [vmem:[%s665 + $0x28] sm:$0xff]
          %v2346 = vld [vmem:[%s665 + $0x30] sm:$0xff]
          %v2347 = vld [vmem:[%s665 + $0x38] sm:$0xff]
          %v2348 = vld [vmem:[%s665 + $0x40] sm:$0xff]
          %v2349 = vld [vmem:[%s665 + $0x48] sm:$0xff]
          %v2350 = vld [vmem:[%s665 + $0x50] sm:$0xff]
          %v2351 = vld [vmem:[%s665 + $0x58] sm:$0xff]
          %v2352 = vld [vmem:[%s665 + $0x60] sm:$0xff]
          %v2353 = vld [vmem:[%s665 + $0x68] sm:$0xff]
          %v2354 = vld [vmem:[%s665 + $0x70] sm:$0xff]
          %v2355 = vld [vmem:[%s665 + $0x78] sm:$0xff]
          %v2356 = vld [vmem:[%s665 + $0x80] sm:$0xff]
          %v2357 = vld [vmem:[%s665 + $0x88] sm:$0xff]
          %v2358 = vld [vmem:[%s665 + $0x90] sm:$0xff]
          %v2359 = vld [vmem:[%s665 + $0x98] sm:$0xff]
          %v2360 = vld [vmem:[%s665 + $0xa0] sm:$0xff]
          %v2361 = vld [vmem:[%s665 + $0xa8] sm:$0xff]
          %v2362 = vld [vmem:[%s665 + $0xb0] sm:$0xff]
          %v2363 = vld [vmem:[%s665 + $0xb8] sm:$0xff]
          %v2364 = vld [vmem:[%s665 + $0xc0] sm:$0xff]
          %v2365 = vld [vmem:[%s665 + $0xc8] sm:$0xff]
          %v2366 = vld [vmem:[%s665 + $0xd0] sm:$0xff]
          %v2367 = vld [vmem:[%s665 + $0xd8] sm:$0xff]
          %v2368 = vld [vmem:[%s665 + $0xe0] sm:$0xff]
          %v2369 = vld [vmem:[%s665 + $0xe8] sm:$0xff]
          %v2370 = vld [vmem:[%s665 + $0xf0] sm:$0xff]
          %v2371 = vld [vmem:[%s665 + $0xf8] sm:$0xff]
          %v2372 = vld [vmem:[%s665 + $0x100] sm:$0xff]
          %v2373 = vld [vmem:[%s665 + $0x108] sm:$0xff]
          %v2374 = vld [vmem:[%s665 + $0x110] sm:$0xff]
          %v2375 = vld [vmem:[%s665 + $0x118] sm:$0xff]
          %v2376 = vld [vmem:[%s665 + $0x120] sm:$0xff]
          %v2377 = vld [vmem:[%s665 + $0x128] sm:$0xff]
          %v2378 = vld [vmem:[%s665 + $0x130] sm:$0xff]
          %v2379 = vld [vmem:[%s665 + $0x138] sm:$0xff]
          %v2380 = vld [vmem:[%s665 + $0x140] sm:$0xff]
          %v2381 = vld [vmem:[%s665 + $0x148] sm:$0xff]
          %v2382 = vld [vmem:[%s665 + $0x150] sm:$0xff]
          %v2383 = vld [vmem:[%s665 + $0x158] sm:$0xff]
          %v2384 = vld [vmem:[%s665 + $0x160] sm:$0xff]
          %v2385 = vld [vmem:[%s665 + $0x168] sm:$0xff]
          %v2386 = vld [vmem:[%s665 + $0x170] sm:$0xff]
          %v2387 = vld [vmem:[%s665 + $0x178] sm:$0xff]
          %v2388 = vld [vmem:[%s665 + $0x180] sm:$0xff]
          %v2389 = vld [vmem:[%s665 + $0x188] sm:$0xff]
          %v2390 = vld [vmem:[%s665 + $0x190] sm:$0xff]
          %v2391 = vld [vmem:[%s665 + $0x198] sm:$0xff]
          %v2392 = vld [vmem:[%s665 + $0x1a0] sm:$0xff]
          %v2393 = vld [vmem:[%s665 + $0x1a8] sm:$0xff]
          %v2394 = vld [vmem:[%s665 + $0x1b0] sm:$0xff]
          %v2395 = vld [vmem:[%s665 + $0x1b8] sm:$0xff]
          %v2396 = vld [vmem:[%s665 + $0x1c0] sm:$0xff]
          %v2397 = vld [vmem:[%s665 + $0x1c8] sm:$0xff]
          %v2398 = vld [vmem:[%s665 + $0x1d0] sm:$0xff]
          %v2399 = vld [vmem:[%s665 + $0x1d8] sm:$0xff]
          %v2400 = vld [vmem:[%s665 + $0x1e0] sm:$0xff]
          %v2401 = vld [vmem:[%s665 + $0x1e8] sm:$0xff]
          %v2402 = vld [vmem:[%s665 + $0x1f0] sm:$0xff]
          %v2403 = vld [vmem:[%s665 + $0x1f8] sm:$0xff]
          %v2404 = vunpack.c.l.bf16 %v2340
          %v2405 = vunpack.c.h.bf16 %v2340
          %v2406 = vunpack.c.l.bf16 %v2341
          %v2407 = vunpack.c.h.bf16 %v2341
          %v2408 = vunpack.c.l.bf16 %v2342
          %v2409 = vunpack.c.h.bf16 %v2342
          %v2410 = vunpack.c.l.bf16 %v2343
          %v2411 = vunpack.c.h.bf16 %v2343
          %v2412 = vunpack.c.l.bf16 %v2344
          %v2413 = vunpack.c.h.bf16 %v2344
          %v2414 = vunpack.c.l.bf16 %v2345
          %v2415 = vunpack.c.h.bf16 %v2345
          %v2416 = vunpack.c.l.bf16 %v2346
          %v2417 = vunpack.c.h.bf16 %v2346
          %v2418 = vunpack.c.l.bf16 %v2347
          %v2419 = vunpack.c.h.bf16 %v2347
          %v2420 = vunpack.c.l.bf16 %v2348
          %v2421 = vunpack.c.h.bf16 %v2348
          %v2422 = vunpack.c.l.bf16 %v2349
          %v2423 = vunpack.c.h.bf16 %v2349
          %v2424 = vunpack.c.l.bf16 %v2350
          %v2425 = vunpack.c.h.bf16 %v2350
          %v2426 = vunpack.c.l.bf16 %v2351
          %v2427 = vunpack.c.h.bf16 %v2351
          %v2428 = vunpack.c.l.bf16 %v2352
          %v2429 = vunpack.c.h.bf16 %v2352
          %v2430 = vunpack.c.l.bf16 %v2353
          %v2431 = vunpack.c.h.bf16 %v2353
          %v2432 = vunpack.c.l.bf16 %v2354
          %v2433 = vunpack.c.h.bf16 %v2354
          %v2434 = vunpack.c.l.bf16 %v2355
          %v2435 = vunpack.c.h.bf16 %v2355
          %v2436 = vunpack.c.l.bf16 %v2356
          %v2437 = vunpack.c.h.bf16 %v2356
          %v2438 = vunpack.c.l.bf16 %v2357
          %v2439 = vunpack.c.h.bf16 %v2357
          %v2440 = vunpack.c.l.bf16 %v2358
          %v2441 = vunpack.c.h.bf16 %v2358
          %v2442 = vunpack.c.l.bf16 %v2359
          %v2443 = vunpack.c.h.bf16 %v2359
          %v2444 = vunpack.c.l.bf16 %v2360
          %v2445 = vunpack.c.h.bf16 %v2360
          %v2446 = vunpack.c.l.bf16 %v2361
          %v2447 = vunpack.c.h.bf16 %v2361
          %v2448 = vunpack.c.l.bf16 %v2362
          %v2449 = vunpack.c.h.bf16 %v2362
          %v2450 = vunpack.c.l.bf16 %v2363
          %v2451 = vunpack.c.h.bf16 %v2363
          %v2452 = vunpack.c.l.bf16 %v2364
          %v2453 = vunpack.c.h.bf16 %v2364
          %v2454 = vunpack.c.l.bf16 %v2365
          %v2455 = vunpack.c.h.bf16 %v2365
          %v2456 = vunpack.c.l.bf16 %v2366
          %v2457 = vunpack.c.h.bf16 %v2366
          %v2458 = vunpack.c.l.bf16 %v2367
          %v2459 = vunpack.c.h.bf16 %v2367
          %v2460 = vunpack.c.l.bf16 %v2368
          %v2461 = vunpack.c.h.bf16 %v2368
          %v2462 = vunpack.c.l.bf16 %v2369
          %v2463 = vunpack.c.h.bf16 %v2369
          %v2464 = vunpack.c.l.bf16 %v2370
          %v2465 = vunpack.c.h.bf16 %v2370
          %v2466 = vunpack.c.l.bf16 %v2371
          %v2467 = vunpack.c.h.bf16 %v2371
          %v2468 = vunpack.c.l.bf16 %v2372
          %v2469 = vunpack.c.h.bf16 %v2372
          %v2470 = vunpack.c.l.bf16 %v2373
          %v2471 = vunpack.c.h.bf16 %v2373
          %v2472 = vunpack.c.l.bf16 %v2374
          %v2473 = vunpack.c.h.bf16 %v2374
          %v2474 = vunpack.c.l.bf16 %v2375
          %v2475 = vunpack.c.h.bf16 %v2375
          %v2476 = vunpack.c.l.bf16 %v2376
          %v2477 = vunpack.c.h.bf16 %v2376
          %v2478 = vunpack.c.l.bf16 %v2377
          %v2479 = vunpack.c.h.bf16 %v2377
          %v2480 = vunpack.c.l.bf16 %v2378
          %v2481 = vunpack.c.h.bf16 %v2378
          %v2482 = vunpack.c.l.bf16 %v2379
          %v2483 = vunpack.c.h.bf16 %v2379
          %v2484 = vunpack.c.l.bf16 %v2380
          %v2485 = vunpack.c.h.bf16 %v2380
          %v2486 = vunpack.c.l.bf16 %v2381
          %v2487 = vunpack.c.h.bf16 %v2381
          %v2488 = vunpack.c.l.bf16 %v2382
          %v2489 = vunpack.c.h.bf16 %v2382
          %v2490 = vunpack.c.l.bf16 %v2383
          %v2491 = vunpack.c.h.bf16 %v2383
          %v2492 = vunpack.c.l.bf16 %v2384
          %v2493 = vunpack.c.h.bf16 %v2384
          %v2494 = vunpack.c.l.bf16 %v2385
          %v2495 = vunpack.c.h.bf16 %v2385
          %v2496 = vunpack.c.l.bf16 %v2386
          %v2497 = vunpack.c.h.bf16 %v2386
          %v2498 = vunpack.c.l.bf16 %v2387
          %v2499 = vunpack.c.h.bf16 %v2387
          %v2500 = vunpack.c.l.bf16 %v2388
          %v2501 = vunpack.c.h.bf16 %v2388
          %v2502 = vunpack.c.l.bf16 %v2389
          %v2503 = vunpack.c.h.bf16 %v2389
          %v2504 = vunpack.c.l.bf16 %v2390
          %v2505 = vunpack.c.h.bf16 %v2390
          %v2506 = vunpack.c.l.bf16 %v2391
          %v2507 = vunpack.c.h.bf16 %v2391
          %v2508 = vunpack.c.l.bf16 %v2392
          %v2509 = vunpack.c.h.bf16 %v2392
          %v2510 = vunpack.c.l.bf16 %v2393
          %v2511 = vunpack.c.h.bf16 %v2393
          %v2512 = vunpack.c.l.bf16 %v2394
          %v2513 = vunpack.c.h.bf16 %v2394
          %v2514 = vunpack.c.l.bf16 %v2395
          %v2515 = vunpack.c.h.bf16 %v2395
          %v2516 = vunpack.c.l.bf16 %v2396
          %v2517 = vunpack.c.h.bf16 %v2396
          %v2518 = vunpack.c.l.bf16 %v2397
          %v2519 = vunpack.c.h.bf16 %v2397
          %v2520 = vunpack.c.l.bf16 %v2398
          %v2521 = vunpack.c.h.bf16 %v2398
          %v2522 = vunpack.c.l.bf16 %v2399
          %v2523 = vunpack.c.h.bf16 %v2399
          %v2524 = vunpack.c.l.bf16 %v2400
          %v2525 = vunpack.c.h.bf16 %v2400
          %v2526 = vunpack.c.l.bf16 %v2401
          %v2527 = vunpack.c.h.bf16 %v2401
          %v2528 = vunpack.c.l.bf16 %v2402
          %v2529 = vunpack.c.h.bf16 %v2402
          %v2530 = vunpack.c.l.bf16 %v2403
          %v2531 = vunpack.c.h.bf16 %v2403
          %v2532 = vadd.f32 %v2212, %v2404
          %v2533 = vadd.f32 %v2213, %v2405
          %v2534 = vadd.f32 %v2214, %v2406
          %v2535 = vadd.f32 %v2215, %v2407
          %v2536 = vadd.f32 %v2216, %v2408
          %v2537 = vadd.f32 %v2217, %v2409
          %v2538 = vadd.f32 %v2218, %v2410
          %v2539 = vadd.f32 %v2219, %v2411
          %v2540 = vadd.f32 %v2220, %v2412
          %v2541 = vadd.f32 %v2221, %v2413
          %v2542 = vadd.f32 %v2222, %v2414
          %v2543 = vadd.f32 %v2223, %v2415
          %v2544 = vadd.f32 %v2224, %v2416
          %v2545 = vadd.f32 %v2225, %v2417
          %v2546 = vadd.f32 %v2226, %v2418
          %v2547 = vadd.f32 %v2227, %v2419
          %v2548 = vadd.f32 %v2228, %v2420
          %v2549 = vadd.f32 %v2229, %v2421
          %v2550 = vadd.f32 %v2230, %v2422
          %v2551 = vadd.f32 %v2231, %v2423
          %v2552 = vadd.f32 %v2232, %v2424
          %v2553 = vadd.f32 %v2233, %v2425
          %v2554 = vadd.f32 %v2234, %v2426
          %v2555 = vadd.f32 %v2235, %v2427
          %v2556 = vadd.f32 %v2236, %v2428
          %v2557 = vadd.f32 %v2237, %v2429
          %v2558 = vadd.f32 %v2238, %v2430
          %v2559 = vadd.f32 %v2239, %v2431
          %v2560 = vadd.f32 %v2240, %v2432
          %v2561 = vadd.f32 %v2241, %v2433
          %v2562 = vadd.f32 %v2242, %v2434
          %v2563 = vadd.f32 %v2243, %v2435
          %v2564 = vadd.f32 %v2244, %v2436
          %v2565 = vadd.f32 %v2245, %v2437
          %v2566 = vadd.f32 %v2246, %v2438
          %v2567 = vadd.f32 %v2247, %v2439
          %v2568 = vadd.f32 %v2248, %v2440
          %v2569 = vadd.f32 %v2249, %v2441
          %v2570 = vadd.f32 %v2250, %v2442
          %v2571 = vadd.f32 %v2251, %v2443
          %v2572 = vadd.f32 %v2252, %v2444
          %v2573 = vadd.f32 %v2253, %v2445
          %v2574 = vadd.f32 %v2254, %v2446
          %v2575 = vadd.f32 %v2255, %v2447
          %v2576 = vadd.f32 %v2256, %v2448
          %v2577 = vadd.f32 %v2257, %v2449
          %v2578 = vadd.f32 %v2258, %v2450
          %v2579 = vadd.f32 %v2259, %v2451
          %v2580 = vadd.f32 %v2260, %v2452
          %v2581 = vadd.f32 %v2261, %v2453
          %v2582 = vadd.f32 %v2262, %v2454
          %v2583 = vadd.f32 %v2263, %v2455
          %v2584 = vadd.f32 %v2264, %v2456
          %v2585 = vadd.f32 %v2265, %v2457
          %v2586 = vadd.f32 %v2266, %v2458
          %v2587 = vadd.f32 %v2267, %v2459
          %v2588 = vadd.f32 %v2268, %v2460
          %v2589 = vadd.f32 %v2269, %v2461
          %v2590 = vadd.f32 %v2270, %v2462
          %v2591 = vadd.f32 %v2271, %v2463
          %v2592 = vadd.f32 %v2272, %v2464
          %v2593 = vadd.f32 %v2273, %v2465
          %v2594 = vadd.f32 %v2274, %v2466
          %v2595 = vadd.f32 %v2275, %v2467
          %v2596 = vadd.f32 %v2276, %v2468
          %v2597 = vadd.f32 %v2277, %v2469
          %v2598 = vadd.f32 %v2278, %v2470
          %v2599 = vadd.f32 %v2279, %v2471
          %v2600 = vadd.f32 %v2280, %v2472
          %v2601 = vadd.f32 %v2281, %v2473
          %v2602 = vadd.f32 %v2282, %v2474
          %v2603 = vadd.f32 %v2283, %v2475
          %v2604 = vadd.f32 %v2284, %v2476
          %v2605 = vadd.f32 %v2285, %v2477
          %v2606 = vadd.f32 %v2286, %v2478
          %v2607 = vadd.f32 %v2287, %v2479
          %v2608 = vadd.f32 %v2288, %v2480
          %v2609 = vadd.f32 %v2289, %v2481
          %v2610 = vadd.f32 %v2290, %v2482
          %v2611 = vadd.f32 %v2291, %v2483
          %v2612 = vadd.f32 %v2292, %v2484
          %v2613 = vadd.f32 %v2293, %v2485
          %v2614 = vadd.f32 %v2294, %v2486
          %v2615 = vadd.f32 %v2295, %v2487
          %v2616 = vadd.f32 %v2296, %v2488
          %v2617 = vadd.f32 %v2297, %v2489
          %v2618 = vadd.f32 %v2298, %v2490
          %v2619 = vadd.f32 %v2299, %v2491
          %v2620 = vadd.f32 %v2300, %v2492
          %v2621 = vadd.f32 %v2301, %v2493
          %v2622 = vadd.f32 %v2302, %v2494
          %v2623 = vadd.f32 %v2303, %v2495
          %v2624 = vadd.f32 %v2304, %v2496
          %v2625 = vadd.f32 %v2305, %v2497
          %v2626 = vadd.f32 %v2306, %v2498
          %v2627 = vadd.f32 %v2307, %v2499
          %v2628 = vadd.f32 %v2308, %v2500
          %v2629 = vadd.f32 %v2309, %v2501
          %v2630 = vadd.f32 %v2310, %v2502
          %v2631 = vadd.f32 %v2311, %v2503
          %v2632 = vadd.f32 %v2312, %v2504
          %v2633 = vadd.f32 %v2313, %v2505
          %v2634 = vadd.f32 %v2314, %v2506
          %v2635 = vadd.f32 %v2315, %v2507
          %v2636 = vadd.f32 %v2316, %v2508
          %v2637 = vadd.f32 %v2317, %v2509
          %v2638 = vadd.f32 %v2318, %v2510
          %v2639 = vadd.f32 %v2319, %v2511
          %v2640 = vadd.f32 %v2320, %v2512
          %v2641 = vadd.f32 %v2321, %v2513
          %v2642 = vadd.f32 %v2322, %v2514
          %v2643 = vadd.f32 %v2323, %v2515
          %v2644 = vadd.f32 %v2324, %v2516
          %v2645 = vadd.f32 %v2325, %v2517
          %v2646 = vadd.f32 %v2326, %v2518
          %v2647 = vadd.f32 %v2327, %v2519
          %v2648 = vadd.f32 %v2328, %v2520
          %v2649 = vadd.f32 %v2329, %v2521
          %v2650 = vadd.f32 %v2330, %v2522
          %v2651 = vadd.f32 %v2331, %v2523
          %v2652 = vadd.f32 %v2332, %v2524
          %v2653 = vadd.f32 %v2333, %v2525
          %v2654 = vadd.f32 %v2334, %v2526
          %v2655 = vadd.f32 %v2335, %v2527
          %v2656 = vadd.f32 %v2336, %v2528
          %v2657 = vadd.f32 %v2337, %v2529
          %v2658 = vadd.f32 %v2338, %v2530
          %v2659 = vadd.f32 %v2339, %v2531
          %v2660 = vmax.f32 %v2532, 0.0
          %v2661 = vmax.f32 %v2533, 0.0
          %v2662 = vmax.f32 %v2534, 0.0
          %v2663 = vmax.f32 %v2535, 0.0
          %v2664 = vmax.f32 %v2536, 0.0
          %v2665 = vmax.f32 %v2537, 0.0
          %v2666 = vmax.f32 %v2538, 0.0
          %v2667 = vmax.f32 %v2539, 0.0
          %v2668 = vmax.f32 %v2540, 0.0
          %v2669 = vmax.f32 %v2541, 0.0
          %v2670 = vmax.f32 %v2542, 0.0
          %v2671 = vmax.f32 %v2543, 0.0
          %v2672 = vmax.f32 %v2544, 0.0
          %v2673 = vmax.f32 %v2545, 0.0
          %v2674 = vmax.f32 %v2546, 0.0
          %v2675 = vmax.f32 %v2547, 0.0
          %v2676 = vmax.f32 %v2548, 0.0
          %v2677 = vmax.f32 %v2549, 0.0
          %v2678 = vmax.f32 %v2550, 0.0
          %v2679 = vmax.f32 %v2551, 0.0
          %v2680 = vmax.f32 %v2552, 0.0
          %v2681 = vmax.f32 %v2553, 0.0
          %v2682 = vmax.f32 %v2554, 0.0
          %v2683 = vmax.f32 %v2555, 0.0
          %v2684 = vmax.f32 %v2556, 0.0
          %v2685 = vmax.f32 %v2557, 0.0
          %v2686 = vmax.f32 %v2558, 0.0
          %v2687 = vmax.f32 %v2559, 0.0
          %v2688 = vmax.f32 %v2560, 0.0
          %v2689 = vmax.f32 %v2561, 0.0
          %v2690 = vmax.f32 %v2562, 0.0
          %v2691 = vmax.f32 %v2563, 0.0
          %v2692 = vmax.f32 %v2564, 0.0
          %v2693 = vmax.f32 %v2565, 0.0
          %v2694 = vmax.f32 %v2566, 0.0
          %v2695 = vmax.f32 %v2567, 0.0
          %v2696 = vmax.f32 %v2568, 0.0
          %v2697 = vmax.f32 %v2569, 0.0
          %v2698 = vmax.f32 %v2570, 0.0
          %v2699 = vmax.f32 %v2571, 0.0
          %v2700 = vmax.f32 %v2572, 0.0
          %v2701 = vmax.f32 %v2573, 0.0
          %v2702 = vmax.f32 %v2574, 0.0
          %v2703 = vmax.f32 %v2575, 0.0
          %v2704 = vmax.f32 %v2576, 0.0
          %v2705 = vmax.f32 %v2577, 0.0
          %v2706 = vmax.f32 %v2578, 0.0
          %v2707 = vmax.f32 %v2579, 0.0
          %v2708 = vmax.f32 %v2580, 0.0
          %v2709 = vmax.f32 %v2581, 0.0
          %v2710 = vmax.f32 %v2582, 0.0
          %v2711 = vmax.f32 %v2583, 0.0
          %v2712 = vmax.f32 %v2584, 0.0
          %v2713 = vmax.f32 %v2585, 0.0
          %v2714 = vmax.f32 %v2586, 0.0
          %v2715 = vmax.f32 %v2587, 0.0
          %v2716 = vmax.f32 %v2588, 0.0
          %v2717 = vmax.f32 %v2589, 0.0
          %v2718 = vmax.f32 %v2590, 0.0
          %v2719 = vmax.f32 %v2591, 0.0
          %v2720 = vmax.f32 %v2592, 0.0
          %v2721 = vmax.f32 %v2593, 0.0
          %v2722 = vmax.f32 %v2594, 0.0
          %v2723 = vmax.f32 %v2595, 0.0
          %v2724 = vmax.f32 %v2596, 0.0
          %v2725 = vmax.f32 %v2597, 0.0
          %v2726 = vmax.f32 %v2598, 0.0
          %v2727 = vmax.f32 %v2599, 0.0
          %v2728 = vmax.f32 %v2600, 0.0
          %v2729 = vmax.f32 %v2601, 0.0
          %v2730 = vmax.f32 %v2602, 0.0
          %v2731 = vmax.f32 %v2603, 0.0
          %v2732 = vmax.f32 %v2604, 0.0
          %v2733 = vmax.f32 %v2605, 0.0
          %v2734 = vmax.f32 %v2606, 0.0
          %v2735 = vmax.f32 %v2607, 0.0
          %v2736 = vmax.f32 %v2608, 0.0
          %v2737 = vmax.f32 %v2609, 0.0
          %v2738 = vmax.f32 %v2610, 0.0
          %v2739 = vmax.f32 %v2611, 0.0
          %v2740 = vmax.f32 %v2612, 0.0
          %v2741 = vmax.f32 %v2613, 0.0
          %v2742 = vmax.f32 %v2614, 0.0
          %v2743 = vmax.f32 %v2615, 0.0
          %v2744 = vmax.f32 %v2616, 0.0
          %v2745 = vmax.f32 %v2617, 0.0
          %v2746 = vmax.f32 %v2618, 0.0
          %v2747 = vmax.f32 %v2619, 0.0
          %v2748 = vmax.f32 %v2620, 0.0
          %v2749 = vmax.f32 %v2621, 0.0
          %v2750 = vmax.f32 %v2622, 0.0
          %v2751 = vmax.f32 %v2623, 0.0
          %v2752 = vmax.f32 %v2624, 0.0
          %v2753 = vmax.f32 %v2625, 0.0
          %v2754 = vmax.f32 %v2626, 0.0
          %v2755 = vmax.f32 %v2627, 0.0
          %v2756 = vmax.f32 %v2628, 0.0
          %v2757 = vmax.f32 %v2629, 0.0
          %v2758 = vmax.f32 %v2630, 0.0
          %v2759 = vmax.f32 %v2631, 0.0
          %v2760 = vmax.f32 %v2632, 0.0
          %v2761 = vmax.f32 %v2633, 0.0
          %v2762 = vmax.f32 %v2634, 0.0
          %v2763 = vmax.f32 %v2635, 0.0
          %v2764 = vmax.f32 %v2636, 0.0
          %v2765 = vmax.f32 %v2637, 0.0
          %v2766 = vmax.f32 %v2638, 0.0
          %v2767 = vmax.f32 %v2639, 0.0
          %v2768 = vmax.f32 %v2640, 0.0
          %v2769 = vmax.f32 %v2641, 0.0
          %v2770 = vmax.f32 %v2642, 0.0
          %v2771 = vmax.f32 %v2643, 0.0
          %v2772 = vmax.f32 %v2644, 0.0
          %v2773 = vmax.f32 %v2645, 0.0
          %v2774 = vmax.f32 %v2646, 0.0
          %v2775 = vmax.f32 %v2647, 0.0
          %v2776 = vmax.f32 %v2648, 0.0
          %v2777 = vmax.f32 %v2649, 0.0
          %v2778 = vmax.f32 %v2650, 0.0
          %v2779 = vmax.f32 %v2651, 0.0
          %v2780 = vmax.f32 %v2652, 0.0
          %v2781 = vmax.f32 %v2653, 0.0
          %v2782 = vmax.f32 %v2654, 0.0
          %v2783 = vmax.f32 %v2655, 0.0
          %v2784 = vmax.f32 %v2656, 0.0
          %v2785 = vmax.f32 %v2657, 0.0
          %v2786 = vmax.f32 %v2658, 0.0
          %v2787 = vmax.f32 %v2659, 0.0
          %2788 = vst [vmem:[%s709] sm:$0xff] %v2660
          %2789 = vst [vmem:[%s709 + $0x8] sm:$0xff] %v2661
          %2790 = vst [vmem:[%s709 + $0x10] sm:$0xff] %v2662
          %2791 = vst [vmem:[%s709 + $0x18] sm:$0xff] %v2663
          %2792 = vst [vmem:[%s709 + $0x20] sm:$0xff] %v2664
          %2793 = vst [vmem:[%s709 + $0x28] sm:$0xff] %v2665
          %2794 = vst [vmem:[%s709 + $0x30] sm:$0xff] %v2666
          %2795 = vst [vmem:[%s709 + $0x38] sm:$0xff] %v2667
          %2796 = vst [vmem:[%s709 + $0x40] sm:$0xff] %v2668
          %2797 = vst [vmem:[%s709 + $0x48] sm:$0xff] %v2669
          %2798 = vst [vmem:[%s709 + $0x50] sm:$0xff] %v2670
          %2799 = vst [vmem:[%s709 + $0x58] sm:$0xff] %v2671
          %2800 = vst [vmem:[%s709 + $0x60] sm:$0xff] %v2672
          %2801 = vst [vmem:[%s709 + $0x68] sm:$0xff] %v2673
          %2802 = vst [vmem:[%s709 + $0x70] sm:$0xff] %v2674
          %2803 = vst [vmem:[%s709 + $0x78] sm:$0xff] %v2675
          %2804 = vst [vmem:[%s709 + $0x80] sm:$0xff] %v2676
          %2805 = vst [vmem:[%s709 + $0x88] sm:$0xff] %v2677
          %2806 = vst [vmem:[%s709 + $0x90] sm:$0xff] %v2678
          %2807 = vst [vmem:[%s709 + $0x98] sm:$0xff] %v2679
          %2808 = vst [vmem:[%s709 + $0xa0] sm:$0xff] %v2680
          %2809 = vst [vmem:[%s709 + $0xa8] sm:$0xff] %v2681
          %2810 = vst [vmem:[%s709 + $0xb0] sm:$0xff] %v2682
          %2811 = vst [vmem:[%s709 + $0xb8] sm:$0xff] %v2683
          %2812 = vst [vmem:[%s709 + $0xc0] sm:$0xff] %v2684
          %2813 = vst [vmem:[%s709 + $0xc8] sm:$0xff] %v2685
          %2814 = vst [vmem:[%s709 + $0xd0] sm:$0xff] %v2686
          %2815 = vst [vmem:[%s709 + $0xd8] sm:$0xff] %v2687
          %2816 = vst [vmem:[%s709 + $0xe0] sm:$0xff] %v2688
          %2817 = vst [vmem:[%s709 + $0xe8] sm:$0xff] %v2689
          %2818 = vst [vmem:[%s709 + $0xf0] sm:$0xff] %v2690
          %2819 = vst [vmem:[%s709 + $0xf8] sm:$0xff] %v2691
          %2820 = vst [vmem:[%s709 + $0x100] sm:$0xff] %v2692
          %2821 = vst [vmem:[%s709 + $0x108] sm:$0xff] %v2693
          %2822 = vst [vmem:[%s709 + $0x110] sm:$0xff] %v2694
          %2823 = vst [vmem:[%s709 + $0x118] sm:$0xff] %v2695
          %2824 = vst [vmem:[%s709 + $0x120] sm:$0xff] %v2696
          %2825 = vst [vmem:[%s709 + $0x128] sm:$0xff] %v2697
          %2826 = vst [vmem:[%s709 + $0x130] sm:$0xff] %v2698
          %2827 = vst [vmem:[%s709 + $0x138] sm:$0xff] %v2699
          %2828 = vst [vmem:[%s709 + $0x140] sm:$0xff] %v2700
          %2829 = vst [vmem:[%s709 + $0x148] sm:$0xff] %v2701
          %2830 = vst [vmem:[%s709 + $0x150] sm:$0xff] %v2702
          %2831 = vst [vmem:[%s709 + $0x158] sm:$0xff] %v2703
          %2832 = vst [vmem:[%s709 + $0x160] sm:$0xff] %v2704
          %2833 = vst [vmem:[%s709 + $0x168] sm:$0xff] %v2705
          %2834 = vst [vmem:[%s709 + $0x170] sm:$0xff] %v2706
          %2835 = vst [vmem:[%s709 + $0x178] sm:$0xff] %v2707
          %2836 = vst [vmem:[%s709 + $0x180] sm:$0xff] %v2708
          %2837 = vst [vmem:[%s709 + $0x188] sm:$0xff] %v2709
          %2838 = vst [vmem:[%s709 + $0x190] sm:$0xff] %v2710
          %2839 = vst [vmem:[%s709 + $0x198] sm:$0xff] %v2711
          %2840 = vst [vmem:[%s709 + $0x1a0] sm:$0xff] %v2712
          %2841 = vst [vmem:[%s709 + $0x1a8] sm:$0xff] %v2713
          %2842 = vst [vmem:[%s709 + $0x1b0] sm:$0xff] %v2714
          %2843 = vst [vmem:[%s709 + $0x1b8] sm:$0xff] %v2715
          %2844 = vst [vmem:[%s709 + $0x1c0] sm:$0xff] %v2716
          %2845 = vst [vmem:[%s709 + $0x1c8] sm:$0xff] %v2717
          %2846 = vst [vmem:[%s709 + $0x1d0] sm:$0xff] %v2718
          %2847 = vst [vmem:[%s709 + $0x1d8] sm:$0xff] %v2719
          %2848 = vst [vmem:[%s709 + $0x1e0] sm:$0xff] %v2720
          %2849 = vst [vmem:[%s709 + $0x1e8] sm:$0xff] %v2721
          %2850 = vst [vmem:[%s709 + $0x1f0] sm:$0xff] %v2722
          %2851 = vst [vmem:[%s709 + $0x1f8] sm:$0xff] %v2723
          %2852 = vst [vmem:[%s709 + $0x200] sm:$0xff] %v2724
          %2853 = vst [vmem:[%s709 + $0x208] sm:$0xff] %v2725
          %2854 = vst [vmem:[%s709 + $0x210] sm:$0xff] %v2726
          %2855 = vst [vmem:[%s709 + $0x218] sm:$0xff] %v2727
          %2856 = vst [vmem:[%s709 + $0x220] sm:$0xff] %v2728
          %2857 = vst [vmem:[%s709 + $0x228] sm:$0xff] %v2729
          %2858 = vst [vmem:[%s709 + $0x230] sm:$0xff] %v2730
          %2859 = vst [vmem:[%s709 + $0x238] sm:$0xff] %v2731
          %2860 = vst [vmem:[%s709 + $0x240] sm:$0xff] %v2732
          %2861 = vst [vmem:[%s709 + $0x248] sm:$0xff] %v2733
          %2862 = vst [vmem:[%s709 + $0x250] sm:$0xff] %v2734
          %2863 = vst [vmem:[%s709 + $0x258] sm:$0xff] %v2735
          %2864 = vst [vmem:[%s709 + $0x260] sm:$0xff] %v2736
          %2865 = vst [vmem:[%s709 + $0x268] sm:$0xff] %v2737
          %2866 = vst [vmem:[%s709 + $0x270] sm:$0xff] %v2738
          %2867 = vst [vmem:[%s709 + $0x278] sm:$0xff] %v2739
          %2868 = vst [vmem:[%s709 + $0x280] sm:$0xff] %v2740
          %2869 = vst [vmem:[%s709 + $0x288] sm:$0xff] %v2741
          %2870 = vst [vmem:[%s709 + $0x290] sm:$0xff] %v2742
          %2871 = vst [vmem:[%s709 + $0x298] sm:$0xff] %v2743
          %2872 = vst [vmem:[%s709 + $0x2a0] sm:$0xff] %v2744
          %2873 = vst [vmem:[%s709 + $0x2a8] sm:$0xff] %v2745
          %2874 = vst [vmem:[%s709 + $0x2b0] sm:$0xff] %v2746
          %2875 = vst [vmem:[%s709 + $0x2b8] sm:$0xff] %v2747
          %2876 = vst [vmem:[%s709 + $0x2c0] sm:$0xff] %v2748
          %2877 = vst [vmem:[%s709 + $0x2c8] sm:$0xff] %v2749
          %2878 = vst [vmem:[%s709 + $0x2d0] sm:$0xff] %v2750
          %2879 = vst [vmem:[%s709 + $0x2d8] sm:$0xff] %v2751
          %2880 = vst [vmem:[%s709 + $0x2e0] sm:$0xff] %v2752
          %2881 = vst [vmem:[%s709 + $0x2e8] sm:$0xff] %v2753
          %2882 = vst [vmem:[%s709 + $0x2f0] sm:$0xff] %v2754
          %2883 = vst [vmem:[%s709 + $0x2f8] sm:$0xff] %v2755
          %2884 = vst [vmem:[%s709 + $0x300] sm:$0xff] %v2756
          %2885 = vst [vmem:[%s709 + $0x308] sm:$0xff] %v2757
          %2886 = vst [vmem:[%s709 + $0x310] sm:$0xff] %v2758
          %2887 = vst [vmem:[%s709 + $0x318] sm:$0xff] %v2759
          %2888 = vst [vmem:[%s709 + $0x320] sm:$0xff] %v2760
          %2889 = vst [vmem:[%s709 + $0x328] sm:$0xff] %v2761
          %2890 = vst [vmem:[%s709 + $0x330] sm:$0xff] %v2762
          %2891 = vst [vmem:[%s709 + $0x338] sm:$0xff] %v2763
          %2892 = vst [vmem:[%s709 + $0x340] sm:$0xff] %v2764
          %2893 = vst [vmem:[%s709 + $0x348] sm:$0xff] %v2765
          %2894 = vst [vmem:[%s709 + $0x350] sm:$0xff] %v2766
          %2895 = vst [vmem:[%s709 + $0x358] sm:$0xff] %v2767
          %2896 = vst [vmem:[%s709 + $0x360] sm:$0xff] %v2768
          %2897 = vst [vmem:[%s709 + $0x368] sm:$0xff] %v2769
          %2898 = vst [vmem:[%s709 + $0x370] sm:$0xff] %v2770
          %2899 = vst [vmem:[%s709 + $0x378] sm:$0xff] %v2771
          %2900 = vst [vmem:[%s709 + $0x380] sm:$0xff] %v2772
          %2901 = vst [vmem:[%s709 + $0x388] sm:$0xff] %v2773
          %2902 = vst [vmem:[%s709 + $0x390] sm:$0xff] %v2774
          %2903 = vst [vmem:[%s709 + $0x398] sm:$0xff] %v2775
          %2904 = vst [vmem:[%s709 + $0x3a0] sm:$0xff] %v2776
          %2905 = vst [vmem:[%s709 + $0x3a8] sm:$0xff] %v2777
          %2906 = vst [vmem:[%s709 + $0x3b0] sm:$0xff] %v2778
          %2907 = vst [vmem:[%s709 + $0x3b8] sm:$0xff] %v2779
          %2908 = vst [vmem:[%s709 + $0x3c0] sm:$0xff] %v2780
          %2909 = vst [vmem:[%s709 + $0x3c8] sm:$0xff] %v2781
          %2910 = vst [vmem:[%s709 + $0x3d0] sm:$0xff] %v2782
          %2911 = vst [vmem:[%s709 + $0x3d8] sm:$0xff] %v2783
          %2912 = vst [vmem:[%s709 + $0x3e0] sm:$0xff] %v2784
          %2913 = vst [vmem:[%s709 + $0x3e8] sm:$0xff] %v2785
          %2914 = vst [vmem:[%s709 + $0x3f0] sm:$0xff] %v2786
          %2915 = vst [vmem:[%s709 + $0x3f8] sm:$0xff] %v2787
        $region124: #{dcn_bottleneck_forward.5} parent=107 // pred_fallthru
          _
        %s2916 = sand.u32 %s184, 1
        %s2917 = scalar_lea.sflag [#allocation6], %s2916
        %s2918 = sand.u32 %s184, 1
        %s2919 = smul.addr %s2918, 1024
        %s2920 = scalar_lea.vmem [#allocation5], %s2919
        // Predicated region
        $region125: #{dcn_bottleneck_forward.5} parent=107 // pred_check
          %p2921 = pneg %p194
        $region126: #{dcn_bottleneck_forward.5} parent=107 // pred_check_branch
          %2923 = sbr.rel (%p2921) target = $region128
        $region127: #{dcn_bottleneck_forward.5} parent=107 // pred_region
          %s2924 = smul.u32 64, %s24
          %s2925 = smul.u32 2, %s25
          %2927 = vsyncadd %s2917, 0
          %s2928 = smul.addr %s2924, 4
          %s2929 = sadd.s32 %s2925, %s2928
          %s2930 = smul.addr %s2929, 8
          %s2931 = scalar_lea.hbm %s5, %s2930
          %s2932 = sshll.u32 %s2920, 4
          %s2933 = int_to_ptr.vmem [resolvable:$true] %s2932
          %s2934 = sshll.u32 %s2931, 4
          %s2935 = int_to_ptr.hbm [resolvable:$true] %s2934
          %2940 = dma.vmem_to_hbm [thread:$0]  %s2933, 16384, %s2935, %s2917, 256, 512, 16
        $region128: #{dcn_bottleneck_forward.5} parent=107 // pred_fallthru
          _
      $region108: #{dcn_bottleneck_forward.5} parent=5 // pred_fallthru
        _
      %p2941 = scmp.le.s32.totalorder 2, %s14
      // Predicated region
      $region129: #{dcn_bottleneck_forward.5} parent=5 // pred_check
        %p2942 = pneg %p2941
      $region130: #{dcn_bottleneck_forward.5} parent=5 // pred_check_branch
        %2944 = sbr.rel (%p2942) target = $region132
      $region131: #{dcn_bottleneck_forward.5} parent=5 // pred_region
        %s2945 = ssub.s32 %s14, 2
        // Predicated region
        $region133: #{dcn_bottleneck_forward.5} parent=131 // pred_check
          %p2946 = pneg %p200
        $region134: #{dcn_bottleneck_forward.5} parent=131 // pred_check_branch
          %2948 = sbr.rel (%p2946) target = $region136
        $region135: #{dcn_bottleneck_forward.5} parent=131 // pred_region
          %s2949 = sand.u32 %s185, 1
          %s2950 = scalar_lea.sflag [#allocation6], %s2949
          %s2951 = sand.u32 %s185, 1
          %s2952 = smul.addr %s2951, 1024
          %s2953 = scalar_lea.vmem [#allocation5], %s2952
          %2955 = dma.done %s2950, 16384
        $region136: #{dcn_bottleneck_forward.5} parent=131 // pred_fallthru
          _
      $region132: #{dcn_bottleneck_forward.5} parent=5 // pred_fallthru
        _
    $region6: #{dcn_bottleneck_forward.5} parent=1 // loop_footer
      %s18 = sadd.s32 1, %s14
    $region7: #{dcn_bottleneck_forward.5} parent=1 // loop_footer_branch
      %13 = sbr.rel target = $region3
    $region8: #{dcn_bottleneck_forward.5} parent=1 // loop_exit
      _
    %2956 = vsyncpa [#allocation6], 1
    %s2957 = scalar_lea.sflag [#allocation6], 1
    %2958 = vsyncpa %s2957, 1

// kernel: dcn_bottleneck_forward.4
$region0: #{dcn_bottleneck_forward.4}
  #allocation0 [shape = 'u32[]', space=smem, size = 0x4, offset = 0x4, fixed_abs, tag = 'smem constant byte address 0x4 - core index']
  #allocation1 [shape = 'u32[72,128]{1,0:T(1,128)}', space=vmem, size = 0x9000, scoped, tag = 'internal scratch']
  %s0 = inlined_call_operand.vmem [shape: bf16[2,18,18,128], index: 0, kind: input, shape index: {}]
  %s1 = inlined_call_operand.vmem [shape: bf16[9,128,128], index: 1, kind: input, shape index: {}]
  %s2 = inlined_call_operand.vmem [shape: f32[1,128], index: 2, kind: input, shape index: {}]
  %s3 = inlined_call_operand.vmem [shape: f32[1,128], index: 3, kind: input, shape index: {}]
  %s4 = inlined_call_operand.vmem [shape: bf16[512,128], index: 4, kind: output, shape index: {}]
  %s5 = sld [smem:[#allocation0]]
  $region49: #{dcn_bottleneck_forward.4} parent=0
    _
  %s7 = ssub.s32 1, %s5
  %s8 = scalar_select 0, %s7, %s5
  loop: start=0, step=1, limit=4
  $region2: #{dcn_bottleneck_forward.4} parent=0 // loop_pre_header
    _
  $region3: #{dcn_bottleneck_forward.4} parent=0 // loop_header
    %s10 = sphi 0, %s14
    %p11 = scmp.ge.s32.totalorder %s10, 4
    %s17 = sphi 0, %s29
    %s18 = sphi 0, %s25
    %s19 = sphi 0, %s17
    %s20 = sphi 0, %s18
    %s21 = sphi 0, %s19
    %s22 = sphi 0, %s20
    %s32 = sphi 0, %s34
    %s35 = sphi 0, %s32
    %s36 = sphi 0, %s35
    %s52 = sphi 0, %s36
    %s58 = sphi 0, %s60
    %s61 = sphi 0, %s58
    %s62 = sphi 0, %s61
    %s78 = sphi 0, %s62
    %s84 = sphi 0, %s86
    %s87 = sphi 0, %s84
    %s88 = sphi 0, %s87
    %s104 = sphi 0, %s88
    %s110 = sphi 0, %s112
    %s113 = sphi 0, %s110
    %s114 = sphi 0, %s113
    %s130 = sphi 0, %s114
    %s138 = sphi 0, %s140
    %s141 = sphi 0, %s138
    %s142 = sphi 0, %s141
    %s158 = sphi 0, %s142
  $region4: #{dcn_bottleneck_forward.4} parent=0 // loop_header_branch
    %13 = sbr.rel (%p11) target = $region8
  $region5: #{dcn_bottleneck_forward.4} parent=0 // loop_body
    %s15 = ssub.s32 %s10, 1
    %s16 = ssub.s32 %s10, 2
    %s23 = sadd.s32 1, %s18
    %p24 = scmp.ge.s32.totalorder %s23, 1
    %s25 = scalar_select %p24, 0, %s23
    %s26 = sadd.s32 1, %s17
    %s27 = scalar_select %p24, %s26, %s17
    %p28 = scmp.ge.s32.totalorder %s27, 2
    %s29 = scalar_select %p28, 0, %s27
    %s30 = ssub.s32 %s17, %s29
    %p31 = scmp.eq.s32.totalorder %s30, 0
    %s33 = sadd.s32 %s32, 1
    %s34 = scalar_select %p31, %s32, %s33
    %p37 = pneg %p31
    %p38 = scmp.eq.s32.totalorder %s10, 1
    %p39 = por %p37, %p38
    %p40 = scmp.ne.s32.totalorder %s32, %s35
    %p41 = scmp.eq.s32.totalorder %s10, 0
    %p42 = por %p40, %p41
    %p43 = scmp.ne.s32.totalorder %s32, %s35
    %p44 = scmp.eq.s32.totalorder %s15, 1
    %p45 = por %p43, %p44
    %p46 = scmp.ne.s32.totalorder %s35, %s36
    %p47 = scmp.eq.s32.totalorder %s15, 0
    %p48 = por %p46, %p47
    %p49 = scmp.ne.s32.totalorder %s35, %s36
    %p50 = scmp.eq.s32.totalorder %s16, 1
    %p51 = por %p49, %p50
    %p53 = scmp.ne.s32.totalorder %s36, %s52
    %p54 = scmp.eq.s32.totalorder %s16, 0
    %p55 = por %p53, %p54
    %s56 = ssub.s32 %s18, %s25
    %p57 = scmp.eq.s32.totalorder %s56, 0
    %s59 = sadd.s32 %s58, 1
    %s60 = scalar_select %p57, %s58, %s59
    %p63 = pneg %p57
    %p64 = scmp.eq.s32.totalorder %s10, 1
    %p65 = por %p63, %p64
    %p66 = scmp.ne.s32.totalorder %s58, %s61
    %p67 = scmp.eq.s32.totalorder %s10, 0
    %p68 = por %p66, %p67
    %p69 = scmp.ne.s32.totalorder %s58, %s61
    %p70 = scmp.eq.s32.totalorder %s15, 1
    %p71 = por %p69, %p70
    %p72 = scmp.ne.s32.totalorder %s61, %s62
    %p73 = scmp.eq.s32.totalorder %s15, 0
    %p74 = por %p72, %p73
    %p75 = scmp.ne.s32.totalorder %s61, %s62
    %p76 = scmp.eq.s32.totalorder %s16, 1
    %p77 = por %p75, %p76
    %p79 = scmp.ne.s32.totalorder %s62, %s78
    %p80 = scmp.eq.s32.totalorder %s16, 0
    %p81 = por %p79, %p80
    %s82 = ssub.s32 %s18, %s25
    %p83 = scmp.eq.s32.totalorder %s82, 0
    %s85 = sadd.s32 %s84, 1
    %s86 = scalar_select %p83, %s84, %s85
    %p89 = pneg %p83
    %p90 = scmp.eq.s32.totalorder %s10, 1
    %p91 = por %p89, %p90
    %p92 = scmp.ne.s32.totalorder %s84, %s87
    %p93 = scmp.eq.s32.totalorder %s10, 0
    %p94 = por %p92, %p93
    %p95 = scmp.ne.s32.totalorder %s84, %s87
    %p96 = scmp.eq.s32.totalorder %s15, 1
    %p97 = por %p95, %p96
    %p98 = scmp.ne.s32.totalorder %s87, %s88
    %p99 = scmp.eq.s32.totalorder %s15, 0
    %p100 = por %p98, %p99
    %p101 = scmp.ne.s32.totalorder %s87, %s88
    %p102 = scmp.eq.s32.totalorder %s16, 1
    %p103 = por %p101, %p102
    %p105 = scmp.ne.s32.totalorder %s88, %s104
    %p106 = scmp.eq.s32.totalorder %s16, 0
    %p107 = por %p105, %p106
    %s108 = ssub.s32 %s18, %s25
    %p109 = scmp.eq.s32.totalorder %s108, 0
    %s111 = sadd.s32 %s110, 1
    %s112 = scalar_select %p109, %s110, %s111
    %p115 = pneg %p109
    %p116 = scmp.eq.s32.totalorder %s10, 1
    %p117 = por %p115, %p116
    %p118 = scmp.ne.s32.totalorder %s110, %s113
    %p119 = scmp.eq.s32.totalorder %s10, 0
    %p120 = por %p118, %p119
    %p121 = scmp.ne.s32.totalorder %s110, %s113
    %p122 = scmp.eq.s32.totalorder %s15, 1
    %p123 = por %p121, %p122
    %p124 = scmp.ne.s32.totalorder %s113, %s114
    %p125 = scmp.eq.s32.totalorder %s15, 0
    %p126 = por %p124, %p125
    %p127 = scmp.ne.s32.totalorder %s113, %s114
    %p128 = scmp.eq.s32.totalorder %s16, 1
    %p129 = por %p127, %p128
    %p131 = scmp.ne.s32.totalorder %s114, %s130
    %p132 = scmp.eq.s32.totalorder %s16, 0
    %p133 = por %p131, %p132
    %s134 = ssub.s32 %s17, %s29
    %s135 = ssub.s32 %s18, %s25
    %s136 = sor.u32 %s134, %s135
    %p137 = scmp.eq.s32.totalorder %s136, 0
    %s139 = sadd.s32 %s138, 1
    %s140 = scalar_select %p137, %s138, %s139
    %p143 = pneg %p137
    %p144 = scmp.eq.s32.totalorder %s10, 1
    %p145 = por %p143, %p144
    %p146 = scmp.ne.s32.totalorder %s138, %s141
    %p147 = scmp.eq.s32.totalorder %s10, 0
    %p148 = por %p146, %p147
    %p149 = scmp.ne.s32.totalorder %s138, %s141
    %p150 = scmp.eq.s32.totalorder %s15, 1
    %p151 = por %p149, %p150
    %p152 = scmp.ne.s32.totalorder %s141, %s142
    %p153 = scmp.eq.s32.totalorder %s15, 0
    %p154 = por %p152, %p153
    %p155 = scmp.ne.s32.totalorder %s141, %s142
    %p156 = scmp.eq.s32.totalorder %s16, 1
    %p157 = por %p155, %p156
    %p159 = scmp.ne.s32.totalorder %s142, %s158
    %p160 = scmp.eq.s32.totalorder %s16, 0
    %p161 = por %p159, %p160
    %p162 = scmp.le.s32.totalorder 1, %s10
    %p163 = scmp.lt.s32.totalorder %s10, 3
    %p164 = pnand %p162, %p163
    %p165 = pneg %p164
    // Predicated region
    $region9: #{dcn_bottleneck_forward.4} parent=5 // pred_check
      _
    $region10: #{dcn_bottleneck_forward.4} parent=5 // pred_check_branch
      %167 = sbr.rel (%p164) target = $region12
    $region11: #{dcn_bottleneck_forward.4} parent=5 // pred_region
      %s168 = ssub.s32 %s10, 1
      // Predicated region
      $region13: #{dcn_bottleneck_forward.4} parent=11 // pred_check
        %p169 = pneg %p74
      $region14: #{dcn_bottleneck_forward.4} parent=11 // pred_check_branch
        %171 = sbr.rel (%p169) target = $region16
      $region15: #{dcn_bottleneck_forward.4} parent=11 // pred_region
        %p172 = scmp.lt.s32.totalorder %s20, 0
        %s173 = scalar_select %p172, %s20, 0
        %s174 = smul.addr %s173, 4
        %s175 = scalar_lea.vmem %s1, %s174
      $region16: #{dcn_bottleneck_forward.4} parent=11 // pred_fallthru
        _
      // Predicated region
      $region17: #{dcn_bottleneck_forward.4} parent=11 // pred_check
        %p176 = pneg %p100
      $region18: #{dcn_bottleneck_forward.4} parent=11 // pred_check_branch
        %178 = sbr.rel (%p176) target = $region20
      $region19: #{dcn_bottleneck_forward.4} parent=11 // pred_region
        %p179 = scmp.lt.s32.totalorder %s20, 0
        %s180 = scalar_select %p179, %s20, 0
        %s181 = scalar_lea.vmem %s2, %s180
      $region20: #{dcn_bottleneck_forward.4} parent=11 // pred_fallthru
        _
      // Predicated region
      $region21: #{dcn_bottleneck_forward.4} parent=11 // pred_check
        %p182 = pneg %p126
      $region22: #{dcn_bottleneck_forward.4} parent=11 // pred_check_branch
        %184 = sbr.rel (%p182) target = $region24
      $region23: #{dcn_bottleneck_forward.4} parent=11 // pred_region
        %p185 = scmp.lt.s32.totalorder %s20, 0
        %s186 = scalar_select %p185, %s20, 0
        %s187 = scalar_lea.vmem %s3, %s186
      $region24: #{dcn_bottleneck_forward.4} parent=11 // pred_fallthru
        _
    $region12: #{dcn_bottleneck_forward.4} parent=5 // pred_fallthru
      _
    %p188 = scmp.lt.s32.totalorder %s10, 2
    // Predicated region
    $region25: #{dcn_bottleneck_forward.4} parent=5 // pred_check
      %p189 = pneg %p188
    $region26: #{dcn_bottleneck_forward.4} parent=5 // pred_check_branch
      %191 = sbr.rel (%p189) target = $region28
    $region27: #{dcn_bottleneck_forward.4} parent=5 // pred_region
      // Predicated region
      $region29: #{dcn_bottleneck_forward.4} parent=27 // pred_check
        %p192 = pneg %p42
      $region30: #{dcn_bottleneck_forward.4} parent=27 // pred_check_branch
        %194 = sbr.rel (%p192) target = $region32
      $region31: #{dcn_bottleneck_forward.4} parent=27 // pred_region
        %p195 = scmp.lt.s32.totalorder %s17, 1
        %s196 = scalar_select %p195, %s17, 1
        %s197 = smul.addr %s196, 54
        %s198 = smul.addr %s197, 4
        %s199 = scalar_lea.vmem %s0, %s198
      $region32: #{dcn_bottleneck_forward.4} parent=27 // pred_fallthru
        _
    $region28: #{dcn_bottleneck_forward.4} parent=5 // pred_fallthru
      _
    %p200 = scmp.le.s32.totalorder 1, %s10
    %p201 = scmp.lt.s32.totalorder %s10, 3
    %p202 = pnand %p200, %p201
    %p203 = pneg %p202
    // Predicated region
    $region33: #{dcn_bottleneck_forward.4} parent=5 // pred_check
      _
    $region34: #{dcn_bottleneck_forward.4} parent=5 // pred_check_branch
      %205 = sbr.rel (%p202) target = $region36
    $region35: #{dcn_bottleneck_forward.4} parent=5 // pred_region
      %s206 = ssub.s32 %s10, 1
      %p207 = scmp.lt.s32.totalorder %s19, 1
      %s208 = scalar_select %p207, %s19, 1
      %s209 = smul.addr %s208, 54
      %s210 = smul.addr %s209, 4
      %s211 = scalar_lea.vmem %s0, %s210
      %p212 = pneg %p48
      %p213 = pneg %p45
      %p214 = scmp.lt.s32.totalorder %s20, 0
      %s215 = scalar_select %p214, %s20, 0
      %s216 = smul.addr %s215, 4
      %s217 = scalar_lea.vmem %s1, %s216
      %p218 = pneg %p74
      %p219 = pneg %p71
      %p220 = scmp.lt.s32.totalorder %s20, 0
      %s221 = scalar_select %p220, %s20, 0
      %s222 = scalar_lea.vmem %s2, %s221
      %p223 = pneg %p100
      %p224 = pneg %p97
      %p225 = scmp.lt.s32.totalorder %s20, 0
      %s226 = scalar_select %p225, %s20, 0
      %s227 = scalar_lea.vmem %s3, %s226
      %p228 = pneg %p126
      %p229 = pneg %p123
      %p230 = pneg %p154
      %p231 = pneg %p151
      %s232 = smul.u32 32, %s19
      %p233 = scmp.lt.s32.totalorder %s232, 63
      %s234 = scalar_select %p233, %s232, 63
      %p235 = scmp.lt.s32.totalorder %s20, 0
      %s236 = scalar_select %p235, %s20, 0
      %s237 = sadd.s32 %s236, %s234
      %s238 = smul.addr %s237, 4
      %s239 = scalar_lea.vmem %s4, %s238
      %p240 = scmp.lt.s32.totalorder %s19, 1
      %s241 = scalar_select %p240, %s19, 1
      %s242 = smul.addr %s241, 54
      %s243 = smul.addr %s242, 4
      %s244 = scalar_lea.vmem %s0, %s243
      %p245 = scmp.lt.s32.totalorder %s20, 0
      %s246 = scalar_select %p245, %s20, 0
      %s247 = smul.addr %s246, 4
      %s248 = scalar_lea.vmem %s1, %s247
      %p249 = scmp.lt.s32.totalorder %s20, 0
      %s250 = scalar_select %p249, %s20, 0
      %s251 = scalar_lea.vmem %s2, %s250
      %p252 = scmp.lt.s32.totalorder %s20, 0
      %s253 = scalar_select %p252, %s20, 0
      %s254 = scalar_lea.vmem %s3, %s253
      %s255 = smul.u32 32, %s19
      %p256 = scmp.lt.s32.totalorder %s255, 63
      %s257 = scalar_select %p256, %s255, 63
      %p258 = scmp.lt.s32.totalorder %s20, 0
      %s259 = scalar_select %p258, %s20, 0
      %s260 = sadd.s32 %s259, %s257
      %s261 = smul.addr %s260, 4
      %s262 = scalar_lea.vmem %s4, %s261
      %s263 = smul.u32 32, %s19
      %v264 = vld [vmem:[%s244] sm:$0xf]
      %v265 = vld [vmem:[%s244 + $0x4] sm:$0xf]
      %v266 = vld [vmem:[%s244 + $0xc] sm:$0xf]
      %v267 = vld [vmem:[%s244 + $0x10] sm:$0xf]
      %v268 = vld [vmem:[%s244 + $0x18] sm:$0xf]
      %v269 = vld [vmem:[%s244 + $0x1c] sm:$0xf]
      %v270 = vld [vmem:[%s244 + $0x24] sm:$0xf]
      %v271 = vld [vmem:[%s244 + $0x28] sm:$0xf]
      %v272 = vld [vmem:[%s244 + $0x30] sm:$0xf]
      %v273 = vld [vmem:[%s244 + $0x34] sm:$0xf]
      %v274 = vld [vmem:[%s244 + $0x3c] sm:$0xf]
      %v275 = vld [vmem:[%s244 + $0x40] sm:$0xf]
      %v276 = vld [vmem:[%s244 + $0x48] sm:$0xf]
      %v277 = vld [vmem:[%s244 + $0x4c] sm:$0xf]
      %v278 = vld [vmem:[%s244 + $0x54] sm:$0xf]
      %v279 = vld [vmem:[%s244 + $0x58] sm:$0xf]
      %v280 = vld [vmem:[%s244 + $0x60] sm:$0xf]
      %v281 = vld [vmem:[%s244 + $0x64] sm:$0xf]
      %v282 = vld [vmem:[%s244 + $0x6c] sm:$0xf]
      %v283 = vld [vmem:[%s244 + $0x70] sm:$0xf]
      %v284 = vld [vmem:[%s244 + $0x78] sm:$0xf]
      %v285 = vld [vmem:[%s244 + $0x7c] sm:$0xf]
      %v286 = vld [vmem:[%s244 + $0x84] sm:$0xf]
      %v287 = vld [vmem:[%s244 + $0x88] sm:$0xf]
      %v288 = vld [vmem:[%s244 + $0x90] sm:$0xf]
      %v289 = vld [vmem:[%s244 + $0x94] sm:$0xf]
      %v290 = vld [vmem:[%s244 + $0x9c] sm:$0xf]
      %v291 = vld [vmem:[%s244 + $0xa0] sm:$0xf]
      %v292 = vld [vmem:[%s244 + $0xa8] sm:$0xf]
      %v293 = vld [vmem:[%s244 + $0xac] sm:$0xf]
      %v294 = vld [vmem:[%s244 + $0xb4] sm:$0xf]
      %v295 = vld [vmem:[%s244 + $0xb8] sm:$0xf]
      %v296 = vld [vmem:[%s248] sm:$0xf]
      %v297 = vld [vmem:[%s248 + $0x4] sm:$0xf]
      %v298 = vld [vmem:[%s248 + $0x8] sm:$0xf]
      %v299 = vld [vmem:[%s248 + $0xc] sm:$0xf]
      %v300 = vld [vmem:[%s248 + $0x10] sm:$0xf]
      %v301 = vld [vmem:[%s248 + $0x14] sm:$0xf]
      %v302 = vld [vmem:[%s248 + $0x18] sm:$0xf]
      %v303 = vld [vmem:[%s248 + $0x1c] sm:$0xf]
      %v304 = vld [vmem:[%s248 + $0x20] sm:$0xf]
      %v305 = vld [vmem:[%s248 + $0x24] sm:$0xf]
      %v306 = vld [vmem:[%s248 + $0x28] sm:$0xf]
      %v307 = vld [vmem:[%s248 + $0x2c] sm:$0xf]
      %v308 = vld [vmem:[%s248 + $0x30] sm:$0xf]
      %v309 = vld [vmem:[%s248 + $0x34] sm:$0xf]
      %v310 = vld [vmem:[%s248 + $0x38] sm:$0xf]
      %v311 = vld [vmem:[%s248 + $0x3c] sm:$0xf]
      %v312 = vld [vmem:[%s244 + $0x8] sm:$0x1]
      %v313 = vld [vmem:[%s244 + $0x14] sm:$0x1]
      %v314 = vld [vmem:[%s244 + $0x20] sm:$0x1]
      %v315 = vld [vmem:[%s244 + $0x2c] sm:$0x1]
      %v316 = vld [vmem:[%s244 + $0x38] sm:$0x1]
      %v317 = vld [vmem:[%s244 + $0x44] sm:$0x1]
      %v318 = vld [vmem:[%s244 + $0x50] sm:$0x1]
      %v319 = vld [vmem:[%s244 + $0x5c] sm:$0x1]
      %v320 = vld [vmem:[%s244 + $0x68] sm:$0x1]
      %v321 = vld [vmem:[%s244 + $0x74] sm:$0x1]
      %v322 = vld [vmem:[%s244 + $0x80] sm:$0x1]
      %v323 = vld [vmem:[%s244 + $0x8c] sm:$0x1]
      %v324 = vld [vmem:[%s244 + $0x98] sm:$0x1]
      %v325 = vld [vmem:[%s244 + $0xa4] sm:$0x1]
      %v326 = vld [vmem:[%s244 + $0xb0] sm:$0x1]
      %v327 = vld [vmem:[%s244 + $0xbc] sm:$0x1]
      %vm328 = vsmask.f32 3328
      %vm329 = vsmask.f32 7440
      %vm330 = vmor %vm328, %vm329
      %v332 = vshrl.u32 %v264, 16
      %v334 = vrot.slane %v332, 4
      %v335 = vshll.u32 %v264, 16
      %v337 = vrot.slane %v335, 5
      %v338 = vor.u32 %v334, %v337
      %v339 = vrot.slane %v338, 4
      %v341 = vshll.u32 %v265, 16
      %v343 = vrot.slane %v341, 5
      %v344 = vsel %vm330, %v339, %v343
      %v345 = vshrl.u32 %v265, 16
      %v347 = vrot.slane %v345, 4
      %v348 = vor.u32 %v347, %v343
      %v349 = vrot.slane %v348, 4
      %v351 = vshll.u32 %v312, 16
      %v353 = vrot.slane %v351, 5
      %v354 = vsel %vm330, %v349, %v353
      %v356 = vshrl.u32 %v266, 16
      %v358 = vrot.slane %v356, 4
      %v359 = vshll.u32 %v266, 16
      %v361 = vrot.slane %v359, 5
      %v362 = vor.u32 %v358, %v361
      %v363 = vrot.slane %v362, 4
      %v365 = vshll.u32 %v267, 16
      %v367 = vrot.slane %v365, 5
      %v368 = vsel %vm330, %v363, %v367
      %v369 = vshrl.u32 %v267, 16
      %v371 = vrot.slane %v369, 4
      %v372 = vor.u32 %v371, %v367
      %v373 = vrot.slane %v372, 4
      %v375 = vshll.u32 %v313, 16
      %v377 = vrot.slane %v375, 5
      %v378 = vsel %vm330, %v373, %v377
      %v380 = vshrl.u32 %v268, 16
      %v382 = vrot.slane %v380, 4
      %v383 = vshll.u32 %v268, 16
      %v385 = vrot.slane %v383, 5
      %v386 = vor.u32 %v382, %v385
      %v387 = vrot.slane %v386, 4
      %v389 = vshll.u32 %v269, 16
      %v391 = vrot.slane %v389, 5
      %v392 = vsel %vm330, %v387, %v391
      %v393 = vshrl.u32 %v269, 16
      %v395 = vrot.slane %v393, 4
      %v396 = vor.u32 %v395, %v391
      %v397 = vrot.slane %v396, 4
      %v399 = vshll.u32 %v314, 16
      %v401 = vrot.slane %v399, 5
      %v402 = vsel %vm330, %v397, %v401
      %v404 = vshrl.u32 %v270, 16
      %v406 = vrot.slane %v404, 4
      %v407 = vshll.u32 %v270, 16
      %v409 = vrot.slane %v407, 5
      %v410 = vor.u32 %v406, %v409
      %v411 = vrot.slane %v410, 4
      %v413 = vshll.u32 %v271, 16
      %v415 = vrot.slane %v413, 5
      %v416 = vsel %vm330, %v411, %v415
      %v417 = vshrl.u32 %v271, 16
      %v419 = vrot.slane %v417, 4
      %v420 = vor.u32 %v419, %v415
      %v421 = vrot.slane %v420, 4
      %v423 = vshll.u32 %v315, 16
      %v425 = vrot.slane %v423, 5
      %v426 = vsel %vm330, %v421, %v425
      %v428 = vshrl.u32 %v272, 16
      %v430 = vrot.slane %v428, 4
      %v431 = vshll.u32 %v272, 16
      %v433 = vrot.slane %v431, 5
      %v434 = vor.u32 %v430, %v433
      %v435 = vrot.slane %v434, 4
      %v437 = vshll.u32 %v273, 16
      %v439 = vrot.slane %v437, 5
      %v440 = vsel %vm330, %v435, %v439
      %v441 = vshrl.u32 %v273, 16
      %v443 = vrot.slane %v441, 4
      %v444 = vor.u32 %v443, %v439
      %v445 = vrot.slane %v444, 4
      %v447 = vshll.u32 %v316, 16
      %v449 = vrot.slane %v447, 5
      %v450 = vsel %vm330, %v445, %v449
      %v452 = vshrl.u32 %v274, 16
      %v454 = vrot.slane %v452, 4
      %v455 = vshll.u32 %v274, 16
      %v457 = vrot.slane %v455, 5
      %v458 = vor.u32 %v454, %v457
      %v459 = vrot.slane %v458, 4
      %v461 = vshll.u32 %v275, 16
      %v463 = vrot.slane %v461, 5
      %v464 = vsel %vm330, %v459, %v463
      %v465 = vshrl.u32 %v275, 16
      %v467 = vrot.slane %v465, 4
      %v468 = vor.u32 %v467, %v463
      %v469 = vrot.slane %v468, 4
      %v471 = vshll.u32 %v317, 16
      %v473 = vrot.slane %v471, 5
      %v474 = vsel %vm330, %v469, %v473
      %v476 = vshrl.u32 %v276, 16
      %v478 = vrot.slane %v476, 4
      %v479 = vshll.u32 %v276, 16
      %v481 = vrot.slane %v479, 5
      %v482 = vor.u32 %v478, %v481
      %v483 = vrot.slane %v482, 4
      %v485 = vshll.u32 %v277, 16
      %v487 = vrot.slane %v485, 5
      %v488 = vsel %vm330, %v483, %v487
      %v489 = vshrl.u32 %v277, 16
      %v491 = vrot.slane %v489, 4
      %v492 = vor.u32 %v491, %v487
      %v493 = vrot.slane %v492, 4
      %v495 = vshll.u32 %v318, 16
      %v497 = vrot.slane %v495, 5
      %v498 = vsel %vm330, %v493, %v497
      %v500 = vshrl.u32 %v278, 16
      %v502 = vrot.slane %v500, 4
      %v503 = vshll.u32 %v278, 16
      %v505 = vrot.slane %v503, 5
      %v506 = vor.u32 %v502, %v505
      %v507 = vrot.slane %v506, 4
      %v509 = vshll.u32 %v279, 16
      %v511 = vrot.slane %v509, 5
      %v512 = vsel %vm330, %v507, %v511
      %v513 = vshrl.u32 %v279, 16
      %v515 = vrot.slane %v513, 4
      %v516 = vor.u32 %v515, %v511
      %v517 = vrot.slane %v516, 4
      %v519 = vshll.u32 %v319, 16
      %v521 = vrot.slane %v519, 5
      %v522 = vsel %vm330, %v517, %v521
      %v524 = vshrl.u32 %v280, 16
      %v526 = vrot.slane %v524, 4
      %v527 = vshll.u32 %v280, 16
      %v529 = vrot.slane %v527, 5
      %v530 = vor.u32 %v526, %v529
      %v531 = vrot.slane %v530, 4
      %v533 = vshll.u32 %v281, 16
      %v535 = vrot.slane %v533, 5
      %v536 = vsel %vm330, %v531, %v535
      %v537 = vshrl.u32 %v281, 16
      %v539 = vrot.slane %v537, 4
      %v540 = vor.u32 %v539, %v535
      %v541 = vrot.slane %v540, 4
      %v543 = vshll.u32 %v320, 16
      %v545 = vrot.slane %v543, 5
      %v546 = vsel %vm330, %v541, %v545
      %v548 = vshrl.u32 %v282, 16
      %v550 = vrot.slane %v548, 4
      %v551 = vshll.u32 %v282, 16
      %v553 = vrot.slane %v551, 5
      %v554 = vor.u32 %v550, %v553
      %v555 = vrot.slane %v554, 4
      %v557 = vshll.u32 %v283, 16
      %v559 = vrot.slane %v557, 5
      %v560 = vsel %vm330, %v555, %v559
      %v561 = vshrl.u32 %v283, 16
      %v563 = vrot.slane %v561, 4
      %v564 = vor.u32 %v563, %v559
      %v565 = vrot.slane %v564, 4
      %v567 = vshll.u32 %v321, 16
      %v569 = vrot.slane %v567, 5
      %v570 = vsel %vm330, %v565, %v569
      %v572 = vshrl.u32 %v284, 16
      %v574 = vrot.slane %v572, 4
      %v575 = vshll.u32 %v284, 16
      %v577 = vrot.slane %v575, 5
      %v578 = vor.u32 %v574, %v577
      %v579 = vrot.slane %v578, 4
      %v581 = vshll.u32 %v285, 16
      %v583 = vrot.slane %v581, 5
      %v584 = vsel %vm330, %v579, %v583
      %v585 = vshrl.u32 %v285, 16
      %v587 = vrot.slane %v585, 4
      %v588 = vor.u32 %v587, %v583
      %v589 = vrot.slane %v588, 4
      %v591 = vshll.u32 %v322, 16
      %v593 = vrot.slane %v591, 5
      %v594 = vsel %vm330, %v589, %v593
      %v596 = vshrl.u32 %v286, 16
      %v598 = vrot.slane %v596, 4
      %v599 = vshll.u32 %v286, 16
      %v601 = vrot.slane %v599, 5
      %v602 = vor.u32 %v598, %v601
      %v603 = vrot.slane %v602, 4
      %v605 = vshll.u32 %v287, 16
      %v607 = vrot.slane %v605, 5
      %v608 = vsel %vm330, %v603, %v607
      %v609 = vshrl.u32 %v287, 16
      %v611 = vrot.slane %v609, 4
      %v612 = vor.u32 %v611, %v607
      %v613 = vrot.slane %v612, 4
      %v615 = vshll.u32 %v323, 16
      %v617 = vrot.slane %v615, 5
      %v618 = vsel %vm330, %v613, %v617
      %v620 = vshrl.u32 %v288, 16
      %v622 = vrot.slane %v620, 4
      %v623 = vshll.u32 %v288, 16
      %v625 = vrot.slane %v623, 5
      %v626 = vor.u32 %v622, %v625
      %v627 = vrot.slane %v626, 4
      %v629 = vshll.u32 %v289, 16
      %v631 = vrot.slane %v629, 5
      %v632 = vsel %vm330, %v627, %v631
      %v633 = vshrl.u32 %v289, 16
      %v635 = vrot.slane %v633, 4
      %v636 = vor.u32 %v635, %v631
      %v637 = vrot.slane %v636, 4
      %v639 = vshll.u32 %v324, 16
      %v641 = vrot.slane %v639, 5
      %v642 = vsel %vm330, %v637, %v641
      %v644 = vshrl.u32 %v290, 16
      %v646 = vrot.slane %v644, 4
      %v647 = vshll.u32 %v290, 16
      %v649 = vrot.slane %v647, 5
      %v650 = vor.u32 %v646, %v649
      %v651 = vrot.slane %v650, 4
      %v653 = vshll.u32 %v291, 16
      %v655 = vrot.slane %v653, 5
      %v656 = vsel %vm330, %v651, %v655
      %v657 = vshrl.u32 %v291, 16
      %v659 = vrot.slane %v657, 4
      %v660 = vor.u32 %v659, %v655
      %v661 = vrot.slane %v660, 4
      %v663 = vshll.u32 %v325, 16
      %v665 = vrot.slane %v663, 5
      %v666 = vsel %vm330, %v661, %v665
      %v668 = vshrl.u32 %v292, 16
      %v670 = vrot.slane %v668, 4
      %v671 = vshll.u32 %v292, 16
      %v673 = vrot.slane %v671, 5
      %v674 = vor.u32 %v670, %v673
      %v675 = vrot.slane %v674, 4
      %v677 = vshll.u32 %v293, 16
      %v679 = vrot.slane %v677, 5
      %v680 = vsel %vm330, %v675, %v679
      %v681 = vshrl.u32 %v293, 16
      %v683 = vrot.slane %v681, 4
      %v684 = vor.u32 %v683, %v679
      %v685 = vrot.slane %v684, 4
      %v687 = vshll.u32 %v326, 16
      %v689 = vrot.slane %v687, 5
      %v690 = vsel %vm330, %v685, %v689
      %v692 = vshrl.u32 %v294, 16
      %v694 = vrot.slane %v692, 4
      %v695 = vshll.u32 %v294, 16
      %v697 = vrot.slane %v695, 5
      %v698 = vor.u32 %v694, %v697
      %v699 = vrot.slane %v698, 4
      %v701 = vshll.u32 %v295, 16
      %v703 = vrot.slane %v701, 5
      %v704 = vsel %vm330, %v699, %v703
      %v705 = vshrl.u32 %v295, 16
      %v707 = vrot.slane %v705, 4
      %v708 = vor.u32 %v707, %v703
      %v709 = vrot.slane %v708, 4
      %v711 = vshll.u32 %v327, 16
      %v713 = vrot.slane %v711, 5
      %v714 = vsel %vm330, %v709, %v713
      %s715 = scalar_lea.vmem %s248, 64
      %v716 = vld [vmem:[%s715] sm:$0xf]
      %v717 = vld [vmem:[%s715 + $0x4] sm:$0xf]
      %v718 = vld [vmem:[%s715 + $0x8] sm:$0xf]
      %v719 = vld [vmem:[%s715 + $0xc] sm:$0xf]
      %v720 = vld [vmem:[%s715 + $0x10] sm:$0xf]
      %v721 = vld [vmem:[%s715 + $0x14] sm:$0xf]
      %v722 = vld [vmem:[%s715 + $0x18] sm:$0xf]
      %v723 = vld [vmem:[%s715 + $0x1c] sm:$0xf]
      %v724 = vld [vmem:[%s715 + $0x20] sm:$0xf]
      %v725 = vld [vmem:[%s715 + $0x24] sm:$0xf]
      %v726 = vld [vmem:[%s715 + $0x28] sm:$0xf]
      %v727 = vld [vmem:[%s715 + $0x2c] sm:$0xf]
      %v728 = vld [vmem:[%s715 + $0x30] sm:$0xf]
      %v729 = vld [vmem:[%s715 + $0x34] sm:$0xf]
      %v730 = vld [vmem:[%s715 + $0x38] sm:$0xf]
      %v731 = vld [vmem:[%s715 + $0x3c] sm:$0xf]
      %v732 = vunpack.c.l.b16 %v344
      %v733 = vunpack.c.l.b16 %v354
      %v734 = vunpack.c.l.b16 %v368
      %v735 = vunpack.c.l.b16 %v378
      %v736 = vunpack.c.l.b16 %v392
      %v737 = vunpack.c.l.b16 %v402
      %v738 = vunpack.c.l.b16 %v416
      %v739 = vunpack.c.l.b16 %v426
      %v740 = vunpack.c.l.b16 %v440
      %v741 = vunpack.c.l.b16 %v450
      %v742 = vunpack.c.l.b16 %v464
      %v743 = vunpack.c.l.b16 %v474
      %v744 = vunpack.c.l.b16 %v488
      %v745 = vunpack.c.l.b16 %v498
      %v746 = vunpack.c.l.b16 %v512
      %v747 = vunpack.c.l.b16 %v522
      %v748 = vunpack.c.l.b16 %v536
      %v749 = vunpack.c.l.b16 %v546
      %v750 = vunpack.c.l.b16 %v560
      %v751 = vunpack.c.l.b16 %v570
      %v752 = vunpack.c.l.b16 %v584
      %v753 = vunpack.c.l.b16 %v594
      %v754 = vunpack.c.l.b16 %v608
      %v755 = vunpack.c.l.b16 %v618
      %v756 = vunpack.c.l.b16 %v632
      %v757 = vunpack.c.l.b16 %v642
      %v758 = vunpack.c.l.b16 %v656
      %v759 = vunpack.c.l.b16 %v666
      %v760 = vunpack.c.l.b16 %v680
      %v761 = vunpack.c.l.b16 %v690
      %v762 = vunpack.c.l.b16 %v704
      %v763 = vunpack.c.l.b16 %v714
      %v764 = vpack.c.b16 %v733, %v732
      %v765 = vpack.c.b16 %v735, %v734
      %v766 = vpack.c.b16 %v737, %v736
      %v767 = vpack.c.b16 %v739, %v738
      %v768 = vpack.c.b16 %v741, %v740
      %v769 = vpack.c.b16 %v743, %v742
      %v770 = vpack.c.b16 %v745, %v744
      %v771 = vpack.c.b16 %v747, %v746
      %v772 = vpack.c.b16 %v749, %v748
      %v773 = vpack.c.b16 %v751, %v750
      %v774 = vpack.c.b16 %v753, %v752
      %v775 = vpack.c.b16 %v755, %v754
      %v776 = vpack.c.b16 %v757, %v756
      %v777 = vpack.c.b16 %v759, %v758
      %v778 = vpack.c.b16 %v761, %v760
      %v779 = vpack.c.b16 %v763, %v762
      %v812 = vunpack.c.l.b16 %v716
      %v813 = vunpack.c.l.b16 %v717
      %v814 = vunpack.c.l.b16 %v718
      %v815 = vunpack.c.l.b16 %v719
      %v816 = vunpack.c.l.b16 %v720
      %v817 = vunpack.c.l.b16 %v721
      %v818 = vunpack.c.l.b16 %v722
      %v819 = vunpack.c.l.b16 %v723
      %v820 = vunpack.c.l.b16 %v724
      %v821 = vunpack.c.l.b16 %v725
      %v822 = vunpack.c.l.b16 %v726
      %v823 = vunpack.c.l.b16 %v727
      %v824 = vunpack.c.l.b16 %v728
      %v825 = vunpack.c.l.b16 %v729
      %v826 = vunpack.c.l.b16 %v730
      %v827 = vunpack.c.l.b16 %v731
      %v828 = vpack.c.b16 %v813, %v812
      %v829 = vpack.c.b16 %v815, %v814
      %v830 = vpack.c.b16 %v817, %v816
      %v831 = vpack.c.b16 %v819, %v818
      %v832 = vpack.c.b16 %v821, %v820
      %v833 = vpack.c.b16 %v823, %v822
      %v834 = vpack.c.b16 %v825, %v824
      %v835 = vpack.c.b16 %v827, %v826
      %844 = vmatpush.bf16.msra.mxu0 %v835
      %845 = vmatpush.bf16.msra.mxu0 %v834
      %846 = vmatpush.bf16.msra.mxu0 %v833
      %847 = vmatpush.bf16.msra.mxu0 %v832
      %848 = vmatpush.bf16.msra.mxu0 %v831
      %849 = vmatpush.bf16.msra.mxu0 %v830
      %850 = vmatpush.bf16.msra.mxu0 %v829
      %851 = vmatpush.bf16.msra.mxu0 %v828
      %852 = vmatmul.bf16.gmra.mxu0 %v764
      %v853 = vpop.f32.mrf.mxu0
      %v854 = vadd.f32 0.0, %v853
      %v855 = vpop.f32.mrf.mxu0
      %v856 = vadd.f32 0.0, %v855
      %857 = vmatmul.bf16.gmra.mxu0 %v765
      %v858 = vpop.f32.mrf.mxu0
      %v859 = vadd.f32 0.0, %v858
      %v860 = vpop.f32.mrf.mxu0
      %v861 = vadd.f32 0.0, %v860
      %862 = vmatmul.bf16.gmra.mxu0 %v766
      %v863 = vpop.f32.mrf.mxu0
      %v864 = vadd.f32 0.0, %v863
      %v865 = vpop.f32.mrf.mxu0
      %v866 = vadd.f32 0.0, %v865
      %867 = vmatmul.bf16.gmra.mxu0 %v767
      %v868 = vpop.f32.mrf.mxu0
      %v869 = vadd.f32 0.0, %v868
      %v870 = vpop.f32.mrf.mxu0
      %v871 = vadd.f32 0.0, %v870
      %872 = vmatmul.bf16.gmra.mxu0 %v768
      %v873 = vpop.f32.mrf.mxu0
      %v874 = vadd.f32 0.0, %v873
      %v875 = vpop.f32.mrf.mxu0
      %v876 = vadd.f32 0.0, %v875
      %877 = vmatmul.bf16.gmra.mxu0 %v769
      %v878 = vpop.f32.mrf.mxu0
      %v879 = vadd.f32 0.0, %v878
      %v880 = vpop.f32.mrf.mxu0
      %v881 = vadd.f32 0.0, %v880
      %882 = vmatmul.bf16.gmra.mxu0 %v770
      %v883 = vpop.f32.mrf.mxu0
      %v884 = vadd.f32 0.0, %v883
      %v885 = vpop.f32.mrf.mxu0
      %v886 = vadd.f32 0.0, %v885
      %887 = vmatmul.bf16.gmra.mxu0 %v771
      %v888 = vpop.f32.mrf.mxu0
      %v889 = vadd.f32 0.0, %v888
      %v890 = vpop.f32.mrf.mxu0
      %v891 = vadd.f32 0.0, %v890
      %892 = vmatmul.bf16.gmra.mxu0 %v772
      %v893 = vpop.f32.mrf.mxu0
      %v894 = vadd.f32 0.0, %v893
      %v895 = vpop.f32.mrf.mxu0
      %v896 = vadd.f32 0.0, %v895
      %897 = vmatmul.bf16.gmra.mxu0 %v773
      %v898 = vpop.f32.mrf.mxu0
      %v899 = vadd.f32 0.0, %v898
      %v900 = vpop.f32.mrf.mxu0
      %v901 = vadd.f32 0.0, %v900
      %902 = vmatmul.bf16.gmra.mxu0 %v774
      %v903 = vpop.f32.mrf.mxu0
      %v904 = vadd.f32 0.0, %v903
      %v905 = vpop.f32.mrf.mxu0
      %v906 = vadd.f32 0.0, %v905
      %907 = vmatmul.bf16.gmra.mxu0 %v775
      %v908 = vpop.f32.mrf.mxu0
      %v909 = vadd.f32 0.0, %v908
      %v910 = vpop.f32.mrf.mxu0
      %v911 = vadd.f32 0.0, %v910
      %912 = vmatmul.bf16.gmra.mxu0 %v776
      %v913 = vpop.f32.mrf.mxu0
      %v914 = vadd.f32 0.0, %v913
      %v915 = vpop.f32.mrf.mxu0
      %v916 = vadd.f32 0.0, %v915
      %917 = vmatmul.bf16.gmra.mxu0 %v777
      %v918 = vpop.f32.mrf.mxu0
      %v919 = vadd.f32 0.0, %v918
      %v920 = vpop.f32.mrf.mxu0
      %v921 = vadd.f32 0.0, %v920
      %922 = vmatmul.bf16.gmra.mxu0 %v778
      %v923 = vpop.f32.mrf.mxu0
      %v924 = vadd.f32 0.0, %v923
      %v925 = vpop.f32.mrf.mxu0
      %v926 = vadd.f32 0.0, %v925
      %927 = vmatmul.bf16.gmra.mxu0 %v779
      %v928 = vpop.f32.mrf.mxu0
      %v929 = vadd.f32 0.0, %v928
      %v930 = vpop.f32.mrf.mxu0
      %v931 = vadd.f32 0.0, %v930
      %932 = vdwg.mxu0
      %v965 = vunpack.c.l.b16 %v264
      %v966 = vunpack.c.l.b16 %v265
      %v967 = vunpack.c.l.b16 %v266
      %v968 = vunpack.c.l.b16 %v267
      %v969 = vunpack.c.l.b16 %v268
      %v970 = vunpack.c.l.b16 %v269
      %v971 = vunpack.c.l.b16 %v270
      %v972 = vunpack.c.l.b16 %v271
      %v973 = vunpack.c.l.b16 %v272
      %v974 = vunpack.c.l.b16 %v273
      %v975 = vunpack.c.l.b16 %v274
      %v976 = vunpack.c.l.b16 %v275
      %v977 = vunpack.c.l.b16 %v276
      %v978 = vunpack.c.l.b16 %v277
      %v979 = vunpack.c.l.b16 %v278
      %v980 = vunpack.c.l.b16 %v279
      %v981 = vunpack.c.l.b16 %v280
      %v982 = vunpack.c.l.b16 %v281
      %v983 = vunpack.c.l.b16 %v282
      %v984 = vunpack.c.l.b16 %v283
      %v985 = vunpack.c.l.b16 %v284
      %v986 = vunpack.c.l.b16 %v285
      %v987 = vunpack.c.l.b16 %v286
      %v988 = vunpack.c.l.b16 %v287
      %v989 = vunpack.c.l.b16 %v288
      %v990 = vunpack.c.l.b16 %v289
      %v991 = vunpack.c.l.b16 %v290
      %v992 = vunpack.c.l.b16 %v291
      %v993 = vunpack.c.l.b16 %v292
      %v994 = vunpack.c.l.b16 %v293
      %v995 = vunpack.c.l.b16 %v294
      %v996 = vunpack.c.l.b16 %v295
      %v997 = vpack.c.b16 %v966, %v965
      %v998 = vpack.c.b16 %v968, %v967
      %v999 = vpack.c.b16 %v970, %v969
      %v1000 = vpack.c.b16 %v972, %v971
      %v1001 = vpack.c.b16 %v974, %v973
      %v1002 = vpack.c.b16 %v976, %v975
      %v1003 = vpack.c.b16 %v978, %v977
      %v1004 = vpack.c.b16 %v980, %v979
      %v1005 = vpack.c.b16 %v982, %v981
      %v1006 = vpack.c.b16 %v984, %v983
      %v1007 = vpack.c.b16 %v986, %v985
      %v1008 = vpack.c.b16 %v988, %v987
      %v1009 = vpack.c.b16 %v990, %v989
      %v1010 = vpack.c.b16 %v992, %v991
      %v1011 = vpack.c.b16 %v994, %v993
      %v1012 = vpack.c.b16 %v996, %v995
      %v1045 = vunpack.c.l.b16 %v296
      %v1046 = vunpack.c.l.b16 %v297
      %v1047 = vunpack.c.l.b16 %v298
      %v1048 = vunpack.c.l.b16 %v299
      %v1049 = vunpack.c.l.b16 %v300
      %v1050 = vunpack.c.l.b16 %v301
      %v1051 = vunpack.c.l.b16 %v302
      %v1052 = vunpack.c.l.b16 %v303
      %v1053 = vunpack.c.l.b16 %v304
      %v1054 = vunpack.c.l.b16 %v305
      %v1055 = vunpack.c.l.b16 %v306
      %v1056 = vunpack.c.l.b16 %v307
      %v1057 = vunpack.c.l.b16 %v308
      %v1058 = vunpack.c.l.b16 %v309
      %v1059 = vunpack.c.l.b16 %v310
      %v1060 = vunpack.c.l.b16 %v311
      %v1061 = vpack.c.b16 %v1046, %v1045
      %v1062 = vpack.c.b16 %v1048, %v1047
      %v1063 = vpack.c.b16 %v1050, %v1049
      %v1064 = vpack.c.b16 %v1052, %v1051
      %v1065 = vpack.c.b16 %v1054, %v1053
      %v1066 = vpack.c.b16 %v1056, %v1055
      %v1067 = vpack.c.b16 %v1058, %v1057
      %v1068 = vpack.c.b16 %v1060, %v1059
      %1077 = vmatpush.bf16.msra.mxu0 %v1068
      %1078 = vmatpush.bf16.msra.mxu0 %v1067
      %1079 = vmatpush.bf16.msra.mxu0 %v1066
      %1080 = vmatpush.bf16.msra.mxu0 %v1065
      %1081 = vmatpush.bf16.msra.mxu0 %v1064
      %1082 = vmatpush.bf16.msra.mxu0 %v1063
      %1083 = vmatpush.bf16.msra.mxu0 %v1062
      %1084 = vmatpush.bf16.msra.mxu0 %v1061
      %1085 = vmatmul.bf16.gmra.mxu0 %v997
      %v1086 = vpop.f32.mrf.mxu0
      %v1087 = vadd.f32 %v854, %v1086
      %v1088 = vpop.f32.mrf.mxu0
      %v1089 = vadd.f32 %v856, %v1088
      %1090 = vmatmul.bf16.gmra.mxu0 %v998
      %v1091 = vpop.f32.mrf.mxu0
      %v1092 = vadd.f32 %v859, %v1091
      %v1093 = vpop.f32.mrf.mxu0
      %v1094 = vadd.f32 %v861, %v1093
      %1095 = vmatmul.bf16.gmra.mxu0 %v999
      %v1096 = vpop.f32.mrf.mxu0
      %v1097 = vadd.f32 %v864, %v1096
      %v1098 = vpop.f32.mrf.mxu0
      %v1099 = vadd.f32 %v866, %v1098
      %1100 = vmatmul.bf16.gmra.mxu0 %v1000
      %v1101 = vpop.f32.mrf.mxu0
      %v1102 = vadd.f32 %v869, %v1101
      %v1103 = vpop.f32.mrf.mxu0
      %v1104 = vadd.f32 %v871, %v1103
      %1105 = vmatmul.bf16.gmra.mxu0 %v1001
      %v1106 = vpop.f32.mrf.mxu0
      %v1107 = vadd.f32 %v874, %v1106
      %v1108 = vpop.f32.mrf.mxu0
      %v1109 = vadd.f32 %v876, %v1108
      %1110 = vmatmul.bf16.gmra.mxu0 %v1002
      %v1111 = vpop.f32.mrf.mxu0
      %v1112 = vadd.f32 %v879, %v1111
      %v1113 = vpop.f32.mrf.mxu0
      %v1114 = vadd.f32 %v881, %v1113
      %1115 = vmatmul.bf16.gmra.mxu0 %v1003
      %v1116 = vpop.f32.mrf.mxu0
      %v1117 = vadd.f32 %v884, %v1116
      %v1118 = vpop.f32.mrf.mxu0
      %v1119 = vadd.f32 %v886, %v1118
      %1120 = vmatmul.bf16.gmra.mxu0 %v1004
      %v1121 = vpop.f32.mrf.mxu0
      %v1122 = vadd.f32 %v889, %v1121
      %v1123 = vpop.f32.mrf.mxu0
      %v1124 = vadd.f32 %v891, %v1123
      %1125 = vmatmul.bf16.gmra.mxu0 %v1005
      %v1126 = vpop.f32.mrf.mxu0
      %v1127 = vadd.f32 %v894, %v1126
      %v1128 = vpop.f32.mrf.mxu0
      %v1129 = vadd.f32 %v896, %v1128
      %1130 = vmatmul.bf16.gmra.mxu0 %v1006
      %v1131 = vpop.f32.mrf.mxu0
      %v1132 = vadd.f32 %v899, %v1131
      %v1133 = vpop.f32.mrf.mxu0
      %v1134 = vadd.f32 %v901, %v1133
      %1135 = vmatmul.bf16.gmra.mxu0 %v1007
      %v1136 = vpop.f32.mrf.mxu0
      %v1137 = vadd.f32 %v904, %v1136
      %v1138 = vpop.f32.mrf.mxu0
      %v1139 = vadd.f32 %v906, %v1138
      %1140 = vmatmul.bf16.gmra.mxu0 %v1008
      %v1141 = vpop.f32.mrf.mxu0
      %v1142 = vadd.f32 %v909, %v1141
      %v1143 = vpop.f32.mrf.mxu0
      %v1144 = vadd.f32 %v911, %v1143
      %1145 = vmatmul.bf16.gmra.mxu0 %v1009
      %v1146 = vpop.f32.mrf.mxu0
      %v1147 = vadd.f32 %v914, %v1146
      %v1148 = vpop.f32.mrf.mxu0
      %v1149 = vadd.f32 %v916, %v1148
      %1150 = vmatmul.bf16.gmra.mxu0 %v1010
      %v1151 = vpop.f32.mrf.mxu0
      %v1152 = vadd.f32 %v919, %v1151
      %v1153 = vpop.f32.mrf.mxu0
      %v1154 = vadd.f32 %v921, %v1153
      %1155 = vmatmul.bf16.gmra.mxu0 %v1011
      %v1156 = vpop.f32.mrf.mxu0
      %v1157 = vadd.f32 %v924, %v1156
      %v1158 = vpop.f32.mrf.mxu0
      %v1159 = vadd.f32 %v926, %v1158
      %1160 = vmatmul.bf16.gmra.mxu0 %v1012
      %v1161 = vpop.f32.mrf.mxu0
      %v1162 = vadd.f32 %v929, %v1161
      %v1163 = vpop.f32.mrf.mxu0
      %v1164 = vadd.f32 %v931, %v1163
      %1165 = vdwg.mxu0
      %v1166 = vld [vmem:[%s244] sm:$0xe]
      %v1167 = vld [vmem:[%s244 + $0xc] sm:$0xe]
      %v1168 = vld [vmem:[%s244 + $0x18] sm:$0xe]
      %v1169 = vld [vmem:[%s244 + $0x24] sm:$0xe]
      %v1170 = vld [vmem:[%s244 + $0x30] sm:$0xe]
      %v1171 = vld [vmem:[%s244 + $0x3c] sm:$0xe]
      %v1172 = vld [vmem:[%s244 + $0x48] sm:$0xe]
      %v1173 = vld [vmem:[%s244 + $0x54] sm:$0xe]
      %v1174 = vld [vmem:[%s244 + $0x60] sm:$0xe]
      %v1175 = vld [vmem:[%s244 + $0x6c] sm:$0xe]
      %v1176 = vld [vmem:[%s244 + $0x78] sm:$0xe]
      %v1177 = vld [vmem:[%s244 + $0x84] sm:$0xe]
      %v1178 = vld [vmem:[%s244 + $0x90] sm:$0xe]
      %v1179 = vld [vmem:[%s244 + $0x9c] sm:$0xe]
      %v1180 = vld [vmem:[%s244 + $0xa8] sm:$0xe]
      %v1181 = vld [vmem:[%s244 + $0xb4] sm:$0xe]
      %vm1214 = vcmask 1042432
      %vm1215 = vcmask 1046532
      %vm1216 = vmor %vm1214, %vm1215
      %v1217 = vrot.slane %v1166, 5
      %v1218 = vrot.slane %v1217, 4
      %v1219 = vrot.slane %v265, 5
      %v1220 = vsel %vm1216, %v1218, %v1219
      %v1221 = vrot.slane %v1219, 4
      %v1222 = vrot.slane %v312, 5
      %v1223 = vsel %vm1216, %v1221, %v1222
      %v1224 = vrot.slane %v1167, 5
      %v1225 = vrot.slane %v1224, 4
      %v1226 = vrot.slane %v267, 5
      %v1227 = vsel %vm1216, %v1225, %v1226
      %v1228 = vrot.slane %v1226, 4
      %v1229 = vrot.slane %v313, 5
      %v1230 = vsel %vm1216, %v1228, %v1229
      %v1231 = vrot.slane %v1168, 5
      %v1232 = vrot.slane %v1231, 4
      %v1233 = vrot.slane %v269, 5
      %v1234 = vsel %vm1216, %v1232, %v1233
      %v1235 = vrot.slane %v1233, 4
      %v1236 = vrot.slane %v314, 5
      %v1237 = vsel %vm1216, %v1235, %v1236
      %v1238 = vrot.slane %v1169, 5
      %v1239 = vrot.slane %v1238, 4
      %v1240 = vrot.slane %v271, 5
      %v1241 = vsel %vm1216, %v1239, %v1240
      %v1242 = vrot.slane %v1240, 4
      %v1243 = vrot.slane %v315, 5
      %v1244 = vsel %vm1216, %v1242, %v1243
      %v1245 = vrot.slane %v1170, 5
      %v1246 = vrot.slane %v1245, 4
      %v1247 = vrot.slane %v273, 5
      %v1248 = vsel %vm1216, %v1246, %v1247
      %v1249 = vrot.slane %v1247, 4
      %v1250 = vrot.slane %v316, 5
      %v1251 = vsel %vm1216, %v1249, %v1250
      %v1252 = vrot.slane %v1171, 5
      %v1253 = vrot.slane %v1252, 4
      %v1254 = vrot.slane %v275, 5
      %v1255 = vsel %vm1216, %v1253, %v1254
      %v1256 = vrot.slane %v1254, 4
      %v1257 = vrot.slane %v317, 5
      %v1258 = vsel %vm1216, %v1256, %v1257
      %v1259 = vrot.slane %v1172, 5
      %v1260 = vrot.slane %v1259, 4
      %v1261 = vrot.slane %v277, 5
      %v1262 = vsel %vm1216, %v1260, %v1261
      %v1263 = vrot.slane %v1261, 4
      %v1264 = vrot.slane %v318, 5
      %v1265 = vsel %vm1216, %v1263, %v1264
      %v1266 = vrot.slane %v1173, 5
      %v1267 = vrot.slane %v1266, 4
      %v1268 = vrot.slane %v279, 5
      %v1269 = vsel %vm1216, %v1267, %v1268
      %v1270 = vrot.slane %v1268, 4
      %v1271 = vrot.slane %v319, 5
      %v1272 = vsel %vm1216, %v1270, %v1271
      %v1273 = vrot.slane %v1174, 5
      %v1274 = vrot.slane %v1273, 4
      %v1275 = vrot.slane %v281, 5
      %v1276 = vsel %vm1216, %v1274, %v1275
      %v1277 = vrot.slane %v1275, 4
      %v1278 = vrot.slane %v320, 5
      %v1279 = vsel %vm1216, %v1277, %v1278
      %v1280 = vrot.slane %v1175, 5
      %v1281 = vrot.slane %v1280, 4
      %v1282 = vrot.slane %v283, 5
      %v1283 = vsel %vm1216, %v1281, %v1282
      %v1284 = vrot.slane %v1282, 4
      %v1285 = vrot.slane %v321, 5
      %v1286 = vsel %vm1216, %v1284, %v1285
      %v1287 = vrot.slane %v1176, 5
      %v1288 = vrot.slane %v1287, 4
      %v1289 = vrot.slane %v285, 5
      %v1290 = vsel %vm1216, %v1288, %v1289
      %v1291 = vrot.slane %v1289, 4
      %v1292 = vrot.slane %v322, 5
      %v1293 = vsel %vm1216, %v1291, %v1292
      %v1294 = vrot.slane %v1177, 5
      %v1295 = vrot.slane %v1294, 4
      %v1296 = vrot.slane %v287, 5
      %v1297 = vsel %vm1216, %v1295, %v1296
      %v1298 = vrot.slane %v1296, 4
      %v1299 = vrot.slane %v323, 5
      %v1300 = vsel %vm1216, %v1298, %v1299
      %v1301 = vrot.slane %v1178, 5
      %v1302 = vrot.slane %v1301, 4
      %v1303 = vrot.slane %v289, 5
      %v1304 = vsel %vm1216, %v1302, %v1303
      %v1305 = vrot.slane %v1303, 4
      %v1306 = vrot.slane %v324, 5
      %v1307 = vsel %vm1216, %v1305, %v1306
      %v1308 = vrot.slane %v1179, 5
      %v1309 = vrot.slane %v1308, 4
      %v1310 = vrot.slane %v291, 5
      %v1311 = vsel %vm1216, %v1309, %v1310
      %v1312 = vrot.slane %v1310, 4
      %v1313 = vrot.slane %v325, 5
      %v1314 = vsel %vm1216, %v1312, %v1313
      %v1315 = vrot.slane %v1180, 5
      %v1316 = vrot.slane %v1315, 4
      %v1317 = vrot.slane %v293, 5
      %v1318 = vsel %vm1216, %v1316, %v1317
      %v1319 = vrot.slane %v1317, 4
      %v1320 = vrot.slane %v326, 5
      %v1321 = vsel %vm1216, %v1319, %v1320
      %v1322 = vrot.slane %v1181, 5
      %v1323 = vrot.slane %v1322, 4
      %v1324 = vrot.slane %v295, 5
      %v1325 = vsel %vm1216, %v1323, %v1324
      %v1326 = vrot.slane %v1324, 4
      %v1327 = vrot.slane %v327, 5
      %v1328 = vsel %vm1216, %v1326, %v1327
      %s1329 = scalar_lea.vmem %s248, 128
      %v1330 = vld [vmem:[%s1329] sm:$0xf]
      %v1331 = vld [vmem:[%s1329 + $0x4] sm:$0xf]
      %v1332 = vld [vmem:[%s1329 + $0x8] sm:$0xf]
      %v1333 = vld [vmem:[%s1329 + $0xc] sm:$0xf]
      %v1334 = vld [vmem:[%s1329 + $0x10] sm:$0xf]
      %v1335 = vld [vmem:[%s1329 + $0x14] sm:$0xf]
      %v1336 = vld [vmem:[%s1329 + $0x18] sm:$0xf]
      %v1337 = vld [vmem:[%s1329 + $0x1c] sm:$0xf]
      %v1338 = vld [vmem:[%s1329 + $0x20] sm:$0xf]
      %v1339 = vld [vmem:[%s1329 + $0x24] sm:$0xf]
      %v1340 = vld [vmem:[%s1329 + $0x28] sm:$0xf]
      %v1341 = vld [vmem:[%s1329 + $0x2c] sm:$0xf]
      %v1342 = vld [vmem:[%s1329 + $0x30] sm:$0xf]
      %v1343 = vld [vmem:[%s1329 + $0x34] sm:$0xf]
      %v1344 = vld [vmem:[%s1329 + $0x38] sm:$0xf]
      %v1345 = vld [vmem:[%s1329 + $0x3c] sm:$0xf]
      %v1346 = vunpack.c.l.b16 %v1220
      %v1347 = vunpack.c.l.b16 %v1223
      %v1348 = vunpack.c.l.b16 %v1227
      %v1349 = vunpack.c.l.b16 %v1230
      %v1350 = vunpack.c.l.b16 %v1234
      %v1351 = vunpack.c.l.b16 %v1237
      %v1352 = vunpack.c.l.b16 %v1241
      %v1353 = vunpack.c.l.b16 %v1244
      %v1354 = vunpack.c.l.b16 %v1248
      %v1355 = vunpack.c.l.b16 %v1251
      %v1356 = vunpack.c.l.b16 %v1255
      %v1357 = vunpack.c.l.b16 %v1258
      %v1358 = vunpack.c.l.b16 %v1262
      %v1359 = vunpack.c.l.b16 %v1265
      %v1360 = vunpack.c.l.b16 %v1269
      %v1361 = vunpack.c.l.b16 %v1272
      %v1362 = vunpack.c.l.b16 %v1276
      %v1363 = vunpack.c.l.b16 %v1279
      %v1364 = vunpack.c.l.b16 %v1283
      %v1365 = vunpack.c.l.b16 %v1286
      %v1366 = vunpack.c.l.b16 %v1290
      %v1367 = vunpack.c.l.b16 %v1293
      %v1368 = vunpack.c.l.b16 %v1297
      %v1369 = vunpack.c.l.b16 %v1300
      %v1370 = vunpack.c.l.b16 %v1304
      %v1371 = vunpack.c.l.b16 %v1307
      %v1372 = vunpack.c.l.b16 %v1311
      %v1373 = vunpack.c.l.b16 %v1314
      %v1374 = vunpack.c.l.b16 %v1318
      %v1375 = vunpack.c.l.b16 %v1321
      %v1376 = vunpack.c.l.b16 %v1325
      %v1377 = vunpack.c.l.b16 %v1328
      %v1378 = vpack.c.b16 %v1347, %v1346
      %v1379 = vpack.c.b16 %v1349, %v1348
      %v1380 = vpack.c.b16 %v1351, %v1350
      %v1381 = vpack.c.b16 %v1353, %v1352
      %v1382 = vpack.c.b16 %v1355, %v1354
      %v1383 = vpack.c.b16 %v1357, %v1356
      %v1384 = vpack.c.b16 %v1359, %v1358
      %v1385 = vpack.c.b16 %v1361, %v1360
      %v1386 = vpack.c.b16 %v1363, %v1362
      %v1387 = vpack.c.b16 %v1365, %v1364
      %v1388 = vpack.c.b16 %v1367, %v1366
      %v1389 = vpack.c.b16 %v1369, %v1368
      %v1390 = vpack.c.b16 %v1371, %v1370
      %v1391 = vpack.c.b16 %v1373, %v1372
      %v1392 = vpack.c.b16 %v1375, %v1374
      %v1393 = vpack.c.b16 %v1377, %v1376
      %v1426 = vunpack.c.l.b16 %v1330
      %v1427 = vunpack.c.l.b16 %v1331
      %v1428 = vunpack.c.l.b16 %v1332
      %v1429 = vunpack.c.l.b16 %v1333
      %v1430 = vunpack.c.l.b16 %v1334
      %v1431 = vunpack.c.l.b16 %v1335
      %v1432 = vunpack.c.l.b16 %v1336
      %v1433 = vunpack.c.l.b16 %v1337
      %v1434 = vunpack.c.l.b16 %v1338
      %v1435 = vunpack.c.l.b16 %v1339
      %v1436 = vunpack.c.l.b16 %v1340
      %v1437 = vunpack.c.l.b16 %v1341
      %v1438 = vunpack.c.l.b16 %v1342
      %v1439 = vunpack.c.l.b16 %v1343
      %v1440 = vunpack.c.l.b16 %v1344
      %v1441 = vunpack.c.l.b16 %v1345
      %v1442 = vpack.c.b16 %v1427, %v1426
      %v1443 = vpack.c.b16 %v1429, %v1428
      %v1444 = vpack.c.b16 %v1431, %v1430
      %v1445 = vpack.c.b16 %v1433, %v1432
      %v1446 = vpack.c.b16 %v1435, %v1434
      %v1447 = vpack.c.b16 %v1437, %v1436
      %v1448 = vpack.c.b16 %v1439, %v1438
      %v1449 = vpack.c.b16 %v1441, %v1440
      %1458 = vmatpush.bf16.msra.mxu0 %v1449
      %1459 = vmatpush.bf16.msra.mxu0 %v1448
      %1460 = vmatpush.bf16.msra.mxu0 %v1447
      %1461 = vmatpush.bf16.msra.mxu0 %v1446
      %1462 = vmatpush.bf16.msra.mxu0 %v1445
      %1463 = vmatpush.bf16.msra.mxu0 %v1444
      %1464 = vmatpush.bf16.msra.mxu0 %v1443
      %1465 = vmatpush.bf16.msra.mxu0 %v1442
      %1466 = vmatmul.bf16.gmra.mxu0 %v1378
      %v1467 = vpop.f32.mrf.mxu0
      %v1468 = vadd.f32 0.0, %v1467
      %v1469 = vpop.f32.mrf.mxu0
      %v1470 = vadd.f32 0.0, %v1469
      %1471 = vmatmul.bf16.gmra.mxu0 %v1379
      %v1472 = vpop.f32.mrf.mxu0
      %v1473 = vadd.f32 0.0, %v1472
      %v1474 = vpop.f32.mrf.mxu0
      %v1475 = vadd.f32 0.0, %v1474
      %1476 = vmatmul.bf16.gmra.mxu0 %v1380
      %v1477 = vpop.f32.mrf.mxu0
      %v1478 = vadd.f32 0.0, %v1477
      %v1479 = vpop.f32.mrf.mxu0
      %v1480 = vadd.f32 0.0, %v1479
      %1481 = vmatmul.bf16.gmra.mxu0 %v1381
      %v1482 = vpop.f32.mrf.mxu0
      %v1483 = vadd.f32 0.0, %v1482
      %v1484 = vpop.f32.mrf.mxu0
      %v1485 = vadd.f32 0.0, %v1484
      %1486 = vmatmul.bf16.gmra.mxu0 %v1382
      %v1487 = vpop.f32.mrf.mxu0
      %v1488 = vadd.f32 0.0, %v1487
      %v1489 = vpop.f32.mrf.mxu0
      %v1490 = vadd.f32 0.0, %v1489
      %1491 = vmatmul.bf16.gmra.mxu0 %v1383
      %v1492 = vpop.f32.mrf.mxu0
      %v1493 = vadd.f32 0.0, %v1492
      %v1494 = vpop.f32.mrf.mxu0
      %v1495 = vadd.f32 0.0, %v1494
      %1496 = vmatmul.bf16.gmra.mxu0 %v1384
      %v1497 = vpop.f32.mrf.mxu0
      %v1498 = vadd.f32 0.0, %v1497
      %v1499 = vpop.f32.mrf.mxu0
      %v1500 = vadd.f32 0.0, %v1499
      %1501 = vmatmul.bf16.gmra.mxu0 %v1385
      %v1502 = vpop.f32.mrf.mxu0
      %v1503 = vadd.f32 0.0, %v1502
      %v1504 = vpop.f32.mrf.mxu0
      %v1505 = vadd.f32 0.0, %v1504
      %1506 = vmatmul.bf16.gmra.mxu0 %v1386
      %v1507 = vpop.f32.mrf.mxu0
      %v1508 = vadd.f32 0.0, %v1507
      %v1509 = vpop.f32.mrf.mxu0
      %v1510 = vadd.f32 0.0, %v1509
      %1511 = vmatmul.bf16.gmra.mxu0 %v1387
      %v1512 = vpop.f32.mrf.mxu0
      %v1513 = vadd.f32 0.0, %v1512
      %v1514 = vpop.f32.mrf.mxu0
      %v1515 = vadd.f32 0.0, %v1514
      %1516 = vmatmul.bf16.gmra.mxu0 %v1388
      %v1517 = vpop.f32.mrf.mxu0
      %v1518 = vadd.f32 0.0, %v1517
      %v1519 = vpop.f32.mrf.mxu0
      %v1520 = vadd.f32 0.0, %v1519
      %1521 = vmatmul.bf16.gmra.mxu0 %v1389
      %v1522 = vpop.f32.mrf.mxu0
      %v1523 = vadd.f32 0.0, %v1522
      %v1524 = vpop.f32.mrf.mxu0
      %v1525 = vadd.f32 0.0, %v1524
      %1526 = vmatmul.bf16.gmra.mxu0 %v1390
      %v1527 = vpop.f32.mrf.mxu0
      %v1528 = vadd.f32 0.0, %v1527
      %v1529 = vpop.f32.mrf.mxu0
      %v1530 = vadd.f32 0.0, %v1529
      %1531 = vmatmul.bf16.gmra.mxu0 %v1391
      %v1532 = vpop.f32.mrf.mxu0
      %v1533 = vadd.f32 0.0, %v1532
      %v1534 = vpop.f32.mrf.mxu0
      %v1535 = vadd.f32 0.0, %v1534
      %1536 = vmatmul.bf16.gmra.mxu0 %v1392
      %v1537 = vpop.f32.mrf.mxu0
      %v1538 = vadd.f32 0.0, %v1537
      %v1539 = vpop.f32.mrf.mxu0
      %v1540 = vadd.f32 0.0, %v1539
      %1541 = vmatmul.bf16.gmra.mxu0 %v1393
      %v1542 = vpop.f32.mrf.mxu0
      %v1543 = vadd.f32 0.0, %v1542
      %v1544 = vpop.f32.mrf.mxu0
      %v1545 = vadd.f32 0.0, %v1544
      %1546 = vdwg.mxu0
      %v1547 = vadd.f32 %v1087, %v1468
      %v1548 = vadd.f32 %v1089, %v1470
      %v1549 = vadd.f32 %v1092, %v1473
      %v1550 = vadd.f32 %v1094, %v1475
      %v1551 = vadd.f32 %v1097, %v1478
      %v1552 = vadd.f32 %v1099, %v1480
      %v1553 = vadd.f32 %v1102, %v1483
      %v1554 = vadd.f32 %v1104, %v1485
      %v1555 = vadd.f32 %v1107, %v1488
      %v1556 = vadd.f32 %v1109, %v1490
      %v1557 = vadd.f32 %v1112, %v1493
      %v1558 = vadd.f32 %v1114, %v1495
      %v1559 = vadd.f32 %v1117, %v1498
      %v1560 = vadd.f32 %v1119, %v1500
      %v1561 = vadd.f32 %v1122, %v1503
      %v1562 = vadd.f32 %v1124, %v1505
      %v1563 = vadd.f32 %v1127, %v1508
      %v1564 = vadd.f32 %v1129, %v1510
      %v1565 = vadd.f32 %v1132, %v1513
      %v1566 = vadd.f32 %v1134, %v1515
      %v1567 = vadd.f32 %v1137, %v1518
      %v1568 = vadd.f32 %v1139, %v1520
      %v1569 = vadd.f32 %v1142, %v1523
      %v1570 = vadd.f32 %v1144, %v1525
      %v1571 = vadd.f32 %v1147, %v1528
      %v1572 = vadd.f32 %v1149, %v1530
      %v1573 = vadd.f32 %v1152, %v1533
      %v1574 = vadd.f32 %v1154, %v1535
      %v1575 = vadd.f32 %v1157, %v1538
      %v1576 = vadd.f32 %v1159, %v1540
      %v1577 = vadd.f32 %v1162, %v1543
      %v1578 = vadd.f32 %v1164, %v1545
      %s1579 = scalar_lea.vmem %s244, 12
      %v1580 = vld [vmem:[%s1579] sm:$0xf]
      %v1581 = vld [vmem:[%s1579 + $0x4] sm:$0xf]
      %v1582 = vld [vmem:[%s1579 + $0xc] sm:$0xf]
      %v1583 = vld [vmem:[%s1579 + $0x10] sm:$0xf]
      %v1584 = vld [vmem:[%s1579 + $0x18] sm:$0xf]
      %v1585 = vld [vmem:[%s1579 + $0x1c] sm:$0xf]
      %v1586 = vld [vmem:[%s1579 + $0x24] sm:$0xf]
      %v1587 = vld [vmem:[%s1579 + $0x28] sm:$0xf]
      %v1588 = vld [vmem:[%s1579 + $0x30] sm:$0xf]
      %v1589 = vld [vmem:[%s1579 + $0x34] sm:$0xf]
      %v1590 = vld [vmem:[%s1579 + $0x3c] sm:$0xf]
      %v1591 = vld [vmem:[%s1579 + $0x40] sm:$0xf]
      %v1592 = vld [vmem:[%s1579 + $0x48] sm:$0xf]
      %v1593 = vld [vmem:[%s1579 + $0x4c] sm:$0xf]
      %v1594 = vld [vmem:[%s1579 + $0x54] sm:$0xf]
      %v1595 = vld [vmem:[%s1579 + $0x58] sm:$0xf]
      %v1596 = vld [vmem:[%s1579 + $0x60] sm:$0xf]
      %v1597 = vld [vmem:[%s1579 + $0x64] sm:$0xf]
      %v1598 = vld [vmem:[%s1579 + $0x6c] sm:$0xf]
      %v1599 = vld [vmem:[%s1579 + $0x70] sm:$0xf]
      %v1600 = vld [vmem:[%s1579 + $0x78] sm:$0xf]
      %v1601 = vld [vmem:[%s1579 + $0x7c] sm:$0xf]
      %v1602 = vld [vmem:[%s1579 + $0x84] sm:$0xf]
      %v1603 = vld [vmem:[%s1579 + $0x88] sm:$0xf]
      %v1604 = vld [vmem:[%s1579 + $0x90] sm:$0xf]
      %v1605 = vld [vmem:[%s1579 + $0x94] sm:$0xf]
      %v1606 = vld [vmem:[%s1579 + $0x9c] sm:$0xf]
      %v1607 = vld [vmem:[%s1579 + $0xa0] sm:$0xf]
      %v1608 = vld [vmem:[%s1579 + $0xa8] sm:$0xf]
      %v1609 = vld [vmem:[%s1579 + $0xac] sm:$0xf]
      %v1610 = vld [vmem:[%s1579 + $0xb4] sm:$0xf]
      %v1611 = vld [vmem:[%s1579 + $0xb8] sm:$0xf]
      %s1612 = scalar_lea.vmem %s248, 192
      %v1613 = vld [vmem:[%s1612] sm:$0xf]
      %v1614 = vld [vmem:[%s1612 + $0x4] sm:$0xf]
      %v1615 = vld [vmem:[%s1612 + $0x8] sm:$0xf]
      %v1616 = vld [vmem:[%s1612 + $0xc] sm:$0xf]
      %v1617 = vld [vmem:[%s1612 + $0x10] sm:$0xf]
      %v1618 = vld [vmem:[%s1612 + $0x14] sm:$0xf]
      %v1619 = vld [vmem:[%s1612 + $0x18] sm:$0xf]
      %v1620 = vld [vmem:[%s1612 + $0x1c] sm:$0xf]
      %v1621 = vld [vmem:[%s1612 + $0x20] sm:$0xf]
      %v1622 = vld [vmem:[%s1612 + $0x24] sm:$0xf]
      %v1623 = vld [vmem:[%s1612 + $0x28] sm:$0xf]
      %v1624 = vld [vmem:[%s1612 + $0x2c] sm:$0xf]
      %v1625 = vld [vmem:[%s1612 + $0x30] sm:$0xf]
      %v1626 = vld [vmem:[%s1612 + $0x34] sm:$0xf]
      %v1627 = vld [vmem:[%s1612 + $0x38] sm:$0xf]
      %v1628 = vld [vmem:[%s1612 + $0x3c] sm:$0xf]
      %v1661 = vunpack.c.l.b16 %v1580
      %v1662 = vunpack.c.l.b16 %v1581
      %v1663 = vunpack.c.l.b16 %v1582
      %v1664 = vunpack.c.l.b16 %v1583
      %v1665 = vunpack.c.l.b16 %v1584
      %v1666 = vunpack.c.l.b16 %v1585
      %v1667 = vunpack.c.l.b16 %v1586
      %v1668 = vunpack.c.l.b16 %v1587
      %v1669 = vunpack.c.l.b16 %v1588
      %v1670 = vunpack.c.l.b16 %v1589
      %v1671 = vunpack.c.l.b16 %v1590
      %v1672 = vunpack.c.l.b16 %v1591
      %v1673 = vunpack.c.l.b16 %v1592
      %v1674 = vunpack.c.l.b16 %v1593
      %v1675 = vunpack.c.l.b16 %v1594
      %v1676 = vunpack.c.l.b16 %v1595
      %v1677 = vunpack.c.l.b16 %v1596
      %v1678 = vunpack.c.l.b16 %v1597
      %v1679 = vunpack.c.l.b16 %v1598
      %v1680 = vunpack.c.l.b16 %v1599
      %v1681 = vunpack.c.l.b16 %v1600
      %v1682 = vunpack.c.l.b16 %v1601
      %v1683 = vunpack.c.l.b16 %v1602
      %v1684 = vunpack.c.l.b16 %v1603
      %v1685 = vunpack.c.l.b16 %v1604
      %v1686 = vunpack.c.l.b16 %v1605
      %v1687 = vunpack.c.l.b16 %v1606
      %v1688 = vunpack.c.l.b16 %v1607
      %v1689 = vunpack.c.l.b16 %v1608
      %v1690 = vunpack.c.l.b16 %v1609
      %v1691 = vunpack.c.l.b16 %v1610
      %v1692 = vunpack.c.l.b16 %v1611
      %v1693 = vpack.c.b16 %v1662, %v1661
      %v1694 = vpack.c.b16 %v1664, %v1663
      %v1695 = vpack.c.b16 %v1666, %v1665
      %v1696 = vpack.c.b16 %v1668, %v1667
      %v1697 = vpack.c.b16 %v1670, %v1669
      %v1698 = vpack.c.b16 %v1672, %v1671
      %v1699 = vpack.c.b16 %v1674, %v1673
      %v1700 = vpack.c.b16 %v1676, %v1675
      %v1701 = vpack.c.b16 %v1678, %v1677
      %v1702 = vpack.c.b16 %v1680, %v1679
      %v1703 = vpack.c.b16 %v1682, %v1681
      %v1704 = vpack.c.b16 %v1684, %v1683
      %v1705 = vpack.c.b16 %v1686, %v1685
      %v1706 = vpack.c.b16 %v1688, %v1687
      %v1707 = vpack.c.b16 %v1690, %v1689
      %v1708 = vpack.c.b16 %v1692, %v1691
      %v1741 = vunpack.c.l.b16 %v1613
      %v1742 = vunpack.c.l.b16 %v1614
      %v1743 = vunpack.c.l.b16 %v1615
      %v1744 = vunpack.c.l.b16 %v1616
      %v1745 = vunpack.c.l.b16 %v1617
      %v1746 = vunpack.c.l.b16 %v1618
      %v1747 = vunpack.c.l.b16 %v1619
      %v1748 = vunpack.c.l.b16 %v1620
      %v1749 = vunpack.c.l.b16 %v1621
      %v1750 = vunpack.c.l.b16 %v1622
      %v1751 = vunpack.c.l.b16 %v1623
      %v1752 = vunpack.c.l.b16 %v1624
      %v1753 = vunpack.c.l.b16 %v1625
      %v1754 = vunpack.c.l.b16 %v1626
      %v1755 = vunpack.c.l.b16 %v1627
      %v1756 = vunpack.c.l.b16 %v1628
      %v1757 = vpack.c.b16 %v1742, %v1741
      %v1758 = vpack.c.b16 %v1744, %v1743
      %v1759 = vpack.c.b16 %v1746, %v1745
      %v1760 = vpack.c.b16 %v1748, %v1747
      %v1761 = vpack.c.b16 %v1750, %v1749
      %v1762 = vpack.c.b16 %v1752, %v1751
      %v1763 = vpack.c.b16 %v1754, %v1753
      %v1764 = vpack.c.b16 %v1756, %v1755
      %1773 = vmatpush.bf16.msra.mxu0 %v1764
      %1774 = vmatpush.bf16.msra.mxu0 %v1763
      %1775 = vmatpush.bf16.msra.mxu0 %v1762
      %1776 = vmatpush.bf16.msra.mxu0 %v1761
      %1777 = vmatpush.bf16.msra.mxu0 %v1760
      %1778 = vmatpush.bf16.msra.mxu0 %v1759
      %1779 = vmatpush.bf16.msra.mxu0 %v1758
      %1780 = vmatpush.bf16.msra.mxu0 %v1757
      %1781 = vmatmul.bf16.gmra.mxu0 %v1693
      %v1782 = vpop.f32.mrf.mxu0
      %v1783 = vadd.f32 0.0, %v1782
      %v1784 = vpop.f32.mrf.mxu0
      %v1785 = vadd.f32 0.0, %v1784
      %1786 = vmatmul.bf16.gmra.mxu0 %v1694
      %v1787 = vpop.f32.mrf.mxu0
      %v1788 = vadd.f32 0.0, %v1787
      %v1789 = vpop.f32.mrf.mxu0
      %v1790 = vadd.f32 0.0, %v1789
      %1791 = vmatmul.bf16.gmra.mxu0 %v1695
      %v1792 = vpop.f32.mrf.mxu0
      %v1793 = vadd.f32 0.0, %v1792
      %v1794 = vpop.f32.mrf.mxu0
      %v1795 = vadd.f32 0.0, %v1794
      %1796 = vmatmul.bf16.gmra.mxu0 %v1696
      %v1797 = vpop.f32.mrf.mxu0
      %v1798 = vadd.f32 0.0, %v1797
      %v1799 = vpop.f32.mrf.mxu0
      %v1800 = vadd.f32 0.0, %v1799
      %1801 = vmatmul.bf16.gmra.mxu0 %v1697
      %v1802 = vpop.f32.mrf.mxu0
      %v1803 = vadd.f32 0.0, %v1802
      %v1804 = vpop.f32.mrf.mxu0
      %v1805 = vadd.f32 0.0, %v1804
      %1806 = vmatmul.bf16.gmra.mxu0 %v1698
      %v1807 = vpop.f32.mrf.mxu0
      %v1808 = vadd.f32 0.0, %v1807
      %v1809 = vpop.f32.mrf.mxu0
      %v1810 = vadd.f32 0.0, %v1809
      %1811 = vmatmul.bf16.gmra.mxu0 %v1699
      %v1812 = vpop.f32.mrf.mxu0
      %v1813 = vadd.f32 0.0, %v1812
      %v1814 = vpop.f32.mrf.mxu0
      %v1815 = vadd.f32 0.0, %v1814
      %1816 = vmatmul.bf16.gmra.mxu0 %v1700
      %v1817 = vpop.f32.mrf.mxu0
      %v1818 = vadd.f32 0.0, %v1817
      %v1819 = vpop.f32.mrf.mxu0
      %v1820 = vadd.f32 0.0, %v1819
      %1821 = vmatmul.bf16.gmra.mxu0 %v1701
      %v1822 = vpop.f32.mrf.mxu0
      %v1823 = vadd.f32 0.0, %v1822
      %v1824 = vpop.f32.mrf.mxu0
      %v1825 = vadd.f32 0.0, %v1824
      %1826 = vmatmul.bf16.gmra.mxu0 %v1702
      %v1827 = vpop.f32.mrf.mxu0
      %v1828 = vadd.f32 0.0, %v1827
      %v1829 = vpop.f32.mrf.mxu0
      %v1830 = vadd.f32 0.0, %v1829
      %1831 = vmatmul.bf16.gmra.mxu0 %v1703
      %v1832 = vpop.f32.mrf.mxu0
      %v1833 = vadd.f32 0.0, %v1832
      %v1834 = vpop.f32.mrf.mxu0
      %v1835 = vadd.f32 0.0, %v1834
      %1836 = vmatmul.bf16.gmra.mxu0 %v1704
      %v1837 = vpop.f32.mrf.mxu0
      %v1838 = vadd.f32 0.0, %v1837
      %v1839 = vpop.f32.mrf.mxu0
      %v1840 = vadd.f32 0.0, %v1839
      %1841 = vmatmul.bf16.gmra.mxu0 %v1705
      %v1842 = vpop.f32.mrf.mxu0
      %v1843 = vadd.f32 0.0, %v1842
      %v1844 = vpop.f32.mrf.mxu0
      %v1845 = vadd.f32 0.0, %v1844
      %1846 = vmatmul.bf16.gmra.mxu0 %v1706
      %v1847 = vpop.f32.mrf.mxu0
      %v1848 = vadd.f32 0.0, %v1847
      %v1849 = vpop.f32.mrf.mxu0
      %v1850 = vadd.f32 0.0, %v1849
      %1851 = vmatmul.bf16.gmra.mxu0 %v1707
      %v1852 = vpop.f32.mrf.mxu0
      %v1853 = vadd.f32 0.0, %v1852
      %v1854 = vpop.f32.mrf.mxu0
      %v1855 = vadd.f32 0.0, %v1854
      %1856 = vmatmul.bf16.gmra.mxu0 %v1708
      %v1857 = vpop.f32.mrf.mxu0
      %v1858 = vadd.f32 0.0, %v1857
      %v1859 = vpop.f32.mrf.mxu0
      %v1860 = vadd.f32 0.0, %v1859
      %1861 = vdwg.mxu0
      %v1862 = vadd.f32 %v1547, %v1783
      %v1863 = vadd.f32 %v1548, %v1785
      %v1864 = vadd.f32 %v1549, %v1788
      %v1865 = vadd.f32 %v1550, %v1790
      %v1866 = vadd.f32 %v1551, %v1793
      %v1867 = vadd.f32 %v1552, %v1795
      %v1868 = vadd.f32 %v1553, %v1798
      %v1869 = vadd.f32 %v1554, %v1800
      %v1870 = vadd.f32 %v1555, %v1803
      %v1871 = vadd.f32 %v1556, %v1805
      %v1872 = vadd.f32 %v1557, %v1808
      %v1873 = vadd.f32 %v1558, %v1810
      %v1874 = vadd.f32 %v1559, %v1813
      %v1875 = vadd.f32 %v1560, %v1815
      %v1876 = vadd.f32 %v1561, %v1818
      %v1877 = vadd.f32 %v1562, %v1820
      %v1878 = vadd.f32 %v1563, %v1823
      %v1879 = vadd.f32 %v1564, %v1825
      %v1880 = vadd.f32 %v1565, %v1828
      %v1881 = vadd.f32 %v1566, %v1830
      %v1882 = vadd.f32 %v1567, %v1833
      %v1883 = vadd.f32 %v1568, %v1835
      %v1884 = vadd.f32 %v1569, %v1838
      %v1885 = vadd.f32 %v1570, %v1840
      %v1886 = vadd.f32 %v1571, %v1843
      %v1887 = vadd.f32 %v1572, %v1845
      %v1888 = vadd.f32 %v1573, %v1848
      %v1889 = vadd.f32 %v1574, %v1850
      %v1890 = vadd.f32 %v1575, %v1853
      %v1891 = vadd.f32 %v1576, %v1855
      %v1892 = vadd.f32 %v1577, %v1858
      %v1893 = vadd.f32 %v1578, %v1860
      %v1894 = vld [vmem:[%s1579] sm:$0xf]
      %v1895 = vld [vmem:[%s1579 + $0x4] sm:$0xf]
      %v1896 = vld [vmem:[%s1579 + $0x8] sm:$0x1]
      %v1897 = vld [vmem:[%s1579 + $0xc] sm:$0xf]
      %v1898 = vld [vmem:[%s1579 + $0x10] sm:$0xf]
      %v1899 = vld [vmem:[%s1579 + $0x14] sm:$0x1]
      %v1900 = vld [vmem:[%s1579 + $0x18] sm:$0xf]
      %v1901 = vld [vmem:[%s1579 + $0x1c] sm:$0xf]
      %v1902 = vld [vmem:[%s1579 + $0x20] sm:$0x1]
      %v1903 = vld [vmem:[%s1579 + $0x24] sm:$0xf]
      %v1904 = vld [vmem:[%s1579 + $0x28] sm:$0xf]
      %v1905 = vld [vmem:[%s1579 + $0x2c] sm:$0x1]
      %v1906 = vld [vmem:[%s1579 + $0x30] sm:$0xf]
      %v1907 = vld [vmem:[%s1579 + $0x34] sm:$0xf]
      %v1908 = vld [vmem:[%s1579 + $0x38] sm:$0x1]
      %v1909 = vld [vmem:[%s1579 + $0x3c] sm:$0xf]
      %v1910 = vld [vmem:[%s1579 + $0x40] sm:$0xf]
      %v1911 = vld [vmem:[%s1579 + $0x44] sm:$0x1]
      %v1912 = vld [vmem:[%s1579 + $0x48] sm:$0xf]
      %v1913 = vld [vmem:[%s1579 + $0x4c] sm:$0xf]
      %v1914 = vld [vmem:[%s1579 + $0x50] sm:$0x1]
      %v1915 = vld [vmem:[%s1579 + $0x54] sm:$0xf]
      %v1916 = vld [vmem:[%s1579 + $0x58] sm:$0xf]
      %v1917 = vld [vmem:[%s1579 + $0x5c] sm:$0x1]
      %v1918 = vld [vmem:[%s1579 + $0x60] sm:$0xf]
      %v1919 = vld [vmem:[%s1579 + $0x64] sm:$0xf]
      %v1920 = vld [vmem:[%s1579 + $0x68] sm:$0x1]
      %v1921 = vld [vmem:[%s1579 + $0x6c] sm:$0xf]
      %v1922 = vld [vmem:[%s1579 + $0x70] sm:$0xf]
      %v1923 = vld [vmem:[%s1579 + $0x74] sm:$0x1]
      %v1924 = vld [vmem:[%s1579 + $0x78] sm:$0xf]
      %v1925 = vld [vmem:[%s1579 + $0x7c] sm:$0xf]
      %v1926 = vld [vmem:[%s1579 + $0x80] sm:$0x1]
      %v1927 = vld [vmem:[%s1579 + $0x84] sm:$0xf]
      %v1928 = vld [vmem:[%s1579 + $0x88] sm:$0xf]
      %v1929 = vld [vmem:[%s1579 + $0x8c] sm:$0x1]
      %v1930 = vld [vmem:[%s1579 + $0x90] sm:$0xf]
      %v1931 = vld [vmem:[%s1579 + $0x94] sm:$0xf]
      %v1932 = vld [vmem:[%s1579 + $0x98] sm:$0x1]
      %v1933 = vld [vmem:[%s1579 + $0x9c] sm:$0xf]
      %v1934 = vld [vmem:[%s1579 + $0xa0] sm:$0xf]
      %v1935 = vld [vmem:[%s1579 + $0xa4] sm:$0x1]
      %v1936 = vld [vmem:[%s1579 + $0xa8] sm:$0xf]
      %v1937 = vld [vmem:[%s1579 + $0xac] sm:$0xf]
      %v1938 = vld [vmem:[%s1579 + $0xb0] sm:$0x1]
      %v1939 = vld [vmem:[%s1579 + $0xb4] sm:$0xf]
      %v1940 = vld [vmem:[%s1579 + $0xb8] sm:$0xf]
      %v1941 = vld [vmem:[%s1579 + $0xbc] sm:$0x1]
      %v1943 = vshrl.u32 %v1894, 16
      %v1945 = vrot.slane %v1943, 4
      %v1946 = vshll.u32 %v1894, 16
      %v1948 = vrot.slane %v1946, 5
      %v1949 = vor.u32 %v1945, %v1948
      %v1950 = vrot.slane %v1949, 4
      %v1952 = vshll.u32 %v1895, 16
      %v1954 = vrot.slane %v1952, 5
      %v1955 = vsel %vm330, %v1950, %v1954
      %v1956 = vshrl.u32 %v1895, 16
      %v1958 = vrot.slane %v1956, 4
      %v1959 = vor.u32 %v1958, %v1954
      %v1960 = vrot.slane %v1959, 4
      %v1962 = vshll.u32 %v1896, 16
      %v1964 = vrot.slane %v1962, 5
      %v1965 = vsel %vm330, %v1960, %v1964
      %v1967 = vshrl.u32 %v1897, 16
      %v1969 = vrot.slane %v1967, 4
      %v1970 = vshll.u32 %v1897, 16
      %v1972 = vrot.slane %v1970, 5
      %v1973 = vor.u32 %v1969, %v1972
      %v1974 = vrot.slane %v1973, 4
      %v1976 = vshll.u32 %v1898, 16
      %v1978 = vrot.slane %v1976, 5
      %v1979 = vsel %vm330, %v1974, %v1978
      %v1980 = vshrl.u32 %v1898, 16
      %v1982 = vrot.slane %v1980, 4
      %v1983 = vor.u32 %v1982, %v1978
      %v1984 = vrot.slane %v1983, 4
      %v1986 = vshll.u32 %v1899, 16
      %v1988 = vrot.slane %v1986, 5
      %v1989 = vsel %vm330, %v1984, %v1988
      %v1991 = vshrl.u32 %v1900, 16
      %v1993 = vrot.slane %v1991, 4
      %v1994 = vshll.u32 %v1900, 16
      %v1996 = vrot.slane %v1994, 5
      %v1997 = vor.u32 %v1993, %v1996
      %v1998 = vrot.slane %v1997, 4
      %v2000 = vshll.u32 %v1901, 16
      %v2002 = vrot.slane %v2000, 5
      %v2003 = vsel %vm330, %v1998, %v2002
      %v2004 = vshrl.u32 %v1901, 16
      %v2006 = vrot.slane %v2004, 4
      %v2007 = vor.u32 %v2006, %v2002
      %v2008 = vrot.slane %v2007, 4
      %v2010 = vshll.u32 %v1902, 16
      %v2012 = vrot.slane %v2010, 5
      %v2013 = vsel %vm330, %v2008, %v2012
      %v2015 = vshrl.u32 %v1903, 16
      %v2017 = vrot.slane %v2015, 4
      %v2018 = vshll.u32 %v1903, 16
      %v2020 = vrot.slane %v2018, 5
      %v2021 = vor.u32 %v2017, %v2020
      %v2022 = vrot.slane %v2021, 4
      %v2024 = vshll.u32 %v1904, 16
      %v2026 = vrot.slane %v2024, 5
      %v2027 = vsel %vm330, %v2022, %v2026
      %v2028 = vshrl.u32 %v1904, 16
      %v2030 = vrot.slane %v2028, 4
      %v2031 = vor.u32 %v2030, %v2026
      %v2032 = vrot.slane %v2031, 4
      %v2034 = vshll.u32 %v1905, 16
      %v2036 = vrot.slane %v2034, 5
      %v2037 = vsel %vm330, %v2032, %v2036
      %v2039 = vshrl.u32 %v1906, 16
      %v2041 = vrot.slane %v2039, 4
      %v2042 = vshll.u32 %v1906, 16
      %v2044 = vrot.slane %v2042, 5
      %v2045 = vor.u32 %v2041, %v2044
      %v2046 = vrot.slane %v2045, 4
      %v2048 = vshll.u32 %v1907, 16
      %v2050 = vrot.slane %v2048, 5
      %v2051 = vsel %vm330, %v2046, %v2050
      %v2052 = vshrl.u32 %v1907, 16
      %v2054 = vrot.slane %v2052, 4
      %v2055 = vor.u32 %v2054, %v2050
      %v2056 = vrot.slane %v2055, 4
      %v2058 = vshll.u32 %v1908, 16
      %v2060 = vrot.slane %v2058, 5
      %v2061 = vsel %vm330, %v2056, %v2060
      %v2063 = vshrl.u32 %v1909, 16
      %v2065 = vrot.slane %v2063, 4
      %v2066 = vshll.u32 %v1909, 16
      %v2068 = vrot.slane %v2066, 5
      %v2069 = vor.u32 %v2065, %v2068
      %v2070 = vrot.slane %v2069, 4
      %v2072 = vshll.u32 %v1910, 16
      %v2074 = vrot.slane %v2072, 5
      %v2075 = vsel %vm330, %v2070, %v2074
      %v2076 = vshrl.u32 %v1910, 16
      %v2078 = vrot.slane %v2076, 4
      %v2079 = vor.u32 %v2078, %v2074
      %v2080 = vrot.slane %v2079, 4
      %v2082 = vshll.u32 %v1911, 16
      %v2084 = vrot.slane %v2082, 5
      %v2085 = vsel %vm330, %v2080, %v2084
      %v2087 = vshrl.u32 %v1912, 16
      %v2089 = vrot.slane %v2087, 4
      %v2090 = vshll.u32 %v1912, 16
      %v2092 = vrot.slane %v2090, 5
      %v2093 = vor.u32 %v2089, %v2092
      %v2094 = vrot.slane %v2093, 4
      %v2096 = vshll.u32 %v1913, 16
      %v2098 = vrot.slane %v2096, 5
      %v2099 = vsel %vm330, %v2094, %v2098
      %v2100 = vshrl.u32 %v1913, 16
      %v2102 = vrot.slane %v2100, 4
      %v2103 = vor.u32 %v2102, %v2098
      %v2104 = vrot.slane %v2103, 4
      %v2106 = vshll.u32 %v1914, 16
      %v2108 = vrot.slane %v2106, 5
      %v2109 = vsel %vm330, %v2104, %v2108
      %v2111 = vshrl.u32 %v1915, 16
      %v2113 = vrot.slane %v2111, 4
      %v2114 = vshll.u32 %v1915, 16
      %v2116 = vrot.slane %v2114, 5
      %v2117 = vor.u32 %v2113, %v2116
      %v2118 = vrot.slane %v2117, 4
      %v2120 = vshll.u32 %v1916, 16
      %v2122 = vrot.slane %v2120, 5
      %v2123 = vsel %vm330, %v2118, %v2122
      %v2124 = vshrl.u32 %v1916, 16
      %v2126 = vrot.slane %v2124, 4
      %v2127 = vor.u32 %v2126, %v2122
      %v2128 = vrot.slane %v2127, 4
      %v2130 = vshll.u32 %v1917, 16
      %v2132 = vrot.slane %v2130, 5
      %v2133 = vsel %vm330, %v2128, %v2132
      %v2135 = vshrl.u32 %v1918, 16
      %v2137 = vrot.slane %v2135, 4
      %v2138 = vshll.u32 %v1918, 16
      %v2140 = vrot.slane %v2138, 5
      %v2141 = vor.u32 %v2137, %v2140
      %v2142 = vrot.slane %v2141, 4
      %v2144 = vshll.u32 %v1919, 16
      %v2146 = vrot.slane %v2144, 5
      %v2147 = vsel %vm330, %v2142, %v2146
      %v2148 = vshrl.u32 %v1919, 16
      %v2150 = vrot.slane %v2148, 4
      %v2151 = vor.u32 %v2150, %v2146
      %v2152 = vrot.slane %v2151, 4
      %v2154 = vshll.u32 %v1920, 16
      %v2156 = vrot.slane %v2154, 5
      %v2157 = vsel %vm330, %v2152, %v2156
      %v2159 = vshrl.u32 %v1921, 16
      %v2161 = vrot.slane %v2159, 4
      %v2162 = vshll.u32 %v1921, 16
      %v2164 = vrot.slane %v2162, 5
      %v2165 = vor.u32 %v2161, %v2164
      %v2166 = vrot.slane %v2165, 4
      %v2168 = vshll.u32 %v1922, 16
      %v2170 = vrot.slane %v2168, 5
      %v2171 = vsel %vm330, %v2166, %v2170
      %v2172 = vshrl.u32 %v1922, 16
      %v2174 = vrot.slane %v2172, 4
      %v2175 = vor.u32 %v2174, %v2170
      %v2176 = vrot.slane %v2175, 4
      %v2178 = vshll.u32 %v1923, 16
      %v2180 = vrot.slane %v2178, 5
      %v2181 = vsel %vm330, %v2176, %v2180
      %v2183 = vshrl.u32 %v1924, 16
      %v2185 = vrot.slane %v2183, 4
      %v2186 = vshll.u32 %v1924, 16
      %v2188 = vrot.slane %v2186, 5
      %v2189 = vor.u32 %v2185, %v2188
      %v2190 = vrot.slane %v2189, 4
      %v2192 = vshll.u32 %v1925, 16
      %v2194 = vrot.slane %v2192, 5
      %v2195 = vsel %vm330, %v2190, %v2194
      %v2196 = vshrl.u32 %v1925, 16
      %v2198 = vrot.slane %v2196, 4
      %v2199 = vor.u32 %v2198, %v2194
      %v2200 = vrot.slane %v2199, 4
      %v2202 = vshll.u32 %v1926, 16
      %v2204 = vrot.slane %v2202, 5
      %v2205 = vsel %vm330, %v2200, %v2204
      %v2207 = vshrl.u32 %v1927, 16
      %v2209 = vrot.slane %v2207, 4
      %v2210 = vshll.u32 %v1927, 16
      %v2212 = vrot.slane %v2210, 5
      %v2213 = vor.u32 %v2209, %v2212
      %v2214 = vrot.slane %v2213, 4
      %v2216 = vshll.u32 %v1928, 16
      %v2218 = vrot.slane %v2216, 5
      %v2219 = vsel %vm330, %v2214, %v2218
      %v2220 = vshrl.u32 %v1928, 16
      %v2222 = vrot.slane %v2220, 4
      %v2223 = vor.u32 %v2222, %v2218
      %v2224 = vrot.slane %v2223, 4
      %v2226 = vshll.u32 %v1929, 16
      %v2228 = vrot.slane %v2226, 5
      %v2229 = vsel %vm330, %v2224, %v2228
      %v2231 = vshrl.u32 %v1930, 16
      %v2233 = vrot.slane %v2231, 4
      %v2234 = vshll.u32 %v1930, 16
      %v2236 = vrot.slane %v2234, 5
      %v2237 = vor.u32 %v2233, %v2236
      %v2238 = vrot.slane %v2237, 4
      %v2240 = vshll.u32 %v1931, 16
      %v2242 = vrot.slane %v2240, 5
      %v2243 = vsel %vm330, %v2238, %v2242
      %v2244 = vshrl.u32 %v1931, 16
      %v2246 = vrot.slane %v2244, 4
      %v2247 = vor.u32 %v2246, %v2242
      %v2248 = vrot.slane %v2247, 4
      %v2250 = vshll.u32 %v1932, 16
      %v2252 = vrot.slane %v2250, 5
      %v2253 = vsel %vm330, %v2248, %v2252
      %v2255 = vshrl.u32 %v1933, 16
      %v2257 = vrot.slane %v2255, 4
      %v2258 = vshll.u32 %v1933, 16
      %v2260 = vrot.slane %v2258, 5
      %v2261 = vor.u32 %v2257, %v2260
      %v2262 = vrot.slane %v2261, 4
      %v2264 = vshll.u32 %v1934, 16
      %v2266 = vrot.slane %v2264, 5
      %v2267 = vsel %vm330, %v2262, %v2266
      %v2268 = vshrl.u32 %v1934, 16
      %v2270 = vrot.slane %v2268, 4
      %v2271 = vor.u32 %v2270, %v2266
      %v2272 = vrot.slane %v2271, 4
      %v2274 = vshll.u32 %v1935, 16
      %v2276 = vrot.slane %v2274, 5
      %v2277 = vsel %vm330, %v2272, %v2276
      %v2279 = vshrl.u32 %v1936, 16
      %v2281 = vrot.slane %v2279, 4
      %v2282 = vshll.u32 %v1936, 16
      %v2284 = vrot.slane %v2282, 5
      %v2285 = vor.u32 %v2281, %v2284
      %v2286 = vrot.slane %v2285, 4
      %v2288 = vshll.u32 %v1937, 16
      %v2290 = vrot.slane %v2288, 5
      %v2291 = vsel %vm330, %v2286, %v2290
      %v2292 = vshrl.u32 %v1937, 16
      %v2294 = vrot.slane %v2292, 4
      %v2295 = vor.u32 %v2294, %v2290
      %v2296 = vrot.slane %v2295, 4
      %v2298 = vshll.u32 %v1938, 16
      %v2300 = vrot.slane %v2298, 5
      %v2301 = vsel %vm330, %v2296, %v2300
      %v2303 = vshrl.u32 %v1939, 16
      %v2305 = vrot.slane %v2303, 4
      %v2306 = vshll.u32 %v1939, 16
      %v2308 = vrot.slane %v2306, 5
      %v2309 = vor.u32 %v2305, %v2308
      %v2310 = vrot.slane %v2309, 4
      %v2312 = vshll.u32 %v1940, 16
      %v2314 = vrot.slane %v2312, 5
      %v2315 = vsel %vm330, %v2310, %v2314
      %v2316 = vshrl.u32 %v1940, 16
      %v2318 = vrot.slane %v2316, 4
      %v2319 = vor.u32 %v2318, %v2314
      %v2320 = vrot.slane %v2319, 4
      %v2322 = vshll.u32 %v1941, 16
      %v2324 = vrot.slane %v2322, 5
      %v2325 = vsel %vm330, %v2320, %v2324
      %s2326 = scalar_lea.vmem %s248, 256
      %v2327 = vld [vmem:[%s2326] sm:$0xf]
      %v2328 = vld [vmem:[%s2326 + $0x4] sm:$0xf]
      %v2329 = vld [vmem:[%s2326 + $0x8] sm:$0xf]
      %v2330 = vld [vmem:[%s2326 + $0xc] sm:$0xf]
      %v2331 = vld [vmem:[%s2326 + $0x10] sm:$0xf]
      %v2332 = vld [vmem:[%s2326 + $0x14] sm:$0xf]
      %v2333 = vld [vmem:[%s2326 + $0x18] sm:$0xf]
      %v2334 = vld [vmem:[%s2326 + $0x1c] sm:$0xf]
      %v2335 = vld [vmem:[%s2326 + $0x20] sm:$0xf]
      %v2336 = vld [vmem:[%s2326 + $0x24] sm:$0xf]
      %v2337 = vld [vmem:[%s2326 + $0x28] sm:$0xf]
      %v2338 = vld [vmem:[%s2326 + $0x2c] sm:$0xf]
      %v2339 = vld [vmem:[%s2326 + $0x30] sm:$0xf]
      %v2340 = vld [vmem:[%s2326 + $0x34] sm:$0xf]
      %v2341 = vld [vmem:[%s2326 + $0x38] sm:$0xf]
      %v2342 = vld [vmem:[%s2326 + $0x3c] sm:$0xf]
      %v2343 = vunpack.c.l.b16 %v1955
      %v2344 = vunpack.c.l.b16 %v1965
      %v2345 = vunpack.c.l.b16 %v1979
      %v2346 = vunpack.c.l.b16 %v1989
      %v2347 = vunpack.c.l.b16 %v2003
      %v2348 = vunpack.c.l.b16 %v2013
      %v2349 = vunpack.c.l.b16 %v2027
      %v2350 = vunpack.c.l.b16 %v2037
      %v2351 = vunpack.c.l.b16 %v2051
      %v2352 = vunpack.c.l.b16 %v2061
      %v2353 = vunpack.c.l.b16 %v2075
      %v2354 = vunpack.c.l.b16 %v2085
      %v2355 = vunpack.c.l.b16 %v2099
      %v2356 = vunpack.c.l.b16 %v2109
      %v2357 = vunpack.c.l.b16 %v2123
      %v2358 = vunpack.c.l.b16 %v2133
      %v2359 = vunpack.c.l.b16 %v2147
      %v2360 = vunpack.c.l.b16 %v2157
      %v2361 = vunpack.c.l.b16 %v2171
      %v2362 = vunpack.c.l.b16 %v2181
      %v2363 = vunpack.c.l.b16 %v2195
      %v2364 = vunpack.c.l.b16 %v2205
      %v2365 = vunpack.c.l.b16 %v2219
      %v2366 = vunpack.c.l.b16 %v2229
      %v2367 = vunpack.c.l.b16 %v2243
      %v2368 = vunpack.c.l.b16 %v2253
      %v2369 = vunpack.c.l.b16 %v2267
      %v2370 = vunpack.c.l.b16 %v2277
      %v2371 = vunpack.c.l.b16 %v2291
      %v2372 = vunpack.c.l.b16 %v2301
      %v2373 = vunpack.c.l.b16 %v2315
      %v2374 = vunpack.c.l.b16 %v2325
      %v2375 = vpack.c.b16 %v2344, %v2343
      %v2376 = vpack.c.b16 %v2346, %v2345
      %v2377 = vpack.c.b16 %v2348, %v2347
      %v2378 = vpack.c.b16 %v2350, %v2349
      %v2379 = vpack.c.b16 %v2352, %v2351
      %v2380 = vpack.c.b16 %v2354, %v2353
      %v2381 = vpack.c.b16 %v2356, %v2355
      %v2382 = vpack.c.b16 %v2358, %v2357
      %v2383 = vpack.c.b16 %v2360, %v2359
      %v2384 = vpack.c.b16 %v2362, %v2361
      %v2385 = vpack.c.b16 %v2364, %v2363
      %v2386 = vpack.c.b16 %v2366, %v2365
      %v2387 = vpack.c.b16 %v2368, %v2367
      %v2388 = vpack.c.b16 %v2370, %v2369
      %v2389 = vpack.c.b16 %v2372, %v2371
      %v2390 = vpack.c.b16 %v2374, %v2373
      %v2423 = vunpack.c.l.b16 %v2327
      %v2424 = vunpack.c.l.b16 %v2328
      %v2425 = vunpack.c.l.b16 %v2329
      %v2426 = vunpack.c.l.b16 %v2330
      %v2427 = vunpack.c.l.b16 %v2331
      %v2428 = vunpack.c.l.b16 %v2332
      %v2429 = vunpack.c.l.b16 %v2333
      %v2430 = vunpack.c.l.b16 %v2334
      %v2431 = vunpack.c.l.b16 %v2335
      %v2432 = vunpack.c.l.b16 %v2336
      %v2433 = vunpack.c.l.b16 %v2337
      %v2434 = vunpack.c.l.b16 %v2338
      %v2435 = vunpack.c.l.b16 %v2339
      %v2436 = vunpack.c.l.b16 %v2340
      %v2437 = vunpack.c.l.b16 %v2341
      %v2438 = vunpack.c.l.b16 %v2342
      %v2439 = vpack.c.b16 %v2424, %v2423
      %v2440 = vpack.c.b16 %v2426, %v2425
      %v2441 = vpack.c.b16 %v2428, %v2427
      %v2442 = vpack.c.b16 %v2430, %v2429
      %v2443 = vpack.c.b16 %v2432, %v2431
      %v2444 = vpack.c.b16 %v2434, %v2433
      %v2445 = vpack.c.b16 %v2436, %v2435
      %v2446 = vpack.c.b16 %v2438, %v2437
      %2455 = vmatpush.bf16.msra.mxu0 %v2446
      %2456 = vmatpush.bf16.msra.mxu0 %v2445
      %2457 = vmatpush.bf16.msra.mxu0 %v2444
      %2458 = vmatpush.bf16.msra.mxu0 %v2443
      %2459 = vmatpush.bf16.msra.mxu0 %v2442
      %2460 = vmatpush.bf16.msra.mxu0 %v2441
      %2461 = vmatpush.bf16.msra.mxu0 %v2440
      %2462 = vmatpush.bf16.msra.mxu0 %v2439
      %2463 = vmatmul.bf16.gmra.mxu0 %v2375
      %v2464 = vpop.f32.mrf.mxu0
      %v2465 = vadd.f32 0.0, %v2464
      %v2466 = vpop.f32.mrf.mxu0
      %v2467 = vadd.f32 0.0, %v2466
      %2468 = vmatmul.bf16.gmra.mxu0 %v2376
      %v2469 = vpop.f32.mrf.mxu0
      %v2470 = vadd.f32 0.0, %v2469
      %v2471 = vpop.f32.mrf.mxu0
      %v2472 = vadd.f32 0.0, %v2471
      %2473 = vmatmul.bf16.gmra.mxu0 %v2377
      %v2474 = vpop.f32.mrf.mxu0
      %v2475 = vadd.f32 0.0, %v2474
      %v2476 = vpop.f32.mrf.mxu0
      %v2477 = vadd.f32 0.0, %v2476
      %2478 = vmatmul.bf16.gmra.mxu0 %v2378
      %v2479 = vpop.f32.mrf.mxu0
      %v2480 = vadd.f32 0.0, %v2479
      %v2481 = vpop.f32.mrf.mxu0
      %v2482 = vadd.f32 0.0, %v2481
      %2483 = vmatmul.bf16.gmra.mxu0 %v2379
      %v2484 = vpop.f32.mrf.mxu0
      %v2485 = vadd.f32 0.0, %v2484
      %v2486 = vpop.f32.mrf.mxu0
      %v2487 = vadd.f32 0.0, %v2486
      %2488 = vmatmul.bf16.gmra.mxu0 %v2380
      %v2489 = vpop.f32.mrf.mxu0
      %v2490 = vadd.f32 0.0, %v2489
      %v2491 = vpop.f32.mrf.mxu0
      %v2492 = vadd.f32 0.0, %v2491
      %2493 = vmatmul.bf16.gmra.mxu0 %v2381
      %v2494 = vpop.f32.mrf.mxu0
      %v2495 = vadd.f32 0.0, %v2494
      %v2496 = vpop.f32.mrf.mxu0
      %v2497 = vadd.f32 0.0, %v2496
      %2498 = vmatmul.bf16.gmra.mxu0 %v2382
      %v2499 = vpop.f32.mrf.mxu0
      %v2500 = vadd.f32 0.0, %v2499
      %v2501 = vpop.f32.mrf.mxu0
      %v2502 = vadd.f32 0.0, %v2501
      %2503 = vmatmul.bf16.gmra.mxu0 %v2383
      %v2504 = vpop.f32.mrf.mxu0
      %v2505 = vadd.f32 0.0, %v2504
      %v2506 = vpop.f32.mrf.mxu0
      %v2507 = vadd.f32 0.0, %v2506
      %2508 = vmatmul.bf16.gmra.mxu0 %v2384
      %v2509 = vpop.f32.mrf.mxu0
      %v2510 = vadd.f32 0.0, %v2509
      %v2511 = vpop.f32.mrf.mxu0
      %v2512 = vadd.f32 0.0, %v2511
      %2513 = vmatmul.bf16.gmra.mxu0 %v2385
      %v2514 = vpop.f32.mrf.mxu0
      %v2515 = vadd.f32 0.0, %v2514
      %v2516 = vpop.f32.mrf.mxu0
      %v2517 = vadd.f32 0.0, %v2516
      %2518 = vmatmul.bf16.gmra.mxu0 %v2386
      %v2519 = vpop.f32.mrf.mxu0
      %v2520 = vadd.f32 0.0, %v2519
      %v2521 = vpop.f32.mrf.mxu0
      %v2522 = vadd.f32 0.0, %v2521
      %2523 = vmatmul.bf16.gmra.mxu0 %v2387
      %v2524 = vpop.f32.mrf.mxu0
      %v2525 = vadd.f32 0.0, %v2524
      %v2526 = vpop.f32.mrf.mxu0
      %v2527 = vadd.f32 0.0, %v2526
      %2528 = vmatmul.bf16.gmra.mxu0 %v2388
      %v2529 = vpop.f32.mrf.mxu0
      %v2530 = vadd.f32 0.0, %v2529
      %v2531 = vpop.f32.mrf.mxu0
      %v2532 = vadd.f32 0.0, %v2531
      %2533 = vmatmul.bf16.gmra.mxu0 %v2389
      %v2534 = vpop.f32.mrf.mxu0
      %v2535 = vadd.f32 0.0, %v2534
      %v2536 = vpop.f32.mrf.mxu0
      %v2537 = vadd.f32 0.0, %v2536
      %2538 = vmatmul.bf16.gmra.mxu0 %v2390
      %v2539 = vpop.f32.mrf.mxu0
      %v2540 = vadd.f32 0.0, %v2539
      %v2541 = vpop.f32.mrf.mxu0
      %v2542 = vadd.f32 0.0, %v2541
      %2543 = vdwg.mxu0
      %v2544 = vadd.f32 %v1862, %v2465
      %v2545 = vadd.f32 %v1863, %v2467
      %v2546 = vadd.f32 %v1864, %v2470
      %v2547 = vadd.f32 %v1865, %v2472
      %v2548 = vadd.f32 %v1866, %v2475
      %v2549 = vadd.f32 %v1867, %v2477
      %v2550 = vadd.f32 %v1868, %v2480
      %v2551 = vadd.f32 %v1869, %v2482
      %v2552 = vadd.f32 %v1870, %v2485
      %v2553 = vadd.f32 %v1871, %v2487
      %v2554 = vadd.f32 %v1872, %v2490
      %v2555 = vadd.f32 %v1873, %v2492
      %v2556 = vadd.f32 %v1874, %v2495
      %v2557 = vadd.f32 %v1875, %v2497
      %v2558 = vadd.f32 %v1876, %v2500
      %v2559 = vadd.f32 %v1877, %v2502
      %v2560 = vadd.f32 %v1878, %v2505
      %v2561 = vadd.f32 %v1879, %v2507
      %v2562 = vadd.f32 %v1880, %v2510
      %v2563 = vadd.f32 %v1881, %v2512
      %v2564 = vadd.f32 %v1882, %v2515
      %v2565 = vadd.f32 %v1883, %v2517
      %v2566 = vadd.f32 %v1884, %v2520
      %v2567 = vadd.f32 %v1885, %v2522
      %v2568 = vadd.f32 %v1886, %v2525
      %v2569 = vadd.f32 %v1887, %v2527
      %v2570 = vadd.f32 %v1888, %v2530
      %v2571 = vadd.f32 %v1889, %v2532
      %v2572 = vadd.f32 %v1890, %v2535
      %v2573 = vadd.f32 %v1891, %v2537
      %v2574 = vadd.f32 %v1892, %v2540
      %v2575 = vadd.f32 %v1893, %v2542
      %v2576 = vld [vmem:[%s1579] sm:$0xe]
      %v2577 = vld [vmem:[%s1579 + $0xc] sm:$0xe]
      %v2578 = vld [vmem:[%s1579 + $0x18] sm:$0xe]
      %v2579 = vld [vmem:[%s1579 + $0x24] sm:$0xe]
      %v2580 = vld [vmem:[%s1579 + $0x30] sm:$0xe]
      %v2581 = vld [vmem:[%s1579 + $0x3c] sm:$0xe]
      %v2582 = vld [vmem:[%s1579 + $0x48] sm:$0xe]
      %v2583 = vld [vmem:[%s1579 + $0x54] sm:$0xe]
      %v2584 = vld [vmem:[%s1579 + $0x60] sm:$0xe]
      %v2585 = vld [vmem:[%s1579 + $0x6c] sm:$0xe]
      %v2586 = vld [vmem:[%s1579 + $0x78] sm:$0xe]
      %v2587 = vld [vmem:[%s1579 + $0x84] sm:$0xe]
      %v2588 = vld [vmem:[%s1579 + $0x90] sm:$0xe]
      %v2589 = vld [vmem:[%s1579 + $0x9c] sm:$0xe]
      %v2590 = vld [vmem:[%s1579 + $0xa8] sm:$0xe]
      %v2591 = vld [vmem:[%s1579 + $0xb4] sm:$0xe]
      %v2640 = vrot.slane %v2576, 5
      %v2641 = vrot.slane %v2640, 4
      %v2642 = vrot.slane %v1895, 5
      %v2643 = vsel %vm1216, %v2641, %v2642
      %v2644 = vrot.slane %v2642, 4
      %v2645 = vrot.slane %v1896, 5
      %v2646 = vsel %vm1216, %v2644, %v2645
      %v2647 = vrot.slane %v2577, 5
      %v2648 = vrot.slane %v2647, 4
      %v2649 = vrot.slane %v1898, 5
      %v2650 = vsel %vm1216, %v2648, %v2649
      %v2651 = vrot.slane %v2649, 4
      %v2652 = vrot.slane %v1899, 5
      %v2653 = vsel %vm1216, %v2651, %v2652
      %v2654 = vrot.slane %v2578, 5
      %v2655 = vrot.slane %v2654, 4
      %v2656 = vrot.slane %v1901, 5
      %v2657 = vsel %vm1216, %v2655, %v2656
      %v2658 = vrot.slane %v2656, 4
      %v2659 = vrot.slane %v1902, 5
      %v2660 = vsel %vm1216, %v2658, %v2659
      %v2661 = vrot.slane %v2579, 5
      %v2662 = vrot.slane %v2661, 4
      %v2663 = vrot.slane %v1904, 5
      %v2664 = vsel %vm1216, %v2662, %v2663
      %v2665 = vrot.slane %v2663, 4
      %v2666 = vrot.slane %v1905, 5
      %v2667 = vsel %vm1216, %v2665, %v2666
      %v2668 = vrot.slane %v2580, 5
      %v2669 = vrot.slane %v2668, 4
      %v2670 = vrot.slane %v1907, 5
      %v2671 = vsel %vm1216, %v2669, %v2670
      %v2672 = vrot.slane %v2670, 4
      %v2673 = vrot.slane %v1908, 5
      %v2674 = vsel %vm1216, %v2672, %v2673
      %v2675 = vrot.slane %v2581, 5
      %v2676 = vrot.slane %v2675, 4
      %v2677 = vrot.slane %v1910, 5
      %v2678 = vsel %vm1216, %v2676, %v2677
      %v2679 = vrot.slane %v2677, 4
      %v2680 = vrot.slane %v1911, 5
      %v2681 = vsel %vm1216, %v2679, %v2680
      %v2682 = vrot.slane %v2582, 5
      %v2683 = vrot.slane %v2682, 4
      %v2684 = vrot.slane %v1913, 5
      %v2685 = vsel %vm1216, %v2683, %v2684
      %v2686 = vrot.slane %v2684, 4
      %v2687 = vrot.slane %v1914, 5
      %v2688 = vsel %vm1216, %v2686, %v2687
      %v2689 = vrot.slane %v2583, 5
      %v2690 = vrot.slane %v2689, 4
      %v2691 = vrot.slane %v1916, 5
      %v2692 = vsel %vm1216, %v2690, %v2691
      %v2693 = vrot.slane %v2691, 4
      %v2694 = vrot.slane %v1917, 5
      %v2695 = vsel %vm1216, %v2693, %v2694
      %v2696 = vrot.slane %v2584, 5
      %v2697 = vrot.slane %v2696, 4
      %v2698 = vrot.slane %v1919, 5
      %v2699 = vsel %vm1216, %v2697, %v2698
      %v2700 = vrot.slane %v2698, 4
      %v2701 = vrot.slane %v1920, 5
      %v2702 = vsel %vm1216, %v2700, %v2701
      %v2703 = vrot.slane %v2585, 5
      %v2704 = vrot.slane %v2703, 4
      %v2705 = vrot.slane %v1922, 5
      %v2706 = vsel %vm1216, %v2704, %v2705
      %v2707 = vrot.slane %v2705, 4
      %v2708 = vrot.slane %v1923, 5
      %v2709 = vsel %vm1216, %v2707, %v2708
      %v2710 = vrot.slane %v2586, 5
      %v2711 = vrot.slane %v2710, 4
      %v2712 = vrot.slane %v1925, 5
      %v2713 = vsel %vm1216, %v2711, %v2712
      %v2714 = vrot.slane %v2712, 4
      %v2715 = vrot.slane %v1926, 5
      %v2716 = vsel %vm1216, %v2714, %v2715
      %v2717 = vrot.slane %v2587, 5
      %v2718 = vrot.slane %v2717, 4
      %v2719 = vrot.slane %v1928, 5
      %v2720 = vsel %vm1216, %v2718, %v2719
      %v2721 = vrot.slane %v2719, 4
      %v2722 = vrot.slane %v1929, 5
      %v2723 = vsel %vm1216, %v2721, %v2722
      %v2724 = vrot.slane %v2588, 5
      %v2725 = vrot.slane %v2724, 4
      %v2726 = vrot.slane %v1931, 5
      %v2727 = vsel %vm1216, %v2725, %v2726
      %v2728 = vrot.slane %v2726, 4
      %v2729 = vrot.slane %v1932, 5
      %v2730 = vsel %vm1216, %v2728, %v2729
      %v2731 = vrot.slane %v2589, 5
      %v2732 = vrot.slane %v2731, 4
      %v2733 = vrot.slane %v1934, 5
      %v2734 = vsel %vm1216, %v2732, %v2733
      %v2735 = vrot.slane %v2733, 4
      %v2736 = vrot.slane %v1935, 5
      %v2737 = vsel %vm1216, %v2735, %v2736
      %v2738 = vrot.slane %v2590, 5
      %v2739 = vrot.slane %v2738, 4
      %v2740 = vrot.slane %v1937, 5
      %v2741 = vsel %vm1216, %v2739, %v2740
      %v2742 = vrot.slane %v2740, 4
      %v2743 = vrot.slane %v1938, 5
      %v2744 = vsel %vm1216, %v2742, %v2743
      %v2745 = vrot.slane %v2591, 5
      %v2746 = vrot.slane %v2745, 4
      %v2747 = vrot.slane %v1940, 5
      %v2748 = vsel %vm1216, %v2746, %v2747
      %v2749 = vrot.slane %v2747, 4
      %v2750 = vrot.slane %v1941, 5
      %v2751 = vsel %vm1216, %v2749, %v2750
      %s2752 = scalar_lea.vmem %s248, 320
      %v2753 = vld [vmem:[%s2752] sm:$0xf]
      %v2754 = vld [vmem:[%s2752 + $0x4] sm:$0xf]
      %v2755 = vld [vmem:[%s2752 + $0x8] sm:$0xf]
      %v2756 = vld [vmem:[%s2752 + $0xc] sm:$0xf]
      %v2757 = vld [vmem:[%s2752 + $0x10] sm:$0xf]
      %v2758 = vld [vmem:[%s2752 + $0x14] sm:$0xf]
      %v2759 = vld [vmem:[%s2752 + $0x18] sm:$0xf]
      %v2760 = vld [vmem:[%s2752 + $0x1c] sm:$0xf]
      %v2761 = vld [vmem:[%s2752 + $0x20] sm:$0xf]
      %v2762 = vld [vmem:[%s2752 + $0x24] sm:$0xf]
      %v2763 = vld [vmem:[%s2752 + $0x28] sm:$0xf]
      %v2764 = vld [vmem:[%s2752 + $0x2c] sm:$0xf]
      %v2765 = vld [vmem:[%s2752 + $0x30] sm:$0xf]
      %v2766 = vld [vmem:[%s2752 + $0x34] sm:$0xf]
      %v2767 = vld [vmem:[%s2752 + $0x38] sm:$0xf]
      %v2768 = vld [vmem:[%s2752 + $0x3c] sm:$0xf]
      %v2769 = vunpack.c.l.b16 %v2643
      %v2770 = vunpack.c.l.b16 %v2646
      %v2771 = vunpack.c.l.b16 %v2650
      %v2772 = vunpack.c.l.b16 %v2653
      %v2773 = vunpack.c.l.b16 %v2657
      %v2774 = vunpack.c.l.b16 %v2660
      %v2775 = vunpack.c.l.b16 %v2664
      %v2776 = vunpack.c.l.b16 %v2667
      %v2777 = vunpack.c.l.b16 %v2671
      %v2778 = vunpack.c.l.b16 %v2674
      %v2779 = vunpack.c.l.b16 %v2678
      %v2780 = vunpack.c.l.b16 %v2681
      %v2781 = vunpack.c.l.b16 %v2685
      %v2782 = vunpack.c.l.b16 %v2688
      %v2783 = vunpack.c.l.b16 %v2692
      %v2784 = vunpack.c.l.b16 %v2695
      %v2785 = vunpack.c.l.b16 %v2699
      %v2786 = vunpack.c.l.b16 %v2702
      %v2787 = vunpack.c.l.b16 %v2706
      %v2788 = vunpack.c.l.b16 %v2709
      %v2789 = vunpack.c.l.b16 %v2713
      %v2790 = vunpack.c.l.b16 %v2716
      %v2791 = vunpack.c.l.b16 %v2720
      %v2792 = vunpack.c.l.b16 %v2723
      %v2793 = vunpack.c.l.b16 %v2727
      %v2794 = vunpack.c.l.b16 %v2730
      %v2795 = vunpack.c.l.b16 %v2734
      %v2796 = vunpack.c.l.b16 %v2737
      %v2797 = vunpack.c.l.b16 %v2741
      %v2798 = vunpack.c.l.b16 %v2744
      %v2799 = vunpack.c.l.b16 %v2748
      %v2800 = vunpack.c.l.b16 %v2751
      %v2801 = vpack.c.b16 %v2770, %v2769
      %v2802 = vpack.c.b16 %v2772, %v2771
      %v2803 = vpack.c.b16 %v2774, %v2773
      %v2804 = vpack.c.b16 %v2776, %v2775
      %v2805 = vpack.c.b16 %v2778, %v2777
      %v2806 = vpack.c.b16 %v2780, %v2779
      %v2807 = vpack.c.b16 %v2782, %v2781
      %v2808 = vpack.c.b16 %v2784, %v2783
      %v2809 = vpack.c.b16 %v2786, %v2785
      %v2810 = vpack.c.b16 %v2788, %v2787
      %v2811 = vpack.c.b16 %v2790, %v2789
      %v2812 = vpack.c.b16 %v2792, %v2791
      %v2813 = vpack.c.b16 %v2794, %v2793
      %v2814 = vpack.c.b16 %v2796, %v2795
      %v2815 = vpack.c.b16 %v2798, %v2797
      %v2816 = vpack.c.b16 %v2800, %v2799
      %v2849 = vunpack.c.l.b16 %v2753
      %v2850 = vunpack.c.l.b16 %v2754
      %v2851 = vunpack.c.l.b16 %v2755
      %v2852 = vunpack.c.l.b16 %v2756
      %v2853 = vunpack.c.l.b16 %v2757
      %v2854 = vunpack.c.l.b16 %v2758
      %v2855 = vunpack.c.l.b16 %v2759
      %v2856 = vunpack.c.l.b16 %v2760
      %v2857 = vunpack.c.l.b16 %v2761
      %v2858 = vunpack.c.l.b16 %v2762
      %v2859 = vunpack.c.l.b16 %v2763
      %v2860 = vunpack.c.l.b16 %v2764
      %v2861 = vunpack.c.l.b16 %v2765
      %v2862 = vunpack.c.l.b16 %v2766
      %v2863 = vunpack.c.l.b16 %v2767
      %v2864 = vunpack.c.l.b16 %v2768
      %v2865 = vpack.c.b16 %v2850, %v2849
      %v2866 = vpack.c.b16 %v2852, %v2851
      %v2867 = vpack.c.b16 %v2854, %v2853
      %v2868 = vpack.c.b16 %v2856, %v2855
      %v2869 = vpack.c.b16 %v2858, %v2857
      %v2870 = vpack.c.b16 %v2860, %v2859
      %v2871 = vpack.c.b16 %v2862, %v2861
      %v2872 = vpack.c.b16 %v2864, %v2863
      %2881 = vmatpush.bf16.msra.mxu0 %v2872
      %2882 = vmatpush.bf16.msra.mxu0 %v2871
      %2883 = vmatpush.bf16.msra.mxu0 %v2870
      %2884 = vmatpush.bf16.msra.mxu0 %v2869
      %2885 = vmatpush.bf16.msra.mxu0 %v2868
      %2886 = vmatpush.bf16.msra.mxu0 %v2867
      %2887 = vmatpush.bf16.msra.mxu0 %v2866
      %2888 = vmatpush.bf16.msra.mxu0 %v2865
      %2889 = vmatmul.bf16.gmra.mxu0 %v2801
      %v2890 = vpop.f32.mrf.mxu0
      %v2891 = vadd.f32 0.0, %v2890
      %v2892 = vpop.f32.mrf.mxu0
      %v2893 = vadd.f32 0.0, %v2892
      %2894 = vmatmul.bf16.gmra.mxu0 %v2802
      %v2895 = vpop.f32.mrf.mxu0
      %v2896 = vadd.f32 0.0, %v2895
      %v2897 = vpop.f32.mrf.mxu0
      %v2898 = vadd.f32 0.0, %v2897
      %2899 = vmatmul.bf16.gmra.mxu0 %v2803
      %v2900 = vpop.f32.mrf.mxu0
      %v2901 = vadd.f32 0.0, %v2900
      %v2902 = vpop.f32.mrf.mxu0
      %v2903 = vadd.f32 0.0, %v2902
      %2904 = vmatmul.bf16.gmra.mxu0 %v2804
      %v2905 = vpop.f32.mrf.mxu0
      %v2906 = vadd.f32 0.0, %v2905
      %v2907 = vpop.f32.mrf.mxu0
      %v2908 = vadd.f32 0.0, %v2907
      %2909 = vmatmul.bf16.gmra.mxu0 %v2805
      %v2910 = vpop.f32.mrf.mxu0
      %v2911 = vadd.f32 0.0, %v2910
      %v2912 = vpop.f32.mrf.mxu0
      %v2913 = vadd.f32 0.0, %v2912
      %2914 = vmatmul.bf16.gmra.mxu0 %v2806
      %v2915 = vpop.f32.mrf.mxu0
      %v2916 = vadd.f32 0.0, %v2915
      %v2917 = vpop.f32.mrf.mxu0
      %v2918 = vadd.f32 0.0, %v2917
      %2919 = vmatmul.bf16.gmra.mxu0 %v2807
      %v2920 = vpop.f32.mrf.mxu0
      %v2921 = vadd.f32 0.0, %v2920
      %v2922 = vpop.f32.mrf.mxu0
      %v2923 = vadd.f32 0.0, %v2922
      %2924 = vmatmul.bf16.gmra.mxu0 %v2808
      %v2925 = vpop.f32.mrf.mxu0
      %v2926 = vadd.f32 0.0, %v2925
      %v2927 = vpop.f32.mrf.mxu0
      %v2928 = vadd.f32 0.0, %v2927
      %2929 = vmatmul.bf16.gmra.mxu0 %v2809
      %v2930 = vpop.f32.mrf.mxu0
      %v2931 = vadd.f32 0.0, %v2930
      %v2932 = vpop.f32.mrf.mxu0
      %v2933 = vadd.f32 0.0, %v2932
      %2934 = vmatmul.bf16.gmra.mxu0 %v2810
      %v2935 = vpop.f32.mrf.mxu0
      %v2936 = vadd.f32 0.0, %v2935
      %v2937 = vpop.f32.mrf.mxu0
      %v2938 = vadd.f32 0.0, %v2937
      %2939 = vmatmul.bf16.gmra.mxu0 %v2811
      %v2940 = vpop.f32.mrf.mxu0
      %v2941 = vadd.f32 0.0, %v2940
      %v2942 = vpop.f32.mrf.mxu0
      %v2943 = vadd.f32 0.0, %v2942
      %2944 = vmatmul.bf16.gmra.mxu0 %v2812
      %v2945 = vpop.f32.mrf.mxu0
      %v2946 = vadd.f32 0.0, %v2945
      %v2947 = vpop.f32.mrf.mxu0
      %v2948 = vadd.f32 0.0, %v2947
      %2949 = vmatmul.bf16.gmra.mxu0 %v2813
      %v2950 = vpop.f32.mrf.mxu0
      %v2951 = vadd.f32 0.0, %v2950
      %v2952 = vpop.f32.mrf.mxu0
      %v2953 = vadd.f32 0.0, %v2952
      %2954 = vmatmul.bf16.gmra.mxu0 %v2814
      %v2955 = vpop.f32.mrf.mxu0
      %v2956 = vadd.f32 0.0, %v2955
      %v2957 = vpop.f32.mrf.mxu0
      %v2958 = vadd.f32 0.0, %v2957
      %2959 = vmatmul.bf16.gmra.mxu0 %v2815
      %v2960 = vpop.f32.mrf.mxu0
      %v2961 = vadd.f32 0.0, %v2960
      %v2962 = vpop.f32.mrf.mxu0
      %v2963 = vadd.f32 0.0, %v2962
      %2964 = vmatmul.bf16.gmra.mxu0 %v2816
      %v2965 = vpop.f32.mrf.mxu0
      %v2966 = vadd.f32 0.0, %v2965
      %v2967 = vpop.f32.mrf.mxu0
      %v2968 = vadd.f32 0.0, %v2967
      %2969 = vdwg.mxu0
      %v2970 = vadd.f32 %v2544, %v2891
      %v2971 = vadd.f32 %v2545, %v2893
      %v2972 = vadd.f32 %v2546, %v2896
      %v2973 = vadd.f32 %v2547, %v2898
      %v2974 = vadd.f32 %v2548, %v2901
      %v2975 = vadd.f32 %v2549, %v2903
      %v2976 = vadd.f32 %v2550, %v2906
      %v2977 = vadd.f32 %v2551, %v2908
      %v2978 = vadd.f32 %v2552, %v2911
      %v2979 = vadd.f32 %v2553, %v2913
      %v2980 = vadd.f32 %v2554, %v2916
      %v2981 = vadd.f32 %v2555, %v2918
      %v2982 = vadd.f32 %v2556, %v2921
      %v2983 = vadd.f32 %v2557, %v2923
      %v2984 = vadd.f32 %v2558, %v2926
      %v2985 = vadd.f32 %v2559, %v2928
      %v2986 = vadd.f32 %v2560, %v2931
      %v2987 = vadd.f32 %v2561, %v2933
      %v2988 = vadd.f32 %v2562, %v2936
      %v2989 = vadd.f32 %v2563, %v2938
      %v2990 = vadd.f32 %v2564, %v2941
      %v2991 = vadd.f32 %v2565, %v2943
      %v2992 = vadd.f32 %v2566, %v2946
      %v2993 = vadd.f32 %v2567, %v2948
      %v2994 = vadd.f32 %v2568, %v2951
      %v2995 = vadd.f32 %v2569, %v2953
      %v2996 = vadd.f32 %v2570, %v2956
      %v2997 = vadd.f32 %v2571, %v2958
      %v2998 = vadd.f32 %v2572, %v2961
      %v2999 = vadd.f32 %v2573, %v2963
      %v3000 = vadd.f32 %v2574, %v2966
      %v3001 = vadd.f32 %v2575, %v2968
      %s3002 = scalar_lea.vmem %s244, 24
      %v3003 = vld [vmem:[%s3002] sm:$0xf]
      %v3004 = vld [vmem:[%s3002 + $0x4] sm:$0xf]
      %v3005 = vld [vmem:[%s3002 + $0xc] sm:$0xf]
      %v3006 = vld [vmem:[%s3002 + $0x10] sm:$0xf]
      %v3007 = vld [vmem:[%s3002 + $0x18] sm:$0xf]
      %v3008 = vld [vmem:[%s3002 + $0x1c] sm:$0xf]
      %v3009 = vld [vmem:[%s3002 + $0x24] sm:$0xf]
      %v3010 = vld [vmem:[%s3002 + $0x28] sm:$0xf]
      %v3011 = vld [vmem:[%s3002 + $0x30] sm:$0xf]
      %v3012 = vld [vmem:[%s3002 + $0x34] sm:$0xf]
      %v3013 = vld [vmem:[%s3002 + $0x3c] sm:$0xf]
      %v3014 = vld [vmem:[%s3002 + $0x40] sm:$0xf]
      %v3015 = vld [vmem:[%s3002 + $0x48] sm:$0xf]
      %v3016 = vld [vmem:[%s3002 + $0x4c] sm:$0xf]
      %v3017 = vld [vmem:[%s3002 + $0x54] sm:$0xf]
      %v3018 = vld [vmem:[%s3002 + $0x58] sm:$0xf]
      %v3019 = vld [vmem:[%s3002 + $0x60] sm:$0xf]
      %v3020 = vld [vmem:[%s3002 + $0x64] sm:$0xf]
      %v3021 = vld [vmem:[%s3002 + $0x6c] sm:$0xf]
      %v3022 = vld [vmem:[%s3002 + $0x70] sm:$0xf]
      %v3023 = vld [vmem:[%s3002 + $0x78] sm:$0xf]
      %v3024 = vld [vmem:[%s3002 + $0x7c] sm:$0xf]
      %v3025 = vld [vmem:[%s3002 + $0x84] sm:$0xf]
      %v3026 = vld [vmem:[%s3002 + $0x88] sm:$0xf]
      %v3027 = vld [vmem:[%s3002 + $0x90] sm:$0xf]
      %v3028 = vld [vmem:[%s3002 + $0x94] sm:$0xf]
      %v3029 = vld [vmem:[%s3002 + $0x9c] sm:$0xf]
      %v3030 = vld [vmem:[%s3002 + $0xa0] sm:$0xf]
      %v3031 = vld [vmem:[%s3002 + $0xa8] sm:$0xf]
      %v3032 = vld [vmem:[%s3002 + $0xac] sm:$0xf]
      %v3033 = vld [vmem:[%s3002 + $0xb4] sm:$0xf]
      %v3034 = vld [vmem:[%s3002 + $0xb8] sm:$0xf]
      %s3035 = scalar_lea.vmem %s248, 384
      %v3036 = vld [vmem:[%s3035] sm:$0xf]
      %v3037 = vld [vmem:[%s3035 + $0x4] sm:$0xf]
      %v3038 = vld [vmem:[%s3035 + $0x8] sm:$0xf]
      %v3039 = vld [vmem:[%s3035 + $0xc] sm:$0xf]
      %v3040 = vld [vmem:[%s3035 + $0x10] sm:$0xf]
      %v3041 = vld [vmem:[%s3035 + $0x14] sm:$0xf]
      %v3042 = vld [vmem:[%s3035 + $0x18] sm:$0xf]
      %v3043 = vld [vmem:[%s3035 + $0x1c] sm:$0xf]
      %v3044 = vld [vmem:[%s3035 + $0x20] sm:$0xf]
      %v3045 = vld [vmem:[%s3035 + $0x24] sm:$0xf]
      %v3046 = vld [vmem:[%s3035 + $0x28] sm:$0xf]
      %v3047 = vld [vmem:[%s3035 + $0x2c] sm:$0xf]
      %v3048 = vld [vmem:[%s3035 + $0x30] sm:$0xf]
      %v3049 = vld [vmem:[%s3035 + $0x34] sm:$0xf]
      %v3050 = vld [vmem:[%s3035 + $0x38] sm:$0xf]
      %v3051 = vld [vmem:[%s3035 + $0x3c] sm:$0xf]
      %v3084 = vunpack.c.l.b16 %v3003
      %v3085 = vunpack.c.l.b16 %v3004
      %v3086 = vunpack.c.l.b16 %v3005
      %v3087 = vunpack.c.l.b16 %v3006
      %v3088 = vunpack.c.l.b16 %v3007
      %v3089 = vunpack.c.l.b16 %v3008
      %v3090 = vunpack.c.l.b16 %v3009
      %v3091 = vunpack.c.l.b16 %v3010
      %v3092 = vunpack.c.l.b16 %v3011
      %v3093 = vunpack.c.l.b16 %v3012
      %v3094 = vunpack.c.l.b16 %v3013
      %v3095 = vunpack.c.l.b16 %v3014
      %v3096 = vunpack.c.l.b16 %v3015
      %v3097 = vunpack.c.l.b16 %v3016
      %v3098 = vunpack.c.l.b16 %v3017
      %v3099 = vunpack.c.l.b16 %v3018
      %v3100 = vunpack.c.l.b16 %v3019
      %v3101 = vunpack.c.l.b16 %v3020
      %v3102 = vunpack.c.l.b16 %v3021
      %v3103 = vunpack.c.l.b16 %v3022
      %v3104 = vunpack.c.l.b16 %v3023
      %v3105 = vunpack.c.l.b16 %v3024
      %v3106 = vunpack.c.l.b16 %v3025
      %v3107 = vunpack.c.l.b16 %v3026
      %v3108 = vunpack.c.l.b16 %v3027
      %v3109 = vunpack.c.l.b16 %v3028
      %v3110 = vunpack.c.l.b16 %v3029
      %v3111 = vunpack.c.l.b16 %v3030
      %v3112 = vunpack.c.l.b16 %v3031
      %v3113 = vunpack.c.l.b16 %v3032
      %v3114 = vunpack.c.l.b16 %v3033
      %v3115 = vunpack.c.l.b16 %v3034
      %v3116 = vpack.c.b16 %v3085, %v3084
      %v3117 = vpack.c.b16 %v3087, %v3086
      %v3118 = vpack.c.b16 %v3089, %v3088
      %v3119 = vpack.c.b16 %v3091, %v3090
      %v3120 = vpack.c.b16 %v3093, %v3092
      %v3121 = vpack.c.b16 %v3095, %v3094
      %v3122 = vpack.c.b16 %v3097, %v3096
      %v3123 = vpack.c.b16 %v3099, %v3098
      %v3124 = vpack.c.b16 %v3101, %v3100
      %v3125 = vpack.c.b16 %v3103, %v3102
      %v3126 = vpack.c.b16 %v3105, %v3104
      %v3127 = vpack.c.b16 %v3107, %v3106
      %v3128 = vpack.c.b16 %v3109, %v3108
      %v3129 = vpack.c.b16 %v3111, %v3110
      %v3130 = vpack.c.b16 %v3113, %v3112
      %v3131 = vpack.c.b16 %v3115, %v3114
      %v3164 = vunpack.c.l.b16 %v3036
      %v3165 = vunpack.c.l.b16 %v3037
      %v3166 = vunpack.c.l.b16 %v3038
      %v3167 = vunpack.c.l.b16 %v3039
      %v3168 = vunpack.c.l.b16 %v3040
      %v3169 = vunpack.c.l.b16 %v3041
      %v3170 = vunpack.c.l.b16 %v3042
      %v3171 = vunpack.c.l.b16 %v3043
      %v3172 = vunpack.c.l.b16 %v3044
      %v3173 = vunpack.c.l.b16 %v3045
      %v3174 = vunpack.c.l.b16 %v3046
      %v3175 = vunpack.c.l.b16 %v3047
      %v3176 = vunpack.c.l.b16 %v3048
      %v3177 = vunpack.c.l.b16 %v3049
      %v3178 = vunpack.c.l.b16 %v3050
      %v3179 = vunpack.c.l.b16 %v3051
      %v3180 = vpack.c.b16 %v3165, %v3164
      %v3181 = vpack.c.b16 %v3167, %v3166
      %v3182 = vpack.c.b16 %v3169, %v3168
      %v3183 = vpack.c.b16 %v3171, %v3170
      %v3184 = vpack.c.b16 %v3173, %v3172
      %v3185 = vpack.c.b16 %v3175, %v3174
      %v3186 = vpack.c.b16 %v3177, %v3176
      %v3187 = vpack.c.b16 %v3179, %v3178
      %3196 = vmatpush.bf16.msra.mxu0 %v3187
      %3197 = vmatpush.bf16.msra.mxu0 %v3186
      %3198 = vmatpush.bf16.msra.mxu0 %v3185
      %3199 = vmatpush.bf16.msra.mxu0 %v3184
      %3200 = vmatpush.bf16.msra.mxu0 %v3183
      %3201 = vmatpush.bf16.msra.mxu0 %v3182
      %3202 = vmatpush.bf16.msra.mxu0 %v3181
      %3203 = vmatpush.bf16.msra.mxu0 %v3180
      %3204 = vmatmul.bf16.gmra.mxu0 %v3116
      %v3205 = vpop.f32.mrf.mxu0
      %v3206 = vadd.f32 0.0, %v3205
      %v3207 = vpop.f32.mrf.mxu0
      %v3208 = vadd.f32 0.0, %v3207
      %3209 = vmatmul.bf16.gmra.mxu0 %v3117
      %v3210 = vpop.f32.mrf.mxu0
      %v3211 = vadd.f32 0.0, %v3210
      %v3212 = vpop.f32.mrf.mxu0
      %v3213 = vadd.f32 0.0, %v3212
      %3214 = vmatmul.bf16.gmra.mxu0 %v3118
      %v3215 = vpop.f32.mrf.mxu0
      %v3216 = vadd.f32 0.0, %v3215
      %v3217 = vpop.f32.mrf.mxu0
      %v3218 = vadd.f32 0.0, %v3217
      %3219 = vmatmul.bf16.gmra.mxu0 %v3119
      %v3220 = vpop.f32.mrf.mxu0
      %v3221 = vadd.f32 0.0, %v3220
      %v3222 = vpop.f32.mrf.mxu0
      %v3223 = vadd.f32 0.0, %v3222
      %3224 = vmatmul.bf16.gmra.mxu0 %v3120
      %v3225 = vpop.f32.mrf.mxu0
      %v3226 = vadd.f32 0.0, %v3225
      %v3227 = vpop.f32.mrf.mxu0
      %v3228 = vadd.f32 0.0, %v3227
      %3229 = vmatmul.bf16.gmra.mxu0 %v3121
      %v3230 = vpop.f32.mrf.mxu0
      %v3231 = vadd.f32 0.0, %v3230
      %v3232 = vpop.f32.mrf.mxu0
      %v3233 = vadd.f32 0.0, %v3232
      %3234 = vmatmul.bf16.gmra.mxu0 %v3122
      %v3235 = vpop.f32.mrf.mxu0
      %v3236 = vadd.f32 0.0, %v3235
      %v3237 = vpop.f32.mrf.mxu0
      %v3238 = vadd.f32 0.0, %v3237
      %3239 = vmatmul.bf16.gmra.mxu0 %v3123
      %v3240 = vpop.f32.mrf.mxu0
      %v3241 = vadd.f32 0.0, %v3240
      %v3242 = vpop.f32.mrf.mxu0
      %v3243 = vadd.f32 0.0, %v3242
      %3244 = vmatmul.bf16.gmra.mxu0 %v3124
      %v3245 = vpop.f32.mrf.mxu0
      %v3246 = vadd.f32 0.0, %v3245
      %v3247 = vpop.f32.mrf.mxu0
      %v3248 = vadd.f32 0.0, %v3247
      %3249 = vmatmul.bf16.gmra.mxu0 %v3125
      %v3250 = vpop.f32.mrf.mxu0
      %v3251 = vadd.f32 0.0, %v3250
      %v3252 = vpop.f32.mrf.mxu0
      %v3253 = vadd.f32 0.0, %v3252
      %3254 = vmatmul.bf16.gmra.mxu0 %v3126
      %v3255 = vpop.f32.mrf.mxu0
      %v3256 = vadd.f32 0.0, %v3255
      %v3257 = vpop.f32.mrf.mxu0
      %v3258 = vadd.f32 0.0, %v3257
      %3259 = vmatmul.bf16.gmra.mxu0 %v3127
      %v3260 = vpop.f32.mrf.mxu0
      %v3261 = vadd.f32 0.0, %v3260
      %v3262 = vpop.f32.mrf.mxu0
      %v3263 = vadd.f32 0.0, %v3262
      %3264 = vmatmul.bf16.gmra.mxu0 %v3128
      %v3265 = vpop.f32.mrf.mxu0
      %v3266 = vadd.f32 0.0, %v3265
      %v3267 = vpop.f32.mrf.mxu0
      %v3268 = vadd.f32 0.0, %v3267
      %3269 = vmatmul.bf16.gmra.mxu0 %v3129
      %v3270 = vpop.f32.mrf.mxu0
      %v3271 = vadd.f32 0.0, %v3270
      %v3272 = vpop.f32.mrf.mxu0
      %v3273 = vadd.f32 0.0, %v3272
      %3274 = vmatmul.bf16.gmra.mxu0 %v3130
      %v3275 = vpop.f32.mrf.mxu0
      %v3276 = vadd.f32 0.0, %v3275
      %v3277 = vpop.f32.mrf.mxu0
      %v3278 = vadd.f32 0.0, %v3277
      %3279 = vmatmul.bf16.gmra.mxu0 %v3131
      %v3280 = vpop.f32.mrf.mxu0
      %v3281 = vadd.f32 0.0, %v3280
      %v3282 = vpop.f32.mrf.mxu0
      %v3283 = vadd.f32 0.0, %v3282
      %3284 = vdwg.mxu0
      %v3285 = vadd.f32 %v2970, %v3206
      %v3286 = vadd.f32 %v2971, %v3208
      %v3287 = vadd.f32 %v2972, %v3211
      %v3288 = vadd.f32 %v2973, %v3213
      %v3289 = vadd.f32 %v2974, %v3216
      %v3290 = vadd.f32 %v2975, %v3218
      %v3291 = vadd.f32 %v2976, %v3221
      %v3292 = vadd.f32 %v2977, %v3223
      %v3293 = vadd.f32 %v2978, %v3226
      %v3294 = vadd.f32 %v2979, %v3228
      %v3295 = vadd.f32 %v2980, %v3231
      %v3296 = vadd.f32 %v2981, %v3233
      %v3297 = vadd.f32 %v2982, %v3236
      %v3298 = vadd.f32 %v2983, %v3238
      %v3299 = vadd.f32 %v2984, %v3241
      %v3300 = vadd.f32 %v2985, %v3243
      %v3301 = vadd.f32 %v2986, %v3246
      %v3302 = vadd.f32 %v2987, %v3248
      %v3303 = vadd.f32 %v2988, %v3251
      %v3304 = vadd.f32 %v2989, %v3253
      %v3305 = vadd.f32 %v2990, %v3256
      %v3306 = vadd.f32 %v2991, %v3258
      %v3307 = vadd.f32 %v2992, %v3261
      %v3308 = vadd.f32 %v2993, %v3263
      %v3309 = vadd.f32 %v2994, %v3266
      %v3310 = vadd.f32 %v2995, %v3268
      %v3311 = vadd.f32 %v2996, %v3271
      %v3312 = vadd.f32 %v2997, %v3273
      %v3313 = vadd.f32 %v2998, %v3276
      %v3314 = vadd.f32 %v2999, %v3278
      %v3315 = vadd.f32 %v3000, %v3281
      %v3316 = vadd.f32 %v3001, %v3283
      %v3317 = vld [vmem:[%s3002] sm:$0xf]
      %v3318 = vld [vmem:[%s3002 + $0x4] sm:$0xf]
      %v3319 = vld [vmem:[%s3002 + $0x8] sm:$0x1]
      %v3320 = vld [vmem:[%s3002 + $0xc] sm:$0xf]
      %v3321 = vld [vmem:[%s3002 + $0x10] sm:$0xf]
      %v3322 = vld [vmem:[%s3002 + $0x14] sm:$0x1]
      %v3323 = vld [vmem:[%s3002 + $0x18] sm:$0xf]
      %v3324 = vld [vmem:[%s3002 + $0x1c] sm:$0xf]
      %v3325 = vld [vmem:[%s3002 + $0x20] sm:$0x1]
      %v3326 = vld [vmem:[%s3002 + $0x24] sm:$0xf]
      %v3327 = vld [vmem:[%s3002 + $0x28] sm:$0xf]
      %v3328 = vld [vmem:[%s3002 + $0x2c] sm:$0x1]
      %v3329 = vld [vmem:[%s3002 + $0x30] sm:$0xf]
      %v3330 = vld [vmem:[%s3002 + $0x34] sm:$0xf]
      %v3331 = vld [vmem:[%s3002 + $0x38] sm:$0x1]
      %v3332 = vld [vmem:[%s3002 + $0x3c] sm:$0xf]
      %v3333 = vld [vmem:[%s3002 + $0x40] sm:$0xf]
      %v3334 = vld [vmem:[%s3002 + $0x44] sm:$0x1]
      %v3335 = vld [vmem:[%s3002 + $0x48] sm:$0xf]
      %v3336 = vld [vmem:[%s3002 + $0x4c] sm:$0xf]
      %v3337 = vld [vmem:[%s3002 + $0x50] sm:$0x1]
      %v3338 = vld [vmem:[%s3002 + $0x54] sm:$0xf]
      %v3339 = vld [vmem:[%s3002 + $0x58] sm:$0xf]
      %v3340 = vld [vmem:[%s3002 + $0x5c] sm:$0x1]
      %v3341 = vld [vmem:[%s3002 + $0x60] sm:$0xf]
      %v3342 = vld [vmem:[%s3002 + $0x64] sm:$0xf]
      %v3343 = vld [vmem:[%s3002 + $0x68] sm:$0x1]
      %v3344 = vld [vmem:[%s3002 + $0x6c] sm:$0xf]
      %v3345 = vld [vmem:[%s3002 + $0x70] sm:$0xf]
      %v3346 = vld [vmem:[%s3002 + $0x74] sm:$0x1]
      %v3347 = vld [vmem:[%s3002 + $0x78] sm:$0xf]
      %v3348 = vld [vmem:[%s3002 + $0x7c] sm:$0xf]
      %v3349 = vld [vmem:[%s3002 + $0x80] sm:$0x1]
      %v3350 = vld [vmem:[%s3002 + $0x84] sm:$0xf]
      %v3351 = vld [vmem:[%s3002 + $0x88] sm:$0xf]
      %v3352 = vld [vmem:[%s3002 + $0x8c] sm:$0x1]
      %v3353 = vld [vmem:[%s3002 + $0x90] sm:$0xf]
      %v3354 = vld [vmem:[%s3002 + $0x94] sm:$0xf]
      %v3355 = vld [vmem:[%s3002 + $0x98] sm:$0x1]
      %v3356 = vld [vmem:[%s3002 + $0x9c] sm:$0xf]
      %v3357 = vld [vmem:[%s3002 + $0xa0] sm:$0xf]
      %v3358 = vld [vmem:[%s3002 + $0xa4] sm:$0x1]
      %v3359 = vld [vmem:[%s3002 + $0xa8] sm:$0xf]
      %v3360 = vld [vmem:[%s3002 + $0xac] sm:$0xf]
      %v3361 = vld [vmem:[%s3002 + $0xb0] sm:$0x1]
      %v3362 = vld [vmem:[%s3002 + $0xb4] sm:$0xf]
      %v3363 = vld [vmem:[%s3002 + $0xb8] sm:$0xf]
      %v3364 = vld [vmem:[%s3002 + $0xbc] sm:$0x1]
      %v3366 = vshrl.u32 %v3317, 16
      %v3368 = vrot.slane %v3366, 4
      %v3369 = vshll.u32 %v3317, 16
      %v3371 = vrot.slane %v3369, 5
      %v3372 = vor.u32 %v3368, %v3371
      %v3373 = vrot.slane %v3372, 4
      %v3375 = vshll.u32 %v3318, 16
      %v3377 = vrot.slane %v3375, 5
      %v3378 = vsel %vm330, %v3373, %v3377
      %v3379 = vshrl.u32 %v3318, 16
      %v3381 = vrot.slane %v3379, 4
      %v3382 = vor.u32 %v3381, %v3377
      %v3383 = vrot.slane %v3382, 4
      %v3385 = vshll.u32 %v3319, 16
      %v3387 = vrot.slane %v3385, 5
      %v3388 = vsel %vm330, %v3383, %v3387
      %v3390 = vshrl.u32 %v3320, 16
      %v3392 = vrot.slane %v3390, 4
      %v3393 = vshll.u32 %v3320, 16
      %v3395 = vrot.slane %v3393, 5
      %v3396 = vor.u32 %v3392, %v3395
      %v3397 = vrot.slane %v3396, 4
      %v3399 = vshll.u32 %v3321, 16
      %v3401 = vrot.slane %v3399, 5
      %v3402 = vsel %vm330, %v3397, %v3401
      %v3403 = vshrl.u32 %v3321, 16
      %v3405 = vrot.slane %v3403, 4
      %v3406 = vor.u32 %v3405, %v3401
      %v3407 = vrot.slane %v3406, 4
      %v3409 = vshll.u32 %v3322, 16
      %v3411 = vrot.slane %v3409, 5
      %v3412 = vsel %vm330, %v3407, %v3411
      %v3414 = vshrl.u32 %v3323, 16
      %v3416 = vrot.slane %v3414, 4
      %v3417 = vshll.u32 %v3323, 16
      %v3419 = vrot.slane %v3417, 5
      %v3420 = vor.u32 %v3416, %v3419
      %v3421 = vrot.slane %v3420, 4
      %v3423 = vshll.u32 %v3324, 16
      %v3425 = vrot.slane %v3423, 5
      %v3426 = vsel %vm330, %v3421, %v3425
      %v3427 = vshrl.u32 %v3324, 16
      %v3429 = vrot.slane %v3427, 4
      %v3430 = vor.u32 %v3429, %v3425
      %v3431 = vrot.slane %v3430, 4
      %v3433 = vshll.u32 %v3325, 16
      %v3435 = vrot.slane %v3433, 5
      %v3436 = vsel %vm330, %v3431, %v3435
      %v3438 = vshrl.u32 %v3326, 16
      %v3440 = vrot.slane %v3438, 4
      %v3441 = vshll.u32 %v3326, 16
      %v3443 = vrot.slane %v3441, 5
      %v3444 = vor.u32 %v3440, %v3443
      %v3445 = vrot.slane %v3444, 4
      %v3447 = vshll.u32 %v3327, 16
      %v3449 = vrot.slane %v3447, 5
      %v3450 = vsel %vm330, %v3445, %v3449
      %v3451 = vshrl.u32 %v3327, 16
      %v3453 = vrot.slane %v3451, 4
      %v3454 = vor.u32 %v3453, %v3449
      %v3455 = vrot.slane %v3454, 4
      %v3457 = vshll.u32 %v3328, 16
      %v3459 = vrot.slane %v3457, 5
      %v3460 = vsel %vm330, %v3455, %v3459
      %v3462 = vshrl.u32 %v3329, 16
      %v3464 = vrot.slane %v3462, 4
      %v3465 = vshll.u32 %v3329, 16
      %v3467 = vrot.slane %v3465, 5
      %v3468 = vor.u32 %v3464, %v3467
      %v3469 = vrot.slane %v3468, 4
      %v3471 = vshll.u32 %v3330, 16
      %v3473 = vrot.slane %v3471, 5
      %v3474 = vsel %vm330, %v3469, %v3473
      %v3475 = vshrl.u32 %v3330, 16
      %v3477 = vrot.slane %v3475, 4
      %v3478 = vor.u32 %v3477, %v3473
      %v3479 = vrot.slane %v3478, 4
      %v3481 = vshll.u32 %v3331, 16
      %v3483 = vrot.slane %v3481, 5
      %v3484 = vsel %vm330, %v3479, %v3483
      %v3486 = vshrl.u32 %v3332, 16
      %v3488 = vrot.slane %v3486, 4
      %v3489 = vshll.u32 %v3332, 16
      %v3491 = vrot.slane %v3489, 5
      %v3492 = vor.u32 %v3488, %v3491
      %v3493 = vrot.slane %v3492, 4
      %v3495 = vshll.u32 %v3333, 16
      %v3497 = vrot.slane %v3495, 5
      %v3498 = vsel %vm330, %v3493, %v3497
      %v3499 = vshrl.u32 %v3333, 16
      %v3501 = vrot.slane %v3499, 4
      %v3502 = vor.u32 %v3501, %v3497
      %v3503 = vrot.slane %v3502, 4
      %v3505 = vshll.u32 %v3334, 16
      %v3507 = vrot.slane %v3505, 5
      %v3508 = vsel %vm330, %v3503, %v3507
      %v3510 = vshrl.u32 %v3335, 16
      %v3512 = vrot.slane %v3510, 4
      %v3513 = vshll.u32 %v3335, 16
      %v3515 = vrot.slane %v3513, 5
      %v3516 = vor.u32 %v3512, %v3515
      %v3517 = vrot.slane %v3516, 4
      %v3519 = vshll.u32 %v3336, 16
      %v3521 = vrot.slane %v3519, 5
      %v3522 = vsel %vm330, %v3517, %v3521
      %v3523 = vshrl.u32 %v3336, 16
      %v3525 = vrot.slane %v3523, 4
      %v3526 = vor.u32 %v3525, %v3521
      %v3527 = vrot.slane %v3526, 4
      %v3529 = vshll.u32 %v3337, 16
      %v3531 = vrot.slane %v3529, 5
      %v3532 = vsel %vm330, %v3527, %v3531
      %v3534 = vshrl.u32 %v3338, 16
      %v3536 = vrot.slane %v3534, 4
      %v3537 = vshll.u32 %v3338, 16
      %v3539 = vrot.slane %v3537, 5
      %v3540 = vor.u32 %v3536, %v3539
      %v3541 = vrot.slane %v3540, 4
      %v3543 = vshll.u32 %v3339, 16
      %v3545 = vrot.slane %v3543, 5
      %v3546 = vsel %vm330, %v3541, %v3545
      %v3547 = vshrl.u32 %v3339, 16
      %v3549 = vrot.slane %v3547, 4
      %v3550 = vor.u32 %v3549, %v3545
      %v3551 = vrot.slane %v3550, 4
      %v3553 = vshll.u32 %v3340, 16
      %v3555 = vrot.slane %v3553, 5
      %v3556 = vsel %vm330, %v3551, %v3555
      %v3558 = vshrl.u32 %v3341, 16
      %v3560 = vrot.slane %v3558, 4
      %v3561 = vshll.u32 %v3341, 16
      %v3563 = vrot.slane %v3561, 5
      %v3564 = vor.u32 %v3560, %v3563
      %v3565 = vrot.slane %v3564, 4
      %v3567 = vshll.u32 %v3342, 16
      %v3569 = vrot.slane %v3567, 5
      %v3570 = vsel %vm330, %v3565, %v3569
      %v3571 = vshrl.u32 %v3342, 16
      %v3573 = vrot.slane %v3571, 4
      %v3574 = vor.u32 %v3573, %v3569
      %v3575 = vrot.slane %v3574, 4
      %v3577 = vshll.u32 %v3343, 16
      %v3579 = vrot.slane %v3577, 5
      %v3580 = vsel %vm330, %v3575, %v3579
      %v3582 = vshrl.u32 %v3344, 16
      %v3584 = vrot.slane %v3582, 4
      %v3585 = vshll.u32 %v3344, 16
      %v3587 = vrot.slane %v3585, 5
      %v3588 = vor.u32 %v3584, %v3587
      %v3589 = vrot.slane %v3588, 4
      %v3591 = vshll.u32 %v3345, 16
      %v3593 = vrot.slane %v3591, 5
      %v3594 = vsel %vm330, %v3589, %v3593
      %v3595 = vshrl.u32 %v3345, 16
      %v3597 = vrot.slane %v3595, 4
      %v3598 = vor.u32 %v3597, %v3593
      %v3599 = vrot.slane %v3598, 4
      %v3601 = vshll.u32 %v3346, 16
      %v3603 = vrot.slane %v3601, 5
      %v3604 = vsel %vm330, %v3599, %v3603
      %v3606 = vshrl.u32 %v3347, 16
      %v3608 = vrot.slane %v3606, 4
      %v3609 = vshll.u32 %v3347, 16
      %v3611 = vrot.slane %v3609, 5
      %v3612 = vor.u32 %v3608, %v3611
      %v3613 = vrot.slane %v3612, 4
      %v3615 = vshll.u32 %v3348, 16
      %v3617 = vrot.slane %v3615, 5
      %v3618 = vsel %vm330, %v3613, %v3617
      %v3619 = vshrl.u32 %v3348, 16
      %v3621 = vrot.slane %v3619, 4
      %v3622 = vor.u32 %v3621, %v3617
      %v3623 = vrot.slane %v3622, 4
      %v3625 = vshll.u32 %v3349, 16
      %v3627 = vrot.slane %v3625, 5
      %v3628 = vsel %vm330, %v3623, %v3627
      %v3630 = vshrl.u32 %v3350, 16
      %v3632 = vrot.slane %v3630, 4
      %v3633 = vshll.u32 %v3350, 16
      %v3635 = vrot.slane %v3633, 5
      %v3636 = vor.u32 %v3632, %v3635
      %v3637 = vrot.slane %v3636, 4
      %v3639 = vshll.u32 %v3351, 16
      %v3641 = vrot.slane %v3639, 5
      %v3642 = vsel %vm330, %v3637, %v3641
      %v3643 = vshrl.u32 %v3351, 16
      %v3645 = vrot.slane %v3643, 4
      %v3646 = vor.u32 %v3645, %v3641
      %v3647 = vrot.slane %v3646, 4
      %v3649 = vshll.u32 %v3352, 16
      %v3651 = vrot.slane %v3649, 5
      %v3652 = vsel %vm330, %v3647, %v3651
      %v3654 = vshrl.u32 %v3353, 16
      %v3656 = vrot.slane %v3654, 4
      %v3657 = vshll.u32 %v3353, 16
      %v3659 = vrot.slane %v3657, 5
      %v3660 = vor.u32 %v3656, %v3659
      %v3661 = vrot.slane %v3660, 4
      %v3663 = vshll.u32 %v3354, 16
      %v3665 = vrot.slane %v3663, 5
      %v3666 = vsel %vm330, %v3661, %v3665
      %v3667 = vshrl.u32 %v3354, 16
      %v3669 = vrot.slane %v3667, 4
      %v3670 = vor.u32 %v3669, %v3665
      %v3671 = vrot.slane %v3670, 4
      %v3673 = vshll.u32 %v3355, 16
      %v3675 = vrot.slane %v3673, 5
      %v3676 = vsel %vm330, %v3671, %v3675
      %v3678 = vshrl.u32 %v3356, 16
      %v3680 = vrot.slane %v3678, 4
      %v3681 = vshll.u32 %v3356, 16
      %v3683 = vrot.slane %v3681, 5
      %v3684 = vor.u32 %v3680, %v3683
      %v3685 = vrot.slane %v3684, 4
      %v3687 = vshll.u32 %v3357, 16
      %v3689 = vrot.slane %v3687, 5
      %v3690 = vsel %vm330, %v3685, %v3689
      %v3691 = vshrl.u32 %v3357, 16
      %v3693 = vrot.slane %v3691, 4
      %v3694 = vor.u32 %v3693, %v3689
      %v3695 = vrot.slane %v3694, 4
      %v3697 = vshll.u32 %v3358, 16
      %v3699 = vrot.slane %v3697, 5
      %v3700 = vsel %vm330, %v3695, %v3699
      %v3702 = vshrl.u32 %v3359, 16
      %v3704 = vrot.slane %v3702, 4
      %v3705 = vshll.u32 %v3359, 16
      %v3707 = vrot.slane %v3705, 5
      %v3708 = vor.u32 %v3704, %v3707
      %v3709 = vrot.slane %v3708, 4
      %v3711 = vshll.u32 %v3360, 16
      %v3713 = vrot.slane %v3711, 5
      %v3714 = vsel %vm330, %v3709, %v3713
      %v3715 = vshrl.u32 %v3360, 16
      %v3717 = vrot.slane %v3715, 4
      %v3718 = vor.u32 %v3717, %v3713
      %v3719 = vrot.slane %v3718, 4
      %v3721 = vshll.u32 %v3361, 16
      %v3723 = vrot.slane %v3721, 5
      %v3724 = vsel %vm330, %v3719, %v3723
      %v3726 = vshrl.u32 %v3362, 16
      %v3728 = vrot.slane %v3726, 4
      %v3729 = vshll.u32 %v3362, 16
      %v3731 = vrot.slane %v3729, 5
      %v3732 = vor.u32 %v3728, %v3731
      %v3733 = vrot.slane %v3732, 4
      %v3735 = vshll.u32 %v3363, 16
      %v3737 = vrot.slane %v3735, 5
      %v3738 = vsel %vm330, %v3733, %v3737
      %v3739 = vshrl.u32 %v3363, 16
      %v3741 = vrot.slane %v3739, 4
      %v3742 = vor.u32 %v3741, %v3737
      %v3743 = vrot.slane %v3742, 4
      %v3745 = vshll.u32 %v3364, 16
      %v3747 = vrot.slane %v3745, 5
      %v3748 = vsel %vm330, %v3743, %v3747
      %s3749 = scalar_lea.vmem %s248, 448
      %v3750 = vld [vmem:[%s3749] sm:$0xf]
      %v3751 = vld [vmem:[%s3749 + $0x4] sm:$0xf]
      %v3752 = vld [vmem:[%s3749 + $0x8] sm:$0xf]
      %v3753 = vld [vmem:[%s3749 + $0xc] sm:$0xf]
      %v3754 = vld [vmem:[%s3749 + $0x10] sm:$0xf]
      %v3755 = vld [vmem:[%s3749 + $0x14] sm:$0xf]
      %v3756 = vld [vmem:[%s3749 + $0x18] sm:$0xf]
      %v3757 = vld [vmem:[%s3749 + $0x1c] sm:$0xf]
      %v3758 = vld [vmem:[%s3749 + $0x20] sm:$0xf]
      %v3759 = vld [vmem:[%s3749 + $0x24] sm:$0xf]
      %v3760 = vld [vmem:[%s3749 + $0x28] sm:$0xf]
      %v3761 = vld [vmem:[%s3749 + $0x2c] sm:$0xf]
      %v3762 = vld [vmem:[%s3749 + $0x30] sm:$0xf]
      %v3763 = vld [vmem:[%s3749 + $0x34] sm:$0xf]
      %v3764 = vld [vmem:[%s3749 + $0x38] sm:$0xf]
      %v3765 = vld [vmem:[%s3749 + $0x3c] sm:$0xf]
      %v3766 = vunpack.c.l.b16 %v3378
      %v3767 = vunpack.c.l.b16 %v3388
      %v3768 = vunpack.c.l.b16 %v3402
      %v3769 = vunpack.c.l.b16 %v3412
      %v3770 = vunpack.c.l.b16 %v3426
      %v3771 = vunpack.c.l.b16 %v3436
      %v3772 = vunpack.c.l.b16 %v3450
      %v3773 = vunpack.c.l.b16 %v3460
      %v3774 = vunpack.c.l.b16 %v3474
      %v3775 = vunpack.c.l.b16 %v3484
      %v3776 = vunpack.c.l.b16 %v3498
      %v3777 = vunpack.c.l.b16 %v3508
      %v3778 = vunpack.c.l.b16 %v3522
      %v3779 = vunpack.c.l.b16 %v3532
      %v3780 = vunpack.c.l.b16 %v3546
      %v3781 = vunpack.c.l.b16 %v3556
      %v3782 = vunpack.c.l.b16 %v3570
      %v3783 = vunpack.c.l.b16 %v3580
      %v3784 = vunpack.c.l.b16 %v3594
      %v3785 = vunpack.c.l.b16 %v3604
      %v3786 = vunpack.c.l.b16 %v3618
      %v3787 = vunpack.c.l.b16 %v3628
      %v3788 = vunpack.c.l.b16 %v3642
      %v3789 = vunpack.c.l.b16 %v3652
      %v3790 = vunpack.c.l.b16 %v3666
      %v3791 = vunpack.c.l.b16 %v3676
      %v3792 = vunpack.c.l.b16 %v3690
      %v3793 = vunpack.c.l.b16 %v3700
      %v3794 = vunpack.c.l.b16 %v3714
      %v3795 = vunpack.c.l.b16 %v3724
      %v3796 = vunpack.c.l.b16 %v3738
      %v3797 = vunpack.c.l.b16 %v3748
      %v3798 = vpack.c.b16 %v3767, %v3766
      %v3799 = vpack.c.b16 %v3769, %v3768
      %v3800 = vpack.c.b16 %v3771, %v3770
      %v3801 = vpack.c.b16 %v3773, %v3772
      %v3802 = vpack.c.b16 %v3775, %v3774
      %v3803 = vpack.c.b16 %v3777, %v3776
      %v3804 = vpack.c.b16 %v3779, %v3778
      %v3805 = vpack.c.b16 %v3781, %v3780
      %v3806 = vpack.c.b16 %v3783, %v3782
      %v3807 = vpack.c.b16 %v3785, %v3784
      %v3808 = vpack.c.b16 %v3787, %v3786
      %v3809 = vpack.c.b16 %v3789, %v3788
      %v3810 = vpack.c.b16 %v3791, %v3790
      %v3811 = vpack.c.b16 %v3793, %v3792
      %v3812 = vpack.c.b16 %v3795, %v3794
      %v3813 = vpack.c.b16 %v3797, %v3796
      %v3846 = vunpack.c.l.b16 %v3750
      %v3847 = vunpack.c.l.b16 %v3751
      %v3848 = vunpack.c.l.b16 %v3752
      %v3849 = vunpack.c.l.b16 %v3753
      %v3850 = vunpack.c.l.b16 %v3754
      %v3851 = vunpack.c.l.b16 %v3755
      %v3852 = vunpack.c.l.b16 %v3756
      %v3853 = vunpack.c.l.b16 %v3757
      %v3854 = vunpack.c.l.b16 %v3758
      %v3855 = vunpack.c.l.b16 %v3759
      %v3856 = vunpack.c.l.b16 %v3760
      %v3857 = vunpack.c.l.b16 %v3761
      %v3858 = vunpack.c.l.b16 %v3762
      %v3859 = vunpack.c.l.b16 %v3763
      %v3860 = vunpack.c.l.b16 %v3764
      %v3861 = vunpack.c.l.b16 %v3765
      %v3862 = vpack.c.b16 %v3847, %v3846
      %v3863 = vpack.c.b16 %v3849, %v3848
      %v3864 = vpack.c.b16 %v3851, %v3850
      %v3865 = vpack.c.b16 %v3853, %v3852
      %v3866 = vpack.c.b16 %v3855, %v3854
      %v3867 = vpack.c.b16 %v3857, %v3856
      %v3868 = vpack.c.b16 %v3859, %v3858
      %v3869 = vpack.c.b16 %v3861, %v3860
      %3878 = vmatpush.bf16.msra.mxu0 %v3869
      %3879 = vmatpush.bf16.msra.mxu0 %v3868
      %3880 = vmatpush.bf16.msra.mxu0 %v3867
      %3881 = vmatpush.bf16.msra.mxu0 %v3866
      %3882 = vmatpush.bf16.msra.mxu0 %v3865
      %3883 = vmatpush.bf16.msra.mxu0 %v3864
      %3884 = vmatpush.bf16.msra.mxu0 %v3863
      %3885 = vmatpush.bf16.msra.mxu0 %v3862
      %3886 = vmatmul.bf16.gmra.mxu0 %v3798
      %v3887 = vpop.f32.mrf.mxu0
      %v3888 = vadd.f32 0.0, %v3887
      %v3889 = vpop.f32.mrf.mxu0
      %v3890 = vadd.f32 0.0, %v3889
      %3891 = vmatmul.bf16.gmra.mxu0 %v3799
      %v3892 = vpop.f32.mrf.mxu0
      %v3893 = vadd.f32 0.0, %v3892
      %v3894 = vpop.f32.mrf.mxu0
      %v3895 = vadd.f32 0.0, %v3894
      %3896 = vmatmul.bf16.gmra.mxu0 %v3800
      %v3897 = vpop.f32.mrf.mxu0
      %v3898 = vadd.f32 0.0, %v3897
      %v3899 = vpop.f32.mrf.mxu0
      %v3900 = vadd.f32 0.0, %v3899
      %3901 = vmatmul.bf16.gmra.mxu0 %v3801
      %v3902 = vpop.f32.mrf.mxu0
      %v3903 = vadd.f32 0.0, %v3902
      %v3904 = vpop.f32.mrf.mxu0
      %v3905 = vadd.f32 0.0, %v3904
      %3906 = vmatmul.bf16.gmra.mxu0 %v3802
      %v3907 = vpop.f32.mrf.mxu0
      %v3908 = vadd.f32 0.0, %v3907
      %v3909 = vpop.f32.mrf.mxu0
      %v3910 = vadd.f32 0.0, %v3909
      %3911 = vmatmul.bf16.gmra.mxu0 %v3803
      %v3912 = vpop.f32.mrf.mxu0
      %v3913 = vadd.f32 0.0, %v3912
      %v3914 = vpop.f32.mrf.mxu0
      %v3915 = vadd.f32 0.0, %v3914
      %3916 = vmatmul.bf16.gmra.mxu0 %v3804
      %v3917 = vpop.f32.mrf.mxu0
      %v3918 = vadd.f32 0.0, %v3917
      %v3919 = vpop.f32.mrf.mxu0
      %v3920 = vadd.f32 0.0, %v3919
      %3921 = vmatmul.bf16.gmra.mxu0 %v3805
      %v3922 = vpop.f32.mrf.mxu0
      %v3923 = vadd.f32 0.0, %v3922
      %v3924 = vpop.f32.mrf.mxu0
      %v3925 = vadd.f32 0.0, %v3924
      %3926 = vmatmul.bf16.gmra.mxu0 %v3806
      %v3927 = vpop.f32.mrf.mxu0
      %v3928 = vadd.f32 0.0, %v3927
      %v3929 = vpop.f32.mrf.mxu0
      %v3930 = vadd.f32 0.0, %v3929
      %3931 = vmatmul.bf16.gmra.mxu0 %v3807
      %v3932 = vpop.f32.mrf.mxu0
      %v3933 = vadd.f32 0.0, %v3932
      %v3934 = vpop.f32.mrf.mxu0
      %v3935 = vadd.f32 0.0, %v3934
      %3936 = vmatmul.bf16.gmra.mxu0 %v3808
      %v3937 = vpop.f32.mrf.mxu0
      %v3938 = vadd.f32 0.0, %v3937
      %v3939 = vpop.f32.mrf.mxu0
      %v3940 = vadd.f32 0.0, %v3939
      %3941 = vmatmul.bf16.gmra.mxu0 %v3809
      %v3942 = vpop.f32.mrf.mxu0
      %v3943 = vadd.f32 0.0, %v3942
      %v3944 = vpop.f32.mrf.mxu0
      %v3945 = vadd.f32 0.0, %v3944
      %3946 = vmatmul.bf16.gmra.mxu0 %v3810
      %v3947 = vpop.f32.mrf.mxu0
      %v3948 = vadd.f32 0.0, %v3947
      %v3949 = vpop.f32.mrf.mxu0
      %v3950 = vadd.f32 0.0, %v3949
      %3951 = vmatmul.bf16.gmra.mxu0 %v3811
      %v3952 = vpop.f32.mrf.mxu0
      %v3953 = vadd.f32 0.0, %v3952
      %v3954 = vpop.f32.mrf.mxu0
      %v3955 = vadd.f32 0.0, %v3954
      %3956 = vmatmul.bf16.gmra.mxu0 %v3812
      %v3957 = vpop.f32.mrf.mxu0
      %v3958 = vadd.f32 0.0, %v3957
      %v3959 = vpop.f32.mrf.mxu0
      %v3960 = vadd.f32 0.0, %v3959
      %3961 = vmatmul.bf16.gmra.mxu0 %v3813
      %v3962 = vpop.f32.mrf.mxu0
      %v3963 = vadd.f32 0.0, %v3962
      %v3964 = vpop.f32.mrf.mxu0
      %v3965 = vadd.f32 0.0, %v3964
      %3966 = vdwg.mxu0
      %v3967 = vadd.f32 %v3285, %v3888
      %v3968 = vadd.f32 %v3286, %v3890
      %v3969 = vadd.f32 %v3287, %v3893
      %v3970 = vadd.f32 %v3288, %v3895
      %v3971 = vadd.f32 %v3289, %v3898
      %v3972 = vadd.f32 %v3290, %v3900
      %v3973 = vadd.f32 %v3291, %v3903
      %v3974 = vadd.f32 %v3292, %v3905
      %v3975 = vadd.f32 %v3293, %v3908
      %v3976 = vadd.f32 %v3294, %v3910
      %v3977 = vadd.f32 %v3295, %v3913
      %v3978 = vadd.f32 %v3296, %v3915
      %v3979 = vadd.f32 %v3297, %v3918
      %v3980 = vadd.f32 %v3298, %v3920
      %v3981 = vadd.f32 %v3299, %v3923
      %v3982 = vadd.f32 %v3300, %v3925
      %v3983 = vadd.f32 %v3301, %v3928
      %v3984 = vadd.f32 %v3302, %v3930
      %v3985 = vadd.f32 %v3303, %v3933
      %v3986 = vadd.f32 %v3304, %v3935
      %v3987 = vadd.f32 %v3305, %v3938
      %v3988 = vadd.f32 %v3306, %v3940
      %v3989 = vadd.f32 %v3307, %v3943
      %v3990 = vadd.f32 %v3308, %v3945
      %v3991 = vadd.f32 %v3309, %v3948
      %v3992 = vadd.f32 %v3310, %v3950
      %v3993 = vadd.f32 %v3311, %v3953
      %v3994 = vadd.f32 %v3312, %v3955
      %v3995 = vadd.f32 %v3313, %v3958
      %v3996 = vadd.f32 %v3314, %v3960
      %v3997 = vadd.f32 %v3315, %v3963
      %v3998 = vadd.f32 %v3316, %v3965
      %v3999 = vld [vmem:[%s3002] sm:$0xe]
      %v4000 = vld [vmem:[%s3002 + $0xc] sm:$0xe]
      %v4001 = vld [vmem:[%s3002 + $0x18] sm:$0xe]
      %v4002 = vld [vmem:[%s3002 + $0x24] sm:$0xe]
      %v4003 = vld [vmem:[%s3002 + $0x30] sm:$0xe]
      %v4004 = vld [vmem:[%s3002 + $0x3c] sm:$0xe]
      %v4005 = vld [vmem:[%s3002 + $0x48] sm:$0xe]
      %v4006 = vld [vmem:[%s3002 + $0x54] sm:$0xe]
      %v4007 = vld [vmem:[%s3002 + $0x60] sm:$0xe]
      %v4008 = vld [vmem:[%s3002 + $0x6c] sm:$0xe]
      %v4009 = vld [vmem:[%s3002 + $0x78] sm:$0xe]
      %v4010 = vld [vmem:[%s3002 + $0x84] sm:$0xe]
      %v4011 = vld [vmem:[%s3002 + $0x90] sm:$0xe]
      %v4012 = vld [vmem:[%s3002 + $0x9c] sm:$0xe]
      %v4013 = vld [vmem:[%s3002 + $0xa8] sm:$0xe]
      %v4014 = vld [vmem:[%s3002 + $0xb4] sm:$0xe]
      %v4063 = vrot.slane %v3999, 5
      %v4064 = vrot.slane %v4063, 4
      %v4065 = vrot.slane %v3318, 5
      %v4066 = vsel %vm1216, %v4064, %v4065
      %v4067 = vrot.slane %v4065, 4
      %v4068 = vrot.slane %v3319, 5
      %v4069 = vsel %vm1216, %v4067, %v4068
      %v4070 = vrot.slane %v4000, 5
      %v4071 = vrot.slane %v4070, 4
      %v4072 = vrot.slane %v3321, 5
      %v4073 = vsel %vm1216, %v4071, %v4072
      %v4074 = vrot.slane %v4072, 4
      %v4075 = vrot.slane %v3322, 5
      %v4076 = vsel %vm1216, %v4074, %v4075
      %v4077 = vrot.slane %v4001, 5
      %v4078 = vrot.slane %v4077, 4
      %v4079 = vrot.slane %v3324, 5
      %v4080 = vsel %vm1216, %v4078, %v4079
      %v4081 = vrot.slane %v4079, 4
      %v4082 = vrot.slane %v3325, 5
      %v4083 = vsel %vm1216, %v4081, %v4082
      %v4084 = vrot.slane %v4002, 5
      %v4085 = vrot.slane %v4084, 4
      %v4086 = vrot.slane %v3327, 5
      %v4087 = vsel %vm1216, %v4085, %v4086
      %v4088 = vrot.slane %v4086, 4
      %v4089 = vrot.slane %v3328, 5
      %v4090 = vsel %vm1216, %v4088, %v4089
      %v4091 = vrot.slane %v4003, 5
      %v4092 = vrot.slane %v4091, 4
      %v4093 = vrot.slane %v3330, 5
      %v4094 = vsel %vm1216, %v4092, %v4093
      %v4095 = vrot.slane %v4093, 4
      %v4096 = vrot.slane %v3331, 5
      %v4097 = vsel %vm1216, %v4095, %v4096
      %v4098 = vrot.slane %v4004, 5
      %v4099 = vrot.slane %v4098, 4
      %v4100 = vrot.slane %v3333, 5
      %v4101 = vsel %vm1216, %v4099, %v4100
      %v4102 = vrot.slane %v4100, 4
      %v4103 = vrot.slane %v3334, 5
      %v4104 = vsel %vm1216, %v4102, %v4103
      %v4105 = vrot.slane %v4005, 5
      %v4106 = vrot.slane %v4105, 4
      %v4107 = vrot.slane %v3336, 5
      %v4108 = vsel %vm1216, %v4106, %v4107
      %v4109 = vrot.slane %v4107, 4
      %v4110 = vrot.slane %v3337, 5
      %v4111 = vsel %vm1216, %v4109, %v4110
      %v4112 = vrot.slane %v4006, 5
      %v4113 = vrot.slane %v4112, 4
      %v4114 = vrot.slane %v3339, 5
      %v4115 = vsel %vm1216, %v4113, %v4114
      %v4116 = vrot.slane %v4114, 4
      %v4117 = vrot.slane %v3340, 5
      %v4118 = vsel %vm1216, %v4116, %v4117
      %v4119 = vrot.slane %v4007, 5
      %v4120 = vrot.slane %v4119, 4
      %v4121 = vrot.slane %v3342, 5
      %v4122 = vsel %vm1216, %v4120, %v4121
      %v4123 = vrot.slane %v4121, 4
      %v4124 = vrot.slane %v3343, 5
      %v4125 = vsel %vm1216, %v4123, %v4124
      %v4126 = vrot.slane %v4008, 5
      %v4127 = vrot.slane %v4126, 4
      %v4128 = vrot.slane %v3345, 5
      %v4129 = vsel %vm1216, %v4127, %v4128
      %v4130 = vrot.slane %v4128, 4
      %v4131 = vrot.slane %v3346, 5
      %v4132 = vsel %vm1216, %v4130, %v4131
      %v4133 = vrot.slane %v4009, 5
      %v4134 = vrot.slane %v4133, 4
      %v4135 = vrot.slane %v3348, 5
      %v4136 = vsel %vm1216, %v4134, %v4135
      %v4137 = vrot.slane %v4135, 4
      %v4138 = vrot.slane %v3349, 5
      %v4139 = vsel %vm1216, %v4137, %v4138
      %v4140 = vrot.slane %v4010, 5
      %v4141 = vrot.slane %v4140, 4
      %v4142 = vrot.slane %v3351, 5
      %v4143 = vsel %vm1216, %v4141, %v4142
      %v4144 = vrot.slane %v4142, 4
      %v4145 = vrot.slane %v3352, 5
      %v4146 = vsel %vm1216, %v4144, %v4145
      %v4147 = vrot.slane %v4011, 5
      %v4148 = vrot.slane %v4147, 4
      %v4149 = vrot.slane %v3354, 5
      %v4150 = vsel %vm1216, %v4148, %v4149
      %v4151 = vrot.slane %v4149, 4
      %v4152 = vrot.slane %v3355, 5
      %v4153 = vsel %vm1216, %v4151, %v4152
      %v4154 = vrot.slane %v4012, 5
      %v4155 = vrot.slane %v4154, 4
      %v4156 = vrot.slane %v3357, 5
      %v4157 = vsel %vm1216, %v4155, %v4156
      %v4158 = vrot.slane %v4156, 4
      %v4159 = vrot.slane %v3358, 5
      %v4160 = vsel %vm1216, %v4158, %v4159
      %v4161 = vrot.slane %v4013, 5
      %v4162 = vrot.slane %v4161, 4
      %v4163 = vrot.slane %v3360, 5
      %v4164 = vsel %vm1216, %v4162, %v4163
      %v4165 = vrot.slane %v4163, 4
      %v4166 = vrot.slane %v3361, 5
      %v4167 = vsel %vm1216, %v4165, %v4166
      %v4168 = vrot.slane %v4014, 5
      %v4169 = vrot.slane %v4168, 4
      %v4170 = vrot.slane %v3363, 5
      %v4171 = vsel %vm1216, %v4169, %v4170
      %v4172 = vrot.slane %v4170, 4
      %v4173 = vrot.slane %v3364, 5
      %v4174 = vsel %vm1216, %v4172, %v4173
      %s4175 = scalar_lea.vmem %s248, 512
      %v4176 = vld [vmem:[%s4175] sm:$0xf]
      %v4177 = vld [vmem:[%s4175 + $0x4] sm:$0xf]
      %v4178 = vld [vmem:[%s4175 + $0x8] sm:$0xf]
      %v4179 = vld [vmem:[%s4175 + $0xc] sm:$0xf]
      %v4180 = vld [vmem:[%s4175 + $0x10] sm:$0xf]
      %v4181 = vld [vmem:[%s4175 + $0x14] sm:$0xf]
      %v4182 = vld [vmem:[%s4175 + $0x18] sm:$0xf]
      %v4183 = vld [vmem:[%s4175 + $0x1c] sm:$0xf]
      %v4184 = vld [vmem:[%s4175 + $0x20] sm:$0xf]
      %v4185 = vld [vmem:[%s4175 + $0x24] sm:$0xf]
      %v4186 = vld [vmem:[%s4175 + $0x28] sm:$0xf]
      %v4187 = vld [vmem:[%s4175 + $0x2c] sm:$0xf]
      %v4188 = vld [vmem:[%s4175 + $0x30] sm:$0xf]
      %v4189 = vld [vmem:[%s4175 + $0x34] sm:$0xf]
      %v4190 = vld [vmem:[%s4175 + $0x38] sm:$0xf]
      %v4191 = vld [vmem:[%s4175 + $0x3c] sm:$0xf]
      %v4192 = vunpack.c.l.b16 %v4066
      %v4193 = vunpack.c.l.b16 %v4069
      %v4194 = vunpack.c.l.b16 %v4073
      %v4195 = vunpack.c.l.b16 %v4076
      %v4196 = vunpack.c.l.b16 %v4080
      %v4197 = vunpack.c.l.b16 %v4083
      %v4198 = vunpack.c.l.b16 %v4087
      %v4199 = vunpack.c.l.b16 %v4090
      %v4200 = vunpack.c.l.b16 %v4094
      %v4201 = vunpack.c.l.b16 %v4097
      %v4202 = vunpack.c.l.b16 %v4101
      %v4203 = vunpack.c.l.b16 %v4104
      %v4204 = vunpack.c.l.b16 %v4108
      %v4205 = vunpack.c.l.b16 %v4111
      %v4206 = vunpack.c.l.b16 %v4115
      %v4207 = vunpack.c.l.b16 %v4118
      %v4208 = vunpack.c.l.b16 %v4122
      %v4209 = vunpack.c.l.b16 %v4125
      %v4210 = vunpack.c.l.b16 %v4129
      %v4211 = vunpack.c.l.b16 %v4132
      %v4212 = vunpack.c.l.b16 %v4136
      %v4213 = vunpack.c.l.b16 %v4139
      %v4214 = vunpack.c.l.b16 %v4143
      %v4215 = vunpack.c.l.b16 %v4146
      %v4216 = vunpack.c.l.b16 %v4150
      %v4217 = vunpack.c.l.b16 %v4153
      %v4218 = vunpack.c.l.b16 %v4157
      %v4219 = vunpack.c.l.b16 %v4160
      %v4220 = vunpack.c.l.b16 %v4164
      %v4221 = vunpack.c.l.b16 %v4167
      %v4222 = vunpack.c.l.b16 %v4171
      %v4223 = vunpack.c.l.b16 %v4174
      %v4224 = vpack.c.b16 %v4193, %v4192
      %v4225 = vpack.c.b16 %v4195, %v4194
      %v4226 = vpack.c.b16 %v4197, %v4196
      %v4227 = vpack.c.b16 %v4199, %v4198
      %v4228 = vpack.c.b16 %v4201, %v4200
      %v4229 = vpack.c.b16 %v4203, %v4202
      %v4230 = vpack.c.b16 %v4205, %v4204
      %v4231 = vpack.c.b16 %v4207, %v4206
      %v4232 = vpack.c.b16 %v4209, %v4208
      %v4233 = vpack.c.b16 %v4211, %v4210
      %v4234 = vpack.c.b16 %v4213, %v4212
      %v4235 = vpack.c.b16 %v4215, %v4214
      %v4236 = vpack.c.b16 %v4217, %v4216
      %v4237 = vpack.c.b16 %v4219, %v4218
      %v4238 = vpack.c.b16 %v4221, %v4220
      %v4239 = vpack.c.b16 %v4223, %v4222
      %v4272 = vunpack.c.l.b16 %v4176
      %v4273 = vunpack.c.l.b16 %v4177
      %v4274 = vunpack.c.l.b16 %v4178
      %v4275 = vunpack.c.l.b16 %v4179
      %v4276 = vunpack.c.l.b16 %v4180
      %v4277 = vunpack.c.l.b16 %v4181
      %v4278 = vunpack.c.l.b16 %v4182
      %v4279 = vunpack.c.l.b16 %v4183
      %v4280 = vunpack.c.l.b16 %v4184
      %v4281 = vunpack.c.l.b16 %v4185
      %v4282 = vunpack.c.l.b16 %v4186
      %v4283 = vunpack.c.l.b16 %v4187
      %v4284 = vunpack.c.l.b16 %v4188
      %v4285 = vunpack.c.l.b16 %v4189
      %v4286 = vunpack.c.l.b16 %v4190
      %v4287 = vunpack.c.l.b16 %v4191
      %v4288 = vpack.c.b16 %v4273, %v4272
      %v4289 = vpack.c.b16 %v4275, %v4274
      %v4290 = vpack.c.b16 %v4277, %v4276
      %v4291 = vpack.c.b16 %v4279, %v4278
      %v4292 = vpack.c.b16 %v4281, %v4280
      %v4293 = vpack.c.b16 %v4283, %v4282
      %v4294 = vpack.c.b16 %v4285, %v4284
      %v4295 = vpack.c.b16 %v4287, %v4286
      %4304 = vmatpush.bf16.msra.mxu0 %v4295
      %4305 = vmatpush.bf16.msra.mxu0 %v4294
      %4306 = vmatpush.bf16.msra.mxu0 %v4293
      %4307 = vmatpush.bf16.msra.mxu0 %v4292
      %4308 = vmatpush.bf16.msra.mxu0 %v4291
      %4309 = vmatpush.bf16.msra.mxu0 %v4290
      %4310 = vmatpush.bf16.msra.mxu0 %v4289
      %4311 = vmatpush.bf16.msra.mxu0 %v4288
      %4312 = vmatmul.bf16.gmra.mxu0 %v4224
      %v4313 = vpop.f32.mrf.mxu0
      %v4314 = vadd.f32 0.0, %v4313
      %v4315 = vpop.f32.mrf.mxu0
      %v4316 = vadd.f32 0.0, %v4315
      %4317 = vmatmul.bf16.gmra.mxu0 %v4225
      %v4318 = vpop.f32.mrf.mxu0
      %v4319 = vadd.f32 0.0, %v4318
      %v4320 = vpop.f32.mrf.mxu0
      %v4321 = vadd.f32 0.0, %v4320
      %4322 = vmatmul.bf16.gmra.mxu0 %v4226
      %v4323 = vpop.f32.mrf.mxu0
      %v4324 = vadd.f32 0.0, %v4323
      %v4325 = vpop.f32.mrf.mxu0
      %v4326 = vadd.f32 0.0, %v4325
      %4327 = vmatmul.bf16.gmra.mxu0 %v4227
      %v4328 = vpop.f32.mrf.mxu0
      %v4329 = vadd.f32 0.0, %v4328
      %v4330 = vpop.f32.mrf.mxu0
      %v4331 = vadd.f32 0.0, %v4330
      %4332 = vmatmul.bf16.gmra.mxu0 %v4228
      %v4333 = vpop.f32.mrf.mxu0
      %v4334 = vadd.f32 0.0, %v4333
      %v4335 = vpop.f32.mrf.mxu0
      %v4336 = vadd.f32 0.0, %v4335
      %4337 = vmatmul.bf16.gmra.mxu0 %v4229
      %v4338 = vpop.f32.mrf.mxu0
      %v4339 = vadd.f32 0.0, %v4338
      %v4340 = vpop.f32.mrf.mxu0
      %v4341 = vadd.f32 0.0, %v4340
      %4342 = vmatmul.bf16.gmra.mxu0 %v4230
      %v4343 = vpop.f32.mrf.mxu0
      %v4344 = vadd.f32 0.0, %v4343
      %v4345 = vpop.f32.mrf.mxu0
      %v4346 = vadd.f32 0.0, %v4345
      %4347 = vmatmul.bf16.gmra.mxu0 %v4231
      %v4348 = vpop.f32.mrf.mxu0
      %v4349 = vadd.f32 0.0, %v4348
      %v4350 = vpop.f32.mrf.mxu0
      %v4351 = vadd.f32 0.0, %v4350
      %4352 = vmatmul.bf16.gmra.mxu0 %v4232
      %v4353 = vpop.f32.mrf.mxu0
      %v4354 = vadd.f32 0.0, %v4353
      %v4355 = vpop.f32.mrf.mxu0
      %v4356 = vadd.f32 0.0, %v4355
      %4357 = vmatmul.bf16.gmra.mxu0 %v4233
      %v4358 = vpop.f32.mrf.mxu0
      %v4359 = vadd.f32 0.0, %v4358
      %v4360 = vpop.f32.mrf.mxu0
      %v4361 = vadd.f32 0.0, %v4360
      %4362 = vmatmul.bf16.gmra.mxu0 %v4234
      %v4363 = vpop.f32.mrf.mxu0
      %v4364 = vadd.f32 0.0, %v4363
      %v4365 = vpop.f32.mrf.mxu0
      %v4366 = vadd.f32 0.0, %v4365
      %4367 = vmatmul.bf16.gmra.mxu0 %v4235
      %v4368 = vpop.f32.mrf.mxu0
      %v4369 = vadd.f32 0.0, %v4368
      %v4370 = vpop.f32.mrf.mxu0
      %v4371 = vadd.f32 0.0, %v4370
      %4372 = vmatmul.bf16.gmra.mxu0 %v4236
      %v4373 = vpop.f32.mrf.mxu0
      %v4374 = vadd.f32 0.0, %v4373
      %v4375 = vpop.f32.mrf.mxu0
      %v4376 = vadd.f32 0.0, %v4375
      %4377 = vmatmul.bf16.gmra.mxu0 %v4237
      %v4378 = vpop.f32.mrf.mxu0
      %v4379 = vadd.f32 0.0, %v4378
      %v4380 = vpop.f32.mrf.mxu0
      %v4381 = vadd.f32 0.0, %v4380
      %4382 = vmatmul.bf16.gmra.mxu0 %v4238
      %v4383 = vpop.f32.mrf.mxu0
      %v4384 = vadd.f32 0.0, %v4383
      %v4385 = vpop.f32.mrf.mxu0
      %v4386 = vadd.f32 0.0, %v4385
      %4387 = vmatmul.bf16.gmra.mxu0 %v4239
      %v4388 = vpop.f32.mrf.mxu0
      %v4389 = vadd.f32 0.0, %v4388
      %v4390 = vpop.f32.mrf.mxu0
      %v4391 = vadd.f32 0.0, %v4390
      %4392 = vdwg.mxu0
      %v4393 = vadd.f32 %v3967, %v4314
      %v4394 = vadd.f32 %v3968, %v4316
      %v4395 = vadd.f32 %v3969, %v4319
      %v4396 = vadd.f32 %v3970, %v4321
      %v4397 = vadd.f32 %v3971, %v4324
      %v4398 = vadd.f32 %v3972, %v4326
      %v4399 = vadd.f32 %v3973, %v4329
      %v4400 = vadd.f32 %v3974, %v4331
      %v4401 = vadd.f32 %v3975, %v4334
      %v4402 = vadd.f32 %v3976, %v4336
      %v4403 = vadd.f32 %v3977, %v4339
      %v4404 = vadd.f32 %v3978, %v4341
      %v4405 = vadd.f32 %v3979, %v4344
      %v4406 = vadd.f32 %v3980, %v4346
      %v4407 = vadd.f32 %v3981, %v4349
      %v4408 = vadd.f32 %v3982, %v4351
      %v4409 = vadd.f32 %v3983, %v4354
      %v4410 = vadd.f32 %v3984, %v4356
      %v4411 = vadd.f32 %v3985, %v4359
      %v4412 = vadd.f32 %v3986, %v4361
      %v4413 = vadd.f32 %v3987, %v4364
      %v4414 = vadd.f32 %v3988, %v4366
      %v4415 = vadd.f32 %v3989, %v4369
      %v4416 = vadd.f32 %v3990, %v4371
      %v4417 = vadd.f32 %v3991, %v4374
      %v4418 = vadd.f32 %v3992, %v4376
      %v4419 = vadd.f32 %v3993, %v4379
      %v4420 = vadd.f32 %v3994, %v4381
      %v4421 = vadd.f32 %v3995, %v4384
      %v4422 = vadd.f32 %v3996, %v4386
      %v4423 = vadd.f32 %v3997, %v4389
      %v4424 = vadd.f32 %v3998, %v4391
      %v4425 = vld [vmem:[%s251] sm:$0x1]
      %v4427 = vperm.slane %v4425, 0
      %v4429 = vmul.f32 %v4393, %v4427
      %v4430 = vmul.f32 %v4394, %v4427
      %v4431 = vmul.f32 %v4395, %v4427
      %v4432 = vmul.f32 %v4396, %v4427
      %v4433 = vmul.f32 %v4397, %v4427
      %v4434 = vmul.f32 %v4398, %v4427
      %v4435 = vmul.f32 %v4399, %v4427
      %v4436 = vmul.f32 %v4400, %v4427
      %v4437 = vmul.f32 %v4401, %v4427
      %v4438 = vmul.f32 %v4402, %v4427
      %v4439 = vmul.f32 %v4403, %v4427
      %v4440 = vmul.f32 %v4404, %v4427
      %v4441 = vmul.f32 %v4405, %v4427
      %v4442 = vmul.f32 %v4406, %v4427
      %v4443 = vmul.f32 %v4407, %v4427
      %v4444 = vmul.f32 %v4408, %v4427
      %v4445 = vmul.f32 %v4409, %v4427
      %v4446 = vmul.f32 %v4410, %v4427
      %v4447 = vmul.f32 %v4411, %v4427
      %v4448 = vmul.f32 %v4412, %v4427
      %v4449 = vmul.f32 %v4413, %v4427
      %v4450 = vmul.f32 %v4414, %v4427
      %v4451 = vmul.f32 %v4415, %v4427
      %v4452 = vmul.f32 %v4416, %v4427
      %v4453 = vmul.f32 %v4417, %v4427
      %v4454 = vmul.f32 %v4418, %v4427
      %v4455 = vmul.f32 %v4419, %v4427
      %v4456 = vmul.f32 %v4420, %v4427
      %v4457 = vmul.f32 %v4421, %v4427
      %v4458 = vmul.f32 %v4422, %v4427
      %v4459 = vmul.f32 %v4423, %v4427
      %v4460 = vmul.f32 %v4424, %v4427
      %v4461 = vld [vmem:[%s254] sm:$0x1]
      %v4463 = vperm.slane %v4461, 0
      %v4465 = vadd.f32 %v4429, %v4463
      %v4466 = vadd.f32 %v4430, %v4463
      %v4467 = vadd.f32 %v4431, %v4463
      %v4468 = vadd.f32 %v4432, %v4463
      %v4469 = vadd.f32 %v4433, %v4463
      %v4470 = vadd.f32 %v4434, %v4463
      %v4471 = vadd.f32 %v4435, %v4463
      %v4472 = vadd.f32 %v4436, %v4463
      %v4473 = vadd.f32 %v4437, %v4463
      %v4474 = vadd.f32 %v4438, %v4463
      %v4475 = vadd.f32 %v4439, %v4463
      %v4476 = vadd.f32 %v4440, %v4463
      %v4477 = vadd.f32 %v4441, %v4463
      %v4478 = vadd.f32 %v4442, %v4463
      %v4479 = vadd.f32 %v4443, %v4463
      %v4480 = vadd.f32 %v4444, %v4463
      %v4481 = vadd.f32 %v4445, %v4463
      %v4482 = vadd.f32 %v4446, %v4463
      %v4483 = vadd.f32 %v4447, %v4463
      %v4484 = vadd.f32 %v4448, %v4463
      %v4485 = vadd.f32 %v4449, %v4463
      %v4486 = vadd.f32 %v4450, %v4463
      %v4487 = vadd.f32 %v4451, %v4463
      %v4488 = vadd.f32 %v4452, %v4463
      %v4489 = vadd.f32 %v4453, %v4463
      %v4490 = vadd.f32 %v4454, %v4463
      %v4491 = vadd.f32 %v4455, %v4463
      %v4492 = vadd.f32 %v4456, %v4463
      %v4493 = vadd.f32 %v4457, %v4463
      %v4494 = vadd.f32 %v4458, %v4463
      %v4495 = vadd.f32 %v4459, %v4463
      %v4496 = vadd.f32 %v4460, %v4463
      %v4497 = vmax.f32 %v4465, 0.0
      %v4498 = vmax.f32 %v4466, 0.0
      %v4499 = vmax.f32 %v4467, 0.0
      %v4500 = vmax.f32 %v4468, 0.0
      %v4501 = vmax.f32 %v4469, 0.0
      %v4502 = vmax.f32 %v4470, 0.0
      %v4503 = vmax.f32 %v4471, 0.0
      %v4504 = vmax.f32 %v4472, 0.0
      %v4505 = vmax.f32 %v4473, 0.0
      %v4506 = vmax.f32 %v4474, 0.0
      %v4507 = vmax.f32 %v4475, 0.0
      %v4508 = vmax.f32 %v4476, 0.0
      %v4509 = vmax.f32 %v4477, 0.0
      %v4510 = vmax.f32 %v4478, 0.0
      %v4511 = vmax.f32 %v4479, 0.0
      %v4512 = vmax.f32 %v4480, 0.0
      %v4513 = vmax.f32 %v4481, 0.0
      %v4514 = vmax.f32 %v4482, 0.0
      %v4515 = vmax.f32 %v4483, 0.0
      %v4516 = vmax.f32 %v4484, 0.0
      %v4517 = vmax.f32 %v4485, 0.0
      %v4518 = vmax.f32 %v4486, 0.0
      %v4519 = vmax.f32 %v4487, 0.0
      %v4520 = vmax.f32 %v4488, 0.0
      %v4521 = vmax.f32 %v4489, 0.0
      %v4522 = vmax.f32 %v4490, 0.0
      %v4523 = vmax.f32 %v4491, 0.0
      %v4524 = vmax.f32 %v4492, 0.0
      %v4525 = vmax.f32 %v4493, 0.0
      %v4526 = vmax.f32 %v4494, 0.0
      %v4527 = vmax.f32 %v4495, 0.0
      %v4528 = vmax.f32 %v4496, 0.0
      %v4529 = vpack.c.bf16 %v4497, %v4497
      %v4530 = vpack.c.bf16 %v4498, %v4498
      %v4531 = vpack.c.bf16 %v4499, %v4499
      %v4532 = vpack.c.bf16 %v4500, %v4500
      %v4533 = vpack.c.bf16 %v4501, %v4501
      %v4534 = vpack.c.bf16 %v4502, %v4502
      %v4535 = vpack.c.bf16 %v4503, %v4503
      %v4536 = vpack.c.bf16 %v4504, %v4504
      %v4537 = vpack.c.bf16 %v4505, %v4505
      %v4538 = vpack.c.bf16 %v4506, %v4506
      %v4539 = vpack.c.bf16 %v4507, %v4507
      %v4540 = vpack.c.bf16 %v4508, %v4508
      %v4541 = vpack.c.bf16 %v4509, %v4509
      %v4542 = vpack.c.bf16 %v4510, %v4510
      %v4543 = vpack.c.bf16 %v4511, %v4511
      %v4544 = vpack.c.bf16 %v4512, %v4512
      %v4545 = vpack.c.bf16 %v4513, %v4513
      %v4546 = vpack.c.bf16 %v4514, %v4514
      %v4547 = vpack.c.bf16 %v4515, %v4515
      %v4548 = vpack.c.bf16 %v4516, %v4516
      %v4549 = vpack.c.bf16 %v4517, %v4517
      %v4550 = vpack.c.bf16 %v4518, %v4518
      %v4551 = vpack.c.bf16 %v4519, %v4519
      %v4552 = vpack.c.bf16 %v4520, %v4520
      %v4553 = vpack.c.bf16 %v4521, %v4521
      %v4554 = vpack.c.bf16 %v4522, %v4522
      %v4555 = vpack.c.bf16 %v4523, %v4523
      %v4556 = vpack.c.bf16 %v4524, %v4524
      %v4557 = vpack.c.bf16 %v4525, %v4525
      %v4558 = vpack.c.bf16 %v4526, %v4526
      %v4559 = vpack.c.bf16 %v4527, %v4527
      %v4560 = vpack.c.bf16 %v4528, %v4528
      %4561 = vst [vmem:[%s262] sm:$0xf] %v4529
      %4562 = vst [vmem:[%s262 + $0x4] sm:$0xf] %v4530
      %4563 = vst [vmem:[%s262 + $0x8] sm:$0xf] %v4531
      %4564 = vst [vmem:[%s262 + $0xc] sm:$0xf] %v4532
      %4565 = vst [vmem:[%s262 + $0x10] sm:$0xf] %v4533
      %4566 = vst [vmem:[%s262 + $0x14] sm:$0xf] %v4534
      %4567 = vst [vmem:[%s262 + $0x18] sm:$0xf] %v4535
      %4568 = vst [vmem:[%s262 + $0x1c] sm:$0xf] %v4536
      %4569 = vst [vmem:[%s262 + $0x20] sm:$0xf] %v4537
      %4570 = vst [vmem:[%s262 + $0x24] sm:$0xf] %v4538
      %4571 = vst [vmem:[%s262 + $0x28] sm:$0xf] %v4539
      %4572 = vst [vmem:[%s262 + $0x2c] sm:$0xf] %v4540
      %4573 = vst [vmem:[%s262 + $0x30] sm:$0xf] %v4541
      %4574 = vst [vmem:[%s262 + $0x34] sm:$0xf] %v4542
      %4575 = vst [vmem:[%s262 + $0x38] sm:$0xf] %v4543
      %4576 = vst [vmem:[%s262 + $0x3c] sm:$0xf] %v4544
      %4577 = vst [vmem:[%s262 + $0x40] sm:$0xf] %v4545
      %4578 = vst [vmem:[%s262 + $0x44] sm:$0xf] %v4546
      %4579 = vst [vmem:[%s262 + $0x48] sm:$0xf] %v4547
      %4580 = vst [vmem:[%s262 + $0x4c] sm:$0xf] %v4548
      %4581 = vst [vmem:[%s262 + $0x50] sm:$0xf] %v4549
      %4582 = vst [vmem:[%s262 + $0x54] sm:$0xf] %v4550
      %4583 = vst [vmem:[%s262 + $0x58] sm:$0xf] %v4551
      %4584 = vst [vmem:[%s262 + $0x5c] sm:$0xf] %v4552
      %4585 = vst [vmem:[%s262 + $0x60] sm:$0xf] %v4553
      %4586 = vst [vmem:[%s262 + $0x64] sm:$0xf] %v4554
      %4587 = vst [vmem:[%s262 + $0x68] sm:$0xf] %v4555
      %4588 = vst [vmem:[%s262 + $0x6c] sm:$0xf] %v4556
      %4589 = vst [vmem:[%s262 + $0x70] sm:$0xf] %v4557
      %4590 = vst [vmem:[%s262 + $0x74] sm:$0xf] %v4558
      %4591 = vst [vmem:[%s262 + $0x78] sm:$0xf] %v4559
      %4592 = vst [vmem:[%s262 + $0x7c] sm:$0xf] %v4560
      %s4593 = smul.u32 32, %s19
      %p4594 = scmp.lt.s32.totalorder %s4593, 63
      %s4595 = scalar_select %p4594, %s4593, 63
      %p4596 = scmp.lt.s32.totalorder %s20, 0
      %s4597 = scalar_select %p4596, %s20, 0
      %s4598 = sadd.s32 %s4597, %s4595
      %s4599 = smul.addr %s4598, 4
      %s4600 = scalar_lea.vmem %s4, %s4599
      // Predicated region
      $region37: #{dcn_bottleneck_forward.4} parent=35 // pred_check
        %p4601 = pneg %p151
      $region38: #{dcn_bottleneck_forward.4} parent=35 // pred_check_branch
        %4603 = sbr.rel (%p4601) target = $region40
      $region39: #{dcn_bottleneck_forward.4} parent=35 // pred_region
        %s4604 = smul.u32 32, %s19
      $region40: #{dcn_bottleneck_forward.4} parent=35 // pred_fallthru
        _
    $region36: #{dcn_bottleneck_forward.4} parent=5 // pred_fallthru
      _
    %p4605 = scmp.le.s32.totalorder 2, %s10
    // Predicated region
    $region41: #{dcn_bottleneck_forward.4} parent=5 // pred_check
      %p4606 = pneg %p4605
    $region42: #{dcn_bottleneck_forward.4} parent=5 // pred_check_branch
      %4608 = sbr.rel (%p4606) target = $region44
    $region43: #{dcn_bottleneck_forward.4} parent=5 // pred_region
      %s4609 = ssub.s32 %s10, 2
      // Predicated region
      $region45: #{dcn_bottleneck_forward.4} parent=43 // pred_check
        %p4610 = pneg %p157
      $region46: #{dcn_bottleneck_forward.4} parent=43 // pred_check_branch
        %4612 = sbr.rel (%p4610) target = $region48
      $region47: #{dcn_bottleneck_forward.4} parent=43 // pred_region
        %s4613 = smul.u32 32, %s21
        %p4614 = scmp.lt.s32.totalorder %s4613, 63
        %s4615 = scalar_select %p4614, %s4613, 63
        %p4616 = scmp.lt.s32.totalorder %s22, 0
        %s4617 = scalar_select %p4616, %s22, 0
        %s4618 = sadd.s32 %s4617, %s4615
        %s4619 = smul.addr %s4618, 4
        %s4620 = scalar_lea.vmem %s4, %s4619
      $region48: #{dcn_bottleneck_forward.4} parent=43 // pred_fallthru
        _
    $region44: #{dcn_bottleneck_forward.4} parent=5 // pred_fallthru
      _
  $region6: #{dcn_bottleneck_forward.4} parent=0 // loop_footer
    %s14 = sadd.s32 1, %s10
  $region7: #{dcn_bottleneck_forward.4} parent=0 // loop_footer_branch
    %9 = sbr.rel target = $region3
  $region8: #{dcn_bottleneck_forward.4} parent=0 // loop_exit
    _

</llo_original>
